<compile_context>
chip_gen: v7x
topology: tpu7x:2x2x1
jax: 0.10.0
libtpu: 0.0.40
codegen_flags: <defaults>
</compile_context>

<pallas_src>
import functools

import jax
import jax.numpy as jnp
from jax import lax
from jax.experimental import pallas as pl
from jax.experimental.pallas import tpu as pltpu

KSIZE = 5            # conv kernel size
PAD = 2              # conv padding
NB = 256             # per-pool-half lane width (Wo*Cout = 224 real, padded to 256)
LANES = 128

_MOSAIC_PARAMS = pltpu.CompilerParams(
    dimension_semantics=("parallel",),
    vmem_limit_bytes=48 * 1024 * 1024,
)


# ---------------------------------------------------------------------------
# small helpers (tiling, operand preparation)
# ---------------------------------------------------------------------------
def _round_up(x, m):
    return (x + m - 1) // m * m


def _pick_m_tile(m, target=512):
    """Row-tile size: full (rounded to 8) for small M, else `target` rows."""
    if m <= target:
        return _round_up(max(m, 8), 8)
    return target


def _make_band_half(w_oihw, w_out, half):
    """(Cout,Cin,5,5) -> (KSIZE*Wp*Cin, NB) band producing conv outputs at
    output columns w = 2*wo + half, channel-inner, zero-padded to NB lanes."""
    cout, cin, n_kh, n_kw = w_oihw.shape
    wp = w_out + n_kw - 1
    wo_n = w_out // 2
    p = jnp.arange(wp)[:, None]                    # padded-w index
    w = 2 * jnp.arange(wo_n)[None, :] + half       # output-w index for this half
    kw = p - w                                     # (Wp, Wo)
    valid = (kw >= 0) & (kw < n_kw)
    kwc = jnp.clip(kw, 0, n_kw - 1)
    blocks = []
    for kh in range(n_kh):
        wt = jnp.transpose(w_oihw[:, :, kh, :], (1, 2, 0))      # (Cin, KW, Cout)
        g = wt[:, kwc, :]                                       # (Cin, Wp, Wo, Cout)
        g = jnp.where(valid[None, :, :, None], g, 0.0)
        blocks.append(jnp.transpose(g, (1, 0, 2, 3)).reshape(wp * cin, wo_n * cout))
    band = jnp.concatenate(blocks, axis=0)                      # (K, Wo*Cout)
    return jnp.pad(band, ((0, 0), (0, NB - wo_n * cout)))


def _make_band(w_oihw, w_out):
    """Full band (KSIZE*Wp*Cin, 2*NB): lane half 0 -> even-w, half 1 -> odd-w."""
    be = _make_band_half(w_oihw, w_out, 0)
    bo = _make_band_half(w_oihw, w_out, 1)
    return jnp.concatenate([be, bo], axis=1).astype(jnp.bfloat16)


def _chan_selector(wo_n, cout):
    """(2*NB, 128) f32 selector: column c sums every lane carrying channel c."""
    lane = jnp.arange(2 * NB)
    within = (lane % NB) < wo_n * cout
    ch = (lane % NB) % cout
    sel = within[:, None] & (ch[:, None] == jnp.arange(LANES)[None, :])
    return sel.astype(jnp.float32)


def _im2row_split(xpad, ho_n):
    """Padded activation (n, Hp, Wp*Cin) -> even-h / odd-h im2row LHS matrices,
    each (n*ho_n, KSIZE*Wp*Cin) bf16.  Row (img*ho_n + ho) holds the 5 padded
    rows feeding conv-output row h = 2*ho (resp. 2*ho+1), concatenated by kh."""
    n = xpad.shape[0]
    xe = jnp.concatenate(
        [xpad[:, kh:kh + 2 * ho_n:2, :] for kh in range(KSIZE)], axis=-1)
    xo = jnp.concatenate(
        [xpad[:, kh + 1:kh + 1 + 2 * ho_n:2, :] for kh in range(KSIZE)], axis=-1)
    k = xe.shape[-1]
    return xe.reshape(n * ho_n, k), xo.reshape(n * ho_n, k)


def _bn_affine(sum_c, sq_c, count, gamma, beta, *, cout, wo_n, eps):
    """Accumulated per-channel stats -> (1, 2*NB) f32 scale / shift rows.
    The conv bias cancels exactly against the batch mean in training-mode BN."""
    mean = sum_c[:cout] / count
    var = jnp.maximum(sq_c[:cout] / count - mean * mean, 0.0)   # biased batch var
    scale = gamma * lax.rsqrt(var + eps)
    shift = beta - mean * scale

    def row(v):
        r = jnp.pad(jnp.tile(v, wo_n), (0, NB - wo_n * cout))
        return jnp.tile(r, 2)[None, :].astype(jnp.float32)

    return row(scale), row(shift)


def _prep_fc(wfc, bfc):
    """Fold the PyTorch NCHW flatten into the fc weight; pad to 128 lanes."""
    ncls = wfc.shape[0]
    g = jnp.arange(7 * 7 * 32)
    h, rem = g // (7 * 32), g % (7 * 32)
    w, c = rem // 32, rem % 32
    f = c * 49 + h * 7 + w                      # PyTorch flatten index for row g
    w_perm = wfc.T[f, :]                        # (1568, ncls) in our (h, w, c) order
    w_pad = jnp.zeros((7 * 7 * 32, LANES), jnp.float32).at[:, :ncls].set(w_perm)
    b_pad = jnp.zeros((1, LANES), jnp.float32).at[0, :ncls].set(bfc)
    return w_pad.astype(jnp.bfloat16), b_pad


# ---------------------------------------------------------------------------
# Kernels
# ---------------------------------------------------------------------------
def _conv_stats_kernel(xe_ref, xo_ref, band_ref, sel_ref,
                       ze_ref, zo_ref, sum_ref, sq_ref):
    """Pass 1: one big conv matmul per h-parity; write raw conv z (f32) plus
    per-grid-step per-channel sum / sum-of-squares partials."""
    ze = jnp.dot(xe_ref[...], band_ref[...], preferred_element_type=jnp.float32)
    zo = jnp.dot(xo_ref[...], band_ref[...], preferred_element_type=jnp.float32)
    ze_ref[...] = ze
    zo_ref[...] = zo
    cs = jnp.sum(ze, axis=0, keepdims=True) + jnp.sum(zo, axis=0, keepdims=True)
    cq = (jnp.sum(ze * ze, axis=0, keepdims=True)
          + jnp.sum(zo * zo, axis=0, keepdims=True))
    ps = jnp.dot(cs, sel_ref[...], preferred_element_type=jnp.float32)   # (1, 128)
    pq = jnp.dot(cq, sel_ref[...], preferred_element_type=jnp.float32)
    sum_ref[...] = jnp.broadcast_to(ps, sum_ref.shape)
    sq_ref[...] = jnp.broadcast_to(pq, sq_ref.shape)


def _bn_relu_pool_kernel(ze_ref, zo_ref, scale_ref, shift_ref, out_ref):
    """Pass 2: BN(batch stats) + ReLU, then 2x2 MaxPool as two elementwise
    maxes (even/odd h rows, then even/odd w lane halves).  Zero MXU work."""
    sc = scale_ref[...]
    sh = shift_ref[...]
    ye = jnp.maximum(ze_ref[...] * sc + sh, 0.0)
    yo = jnp.maximum(zo_ref[...] * sc + sh, 0.0)
    yh = jnp.maximum(ye, yo)                       # height pool (h even vs odd)
    yw = jnp.maximum(yh[:, :NB], yh[:, NB:])       # width pool (lane halves)
    out_ref[...] = yw.astype(out_ref.dtype)


def _linear_kernel(x_ref, w_ref, b_ref, o_ref):
    o_ref[...] = (jnp.dot(x_ref[...], w_ref[...],
                          preferred_element_type=jnp.float32) + b_ref[...])


# ---------------------------------------------------------------------------
# pallas_call wrappers
# ---------------------------------------------------------------------------
def _conv_stats(xe, xo, band, sel, *, tm):
    m, k = xe.shape
    g = m // tm
    cost = pl.CostEstimate(
        flops=int(2 * 2 * m * k * (2 * NB)),
        transcendentals=0,
        bytes_accessed=int(2 * 2 * m * k + 2 * k * 2 * NB + 2 * m * 2 * NB * 4))
    ze, zo, psum, psq = pl.pallas_call(
        _conv_stats_kernel,
        grid=(g,),
        in_specs=[
            pl.BlockSpec((tm, k), lambda i: (i, 0)),
            pl.BlockSpec((tm, k), lambda i: (i, 0)),
            pl.BlockSpec(band.shape, lambda i: (0, 0)),
            pl.BlockSpec(sel.shape, lambda i: (0, 0)),
        ],
        out_specs=[
            pl.BlockSpec((tm, 2 * NB), lambda i: (i, 0)),
            pl.BlockSpec((tm, 2 * NB), lambda i: (i, 0)),
            pl.BlockSpec((1, 8, LANES), lambda i: (i, 0, 0)),
            pl.BlockSpec((1, 8, LANES), lambda i: (i, 0, 0)),
        ],
        out_shape=[
            jax.ShapeDtypeStruct((m, 2 * NB), jnp.float32),
            jax.ShapeDtypeStruct((m, 2 * NB), jnp.float32),
            jax.ShapeDtypeStruct((g, 8, LANES), jnp.float32),
            jax.ShapeDtypeStruct((g, 8, LANES), jnp.float32),
        ],
        compiler_params=_MOSAIC_PARAMS,
        cost_estimate=cost,
    )(xe, xo, band, sel)
    # Per-step partials (parallel-safe, megacore-friendly); reduce in f32 here.
    sum_c = jnp.sum(psum[:, 0, :], axis=0)
    sq_c = jnp.sum(psq[:, 0, :], axis=0)
    return ze, zo, sum_c, sq_c


def _bn_relu_pool(ze, zo, scale_row, shift_row, *, tm):
    m = ze.shape[0]
    g = m // tm
    cost = pl.CostEstimate(
        flops=int(8 * m * 2 * NB), transcendentals=0,
        bytes_accessed=int(2 * m * 2 * NB * 4 + m * NB * 2))
    return pl.pallas_call(
        _bn_relu_pool_kernel,
        grid=(g,),
        in_specs=[
            pl.BlockSpec((tm, 2 * NB), lambda i: (i, 0)),
            pl.BlockSpec((tm, 2 * NB), lambda i: (i, 0)),
            pl.BlockSpec(scale_row.shape, lambda i: (0, 0)),
            pl.BlockSpec(shift_row.shape, lambda i: (0, 0)),
        ],
        out_specs=pl.BlockSpec((tm, NB), lambda i: (i, 0)),
        out_shape=jax.ShapeDtypeStruct((m, NB), jnp.bfloat16),
        compiler_params=_MOSAIC_PARAMS,
        cost_estimate=cost,
    )(ze, zo, scale_row, shift_row)


def _linear(x, w, b, *, tm):
    m, k = x.shape
    lanes = w.shape[1]
    g = m // tm
    cost = pl.CostEstimate(
        flops=int(2 * m * k * lanes), transcendentals=0,
        bytes_accessed=int(m * k * 2 + k * lanes * 2 + m * lanes * 4))
    return pl.pallas_call(
        _linear_kernel,
        grid=(g,),
        in_specs=[
            pl.BlockSpec((tm, k), lambda i: (i, 0)),
            pl.BlockSpec(w.shape, lambda i: (0, 0)),
            pl.BlockSpec(b.shape, lambda i: (0, 0)),
        ],
        out_specs=pl.BlockSpec((tm, lanes), lambda i: (i, 0)),
        out_shape=jax.ShapeDtypeStruct((m, lanes), jnp.float32),
        compiler_params=_MOSAIC_PARAMS,
        cost_estimate=cost,
    )(x, w, b)


# ---------------------------------------------------------------------------
# Conv + BN + ReLU + MaxPool layer
# ---------------------------------------------------------------------------
def _conv_layer(xpad, w_oihw, bias, gamma, beta, *, h_out, w_out, cout, eps,
                m_target):
    """xpad: (n, Hp, Wp*Cin) bf16 padded activation, channel-inner lanes.
    Returns pooled output (n*Ho, NB) bf16, lanes 0..Wo*Cout-1 valid."""
    del bias  # conv bias cancels exactly against the batch mean in BN
    n = xpad.shape[0]
    ho_n, wo_n = h_out // 2, w_out // 2
    xe, xo = _im2row_split(xpad, ho_n)                   # (n*Ho, KSIZE*Wp*Cin)
    m = n * ho_n
    tm = _pick_m_tile(m, m_target)
    m_pad = _round_up(m, tm)
    if m_pad != m:
        # zero rows contribute 0 to both sum and sum-of-squares; count is analytic
        xe = jnp.pad(xe, ((0, m_pad - m), (0, 0)))
        xo = jnp.pad(xo, ((0, m_pad - m), (0, 0)))

    band = _make_band(w_oihw, w_out)                     # (K, 2*NB) bf16
    sel = _chan_selector(wo_n, cout)                     # (2*NB, 128) f32

    ze, zo, sum_c, sq_c = _conv_stats(xe, xo, band, sel, tm=tm)
    count = n * h_out * w_out
    scale_row, shift_row = _bn_affine(sum_c, sq_c, count, gamma, beta,
                                      cout=cout, wo_n=wo_n, eps=eps)
    y = _bn_relu_pool(ze, zo, scale_row, shift_row, tm=tm)   # (m_pad, NB) bf16
    return y[:m]


# ---------------------------------------------------------------------------
# Forward pass
# ---------------------------------------------------------------------------
@functools.partial(jax.jit, static_argnames=("n_classes", "m_target"))
def conv_nn_forward(x_nchw, params, n_classes=10, m_target=512):
    n = x_nchw.shape[0]
    eps = 1e-5

    # ---- layer 1: Conv(1->16, k5, p2) + BN + ReLU + MaxPool(2,2) ----
    x0 = x_nchw.reshape(n, 28, 28).astype(jnp.bfloat16)      # Cin=1 lane layout
    xp1 = jnp.pad(x0, ((0, 0), (PAD, PAD), (PAD, PAD)))      # (n, 32, 32)
    y1 = _conv_layer(xp1, params["w1"], params["b1"], params["g1"], params["be1"],
                     h_out=28, w_out=28, cout=16, eps=eps, m_target=m_target)
    # y1: (n*14, 256); lanes 0..223 = (w, c) channel-inner, 14x16 per row

    # ---- layer 2: Conv(16->32, k5, p2) + BN + ReLU + MaxPool(2,2) ----
    y1r = y1[:, :14 * 16].reshape(n, 14, 14 * 16)
    xp2 = jnp.pad(y1r, ((0, 0), (PAD, PAD), (PAD * 16, PAD * 16)))   # (n, 18, 288)
    y2 = _conv_layer(xp2, params["w2"], params["b2"], params["g2"], params["be2"],
                     h_out=14, w_out=14, cout=32, eps=eps, m_target=m_target)
    # y2: (n*7, 256); lanes 0..223 = 7x32 per (image, h) row

    # ---- fc (PyTorch NCHW flatten folded into the weight permutation) ----
    flat = y2[:, :7 * 32].reshape(n, 7 * 7 * 32)             # (n, 1568) bf16
    wfc_p, bfc_p = _prep_fc(params["wfc"], params["bfc"])
    tm_fc = _pick_m_tile(n, m_target)
    n_pad = _round_up(n, tm_fc)
    if n_pad != n:
        flat = jnp.pad(flat, ((0, n_pad - n), (0, 0)))
    logits = _linear(flat, wfc_p, bfc_p, tm=tm_fc)
    return logits[:n, :n_classes]


# ---------------------------------------------------------------------------
# Parameter init (PyTorch-style uniform) and pure-JAX reference
# ---------------------------------------------------------------------------
def init_params(key, n_classes=10):
    ks = jax.random.split(key, 6)

    def uniform(k, shape, fan_in):
        bound = 1.0 / (fan_in ** 0.5)
        return jax.random.uniform(k, shape, jnp.float32, -bound, bound)

    return dict(
        w1=uniform(ks[0], (16, 1, 5, 5), 25), b1=uniform(ks[1], (16,), 25),
        g1=jnp.ones((16,), jnp.float32), be1=jnp.zeros((16,), jnp.float32),
        w2=uniform(ks[2], (32, 16, 5, 5), 400), b2=uniform(ks[3], (32,), 400),
        g2=jnp.ones((32,), jnp.float32), be2=jnp.zeros((32,), jnp.float32),
        wfc=uniform(ks[4], (n_classes, 7 * 7 * 32), 7 * 7 * 32),
        bfc=uniform(ks[5], (n_classes,), 7 * 7 * 32),
    )


@jax.jit
def _reference_forward(x_nchw, params, eps=1e-5):
    x = jnp.transpose(x_nchw, (0, 2, 3, 1))                  # NHWC f32

    def layer(x_nhwc, w_oihw, bias, gamma, beta):
        conv = lax.conv_general_dilated(
            x_nhwc.astype(jnp.bfloat16), w_oihw.astype(jnp.bfloat16),
            window_strides=(1, 1), padding=((PAD, PAD), (PAD, PAD)),
            dimension_numbers=("NHWC", "OIHW", "NHWC"),
            preferred_element_type=jnp.float32)
        z = conv + bias
        mean = jnp.mean(z, axis=(0, 1, 2))
        var = jnp.mean((z - mean) ** 2, axis=(0, 1, 2))
        y = jnp.maximum((z - mean) * lax.rsqrt(var + eps) * gamma + beta, 0.0)
        nb, h, w, c = y.shape
        return y.reshape(nb, h // 2, 2, w // 2, 2, c).max(axis=(2, 4))

    y1 = layer(x, params["w1"], params["b1"], params["g1"], params["be1"])
    y2 = layer(y1, params["w2"], params["b2"], params["g2"], params["be2"])
    flat = jnp.transpose(y2, (0, 3, 1, 2)).reshape(x.shape[0], -1)
    return (jnp.dot(flat.astype(jnp.bfloat16), params["wfc"].T.astype(jnp.bfloat16),
                    preferred_element_type=jnp.float32) + params["bfc"])


if __name__ == "__main__":
    key = jax.random.PRNGKey(0)
    kx, kp = jax.random.split(key)
    # Input must be 28x28 so that fc sees 7*7*32 features; batch of 8 keeps the
    # stacked-M row counts (8*14 / 8*7) sublane-aligned and exercises the grid.
    x = jax.random.normal(kx, (8, 1, 28, 28), jnp.float32)
    params = init_params(kp, n_classes=10)

    out = jax.block_until_ready(conv_nn_forward(x, params, n_classes=10))
    assert out.shape == (8, 10) and out.dtype == jnp.float32

    ref = jax.block_until_ready(_reference_forward(x, params))
    max_err = float(jnp.max(jnp.abs(out - ref)))
    assert jnp.allclose(out, ref, atol=5e-2, rtol=5e-2), f"max|diff|={max_err}"
    print("KERNEL_OK")
</pallas_src>

<mosaic_0001>
module attributes {stable_mosaic.version = 11 : i64} {
  func.func @_conv_stats_kernel(%arg0: i32, %arg1: memref<112x160xbf16, #tpu.memory_space<vmem>>, %arg2: memref<112x160xbf16, #tpu.memory_space<vmem>>, %arg3: memref<160x512xbf16, #tpu.memory_space<vmem>>, %arg4: memref<512x128xf32, #tpu.memory_space<vmem>>, %arg5: memref<112x512xf32, #tpu.memory_space<vmem>>, %arg6: memref<112x512xf32, #tpu.memory_space<vmem>>, %arg7: memref<1x8x128xf32, #tpu.memory_space<vmem>>, %arg8: memref<1x8x128xf32, #tpu.memory_space<vmem>>) attributes {dimension_semantics = [#tpu.dimension_semantics<parallel>], iteration_bounds = array<i64: 1>, scalar_prefetch = 0 : i64, scratch_operands = 0 : i64, tpu.core_type = #tpu.core_type<tc>, window_params = [{transform_indices = @transform_0, window_bounds = array<i64: 112, 160>}, {transform_indices = @transform_1, window_bounds = array<i64: 112, 160>}, {pipeline_mode = #tpu.pipeline_mode<synchronous>, transform_indices = @transform_2, window_bounds = array<i64: 160, 512>}, {pipeline_mode = #tpu.pipeline_mode<synchronous>, transform_indices = @transform_3, window_bounds = array<i64: 512, 128>}, {transform_indices = @transform_4, window_bounds = array<i64: 112, 512>}, {transform_indices = @transform_5, window_bounds = array<i64: 112, 512>}, {transform_indices = @transform_6, window_bounds = array<i64: 1, 8, 128>}, {transform_indices = @transform_7, window_bounds = array<i64: 1, 8, 128>}]} {
    %c0 = arith.constant 0 : index
    %c0_0 = arith.constant 0 : index
    %0 = vector.load %arg1[%c0, %c0_0] : memref<112x160xbf16, #tpu.memory_space<vmem>>, vector<112x160xbf16>
    %c0_1 = arith.constant 0 : index
    %c0_2 = arith.constant 0 : index
    %1 = vector.load %arg3[%c0_1, %c0_2] : memref<160x512xbf16, #tpu.memory_space<vmem>>, vector<160x512xbf16>
    %cst = arith.constant dense<0.000000e+00> : vector<112x512xf32>
    %2 = tpu.matmul %0, %1, %cst {dimension_numbers = #tpu.dot_dimension_numbers<[1], [0], [0], [1], [0, 0, 1, 1], [], []>} : vector<112x160xbf16>, vector<160x512xbf16>, vector<112x512xf32> -> vector<112x512xf32>
    %c0_3 = arith.constant 0 : index
    %c0_4 = arith.constant 0 : index
    %3 = vector.load %arg2[%c0_3, %c0_4] : memref<112x160xbf16, #tpu.memory_space<vmem>>, vector<112x160xbf16>
    %c0_5 = arith.constant 0 : index
    %c0_6 = arith.constant 0 : index
    %4 = vector.load %arg3[%c0_5, %c0_6] : memref<160x512xbf16, #tpu.memory_space<vmem>>, vector<160x512xbf16>
    %cst_7 = arith.constant dense<0.000000e+00> : vector<112x512xf32>
    %5 = tpu.matmul %3, %4, %cst_7 {dimension_numbers = #tpu.dot_dimension_numbers<[1], [0], [0], [1], [0, 0, 1, 1], [], []>} : vector<112x160xbf16>, vector<160x512xbf16>, vector<112x512xf32> -> vector<112x512xf32>
    %c0_8 = arith.constant 0 : index
    %c0_9 = arith.constant 0 : index
    %6 = vector.load %arg5[%c0_8, %c0_9] : memref<112x512xf32, #tpu.memory_space<vmem>>, vector<112x512xf32>
    tpu.vector_store %arg5[%c0_8, %c0_9], %2 {strides = array<i32>} : memref<112x512xf32, #tpu.memory_space<vmem>>, vector<112x512xf32>,
    %c0_10 = arith.constant 0 : index
    %c0_11 = arith.constant 0 : index
    %7 = vector.load %arg6[%c0_10, %c0_11] : memref<112x512xf32, #tpu.memory_space<vmem>>, vector<112x512xf32>
    tpu.vector_store %arg6[%c0_10, %c0_11], %5 {strides = array<i32>} : memref<112x512xf32, #tpu.memory_space<vmem>>, vector<112x512xf32>,
    %cst_12 = arith.constant dense<0.000000e+00> : vector<512xf32>
    %8 = vector.multi_reduction <add>, %2, %cst_12 [0] : vector<112x512xf32> to vector<512xf32>
    %9 = vector.shape_cast %8 : vector<512xf32> to vector<1x512xf32>
    %cst_13 = arith.constant dense<0.000000e+00> : vector<512xf32>
    %10 = vector.multi_reduction <add>, %5, %cst_13 [0] : vector<112x512xf32> to vector<512xf32>
    %11 = vector.shape_cast %10 : vector<512xf32> to vector<1x512xf32>
    %12 = arith.addf %9, %11 : vector<1x512xf32>
    %13 = arith.mulf %2, %2 : vector<112x512xf32>
    %cst_14 = arith.constant dense<0.000000e+00> : vector<512xf32>
    %14 = vector.multi_reduction <add>, %13, %cst_14 [0] : vector<112x512xf32> to vector<512xf32>
    %15 = vector.shape_cast %14 : vector<512xf32> to vector<1x512xf32>
    %16 = arith.mulf %5, %5 : vector<112x512xf32>
    %cst_15 = arith.constant dense<0.000000e+00> : vector<512xf32>
    %17 = vector.multi_reduction <add>, %16, %cst_15 [0] : vector<112x512xf32> to vector<512xf32>
    %18 = vector.shape_cast %17 : vector<512xf32> to vector<1x512xf32>
    %19 = arith.addf %15, %18 : vector<1x512xf32>
    %c0_16 = arith.constant 0 : index
    %c0_17 = arith.constant 0 : index
    %20 = vector.load %arg4[%c0_16, %c0_17] : memref<512x128xf32, #tpu.memory_space<vmem>>, vector<512x128xf32>
    %cst_18 = arith.constant dense<0.000000e+00> : vector<1x128xf32>
    %21 = tpu.matmul %12, %20, %cst_18 {dimension_numbers = #tpu.dot_dimension_numbers<[1], [0], [0], [1], [0, 0, 1, 1], [], []>} : vector<1x512xf32>, vector<512x128xf32>, vector<1x128xf32> -> vector<1x128xf32>
    %c0_19 = arith.constant 0 : index
    %c0_20 = arith.constant 0 : index
    %22 = vector.load %arg4[%c0_19, %c0_20] : memref<512x128xf32, #tpu.memory_space<vmem>>, vector<512x128xf32>
    %cst_21 = arith.constant dense<0.000000e+00> : vector<1x128xf32>
    %23 = tpu.matmul %19, %22, %cst_21 {dimension_numbers = #tpu.dot_dimension_numbers<[1], [0], [0], [1], [0, 0, 1, 1], [], []>} : vector<1x512xf32>, vector<512x128xf32>, vector<1x128xf32> -> vector<1x128xf32>
    %24 = vector.shape_cast %21 : vector<1x128xf32> to vector<1x1x128xf32>
    %25 = vector.broadcast %24 : vector<1x1x128xf32> to vector<1x8x128xf32>
    %c0_22 = arith.constant 0 : index
    %c0_23 = arith.constant 0 : index
    %c0_24 = arith.constant 0 : index
    %26 = vector.load %arg7[%c0_22, %c0_23, %c0_24] : memref<1x8x128xf32, #tpu.memory_space<vmem>>, vector<1x8x128xf32>
    tpu.vector_store %arg7[%c0_22, %c0_23, %c0_24], %25 {strides = array<i32>} : memref<1x8x128xf32, #tpu.memory_space<vmem>>, vector<1x8x128xf32>,
    %27 = vector.shape_cast %23 : vector<1x128xf32> to vector<1x1x128xf32>
    %28 = vector.broadcast %27 : vector<1x1x128xf32> to vector<1x8x128xf32>
    %c0_25 = arith.constant 0 : index
    %c0_26 = arith.constant 0 : index
    %c0_27 = arith.constant 0 : index
    %29 = vector.load %arg8[%c0_25, %c0_26, %c0_27] : memref<1x8x128xf32, #tpu.memory_space<vmem>>, vector<1x8x128xf32>
    tpu.vector_store %arg8[%c0_25, %c0_26, %c0_27], %28 {strides = array<i32>} : memref<1x8x128xf32, #tpu.memory_space<vmem>>, vector<1x8x128xf32>,
    return
  }
  func.func @transform_0(%arg0: i32) -> (i32, i32) {
    %c0_i32 = arith.constant 0 : i32
    %c0_i32_0 = arith.constant 0 : i32
    return %arg0, %c0_i32 : i32, i32
  }
  func.func @transform_1(%arg0: i32) -> (i32, i32) {
    %c0_i32 = arith.constant 0 : i32
    %c0_i32_0 = arith.constant 0 : i32
    return %arg0, %c0_i32 : i32, i32
  }
  func.func @transform_2(%arg0: i32) -> (i32, i32) {
    %c0_i32 = arith.constant 0 : i32
    %c0_i32_0 = arith.constant 0 : i32
    %c0_i32_1 = arith.constant 0 : i32
    return %c0_i32, %c0_i32_0 : i32, i32
  }
  func.func @transform_3(%arg0: i32) -> (i32, i32) {
    %c0_i32 = arith.constant 0 : i32
    %c0_i32_0 = arith.constant 0 : i32
    %c0_i32_1 = arith.constant 0 : i32
    return %c0_i32, %c0_i32_0 : i32, i32
  }
  func.func @transform_4(%arg0: i32) -> (i32, i32) {
    %c0_i32 = arith.constant 0 : i32
    %c0_i32_0 = arith.constant 0 : i32
    return %arg0, %c0_i32 : i32, i32
  }
  func.func @transform_5(%arg0: i32) -> (i32, i32) {
    %c0_i32 = arith.constant 0 : i32
    %c0_i32_0 = arith.constant 0 : i32
    return %arg0, %c0_i32 : i32, i32
  }
  func.func @transform_6(%arg0: i32) -> (i32, i32, i32) {
    %c0_i32 = arith.constant 0 : i32
    %c0_i32_0 = arith.constant 0 : i32
    %c0_i32_1 = arith.constant 0 : i32
    return %arg0, %c0_i32, %c0_i32_0 : i32, i32, i32
  }
  func.func @transform_7(%arg0: i32) -> (i32, i32, i32) {
    %c0_i32 = arith.constant 0 : i32
    %c0_i32_0 = arith.constant 0 : i32
    %c0_i32_1 = arith.constant 0 : i32
    return %arg0, %c0_i32, %c0_i32_0 : i32, i32, i32
  }
}

module attributes {stable_mosaic.version = 11 : i64} {
  func.func @_bn_relu_pool_kernel(%arg0: i32, %arg1: memref<112x512xf32, #tpu.memory_space<vmem>>, %arg2: memref<112x512xf32, #tpu.memory_space<vmem>>, %arg3: memref<1x512xf32, #tpu.memory_space<vmem>>, %arg4: memref<1x512xf32, #tpu.memory_space<vmem>>, %arg5: memref<112x256xbf16, #tpu.memory_space<vmem>>) attributes {dimension_semantics = [#tpu.dimension_semantics<parallel>], iteration_bounds = array<i64: 1>, scalar_prefetch = 0 : i64, scratch_operands = 0 : i64, tpu.core_type = #tpu.core_type<tc>, window_params = [{transform_indices = @transform_0, window_bounds = array<i64: 112, 512>}, {transform_indices = @transform_1, window_bounds = array<i64: 112, 512>}, {pipeline_mode = #tpu.pipeline_mode<synchronous>, transform_indices = @transform_2, window_bounds = array<i64: 1, 512>}, {pipeline_mode = #tpu.pipeline_mode<synchronous>, transform_indices = @transform_3, window_bounds = array<i64: 1, 512>}, {transform_indices = @transform_4, window_bounds = array<i64: 112, 256>}]} {
    %c0 = arith.constant 0 : index
    %c0_0 = arith.constant 0 : index
    %0 = vector.load %arg3[%c0, %c0_0] : memref<1x512xf32, #tpu.memory_space<vmem>>, vector<1x512xf32>
    %c0_1 = arith.constant 0 : index
    %c0_2 = arith.constant 0 : index
    %1 = vector.load %arg4[%c0_1, %c0_2] : memref<1x512xf32, #tpu.memory_space<vmem>>, vector<1x512xf32>
    %c0_3 = arith.constant 0 : index
    %c0_4 = arith.constant 0 : index
    %2 = vector.load %arg1[%c0_3, %c0_4] : memref<112x512xf32, #tpu.memory_space<vmem>>, vector<112x512xf32>
    %3 = vector.broadcast %0 : vector<1x512xf32> to vector<112x512xf32>
    %4 = arith.mulf %2, %3 : vector<112x512xf32>
    %5 = vector.broadcast %1 : vector<1x512xf32> to vector<112x512xf32>
    %6 = arith.addf %4, %5 : vector<112x512xf32>
    %cst = arith.constant 0.000000e+00 : f32
    %7 = vector.broadcast %cst : f32 to vector<112x512xf32>
    %8 = arith.maximumf %6, %7 : vector<112x512xf32>
    %c0_5 = arith.constant 0 : index
    %c0_6 = arith.constant 0 : index
    %9 = vector.load %arg2[%c0_5, %c0_6] : memref<112x512xf32, #tpu.memory_space<vmem>>, vector<112x512xf32>
    %10 = vector.broadcast %0 : vector<1x512xf32> to vector<112x512xf32>
    %11 = arith.mulf %9, %10 : vector<112x512xf32>
    %12 = vector.broadcast %1 : vector<1x512xf32> to vector<112x512xf32>
    %13 = arith.addf %11, %12 : vector<112x512xf32>
    %cst_7 = arith.constant 0.000000e+00 : f32
    %14 = vector.broadcast %cst_7 : f32 to vector<112x512xf32>
    %15 = arith.maximumf %13, %14 : vector<112x512xf32>
    %16 = arith.maximumf %8, %15 : vector<112x512xf32>
    %17 = vector.extract_strided_slice %16 {offsets = [0, 0], sizes = [112, 256], strides = [1, 1]} : vector<112x512xf32> to vector<112x256xf32>
    %18 = vector.extract_strided_slice %16 {offsets = [0, 256], sizes = [112, 256], strides = [1, 1]} : vector<112x512xf32> to vector<112x256xf32>
    %19 = arith.maximumf %17, %18 : vector<112x256xf32>
    %20 = arith.truncf %19 : vector<112x256xf32> to vector<112x256xbf16>
    %c0_8 = arith.constant 0 : index
    %c0_9 = arith.constant 0 : index
    %21 = vector.load %arg5[%c0_8, %c0_9] : memref<112x256xbf16, #tpu.memory_space<vmem>>, vector<112x256xbf16>
    tpu.vector_store %arg5[%c0_8, %c0_9], %20 {strides = array<i32>} : memref<112x256xbf16, #tpu.memory_space<vmem>>, vector<112x256xbf16>,
    return
  }
  func.func @transform_0(%arg0: i32) -> (i32, i32) {
    %c0_i32 = arith.constant 0 : i32
    %c0_i32_0 = arith.constant 0 : i32
    return %arg0, %c0_i32 : i32, i32
  }
  func.func @transform_1(%arg0: i32) -> (i32, i32) {
    %c0_i32 = arith.constant 0 : i32
    %c0_i32_0 = arith.constant 0 : i32
    return %arg0, %c0_i32 : i32, i32
  }
  func.func @transform_2(%arg0: i32) -> (i32, i32) {
    %c0_i32 = arith.constant 0 : i32
    %c0_i32_0 = arith.constant 0 : i32
    %c0_i32_1 = arith.constant 0 : i32
    return %c0_i32, %c0_i32_0 : i32, i32
  }
  func.func @transform_3(%arg0: i32) -> (i32, i32) {
    %c0_i32 = arith.constant 0 : i32
    %c0_i32_0 = arith.constant 0 : i32
    %c0_i32_1 = arith.constant 0 : i32
    return %c0_i32, %c0_i32_0 : i32, i32
  }
  func.func @transform_4(%arg0: i32) -> (i32, i32) {
    %c0_i32 = arith.constant 0 : i32
    %c0_i32_0 = arith.constant 0 : i32
    return %arg0, %c0_i32 : i32, i32
  }
}

module attributes {stable_mosaic.version = 11 : i64} {
  func.func @_conv_stats_kernel(%arg0: i32, %arg1: memref<56x1440xbf16, #tpu.memory_space<vmem>>, %arg2: memref<56x1440xbf16, #tpu.memory_space<vmem>>, %arg3: memref<1440x512xbf16, #tpu.memory_space<vmem>>, %arg4: memref<512x128xf32, #tpu.memory_space<vmem>>, %arg5: memref<56x512xf32, #tpu.memory_space<vmem>>, %arg6: memref<56x512xf32, #tpu.memory_space<vmem>>, %arg7: memref<1x8x128xf32, #tpu.memory_space<vmem>>, %arg8: memref<1x8x128xf32, #tpu.memory_space<vmem>>) attributes {dimension_semantics = [#tpu.dimension_semantics<parallel>], iteration_bounds = array<i64: 1>, scalar_prefetch = 0 : i64, scratch_operands = 0 : i64, tpu.core_type = #tpu.core_type<tc>, window_params = [{transform_indices = @transform_0, window_bounds = array<i64: 56, 1440>}, {transform_indices = @transform_1, window_bounds = array<i64: 56, 1440>}, {pipeline_mode = #tpu.pipeline_mode<synchronous>, transform_indices = @transform_2, window_bounds = array<i64: 1440, 512>}, {pipeline_mode = #tpu.pipeline_mode<synchronous>, transform_indices = @transform_3, window_bounds = array<i64: 512, 128>}, {transform_indices = @transform_4, window_bounds = array<i64: 56, 512>}, {transform_indices = @transform_5, window_bounds = array<i64: 56, 512>}, {transform_indices = @transform_6, window_bounds = array<i64: 1, 8, 128>}, {transform_indices = @transform_7, window_bounds = array<i64: 1, 8, 128>}]} {
    %c0 = arith.constant 0 : index
    %c0_0 = arith.constant 0 : index
    %0 = vector.load %arg1[%c0, %c0_0] : memref<56x1440xbf16, #tpu.memory_space<vmem>>, vector<56x1440xbf16>
    %c0_1 = arith.constant 0 : index
    %c0_2 = arith.constant 0 : index
    %1 = vector.load %arg3[%c0_1, %c0_2] : memref<1440x512xbf16, #tpu.memory_space<vmem>>, vector<1440x512xbf16>
    %cst = arith.constant dense<0.000000e+00> : vector<56x512xf32>
    %2 = tpu.matmul %0, %1, %cst {dimension_numbers = #tpu.dot_dimension_numbers<[1], [0], [0], [1], [0, 0, 1, 1], [], []>} : vector<56x1440xbf16>, vector<1440x512xbf16>, vector<56x512xf32> -> vector<56x512xf32>
    %c0_3 = arith.constant 0 : index
    %c0_4 = arith.constant 0 : index
    %3 = vector.load %arg2[%c0_3, %c0_4] : memref<56x1440xbf16, #tpu.memory_space<vmem>>, vector<56x1440xbf16>
    %c0_5 = arith.constant 0 : index
    %c0_6 = arith.constant 0 : index
    %4 = vector.load %arg3[%c0_5, %c0_6] : memref<1440x512xbf16, #tpu.memory_space<vmem>>, vector<1440x512xbf16>
    %cst_7 = arith.constant dense<0.000000e+00> : vector<56x512xf32>
    %5 = tpu.matmul %3, %4, %cst_7 {dimension_numbers = #tpu.dot_dimension_numbers<[1], [0], [0], [1], [0, 0, 1, 1], [], []>} : vector<56x1440xbf16>, vector<1440x512xbf16>, vector<56x512xf32> -> vector<56x512xf32>
    %c0_8 = arith.constant 0 : index
    %c0_9 = arith.constant 0 : index
    %6 = vector.load %arg5[%c0_8, %c0_9] : memref<56x512xf32, #tpu.memory_space<vmem>>, vector<56x512xf32>
    tpu.vector_store %arg5[%c0_8, %c0_9], %2 {strides = array<i32>} : memref<56x512xf32, #tpu.memory_space<vmem>>, vector<56x512xf32>,
    %c0_10 = arith.constant 0 : index
    %c0_11 = arith.constant 0 : index
    %7 = vector.load %arg6[%c0_10, %c0_11] : memref<56x512xf32, #tpu.memory_space<vmem>>, vector<56x512xf32>
    tpu.vector_store %arg6[%c0_10, %c0_11], %5 {strides = array<i32>} : memref<56x512xf32, #tpu.memory_space<vmem>>, vector<56x512xf32>,
    %cst_12 = arith.constant dense<0.000000e+00> : vector<512xf32>
    %8 = vector.multi_reduction <add>, %2, %cst_12 [0] : vector<56x512xf32> to vector<512xf32>
    %9 = vector.shape_cast %8 : vector<512xf32> to vector<1x512xf32>
    %cst_13 = arith.constant dense<0.000000e+00> : vector<512xf32>
    %10 = vector.multi_reduction <add>, %5, %cst_13 [0] : vector<56x512xf32> to vector<512xf32>
    %11 = vector.shape_cast %10 : vector<512xf32> to vector<1x512xf32>
    %12 = arith.addf %9, %11 : vector<1x512xf32>
    %13 = arith.mulf %2, %2 : vector<56x512xf32>
    %cst_14 = arith.constant dense<0.000000e+00> : vector<512xf32>
    %14 = vector.multi_reduction <add>, %13, %cst_14 [0] : vector<56x512xf32> to vector<512xf32>
    %15 = vector.shape_cast %14 : vector<512xf32> to vector<1x512xf32>
    %16 = arith.mulf %5, %5 : vector<56x512xf32>
    %cst_15 = arith.constant dense<0.000000e+00> : vector<512xf32>
    %17 = vector.multi_reduction <add>, %16, %cst_15 [0] : vector<56x512xf32> to vector<512xf32>
    %18 = vector.shape_cast %17 : vector<512xf32> to vector<1x512xf32>
    %19 = arith.addf %15, %18 : vector<1x512xf32>
    %c0_16 = arith.constant 0 : index
    %c0_17 = arith.constant 0 : index
    %20 = vector.load %arg4[%c0_16, %c0_17] : memref<512x128xf32, #tpu.memory_space<vmem>>, vector<512x128xf32>
    %cst_18 = arith.constant dense<0.000000e+00> : vector<1x128xf32>
    %21 = tpu.matmul %12, %20, %cst_18 {dimension_numbers = #tpu.dot_dimension_numbers<[1], [0], [0], [1], [0, 0, 1, 1], [], []>} : vector<1x512xf32>, vector<512x128xf32>, vector<1x128xf32> -> vector<1x128xf32>
    %c0_19 = arith.constant 0 : index
    %c0_20 = arith.constant 0 : index
    %22 = vector.load %arg4[%c0_19, %c0_20] : memref<512x128xf32, #tpu.memory_space<vmem>>, vector<512x128xf32>
    %cst_21 = arith.constant dense<0.000000e+00> : vector<1x128xf32>
    %23 = tpu.matmul %19, %22, %cst_21 {dimension_numbers = #tpu.dot_dimension_numbers<[1], [0], [0], [1], [0, 0, 1, 1], [], []>} : vector<1x512xf32>, vector<512x128xf32>, vector<1x128xf32> -> vector<1x128xf32>
    %24 = vector.shape_cast %21 : vector<1x128xf32> to vector<1x1x128xf32>
    %25 = vector.broadcast %24 : vector<1x1x128xf32> to vector<1x8x128xf32>
    %c0_22 = arith.constant 0 : index
    %c0_23 = arith.constant 0 : index
    %c0_24 = arith.constant 0 : index
    %26 = vector.load %arg7[%c0_22, %c0_23, %c0_24] : memref<1x8x128xf32, #tpu.memory_space<vmem>>, vector<1x8x128xf32>
    tpu.vector_store %arg7[%c0_22, %c0_23, %c0_24], %25 {strides = array<i32>} : memref<1x8x128xf32, #tpu.memory_space<vmem>>, vector<1x8x128xf32>,
    %27 = vector.shape_cast %23 : vector<1x128xf32> to vector<1x1x128xf32>
    %28 = vector.broadcast %27 : vector<1x1x128xf32> to vector<1x8x128xf32>
    %c0_25 = arith.constant 0 : index
    %c0_26 = arith.constant 0 : index
    %c0_27 = arith.constant 0 : index
    %29 = vector.load %arg8[%c0_25, %c0_26, %c0_27] : memref<1x8x128xf32, #tpu.memory_space<vmem>>, vector<1x8x128xf32>
    tpu.vector_store %arg8[%c0_25, %c0_26, %c0_27], %28 {strides = array<i32>} : memref<1x8x128xf32, #tpu.memory_space<vmem>>, vector<1x8x128xf32>,
    return
  }
  func.func @transform_0(%arg0: i32) -> (i32, i32) {
    %c0_i32 = arith.constant 0 : i32
    %c0_i32_0 = arith.constant 0 : i32
    return %arg0, %c0_i32 : i32, i32
  }
  func.func @transform_1(%arg0: i32) -> (i32, i32) {
    %c0_i32 = arith.constant 0 : i32
    %c0_i32_0 = arith.constant 0 : i32
    return %arg0, %c0_i32 : i32, i32
  }
  func.func @transform_2(%arg0: i32) -> (i32, i32) {
    %c0_i32 = arith.constant 0 : i32
    %c0_i32_0 = arith.constant 0 : i32
    %c0_i32_1 = arith.constant 0 : i32
    return %c0_i32, %c0_i32_0 : i32, i32
  }
  func.func @transform_3(%arg0: i32) -> (i32, i32) {
    %c0_i32 = arith.constant 0 : i32
    %c0_i32_0 = arith.constant 0 : i32
    %c0_i32_1 = arith.constant 0 : i32
    return %c0_i32, %c0_i32_0 : i32, i32
  }
  func.func @transform_4(%arg0: i32) -> (i32, i32) {
    %c0_i32 = arith.constant 0 : i32
    %c0_i32_0 = arith.constant 0 : i32
    return %arg0, %c0_i32 : i32, i32
  }
  func.func @transform_5(%arg0: i32) -> (i32, i32) {
    %c0_i32 = arith.constant 0 : i32
    %c0_i32_0 = arith.constant 0 : i32
    return %arg0, %c0_i32 : i32, i32
  }
  func.func @transform_6(%arg0: i32) -> (i32, i32, i32) {
    %c0_i32 = arith.constant 0 : i32
    %c0_i32_0 = arith.constant 0 : i32
    %c0_i32_1 = arith.constant 0 : i32
    return %arg0, %c0_i32, %c0_i32_0 : i32, i32, i32
  }
  func.func @transform_7(%arg0: i32) -> (i32, i32, i32) {
    %c0_i32 = arith.constant 0 : i32
    %c0_i32_0 = arith.constant 0 : i32
    %c0_i32_1 = arith.constant 0 : i32
    return %arg0, %c0_i32, %c0_i32_0 : i32, i32, i32
  }
}

module attributes {stable_mosaic.version = 11 : i64} {
  func.func @_bn_relu_pool_kernel(%arg0: i32, %arg1: memref<56x512xf32, #tpu.memory_space<vmem>>, %arg2: memref<56x512xf32, #tpu.memory_space<vmem>>, %arg3: memref<1x512xf32, #tpu.memory_space<vmem>>, %arg4: memref<1x512xf32, #tpu.memory_space<vmem>>, %arg5: memref<56x256xbf16, #tpu.memory_space<vmem>>) attributes {dimension_semantics = [#tpu.dimension_semantics<parallel>], iteration_bounds = array<i64: 1>, scalar_prefetch = 0 : i64, scratch_operands = 0 : i64, tpu.core_type = #tpu.core_type<tc>, window_params = [{transform_indices = @transform_0, window_bounds = array<i64: 56, 512>}, {transform_indices = @transform_1, window_bounds = array<i64: 56, 512>}, {pipeline_mode = #tpu.pipeline_mode<synchronous>, transform_indices = @transform_2, window_bounds = array<i64: 1, 512>}, {pipeline_mode = #tpu.pipeline_mode<synchronous>, transform_indices = @transform_3, window_bounds = array<i64: 1, 512>}, {transform_indices = @transform_4, window_bounds = array<i64: 56, 256>}]} {
    %c0 = arith.constant 0 : index
    %c0_0 = arith.constant 0 : index
    %0 = vector.load %arg3[%c0, %c0_0] : memref<1x512xf32, #tpu.memory_space<vmem>>, vector<1x512xf32>
    %c0_1 = arith.constant 0 : index
    %c0_2 = arith.constant 0 : index
    %1 = vector.load %arg4[%c0_1, %c0_2] : memref<1x512xf32, #tpu.memory_space<vmem>>, vector<1x512xf32>
    %c0_3 = arith.constant 0 : index
    %c0_4 = arith.constant 0 : index
    %2 = vector.load %arg1[%c0_3, %c0_4] : memref<56x512xf32, #tpu.memory_space<vmem>>, vector<56x512xf32>
    %3 = vector.broadcast %0 : vector<1x512xf32> to vector<56x512xf32>
    %4 = arith.mulf %2, %3 : vector<56x512xf32>
    %5 = vector.broadcast %1 : vector<1x512xf32> to vector<56x512xf32>
    %6 = arith.addf %4, %5 : vector<56x512xf32>
    %cst = arith.constant 0.000000e+00 : f32
    %7 = vector.broadcast %cst : f32 to vector<56x512xf32>
    %8 = arith.maximumf %6, %7 : vector<56x512xf32>
    %c0_5 = arith.constant 0 : index
    %c0_6 = arith.constant 0 : index
    %9 = vector.load %arg2[%c0_5, %c0_6] : memref<56x512xf32, #tpu.memory_space<vmem>>, vector<56x512xf32>
    %10 = vector.broadcast %0 : vector<1x512xf32> to vector<56x512xf32>
    %11 = arith.mulf %9, %10 : vector<56x512xf32>
    %12 = vector.broadcast %1 : vector<1x512xf32> to vector<56x512xf32>
    %13 = arith.addf %11, %12 : vector<56x512xf32>
    %cst_7 = arith.constant 0.000000e+00 : f32
    %14 = vector.broadcast %cst_7 : f32 to vector<56x512xf32>
    %15 = arith.maximumf %13, %14 : vector<56x512xf32>
    %16 = arith.maximumf %8, %15 : vector<56x512xf32>
    %17 = vector.extract_strided_slice %16 {offsets = [0, 0], sizes = [56, 256], strides = [1, 1]} : vector<56x512xf32> to vector<56x256xf32>
    %18 = vector.extract_strided_slice %16 {offsets = [0, 256], sizes = [56, 256], strides = [1, 1]} : vector<56x512xf32> to vector<56x256xf32>
    %19 = arith.maximumf %17, %18 : vector<56x256xf32>
    %20 = arith.truncf %19 : vector<56x256xf32> to vector<56x256xbf16>
    %c0_8 = arith.constant 0 : index
    %c0_9 = arith.constant 0 : index
    %21 = vector.load %arg5[%c0_8, %c0_9] : memref<56x256xbf16, #tpu.memory_space<vmem>>, vector<56x256xbf16>
    tpu.vector_store %arg5[%c0_8, %c0_9], %20 {strides = array<i32>} : memref<56x256xbf16, #tpu.memory_space<vmem>>, vector<56x256xbf16>,
    return
  }
  func.func @transform_0(%arg0: i32) -> (i32, i32) {
    %c0_i32 = arith.constant 0 : i32
    %c0_i32_0 = arith.constant 0 : i32
    return %arg0, %c0_i32 : i32, i32
  }
  func.func @transform_1(%arg0: i32) -> (i32, i32) {
    %c0_i32 = arith.constant 0 : i32
    %c0_i32_0 = arith.constant 0 : i32
    return %arg0, %c0_i32 : i32, i32
  }
  func.func @transform_2(%arg0: i32) -> (i32, i32) {
    %c0_i32 = arith.constant 0 : i32
    %c0_i32_0 = arith.constant 0 : i32
    %c0_i32_1 = arith.constant 0 : i32
    return %c0_i32, %c0_i32_0 : i32, i32
  }
  func.func @transform_3(%arg0: i32) -> (i32, i32) {
    %c0_i32 = arith.constant 0 : i32
    %c0_i32_0 = arith.constant 0 : i32
    %c0_i32_1 = arith.constant 0 : i32
    return %c0_i32, %c0_i32_0 : i32, i32
  }
  func.func @transform_4(%arg0: i32) -> (i32, i32) {
    %c0_i32 = arith.constant 0 : i32
    %c0_i32_0 = arith.constant 0 : i32
    return %arg0, %c0_i32 : i32, i32
  }
}

module attributes {stable_mosaic.version = 11 : i64} {
  func.func @_linear_kernel(%arg0: i32, %arg1: memref<8x1568xbf16, #tpu.memory_space<vmem>>, %arg2: memref<1568x128xbf16, #tpu.memory_space<vmem>>, %arg3: memref<1x128xf32, #tpu.memory_space<vmem>>, %arg4: memref<8x128xf32, #tpu.memory_space<vmem>>) attributes {dimension_semantics = [#tpu.dimension_semantics<parallel>], iteration_bounds = array<i64: 1>, scalar_prefetch = 0 : i64, scratch_operands = 0 : i64, tpu.core_type = #tpu.core_type<tc>, window_params = [{transform_indices = @transform_0, window_bounds = array<i64: 8, 1568>}, {pipeline_mode = #tpu.pipeline_mode<synchronous>, transform_indices = @transform_1, window_bounds = array<i64: 1568, 128>}, {pipeline_mode = #tpu.pipeline_mode<synchronous>, transform_indices = @transform_2, window_bounds = array<i64: 1, 128>}, {transform_indices = @transform_3, window_bounds = array<i64: 8, 128>}]} {
    %c0 = arith.constant 0 : index
    %c0_0 = arith.constant 0 : index
    %0 = vector.load %arg1[%c0, %c0_0] : memref<8x1568xbf16, #tpu.memory_space<vmem>>, vector<8x1568xbf16>
    %c0_1 = arith.constant 0 : index
    %c0_2 = arith.constant 0 : index
    %1 = vector.load %arg2[%c0_1, %c0_2] : memref<1568x128xbf16, #tpu.memory_space<vmem>>, vector<1568x128xbf16>
    %cst = arith.constant dense<0.000000e+00> : vector<8x128xf32>
    %2 = tpu.matmul %0, %1, %cst {dimension_numbers = #tpu.dot_dimension_numbers<[1], [0], [0], [1], [0, 0, 1, 1], [], []>} : vector<8x1568xbf16>, vector<1568x128xbf16>, vector<8x128xf32> -> vector<8x128xf32>
    %c0_3 = arith.constant 0 : index
    %c0_4 = arith.constant 0 : index
    %3 = vector.load %arg3[%c0_3, %c0_4] : memref<1x128xf32, #tpu.memory_space<vmem>>, vector<1x128xf32>
    %4 = vector.broadcast %3 : vector<1x128xf32> to vector<8x128xf32>
    %5 = arith.addf %2, %4 : vector<8x128xf32>
    %c0_5 = arith.constant 0 : index
    %c0_6 = arith.constant 0 : index
    %6 = vector.load %arg4[%c0_5, %c0_6] : memref<8x128xf32, #tpu.memory_space<vmem>>, vector<8x128xf32>
    tpu.vector_store %arg4[%c0_5, %c0_6], %5 {strides = array<i32>} : memref<8x128xf32, #tpu.memory_space<vmem>>, vector<8x128xf32>,
    return
  }
  func.func @transform_0(%arg0: i32) -> (i32, i32) {
    %c0_i32 = arith.constant 0 : i32
    %c0_i32_0 = arith.constant 0 : i32
    return %arg0, %c0_i32 : i32, i32
  }
  func.func @transform_1(%arg0: i32) -> (i32, i32) {
    %c0_i32 = arith.constant 0 : i32
    %c0_i32_0 = arith.constant 0 : i32
    %c0_i32_1 = arith.constant 0 : i32
    return %c0_i32, %c0_i32_0 : i32, i32
  }
  func.func @transform_2(%arg0: i32) -> (i32, i32) {
    %c0_i32 = arith.constant 0 : i32
    %c0_i32_0 = arith.constant 0 : i32
    %c0_i32_1 = arith.constant 0 : i32
    return %c0_i32, %c0_i32_0 : i32, i32
  }
  func.func @transform_3(%arg0: i32) -> (i32, i32) {
    %c0_i32 = arith.constant 0 : i32
    %c0_i32_0 = arith.constant 0 : i32
    return %arg0, %c0_i32 : i32, i32
  }
}

</mosaic_0001>

<llo_original>
// kernel: tile.43
$region0: #{tile.43}
  #allocation0 [shape = 's32[1]{0}', space=sflag, size = 0x4, scoped, tag = 'scoped memory for tile.43']
  %s0 = inlined_call_operand.vmem [shape: f32[16], index: 0, kind: input, shape index: {}]
  %s1 = inlined_call_operand.vmem [shape: f32[14,16], index: 1, kind: output, shape index: {}]
  // Predicated region
  $region2: #{tile.43} parent=0 // pred_check
    _
  $region3: #{tile.43} parent=0 // pred_check_branch
    %3 = sbr.rel (0) target = $region5
  $region4: #{tile.43} parent=0 // pred_region
    _
  $region5: #{tile.43} parent=0 // pred_fallthru
    _
  %v4 = vld [vmem:[%s0] ss:$0 sm:$0xff]
  %5 = vst [vmem:[%s1] sm:$0xff] %v4
  %s6 = scalar_lea.vmem %s1, 8
  %7 = vst [vmem:[%s6] sm:$0xff] %v4

// kernel: tile.44
$region0: #{tile.44}
  %s0 = inlined_call_operand.vmem [shape: f32[14,16], index: 0, kind: input, shape index: {}]
  %s1 = inlined_call_operand.vmem [shape: f32[224], index: 1, kind: output, shape index: {}]
  $region1: #{tile.44} parent=0
    #allocation0 [shape = 'u8[4096]{0}', space=vmem, size = 0x1000, scoped, tag = 'scoped mem for output reshape']
    %s2 = smov 3
    %v3 = vld [vmem:[%s0] ss:$8 sm:%s2]
    %vm4 = vcmask 130048
    %5 = vst.msk [vmem:[#allocation0] sm:$0x3] %vm4, %v3
    %s6 = scalar_lea.vmem %s0, 7
    %v7 = vld [vmem:[%s6] sm:$0x1]
    %8 = vrot.lane.b32.xlu0 %v7, 112
    %v9 = vpop.permute.xlu0 %8
    %vm10 = vcmask 1048448
    %11 = vst.msk [vmem:[#allocation0] sm:$0x1] %vm10, %v9
    %s12 = scalar_lea.vmem %s0, 6
    %v13 = vld [vmem:[%s12] sm:$0x1]
    %14 = vrot.lane.b32.xlu0 %v13, 96
    %v15 = vpop.permute.xlu0 %14
    %vm16 = vcmask 917248
    %17 = vst.msk [vmem:[#allocation0] sm:$0x1] %vm16, %v15
    %s18 = scalar_lea.vmem %s0, 5
    %s19 = smov 3
    %v20 = vld [vmem:[%s18] ss:$8 sm:%s19]
    %21 = vrot.lane.b32.xlu0 %v20, 80
    %v22 = vpop.permute.xlu0 %21
    %vm23 = vcmask 786048
    %24 = vst.msk [vmem:[#allocation0] sm:$0x3] %vm23, %v22
    %s25 = scalar_lea.vmem %s0, 4
    %s26 = smov 3
    %v27 = vld [vmem:[%s25] ss:$8 sm:%s26]
    %28 = vrot.lane.b32.xlu0 %v27, 64
    %v29 = vpop.permute.xlu0 %28
    %vm30 = vcmask 654848
    %31 = vst.msk [vmem:[#allocation0] sm:$0x3] %vm30, %v29
    %s32 = scalar_lea.vmem %s0, 3
    %s33 = smov 3
    %v34 = vld [vmem:[%s32] ss:$8 sm:%s33]
    %35 = vrot.lane.b32.xlu0 %v34, 48
    %v36 = vpop.permute.xlu0 %35
    %vm37 = vcmask 523648
    %38 = vst.msk [vmem:[#allocation0] sm:$0x3] %vm37, %v36
    %s39 = scalar_lea.vmem %s0, 2
    %s40 = smov 3
    %v41 = vld [vmem:[%s39] ss:$8 sm:%s40]
    %42 = vrot.lane.b32.xlu0 %v41, 32
    %v43 = vpop.permute.xlu0 %42
    %vm44 = vcmask 392448
    %45 = vst.msk [vmem:[#allocation0] sm:$0x3] %vm44, %v43
    %s46 = scalar_lea.vmem %s0, 1
    %s47 = smov 3
    %v48 = vld [vmem:[%s46] ss:$8 sm:%s47]
    %49 = vrot.lane.b32.xlu0 %v48, 16
    %v50 = vpop.permute.xlu0 %49
    %vm51 = vcmask 261248
    %52 = vst.msk [vmem:[#allocation0] sm:$0x3] %vm51, %v50
    %s54 = sshllo.u32 0, 2
    %v56 = vld [vmem:[#allocation0] sm:%s54]
    %s57 = sshllo.u32 0, 2
    %58 = vst [vmem:[%s1] sm:%s57] %v56

// kernel: conv_nn_forward.6
$region0: #{conv_nn_forward.6}
  #allocation0 [shape = 'u32[]', space=smem, size = 0x4, offset = 0x4, fixed_abs, tag = 'smem constant byte address 0x4 - core index']
  #allocation1 [shape = 'u32[144,128]{1,0:T(1,128)}', space=vmem, size = 0x12000, scoped, tag = 'internal scratch']
  %s0 = inlined_call_operand.vmem [shape: f32[112,512], index: 0, kind: input, shape index: {}]
  %s1 = inlined_call_operand.vmem [shape: f32[112,512], index: 1, kind: input, shape index: {}]
  %s2 = inlined_call_operand.vmem [shape: f32[1,512], index: 2, kind: input, shape index: {}]
  %s3 = inlined_call_operand.vmem [shape: f32[1,512], index: 3, kind: input, shape index: {}]
  %s4 = inlined_call_operand.vmem [shape: bf16[112,256], index: 4, kind: output, shape index: {}]
  %s5 = sld [smem:[#allocation0]]
  $region26: #{conv_nn_forward.6} parent=0
    _
  %s7 = ssub.s32 1, %s5
  %s8 = scalar_select 0, %s7, %s5
  // Predicated region
  $region2: #{conv_nn_forward.6} parent=0 // pred_check
    _
  $region3: #{conv_nn_forward.6} parent=0 // pred_check_branch
    %10 = sbr.rel (0) target = $region5
  $region4: #{conv_nn_forward.6} parent=0 // pred_region
    _
  $region5: #{conv_nn_forward.6} parent=0 // pred_fallthru
    _
  // Predicated region
  $region6: #{conv_nn_forward.6} parent=0 // pred_check
    _
  $region7: #{conv_nn_forward.6} parent=0 // pred_check_branch
    %12 = sbr.rel (0) target = $region9
  $region8: #{conv_nn_forward.6} parent=0 // pred_region
    _
  $region9: #{conv_nn_forward.6} parent=0 // pred_fallthru
    _
  // Predicated region
  $region10: #{conv_nn_forward.6} parent=0 // pred_check
    _
  $region11: #{conv_nn_forward.6} parent=0 // pred_check_branch
    %14 = sbr.rel (0) target = $region13
  $region12: #{conv_nn_forward.6} parent=0 // pred_region
    _
  $region13: #{conv_nn_forward.6} parent=0 // pred_fallthru
    _
  // Predicated region
  $region14: #{conv_nn_forward.6} parent=0 // pred_check
    _
  $region15: #{conv_nn_forward.6} parent=0 // pred_check_branch
    %16 = sbr.rel (0) target = $region17
  $region16: #{conv_nn_forward.6} parent=0 // pred_region
    _
  $region17: #{conv_nn_forward.6} parent=0 // pred_fallthru
    _
  %v17 = vld [vmem:[%s2] sm:$0xf]
  %v18 = vld [vmem:[%s3] sm:$0xf]
  %v19 = vld [vmem:[%s0] sm:$0xff]
  %v20 = vld [vmem:[%s0 + $0x8] sm:$0xff]
  %v21 = vld [vmem:[%s0 + $0x10] sm:$0xff]
  %v22 = vld [vmem:[%s0 + $0x18] sm:$0xff]
  %v23 = vld [vmem:[%s0 + $0x20] sm:$0xff]
  %v24 = vld [vmem:[%s0 + $0x28] sm:$0xff]
  %v25 = vld [vmem:[%s0 + $0x30] sm:$0xff]
  %v26 = vld [vmem:[%s0 + $0x38] sm:$0xff]
  %v27 = vld [vmem:[%s0 + $0x40] sm:$0xff]
  %v28 = vld [vmem:[%s0 + $0x48] sm:$0xff]
  %v29 = vld [vmem:[%s0 + $0x50] sm:$0xff]
  %v30 = vld [vmem:[%s0 + $0x58] sm:$0xff]
  %v31 = vld [vmem:[%s0 + $0x60] sm:$0xff]
  %v32 = vld [vmem:[%s0 + $0x68] sm:$0xff]
  %v33 = vld [vmem:[%s0 + $0x70] sm:$0xff]
  %v34 = vld [vmem:[%s0 + $0x78] sm:$0xff]
  %v35 = vld [vmem:[%s0 + $0x80] sm:$0xff]
  %v36 = vld [vmem:[%s0 + $0x88] sm:$0xff]
  %v37 = vld [vmem:[%s0 + $0x90] sm:$0xff]
  %v38 = vld [vmem:[%s0 + $0x98] sm:$0xff]
  %v39 = vld [vmem:[%s0 + $0xa0] sm:$0xff]
  %v40 = vld [vmem:[%s0 + $0xa8] sm:$0xff]
  %v41 = vld [vmem:[%s0 + $0xb0] sm:$0xff]
  %v42 = vld [vmem:[%s0 + $0xb8] sm:$0xff]
  %v43 = vld [vmem:[%s0 + $0xc0] sm:$0xff]
  %v44 = vld [vmem:[%s0 + $0xc8] sm:$0xff]
  %v45 = vld [vmem:[%s0 + $0xd0] sm:$0xff]
  %v46 = vld [vmem:[%s0 + $0xd8] sm:$0xff]
  %v47 = vld [vmem:[%s0 + $0xe0] sm:$0xff]
  %v48 = vld [vmem:[%s0 + $0xe8] sm:$0xff]
  %v49 = vld [vmem:[%s0 + $0xf0] sm:$0xff]
  %v50 = vld [vmem:[%s0 + $0xf8] sm:$0xff]
  %v51 = vld [vmem:[%s0 + $0x100] sm:$0xff]
  %v52 = vld [vmem:[%s0 + $0x108] sm:$0xff]
  %v53 = vld [vmem:[%s0 + $0x110] sm:$0xff]
  %v54 = vld [vmem:[%s0 + $0x118] sm:$0xff]
  %v55 = vld [vmem:[%s0 + $0x120] sm:$0xff]
  %v56 = vld [vmem:[%s0 + $0x128] sm:$0xff]
  %v57 = vld [vmem:[%s0 + $0x130] sm:$0xff]
  %v58 = vld [vmem:[%s0 + $0x138] sm:$0xff]
  %v59 = vld [vmem:[%s0 + $0x140] sm:$0xff]
  %v60 = vld [vmem:[%s0 + $0x148] sm:$0xff]
  %v61 = vld [vmem:[%s0 + $0x150] sm:$0xff]
  %v62 = vld [vmem:[%s0 + $0x158] sm:$0xff]
  %v63 = vld [vmem:[%s0 + $0x160] sm:$0xff]
  %v64 = vld [vmem:[%s0 + $0x168] sm:$0xff]
  %v65 = vld [vmem:[%s0 + $0x170] sm:$0xff]
  %v66 = vld [vmem:[%s0 + $0x178] sm:$0xff]
  %v67 = vld [vmem:[%s0 + $0x180] sm:$0xff]
  %v68 = vld [vmem:[%s0 + $0x188] sm:$0xff]
  %v69 = vld [vmem:[%s0 + $0x190] sm:$0xff]
  %v70 = vld [vmem:[%s0 + $0x198] sm:$0xff]
  %v71 = vld [vmem:[%s0 + $0x1a0] sm:$0xff]
  %v72 = vld [vmem:[%s0 + $0x1a8] sm:$0xff]
  %v73 = vld [vmem:[%s0 + $0x1b0] sm:$0xff]
  %v74 = vld [vmem:[%s0 + $0x1b8] sm:$0xff]
  %v76 = vlaneseq
  %v77 = vshrl.u32 %v76, 7
  %v78 = vsub.s32 0, %v77
  %v79 = vrot.slane %v17, %v78
  %v80 = vlaneseq
  %v81 = vshrl.u32 %v80, 7
  %v82 = vsub.s32 1, %v81
  %v83 = vrot.slane %v17, %v82
  %v84 = vlaneseq
  %v85 = vshrl.u32 %v84, 7
  %v86 = vsub.s32 2, %v85
  %v87 = vrot.slane %v17, %v86
  %v88 = vlaneseq
  %v89 = vshrl.u32 %v88, 7
  %v90 = vsub.s32 3, %v89
  %v91 = vrot.slane %v17, %v90
  %v96 = vmul.f32 %v19, %v79
  %v97 = vmul.f32 %v20, %v83
  %v98 = vmul.f32 %v21, %v87
  %v99 = vmul.f32 %v22, %v91
  %v100 = vmul.f32 %v23, %v79
  %v101 = vmul.f32 %v24, %v83
  %v102 = vmul.f32 %v25, %v87
  %v103 = vmul.f32 %v26, %v91
  %v104 = vmul.f32 %v27, %v79
  %v105 = vmul.f32 %v28, %v83
  %v106 = vmul.f32 %v29, %v87
  %v107 = vmul.f32 %v30, %v91
  %v108 = vmul.f32 %v31, %v79
  %v109 = vmul.f32 %v32, %v83
  %v110 = vmul.f32 %v33, %v87
  %v111 = vmul.f32 %v34, %v91
  %v112 = vmul.f32 %v35, %v79
  %v113 = vmul.f32 %v36, %v83
  %v114 = vmul.f32 %v37, %v87
  %v115 = vmul.f32 %v38, %v91
  %v116 = vmul.f32 %v39, %v79
  %v117 = vmul.f32 %v40, %v83
  %v118 = vmul.f32 %v41, %v87
  %v119 = vmul.f32 %v42, %v91
  %v120 = vmul.f32 %v43, %v79
  %v121 = vmul.f32 %v44, %v83
  %v122 = vmul.f32 %v45, %v87
  %v123 = vmul.f32 %v46, %v91
  %v124 = vmul.f32 %v47, %v79
  %v125 = vmul.f32 %v48, %v83
  %v126 = vmul.f32 %v49, %v87
  %v127 = vmul.f32 %v50, %v91
  %v128 = vmul.f32 %v51, %v79
  %v129 = vmul.f32 %v52, %v83
  %v130 = vmul.f32 %v53, %v87
  %v131 = vmul.f32 %v54, %v91
  %v132 = vmul.f32 %v55, %v79
  %v133 = vmul.f32 %v56, %v83
  %v134 = vmul.f32 %v57, %v87
  %v135 = vmul.f32 %v58, %v91
  %v136 = vmul.f32 %v59, %v79
  %v137 = vmul.f32 %v60, %v83
  %v138 = vmul.f32 %v61, %v87
  %v139 = vmul.f32 %v62, %v91
  %v140 = vmul.f32 %v63, %v79
  %v141 = vmul.f32 %v64, %v83
  %v142 = vmul.f32 %v65, %v87
  %v143 = vmul.f32 %v66, %v91
  %v144 = vmul.f32 %v67, %v79
  %v145 = vmul.f32 %v68, %v83
  %v146 = vmul.f32 %v69, %v87
  %v147 = vmul.f32 %v70, %v91
  %v148 = vmul.f32 %v71, %v79
  %v149 = vmul.f32 %v72, %v83
  %v150 = vmul.f32 %v73, %v87
  %v151 = vmul.f32 %v74, %v91
  %v153 = vlaneseq
  %v154 = vshrl.u32 %v153, 7
  %v155 = vsub.s32 0, %v154
  %v156 = vrot.slane %v18, %v155
  %v157 = vlaneseq
  %v158 = vshrl.u32 %v157, 7
  %v159 = vsub.s32 1, %v158
  %v160 = vrot.slane %v18, %v159
  %v161 = vlaneseq
  %v162 = vshrl.u32 %v161, 7
  %v163 = vsub.s32 2, %v162
  %v164 = vrot.slane %v18, %v163
  %v165 = vlaneseq
  %v166 = vshrl.u32 %v165, 7
  %v167 = vsub.s32 3, %v166
  %v168 = vrot.slane %v18, %v167
  %v173 = vadd.f32 %v96, %v156
  %v174 = vadd.f32 %v97, %v160
  %v175 = vadd.f32 %v98, %v164
  %v176 = vadd.f32 %v99, %v168
  %v177 = vadd.f32 %v100, %v156
  %v178 = vadd.f32 %v101, %v160
  %v179 = vadd.f32 %v102, %v164
  %v180 = vadd.f32 %v103, %v168
  %v181 = vadd.f32 %v104, %v156
  %v182 = vadd.f32 %v105, %v160
  %v183 = vadd.f32 %v106, %v164
  %v184 = vadd.f32 %v107, %v168
  %v185 = vadd.f32 %v108, %v156
  %v186 = vadd.f32 %v109, %v160
  %v187 = vadd.f32 %v110, %v164
  %v188 = vadd.f32 %v111, %v168
  %v189 = vadd.f32 %v112, %v156
  %v190 = vadd.f32 %v113, %v160
  %v191 = vadd.f32 %v114, %v164
  %v192 = vadd.f32 %v115, %v168
  %v193 = vadd.f32 %v116, %v156
  %v194 = vadd.f32 %v117, %v160
  %v195 = vadd.f32 %v118, %v164
  %v196 = vadd.f32 %v119, %v168
  %v197 = vadd.f32 %v120, %v156
  %v198 = vadd.f32 %v121, %v160
  %v199 = vadd.f32 %v122, %v164
  %v200 = vadd.f32 %v123, %v168
  %v201 = vadd.f32 %v124, %v156
  %v202 = vadd.f32 %v125, %v160
  %v203 = vadd.f32 %v126, %v164
  %v204 = vadd.f32 %v127, %v168
  %v205 = vadd.f32 %v128, %v156
  %v206 = vadd.f32 %v129, %v160
  %v207 = vadd.f32 %v130, %v164
  %v208 = vadd.f32 %v131, %v168
  %v209 = vadd.f32 %v132, %v156
  %v210 = vadd.f32 %v133, %v160
  %v211 = vadd.f32 %v134, %v164
  %v212 = vadd.f32 %v135, %v168
  %v213 = vadd.f32 %v136, %v156
  %v214 = vadd.f32 %v137, %v160
  %v215 = vadd.f32 %v138, %v164
  %v216 = vadd.f32 %v139, %v168
  %v217 = vadd.f32 %v140, %v156
  %v218 = vadd.f32 %v141, %v160
  %v219 = vadd.f32 %v142, %v164
  %v220 = vadd.f32 %v143, %v168
  %v221 = vadd.f32 %v144, %v156
  %v222 = vadd.f32 %v145, %v160
  %v223 = vadd.f32 %v146, %v164
  %v224 = vadd.f32 %v147, %v168
  %v225 = vadd.f32 %v148, %v156
  %v226 = vadd.f32 %v149, %v160
  %v227 = vadd.f32 %v150, %v164
  %v228 = vadd.f32 %v151, %v168
  %v229 = vmax.f32 %v173, 0.0
  %v230 = vmax.f32 %v174, 0.0
  %v231 = vmax.f32 %v175, 0.0
  %v232 = vmax.f32 %v176, 0.0
  %v233 = vmax.f32 %v177, 0.0
  %v234 = vmax.f32 %v178, 0.0
  %v235 = vmax.f32 %v179, 0.0
  %v236 = vmax.f32 %v180, 0.0
  %v237 = vmax.f32 %v181, 0.0
  %v238 = vmax.f32 %v182, 0.0
  %v239 = vmax.f32 %v183, 0.0
  %v240 = vmax.f32 %v184, 0.0
  %v241 = vmax.f32 %v185, 0.0
  %v242 = vmax.f32 %v186, 0.0
  %v243 = vmax.f32 %v187, 0.0
  %v244 = vmax.f32 %v188, 0.0
  %v245 = vmax.f32 %v189, 0.0
  %v246 = vmax.f32 %v190, 0.0
  %v247 = vmax.f32 %v191, 0.0
  %v248 = vmax.f32 %v192, 0.0
  %v249 = vmax.f32 %v193, 0.0
  %v250 = vmax.f32 %v194, 0.0
  %v251 = vmax.f32 %v195, 0.0
  %v252 = vmax.f32 %v196, 0.0
  %v253 = vmax.f32 %v197, 0.0
  %v254 = vmax.f32 %v198, 0.0
  %v255 = vmax.f32 %v199, 0.0
  %v256 = vmax.f32 %v200, 0.0
  %v257 = vmax.f32 %v201, 0.0
  %v258 = vmax.f32 %v202, 0.0
  %v259 = vmax.f32 %v203, 0.0
  %v260 = vmax.f32 %v204, 0.0
  %v261 = vmax.f32 %v205, 0.0
  %v262 = vmax.f32 %v206, 0.0
  %v263 = vmax.f32 %v207, 0.0
  %v264 = vmax.f32 %v208, 0.0
  %v265 = vmax.f32 %v209, 0.0
  %v266 = vmax.f32 %v210, 0.0
  %v267 = vmax.f32 %v211, 0.0
  %v268 = vmax.f32 %v212, 0.0
  %v269 = vmax.f32 %v213, 0.0
  %v270 = vmax.f32 %v214, 0.0
  %v271 = vmax.f32 %v215, 0.0
  %v272 = vmax.f32 %v216, 0.0
  %v273 = vmax.f32 %v217, 0.0
  %v274 = vmax.f32 %v218, 0.0
  %v275 = vmax.f32 %v219, 0.0
  %v276 = vmax.f32 %v220, 0.0
  %v277 = vmax.f32 %v221, 0.0
  %v278 = vmax.f32 %v222, 0.0
  %v279 = vmax.f32 %v223, 0.0
  %v280 = vmax.f32 %v224, 0.0
  %v281 = vmax.f32 %v225, 0.0
  %v282 = vmax.f32 %v226, 0.0
  %v283 = vmax.f32 %v227, 0.0
  %v284 = vmax.f32 %v228, 0.0
  %v285 = vld [vmem:[%s1] sm:$0xff]
  %v286 = vld [vmem:[%s1 + $0x8] sm:$0xff]
  %v287 = vld [vmem:[%s1 + $0x10] sm:$0xff]
  %v288 = vld [vmem:[%s1 + $0x18] sm:$0xff]
  %v289 = vld [vmem:[%s1 + $0x20] sm:$0xff]
  %v290 = vld [vmem:[%s1 + $0x28] sm:$0xff]
  %v291 = vld [vmem:[%s1 + $0x30] sm:$0xff]
  %v292 = vld [vmem:[%s1 + $0x38] sm:$0xff]
  %v293 = vld [vmem:[%s1 + $0x40] sm:$0xff]
  %v294 = vld [vmem:[%s1 + $0x48] sm:$0xff]
  %v295 = vld [vmem:[%s1 + $0x50] sm:$0xff]
  %v296 = vld [vmem:[%s1 + $0x58] sm:$0xff]
  %v297 = vld [vmem:[%s1 + $0x60] sm:$0xff]
  %v298 = vld [vmem:[%s1 + $0x68] sm:$0xff]
  %v299 = vld [vmem:[%s1 + $0x70] sm:$0xff]
  %v300 = vld [vmem:[%s1 + $0x78] sm:$0xff]
  %v301 = vld [vmem:[%s1 + $0x80] sm:$0xff]
  %v302 = vld [vmem:[%s1 + $0x88] sm:$0xff]
  %v303 = vld [vmem:[%s1 + $0x90] sm:$0xff]
  %v304 = vld [vmem:[%s1 + $0x98] sm:$0xff]
  %v305 = vld [vmem:[%s1 + $0xa0] sm:$0xff]
  %v306 = vld [vmem:[%s1 + $0xa8] sm:$0xff]
  %v307 = vld [vmem:[%s1 + $0xb0] sm:$0xff]
  %v308 = vld [vmem:[%s1 + $0xb8] sm:$0xff]
  %v309 = vld [vmem:[%s1 + $0xc0] sm:$0xff]
  %v310 = vld [vmem:[%s1 + $0xc8] sm:$0xff]
  %v311 = vld [vmem:[%s1 + $0xd0] sm:$0xff]
  %v312 = vld [vmem:[%s1 + $0xd8] sm:$0xff]
  %v313 = vld [vmem:[%s1 + $0xe0] sm:$0xff]
  %v314 = vld [vmem:[%s1 + $0xe8] sm:$0xff]
  %v315 = vld [vmem:[%s1 + $0xf0] sm:$0xff]
  %v316 = vld [vmem:[%s1 + $0xf8] sm:$0xff]
  %v317 = vld [vmem:[%s1 + $0x100] sm:$0xff]
  %v318 = vld [vmem:[%s1 + $0x108] sm:$0xff]
  %v319 = vld [vmem:[%s1 + $0x110] sm:$0xff]
  %v320 = vld [vmem:[%s1 + $0x118] sm:$0xff]
  %v321 = vld [vmem:[%s1 + $0x120] sm:$0xff]
  %v322 = vld [vmem:[%s1 + $0x128] sm:$0xff]
  %v323 = vld [vmem:[%s1 + $0x130] sm:$0xff]
  %v324 = vld [vmem:[%s1 + $0x138] sm:$0xff]
  %v325 = vld [vmem:[%s1 + $0x140] sm:$0xff]
  %v326 = vld [vmem:[%s1 + $0x148] sm:$0xff]
  %v327 = vld [vmem:[%s1 + $0x150] sm:$0xff]
  %v328 = vld [vmem:[%s1 + $0x158] sm:$0xff]
  %v329 = vld [vmem:[%s1 + $0x160] sm:$0xff]
  %v330 = vld [vmem:[%s1 + $0x168] sm:$0xff]
  %v331 = vld [vmem:[%s1 + $0x170] sm:$0xff]
  %v332 = vld [vmem:[%s1 + $0x178] sm:$0xff]
  %v333 = vld [vmem:[%s1 + $0x180] sm:$0xff]
  %v334 = vld [vmem:[%s1 + $0x188] sm:$0xff]
  %v335 = vld [vmem:[%s1 + $0x190] sm:$0xff]
  %v336 = vld [vmem:[%s1 + $0x198] sm:$0xff]
  %v337 = vld [vmem:[%s1 + $0x1a0] sm:$0xff]
  %v338 = vld [vmem:[%s1 + $0x1a8] sm:$0xff]
  %v339 = vld [vmem:[%s1 + $0x1b0] sm:$0xff]
  %v340 = vld [vmem:[%s1 + $0x1b8] sm:$0xff]
  %v341 = vmul.f32 %v285, %v79
  %v342 = vmul.f32 %v286, %v83
  %v343 = vmul.f32 %v287, %v87
  %v344 = vmul.f32 %v288, %v91
  %v345 = vmul.f32 %v289, %v79
  %v346 = vmul.f32 %v290, %v83
  %v347 = vmul.f32 %v291, %v87
  %v348 = vmul.f32 %v292, %v91
  %v349 = vmul.f32 %v293, %v79
  %v350 = vmul.f32 %v294, %v83
  %v351 = vmul.f32 %v295, %v87
  %v352 = vmul.f32 %v296, %v91
  %v353 = vmul.f32 %v297, %v79
  %v354 = vmul.f32 %v298, %v83
  %v355 = vmul.f32 %v299, %v87
  %v356 = vmul.f32 %v300, %v91
  %v357 = vmul.f32 %v301, %v79
  %v358 = vmul.f32 %v302, %v83
  %v359 = vmul.f32 %v303, %v87
  %v360 = vmul.f32 %v304, %v91
  %v361 = vmul.f32 %v305, %v79
  %v362 = vmul.f32 %v306, %v83
  %v363 = vmul.f32 %v307, %v87
  %v364 = vmul.f32 %v308, %v91
  %v365 = vmul.f32 %v309, %v79
  %v366 = vmul.f32 %v310, %v83
  %v367 = vmul.f32 %v311, %v87
  %v368 = vmul.f32 %v312, %v91
  %v369 = vmul.f32 %v313, %v79
  %v370 = vmul.f32 %v314, %v83
  %v371 = vmul.f32 %v315, %v87
  %v372 = vmul.f32 %v316, %v91
  %v373 = vmul.f32 %v317, %v79
  %v374 = vmul.f32 %v318, %v83
  %v375 = vmul.f32 %v319, %v87
  %v376 = vmul.f32 %v320, %v91
  %v377 = vmul.f32 %v321, %v79
  %v378 = vmul.f32 %v322, %v83
  %v379 = vmul.f32 %v323, %v87
  %v380 = vmul.f32 %v324, %v91
  %v381 = vmul.f32 %v325, %v79
  %v382 = vmul.f32 %v326, %v83
  %v383 = vmul.f32 %v327, %v87
  %v384 = vmul.f32 %v328, %v91
  %v385 = vmul.f32 %v329, %v79
  %v386 = vmul.f32 %v330, %v83
  %v387 = vmul.f32 %v331, %v87
  %v388 = vmul.f32 %v332, %v91
  %v389 = vmul.f32 %v333, %v79
  %v390 = vmul.f32 %v334, %v83
  %v391 = vmul.f32 %v335, %v87
  %v392 = vmul.f32 %v336, %v91
  %v393 = vmul.f32 %v337, %v79
  %v394 = vmul.f32 %v338, %v83
  %v395 = vmul.f32 %v339, %v87
  %v396 = vmul.f32 %v340, %v91
  %v397 = vadd.f32 %v341, %v156
  %v398 = vadd.f32 %v342, %v160
  %v399 = vadd.f32 %v343, %v164
  %v400 = vadd.f32 %v344, %v168
  %v401 = vadd.f32 %v345, %v156
  %v402 = vadd.f32 %v346, %v160
  %v403 = vadd.f32 %v347, %v164
  %v404 = vadd.f32 %v348, %v168
  %v405 = vadd.f32 %v349, %v156
  %v406 = vadd.f32 %v350, %v160
  %v407 = vadd.f32 %v351, %v164
  %v408 = vadd.f32 %v352, %v168
  %v409 = vadd.f32 %v353, %v156
  %v410 = vadd.f32 %v354, %v160
  %v411 = vadd.f32 %v355, %v164
  %v412 = vadd.f32 %v356, %v168
  %v413 = vadd.f32 %v357, %v156
  %v414 = vadd.f32 %v358, %v160
  %v415 = vadd.f32 %v359, %v164
  %v416 = vadd.f32 %v360, %v168
  %v417 = vadd.f32 %v361, %v156
  %v418 = vadd.f32 %v362, %v160
  %v419 = vadd.f32 %v363, %v164
  %v420 = vadd.f32 %v364, %v168
  %v421 = vadd.f32 %v365, %v156
  %v422 = vadd.f32 %v366, %v160
  %v423 = vadd.f32 %v367, %v164
  %v424 = vadd.f32 %v368, %v168
  %v425 = vadd.f32 %v369, %v156
  %v426 = vadd.f32 %v370, %v160
  %v427 = vadd.f32 %v371, %v164
  %v428 = vadd.f32 %v372, %v168
  %v429 = vadd.f32 %v373, %v156
  %v430 = vadd.f32 %v374, %v160
  %v431 = vadd.f32 %v375, %v164
  %v432 = vadd.f32 %v376, %v168
  %v433 = vadd.f32 %v377, %v156
  %v434 = vadd.f32 %v378, %v160
  %v435 = vadd.f32 %v379, %v164
  %v436 = vadd.f32 %v380, %v168
  %v437 = vadd.f32 %v381, %v156
  %v438 = vadd.f32 %v382, %v160
  %v439 = vadd.f32 %v383, %v164
  %v440 = vadd.f32 %v384, %v168
  %v441 = vadd.f32 %v385, %v156
  %v442 = vadd.f32 %v386, %v160
  %v443 = vadd.f32 %v387, %v164
  %v444 = vadd.f32 %v388, %v168
  %v445 = vadd.f32 %v389, %v156
  %v446 = vadd.f32 %v390, %v160
  %v447 = vadd.f32 %v391, %v164
  %v448 = vadd.f32 %v392, %v168
  %v449 = vadd.f32 %v393, %v156
  %v450 = vadd.f32 %v394, %v160
  %v451 = vadd.f32 %v395, %v164
  %v452 = vadd.f32 %v396, %v168
  %v453 = vmax.f32 %v397, 0.0
  %v454 = vmax.f32 %v398, 0.0
  %v455 = vmax.f32 %v399, 0.0
  %v456 = vmax.f32 %v400, 0.0
  %v457 = vmax.f32 %v401, 0.0
  %v458 = vmax.f32 %v402, 0.0
  %v459 = vmax.f32 %v403, 0.0
  %v460 = vmax.f32 %v404, 0.0
  %v461 = vmax.f32 %v405, 0.0
  %v462 = vmax.f32 %v406, 0.0
  %v463 = vmax.f32 %v407, 0.0
  %v464 = vmax.f32 %v408, 0.0
  %v465 = vmax.f32 %v409, 0.0
  %v466 = vmax.f32 %v410, 0.0
  %v467 = vmax.f32 %v411, 0.0
  %v468 = vmax.f32 %v412, 0.0
  %v469 = vmax.f32 %v413, 0.0
  %v470 = vmax.f32 %v414, 0.0
  %v471 = vmax.f32 %v415, 0.0
  %v472 = vmax.f32 %v416, 0.0
  %v473 = vmax.f32 %v417, 0.0
  %v474 = vmax.f32 %v418, 0.0
  %v475 = vmax.f32 %v419, 0.0
  %v476 = vmax.f32 %v420, 0.0
  %v477 = vmax.f32 %v421, 0.0
  %v478 = vmax.f32 %v422, 0.0
  %v479 = vmax.f32 %v423, 0.0
  %v480 = vmax.f32 %v424, 0.0
  %v481 = vmax.f32 %v425, 0.0
  %v482 = vmax.f32 %v426, 0.0
  %v483 = vmax.f32 %v427, 0.0
  %v484 = vmax.f32 %v428, 0.0
  %v485 = vmax.f32 %v429, 0.0
  %v486 = vmax.f32 %v430, 0.0
  %v487 = vmax.f32 %v431, 0.0
  %v488 = vmax.f32 %v432, 0.0
  %v489 = vmax.f32 %v433, 0.0
  %v490 = vmax.f32 %v434, 0.0
  %v491 = vmax.f32 %v435, 0.0
  %v492 = vmax.f32 %v436, 0.0
  %v493 = vmax.f32 %v437, 0.0
  %v494 = vmax.f32 %v438, 0.0
  %v495 = vmax.f32 %v439, 0.0
  %v496 = vmax.f32 %v440, 0.0
  %v497 = vmax.f32 %v441, 0.0
  %v498 = vmax.f32 %v442, 0.0
  %v499 = vmax.f32 %v443, 0.0
  %v500 = vmax.f32 %v444, 0.0
  %v501 = vmax.f32 %v445, 0.0
  %v502 = vmax.f32 %v446, 0.0
  %v503 = vmax.f32 %v447, 0.0
  %v504 = vmax.f32 %v448, 0.0
  %v505 = vmax.f32 %v449, 0.0
  %v506 = vmax.f32 %v450, 0.0
  %v507 = vmax.f32 %v451, 0.0
  %v508 = vmax.f32 %v452, 0.0
  %v509 = vmax.f32 %v229, %v453
  %v510 = vmax.f32 %v230, %v454
  %v511 = vmax.f32 %v231, %v455
  %v512 = vmax.f32 %v232, %v456
  %v513 = vmax.f32 %v233, %v457
  %v514 = vmax.f32 %v234, %v458
  %v515 = vmax.f32 %v235, %v459
  %v516 = vmax.f32 %v236, %v460
  %v517 = vmax.f32 %v237, %v461
  %v518 = vmax.f32 %v238, %v462
  %v519 = vmax.f32 %v239, %v463
  %v520 = vmax.f32 %v240, %v464
  %v521 = vmax.f32 %v241, %v465
  %v522 = vmax.f32 %v242, %v466
  %v523 = vmax.f32 %v243, %v467
  %v524 = vmax.f32 %v244, %v468
  %v525 = vmax.f32 %v245, %v469
  %v526 = vmax.f32 %v246, %v470
  %v527 = vmax.f32 %v247, %v471
  %v528 = vmax.f32 %v248, %v472
  %v529 = vmax.f32 %v249, %v473
  %v530 = vmax.f32 %v250, %v474
  %v531 = vmax.f32 %v251, %v475
  %v532 = vmax.f32 %v252, %v476
  %v533 = vmax.f32 %v253, %v477
  %v534 = vmax.f32 %v254, %v478
  %v535 = vmax.f32 %v255, %v479
  %v536 = vmax.f32 %v256, %v480
  %v537 = vmax.f32 %v257, %v481
  %v538 = vmax.f32 %v258, %v482
  %v539 = vmax.f32 %v259, %v483
  %v540 = vmax.f32 %v260, %v484
  %v541 = vmax.f32 %v261, %v485
  %v542 = vmax.f32 %v262, %v486
  %v543 = vmax.f32 %v263, %v487
  %v544 = vmax.f32 %v264, %v488
  %v545 = vmax.f32 %v265, %v489
  %v546 = vmax.f32 %v266, %v490
  %v547 = vmax.f32 %v267, %v491
  %v548 = vmax.f32 %v268, %v492
  %v549 = vmax.f32 %v269, %v493
  %v550 = vmax.f32 %v270, %v494
  %v551 = vmax.f32 %v271, %v495
  %v552 = vmax.f32 %v272, %v496
  %v553 = vmax.f32 %v273, %v497
  %v554 = vmax.f32 %v274, %v498
  %v555 = vmax.f32 %v275, %v499
  %v556 = vmax.f32 %v276, %v500
  %v557 = vmax.f32 %v277, %v501
  %v558 = vmax.f32 %v278, %v502
  %v559 = vmax.f32 %v279, %v503
  %v560 = vmax.f32 %v280, %v504
  %v561 = vmax.f32 %v281, %v505
  %v562 = vmax.f32 %v282, %v506
  %v563 = vmax.f32 %v283, %v507
  %v564 = vmax.f32 %v284, %v508
  %v565 = vmax.f32 %v509, %v511
  %v566 = vmax.f32 %v510, %v512
  %v567 = vmax.f32 %v513, %v515
  %v568 = vmax.f32 %v514, %v516
  %v569 = vmax.f32 %v517, %v519
  %v570 = vmax.f32 %v518, %v520
  %v571 = vmax.f32 %v521, %v523
  %v572 = vmax.f32 %v522, %v524
  %v573 = vmax.f32 %v525, %v527
  %v574 = vmax.f32 %v526, %v528
  %v575 = vmax.f32 %v529, %v531
  %v576 = vmax.f32 %v530, %v532
  %v577 = vmax.f32 %v533, %v535
  %v578 = vmax.f32 %v534, %v536
  %v579 = vmax.f32 %v537, %v539
  %v580 = vmax.f32 %v538, %v540
  %v581 = vmax.f32 %v541, %v543
  %v582 = vmax.f32 %v542, %v544
  %v583 = vmax.f32 %v545, %v547
  %v584 = vmax.f32 %v546, %v548
  %v585 = vmax.f32 %v549, %v551
  %v586 = vmax.f32 %v550, %v552
  %v587 = vmax.f32 %v553, %v555
  %v588 = vmax.f32 %v554, %v556
  %v589 = vmax.f32 %v557, %v559
  %v590 = vmax.f32 %v558, %v560
  %v591 = vmax.f32 %v561, %v563
  %v592 = vmax.f32 %v562, %v564
  %v593 = vpack.c.bf16 %v567, %v565
  %v594 = vpack.c.bf16 %v568, %v566
  %v595 = vpack.c.bf16 %v571, %v569
  %v596 = vpack.c.bf16 %v572, %v570
  %v597 = vpack.c.bf16 %v575, %v573
  %v598 = vpack.c.bf16 %v576, %v574
  %v599 = vpack.c.bf16 %v579, %v577
  %v600 = vpack.c.bf16 %v580, %v578
  %v601 = vpack.c.bf16 %v583, %v581
  %v602 = vpack.c.bf16 %v584, %v582
  %v603 = vpack.c.bf16 %v587, %v585
  %v604 = vpack.c.bf16 %v588, %v586
  %v605 = vpack.c.bf16 %v591, %v589
  %v606 = vpack.c.bf16 %v592, %v590
  %v621 = vunpack.c.l.b16 %v593
  %v622 = vunpack.c.l.b16 %v594
  %v623 = vunpack.c.h.b16 %v593
  %v624 = vunpack.c.h.b16 %v594
  %v625 = vunpack.c.l.b16 %v595
  %v626 = vunpack.c.l.b16 %v596
  %v627 = vunpack.c.h.b16 %v595
  %v628 = vunpack.c.h.b16 %v596
  %v629 = vunpack.c.l.b16 %v597
  %v630 = vunpack.c.l.b16 %v598
  %v631 = vunpack.c.h.b16 %v597
  %v632 = vunpack.c.h.b16 %v598
  %v633 = vunpack.c.l.b16 %v599
  %v634 = vunpack.c.l.b16 %v600
  %v635 = vunpack.c.h.b16 %v599
  %v636 = vunpack.c.h.b16 %v600
  %v637 = vunpack.c.l.b16 %v601
  %v638 = vunpack.c.l.b16 %v602
  %v639 = vunpack.c.h.b16 %v601
  %v640 = vunpack.c.h.b16 %v602
  %v641 = vunpack.c.l.b16 %v603
  %v642 = vunpack.c.l.b16 %v604
  %v643 = vunpack.c.h.b16 %v603
  %v644 = vunpack.c.h.b16 %v604
  %v645 = vunpack.c.l.b16 %v605
  %v646 = vunpack.c.l.b16 %v606
  %v647 = vunpack.c.h.b16 %v605
  %v648 = vunpack.c.h.b16 %v606
  %v649 = vpack.c.b16 %v622, %v621
  %v650 = vpack.c.b16 %v624, %v623
  %v651 = vpack.c.b16 %v626, %v625
  %v652 = vpack.c.b16 %v628, %v627
  %v653 = vpack.c.b16 %v630, %v629
  %v654 = vpack.c.b16 %v632, %v631
  %v655 = vpack.c.b16 %v634, %v633
  %v656 = vpack.c.b16 %v636, %v635
  %v657 = vpack.c.b16 %v638, %v637
  %v658 = vpack.c.b16 %v640, %v639
  %v659 = vpack.c.b16 %v642, %v641
  %v660 = vpack.c.b16 %v644, %v643
  %v661 = vpack.c.b16 %v646, %v645
  %v662 = vpack.c.b16 %v648, %v647
  %677 = vst [vmem:[%s4] sm:$0xff] %v649
  %678 = vst [vmem:[%s4 + $0x8] sm:$0xff] %v650
  %679 = vst [vmem:[%s4 + $0x10] sm:$0xff] %v651
  %680 = vst [vmem:[%s4 + $0x18] sm:$0xff] %v652
  %681 = vst [vmem:[%s4 + $0x20] sm:$0xff] %v653
  %682 = vst [vmem:[%s4 + $0x28] sm:$0xff] %v654
  %683 = vst [vmem:[%s4 + $0x30] sm:$0xff] %v655
  %684 = vst [vmem:[%s4 + $0x38] sm:$0xff] %v656
  %685 = vst [vmem:[%s4 + $0x40] sm:$0xff] %v657
  %686 = vst [vmem:[%s4 + $0x48] sm:$0xff] %v658
  %687 = vst [vmem:[%s4 + $0x50] sm:$0xff] %v659
  %688 = vst [vmem:[%s4 + $0x58] sm:$0xff] %v660
  %689 = vst [vmem:[%s4 + $0x60] sm:$0xff] %v661
  %690 = vst [vmem:[%s4 + $0x68] sm:$0xff] %v662
  // Predicated region
  $region18: #{conv_nn_forward.6} parent=0 // pred_check
    _
  $region19: #{conv_nn_forward.6} parent=0 // pred_check_branch
    %692 = sbr.rel (0) target = $region21
  $region20: #{conv_nn_forward.6} parent=0 // pred_region
    _
  $region21: #{conv_nn_forward.6} parent=0 // pred_fallthru
    _
  // Predicated region
  $region22: #{conv_nn_forward.6} parent=0 // pred_check
    _
  $region23: #{conv_nn_forward.6} parent=0 // pred_check_branch
    %694 = sbr.rel (0) target = $region25
  $region24: #{conv_nn_forward.6} parent=0 // pred_region
    _
  $region25: #{conv_nn_forward.6} parent=0 // pred_fallthru
    _

// kernel: conv_nn_forward.5
$region0: #{conv_nn_forward.5}
  #allocation0 [shape = 'u32[]', space=smem, size = 0x4, offset = 0x4, fixed_abs, tag = 'smem constant byte address 0x4 - core index']
  #allocation1 [shape = 'u32[144,128]{1,0:T(1,128)}', space=vmem, size = 0x12000, scoped, tag = 'internal scratch']
  %s0 = inlined_call_operand.vmem [shape: bf16[112,160], index: 0, kind: input, shape index: {}]
  %s1 = inlined_call_operand.vmem [shape: bf16[112,160], index: 1, kind: input, shape index: {}]
  %s2 = inlined_call_operand.vmem [shape: bf16[160,512], index: 2, kind: input, shape index: {}]
  %s3 = inlined_call_operand.vmem [shape: f32[512,128], index: 3, kind: input, shape index: {}]
  %s4 = inlined_call_operand.vmem [shape: f32[112,512], index: 4, kind: output, shape index: {0}]
  %s5 = inlined_call_operand.vmem [shape: f32[112,512], index: 5, kind: output, shape index: {1}]
  %s6 = inlined_call_operand.vmem [shape: f32[1,8,128], index: 6, kind: output, shape index: {2}]
  %s7 = inlined_call_operand.vmem [shape: f32[1,8,128], index: 7, kind: output, shape index: {3}]
  %8 = xla_tuple %s4, %s5, %s6, %s7
  %s9 = sld [smem:[#allocation0]]
  $region50: #{conv_nn_forward.5} parent=0
    _
  %s11 = ssub.s32 1, %s9
  %s12 = scalar_select 0, %s11, %s9
  // Predicated region
  $region2: #{conv_nn_forward.5} parent=0 // pred_check
    _
  $region3: #{conv_nn_forward.5} parent=0 // pred_check_branch
    %14 = sbr.rel (0) target = $region5
  $region4: #{conv_nn_forward.5} parent=0 // pred_region
    _
  $region5: #{conv_nn_forward.5} parent=0 // pred_fallthru
    _
  // Predicated region
  $region6: #{conv_nn_forward.5} parent=0 // pred_check
    _
  $region7: #{conv_nn_forward.5} parent=0 // pred_check_branch
    %16 = sbr.rel (0) target = $region9
  $region8: #{conv_nn_forward.5} parent=0 // pred_region
    _
  $region9: #{conv_nn_forward.5} parent=0 // pred_fallthru
    _
  // Predicated region
  $region10: #{conv_nn_forward.5} parent=0 // pred_check
    _
  $region11: #{conv_nn_forward.5} parent=0 // pred_check_branch
    %18 = sbr.rel (0) target = $region13
  $region12: #{conv_nn_forward.5} parent=0 // pred_region
    _
  $region13: #{conv_nn_forward.5} parent=0 // pred_fallthru
    _
  // Predicated region
  $region14: #{conv_nn_forward.5} parent=0 // pred_check
    _
  $region15: #{conv_nn_forward.5} parent=0 // pred_check_branch
    %20 = sbr.rel (0) target = $region17
  $region16: #{conv_nn_forward.5} parent=0 // pred_region
    _
  $region17: #{conv_nn_forward.5} parent=0 // pred_fallthru
    _
  %v22 = vld [vmem:[%s0] sm:$0xff]
  %v23 = vld [vmem:[%s0 + $0x8] sm:$0xff]
  %v24 = vld [vmem:[%s0 + $0x10] sm:$0xff]
  %v25 = vld [vmem:[%s0 + $0x18] sm:$0xff]
  %v26 = vld [vmem:[%s0 + $0x20] sm:$0xff]
  %v27 = vld [vmem:[%s0 + $0x28] sm:$0xff]
  %v28 = vld [vmem:[%s0 + $0x30] sm:$0xff]
  %v29 = vld [vmem:[%s0 + $0x38] sm:$0xff]
  %v30 = vld [vmem:[%s0 + $0x40] sm:$0xff]
  %v31 = vld [vmem:[%s0 + $0x48] sm:$0xff]
  %v32 = vld [vmem:[%s0 + $0x50] sm:$0xff]
  %v33 = vld [vmem:[%s0 + $0x58] sm:$0xff]
  %v34 = vld [vmem:[%s0 + $0x60] sm:$0xff]
  %v35 = vld [vmem:[%s0 + $0x68] sm:$0xff]
  %v36 = vld [vmem:[%s2] sm:$0xff]
  %v37 = vld [vmem:[%s2 + $0x8] sm:$0xff]
  %v38 = vld [vmem:[%s2 + $0x10] sm:$0xff]
  %v39 = vld [vmem:[%s2 + $0x18] sm:$0xff]
  %v40 = vld [vmem:[%s2 + $0x20] sm:$0xff]
  %v41 = vld [vmem:[%s2 + $0x28] sm:$0xff]
  %v42 = vld [vmem:[%s2 + $0x30] sm:$0xff]
  %v43 = vld [vmem:[%s2 + $0x38] sm:$0xff]
  %v44 = vld [vmem:[%s2 + $0x40] sm:$0xff]
  %v45 = vld [vmem:[%s2 + $0x48] sm:$0xff]
  %v46 = vld [vmem:[%s2 + $0x50] sm:$0xff]
  %v47 = vld [vmem:[%s2 + $0x58] sm:$0xff]
  %v48 = vld [vmem:[%s2 + $0x60] sm:$0xff]
  %v49 = vld [vmem:[%s2 + $0x68] sm:$0xff]
  %v50 = vld [vmem:[%s2 + $0x70] sm:$0xff]
  %v51 = vld [vmem:[%s2 + $0x78] sm:$0xff]
  %v52 = vld [vmem:[%s2 + $0x80] sm:$0xff]
  %v53 = vld [vmem:[%s2 + $0x88] sm:$0xff]
  %v54 = vld [vmem:[%s2 + $0x90] sm:$0xff]
  %v55 = vld [vmem:[%s2 + $0x98] sm:$0xff]
  %v56 = vld [vmem:[%s2 + $0xa0] sm:$0xff]
  %v57 = vld [vmem:[%s2 + $0xa8] sm:$0xff]
  %v58 = vld [vmem:[%s2 + $0xb0] sm:$0xff]
  %v59 = vld [vmem:[%s2 + $0xb8] sm:$0xff]
  %v60 = vld [vmem:[%s2 + $0xc0] sm:$0xff]
  %v61 = vld [vmem:[%s2 + $0xc8] sm:$0xff]
  %v62 = vld [vmem:[%s2 + $0xd0] sm:$0xff]
  %v63 = vld [vmem:[%s2 + $0xd8] sm:$0xff]
  %v64 = vld [vmem:[%s2 + $0xe0] sm:$0xff]
  %v65 = vld [vmem:[%s2 + $0xe8] sm:$0xff]
  %v66 = vld [vmem:[%s2 + $0xf0] sm:$0xff]
  %v67 = vld [vmem:[%s2 + $0xf8] sm:$0xff]
  %v68 = vld [vmem:[%s2 + $0x100] sm:$0xff]
  %v69 = vld [vmem:[%s2 + $0x108] sm:$0xff]
  %v70 = vld [vmem:[%s2 + $0x110] sm:$0xff]
  %v71 = vld [vmem:[%s2 + $0x118] sm:$0xff]
  %v72 = vld [vmem:[%s2 + $0x120] sm:$0xff]
  %v73 = vld [vmem:[%s2 + $0x128] sm:$0xff]
  %v74 = vld [vmem:[%s2 + $0x130] sm:$0xff]
  %v75 = vld [vmem:[%s2 + $0x138] sm:$0xff]
  %v90 = vunpack.c.l.b16 %v22
  %v91 = vunpack.c.h.b16 %v22
  %v92 = vunpack.c.l.b16 %v23
  %v93 = vunpack.c.h.b16 %v23
  %v94 = vunpack.c.l.b16 %v24
  %v95 = vunpack.c.h.b16 %v24
  %v96 = vunpack.c.l.b16 %v25
  %v97 = vunpack.c.h.b16 %v25
  %v98 = vunpack.c.l.b16 %v26
  %v99 = vunpack.c.h.b16 %v26
  %v100 = vunpack.c.l.b16 %v27
  %v101 = vunpack.c.h.b16 %v27
  %v102 = vunpack.c.l.b16 %v28
  %v103 = vunpack.c.h.b16 %v28
  %v104 = vunpack.c.l.b16 %v29
  %v105 = vunpack.c.h.b16 %v29
  %v106 = vunpack.c.l.b16 %v30
  %v107 = vunpack.c.h.b16 %v30
  %v108 = vunpack.c.l.b16 %v31
  %v109 = vunpack.c.h.b16 %v31
  %v110 = vunpack.c.l.b16 %v32
  %v111 = vunpack.c.h.b16 %v32
  %v112 = vunpack.c.l.b16 %v33
  %v113 = vunpack.c.h.b16 %v33
  %v114 = vunpack.c.l.b16 %v34
  %v115 = vunpack.c.h.b16 %v34
  %v116 = vunpack.c.l.b16 %v35
  %v117 = vunpack.c.h.b16 %v35
  %v118 = vpack.c.b16 %v92, %v90
  %v119 = vpack.c.b16 %v93, %v91
  %v120 = vpack.c.b16 %v96, %v94
  %v121 = vpack.c.b16 %v97, %v95
  %v122 = vpack.c.b16 %v100, %v98
  %v123 = vpack.c.b16 %v101, %v99
  %v124 = vpack.c.b16 %v104, %v102
  %v125 = vpack.c.b16 %v105, %v103
  %v126 = vpack.c.b16 %v108, %v106
  %v127 = vpack.c.b16 %v109, %v107
  %v128 = vpack.c.b16 %v112, %v110
  %v129 = vpack.c.b16 %v113, %v111
  %v130 = vpack.c.b16 %v116, %v114
  %v131 = vpack.c.b16 %v117, %v115
  %v179 = vunpack.c.l.b16 %v36
  %v180 = vunpack.c.h.b16 %v36
  %v181 = vunpack.c.l.b16 %v37
  %v182 = vunpack.c.h.b16 %v37
  %v183 = vunpack.c.l.b16 %v38
  %v184 = vunpack.c.h.b16 %v38
  %v185 = vunpack.c.l.b16 %v39
  %v186 = vunpack.c.h.b16 %v39
  %v187 = vunpack.c.l.b16 %v40
  %v188 = vunpack.c.h.b16 %v40
  %v189 = vunpack.c.l.b16 %v41
  %v190 = vunpack.c.h.b16 %v41
  %v191 = vunpack.c.l.b16 %v42
  %v192 = vunpack.c.h.b16 %v42
  %v193 = vunpack.c.l.b16 %v43
  %v194 = vunpack.c.h.b16 %v43
  %v195 = vunpack.c.l.b16 %v44
  %v196 = vunpack.c.h.b16 %v44
  %v197 = vunpack.c.l.b16 %v45
  %v198 = vunpack.c.h.b16 %v45
  %v199 = vunpack.c.l.b16 %v46
  %v200 = vunpack.c.h.b16 %v46
  %v201 = vunpack.c.l.b16 %v47
  %v202 = vunpack.c.h.b16 %v47
  %v203 = vunpack.c.l.b16 %v48
  %v204 = vunpack.c.h.b16 %v48
  %v205 = vunpack.c.l.b16 %v49
  %v206 = vunpack.c.h.b16 %v49
  %v207 = vunpack.c.l.b16 %v50
  %v208 = vunpack.c.h.b16 %v50
  %v209 = vunpack.c.l.b16 %v51
  %v210 = vunpack.c.h.b16 %v51
  %v211 = vunpack.c.l.b16 %v52
  %v212 = vunpack.c.h.b16 %v52
  %v213 = vunpack.c.l.b16 %v53
  %v214 = vunpack.c.h.b16 %v53
  %v215 = vunpack.c.l.b16 %v54
  %v216 = vunpack.c.h.b16 %v54
  %v217 = vunpack.c.l.b16 %v55
  %v218 = vunpack.c.h.b16 %v55
  %v219 = vunpack.c.l.b16 %v56
  %v220 = vunpack.c.h.b16 %v56
  %v221 = vunpack.c.l.b16 %v57
  %v222 = vunpack.c.h.b16 %v57
  %v223 = vunpack.c.l.b16 %v58
  %v224 = vunpack.c.h.b16 %v58
  %v225 = vunpack.c.l.b16 %v59
  %v226 = vunpack.c.h.b16 %v59
  %v227 = vunpack.c.l.b16 %v60
  %v228 = vunpack.c.h.b16 %v60
  %v229 = vunpack.c.l.b16 %v61
  %v230 = vunpack.c.h.b16 %v61
  %v231 = vunpack.c.l.b16 %v62
  %v232 = vunpack.c.h.b16 %v62
  %v233 = vunpack.c.l.b16 %v63
  %v234 = vunpack.c.h.b16 %v63
  %v235 = vunpack.c.l.b16 %v64
  %v236 = vunpack.c.h.b16 %v64
  %v237 = vunpack.c.l.b16 %v65
  %v238 = vunpack.c.h.b16 %v65
  %v239 = vunpack.c.l.b16 %v66
  %v240 = vunpack.c.h.b16 %v66
  %v241 = vunpack.c.l.b16 %v67
  %v242 = vunpack.c.h.b16 %v67
  %v243 = vunpack.c.l.b16 %v68
  %v244 = vunpack.c.h.b16 %v68
  %v245 = vunpack.c.l.b16 %v69
  %v246 = vunpack.c.h.b16 %v69
  %v247 = vunpack.c.l.b16 %v70
  %v248 = vunpack.c.h.b16 %v70
  %v249 = vunpack.c.l.b16 %v71
  %v250 = vunpack.c.h.b16 %v71
  %v251 = vunpack.c.l.b16 %v72
  %v252 = vunpack.c.h.b16 %v72
  %v253 = vunpack.c.l.b16 %v73
  %v254 = vunpack.c.h.b16 %v73
  %v255 = vunpack.c.l.b16 %v74
  %v256 = vunpack.c.h.b16 %v74
  %v257 = vunpack.c.l.b16 %v75
  %v258 = vunpack.c.h.b16 %v75
  %v259 = vpack.c.b16 %v183, %v179
  %v260 = vpack.c.b16 %v184, %v180
  %v261 = vpack.c.b16 %v185, %v181
  %v262 = vpack.c.b16 %v186, %v182
  %v263 = vpack.c.b16 %v191, %v187
  %v264 = vpack.c.b16 %v192, %v188
  %v265 = vpack.c.b16 %v193, %v189
  %v266 = vpack.c.b16 %v194, %v190
  %v267 = vpack.c.b16 %v199, %v195
  %v268 = vpack.c.b16 %v200, %v196
  %v269 = vpack.c.b16 %v201, %v197
  %v270 = vpack.c.b16 %v202, %v198
  %v271 = vpack.c.b16 %v207, %v203
  %v272 = vpack.c.b16 %v208, %v204
  %v273 = vpack.c.b16 %v209, %v205
  %v274 = vpack.c.b16 %v210, %v206
  %v275 = vpack.c.b16 %v215, %v211
  %v276 = vpack.c.b16 %v216, %v212
  %v277 = vpack.c.b16 %v217, %v213
  %v278 = vpack.c.b16 %v218, %v214
  %v279 = vpack.c.b16 %v223, %v219
  %v280 = vpack.c.b16 %v224, %v220
  %v281 = vpack.c.b16 %v225, %v221
  %v282 = vpack.c.b16 %v226, %v222
  %v283 = vpack.c.b16 %v231, %v227
  %v284 = vpack.c.b16 %v232, %v228
  %v285 = vpack.c.b16 %v233, %v229
  %v286 = vpack.c.b16 %v234, %v230
  %v287 = vpack.c.b16 %v239, %v235
  %v288 = vpack.c.b16 %v240, %v236
  %v289 = vpack.c.b16 %v241, %v237
  %v290 = vpack.c.b16 %v242, %v238
  %v291 = vpack.c.b16 %v247, %v243
  %v292 = vpack.c.b16 %v248, %v244
  %v293 = vpack.c.b16 %v249, %v245
  %v294 = vpack.c.b16 %v250, %v246
  %v295 = vpack.c.b16 %v255, %v251
  %v296 = vpack.c.b16 %v256, %v252
  %v297 = vpack.c.b16 %v257, %v253
  %v298 = vpack.c.b16 %v258, %v254
  %vm339 = vcmask 261120
  %v341 = vsel %vm339, %v119, 0
  %v344 = vsel %vm339, %v121, 0
  %v347 = vsel %vm339, %v123, 0
  %v350 = vsel %vm339, %v125, 0
  %v353 = vsel %vm339, %v127, 0
  %v356 = vsel %vm339, %v129, 0
  %v359 = vsel %vm339, %v131, 0
  %361 = vmatprep.subr.bf16.mxu0 %v260
  %362 = vmatpush1.bf16.msra.mxu0 %v259
  %363 = vmatprep.subr.bf16.mxu0 %v264
  %364 = vmatpush1.bf16.msra.mxu0 %v263
  %365 = vmatprep.subr.bf16.mxu0 %v268
  %366 = vmatpush1.bf16.msra.mxu0 %v267
  %367 = vmatprep.subr.bf16.mxu0 %v272
  %368 = vmatpush1.bf16.msra.mxu0 %v271
  %369 = vmatprep.subr.bf16.mxu0 %v276
  %370 = vmatpush1.bf16.msra.mxu0 %v275
  %371 = vmatprep.subr.bf16.mxu0 %v280
  %372 = vmatpush1.bf16.msra.mxu0 %v279
  %373 = vmatprep.subr.bf16.mxu0 %v284
  %374 = vmatpush1.bf16.msra.mxu0 %v283
  %375 = vmatprep.subr.bf16.mxu0 %v288
  %376 = vmatpush1.bf16.msra.mxu0 %v287
  %377 = vmatprep.subr.bf16.mxu0 %v292
  %378 = vmatpush1.bf16.msra.mxu0 %v291
  %379 = vmatprep.subr.bf16.mxu0 %v296
  %380 = vmatpush1.bf16.msra.mxu0 %v295
  %381 = vmatprep.subr.bf16.mxu0 0
  %382 = vmatpush1.bf16.msra.mxu0 0
  %383 = vmatprep.subr.bf16.mxu0 0
  %384 = vmatpush1.bf16.msra.mxu0 0
  %385 = vmatprep.subr.bf16.mxu0 0
  %386 = vmatpush1.bf16.msra.mxu0 0
  %387 = vmatprep.subr.bf16.mxu0 0
  %388 = vmatpush1.bf16.msra.mxu0 0
  %389 = vmatprep.subr.bf16.mxu0 0
  %390 = vmatpush1.bf16.msra.mxu0 0
  %391 = vmatprep.subr.bf16.mxu0 0
  %392 = vmatpush1.bf16.msra.mxu0 0
  %393 = vmatprep.mubr.bf16.mxu0 %v341
  %394 = vmatmul.mubr.bf16.gmra.mrb[0].mxu0 %v118
  %v395 = vpop.f32.mrb[0].mxu0
  %v396 = vadd.f32 0.0, %v395
  %v397 = vpop.f32.mrb[0].mxu0
  %v398 = vadd.f32 0.0, %v397
  %v399 = vpop.f32.mrb[0].mxu0
  %v400 = vadd.f32 0.0, %v399
  %v401 = vpop.f32.mrb[0].mxu0
  %v402 = vadd.f32 0.0, %v401
  %403 = vmatprep.mubr.bf16.mxu0 %v344
  %404 = vmatmul.mubr.bf16.gmra.mrb[0].mxu0 %v120
  %v405 = vpop.f32.mrb[0].mxu0
  %v406 = vadd.f32 0.0, %v405
  %v407 = vpop.f32.mrb[0].mxu0
  %v408 = vadd.f32 0.0, %v407
  %v409 = vpop.f32.mrb[0].mxu0
  %v410 = vadd.f32 0.0, %v409
  %v411 = vpop.f32.mrb[0].mxu0
  %v412 = vadd.f32 0.0, %v411
  %413 = vmatprep.mubr.bf16.mxu0 %v347
  %414 = vmatmul.mubr.bf16.gmra.mrb[0].mxu0 %v122
  %v415 = vpop.f32.mrb[0].mxu0
  %v416 = vadd.f32 0.0, %v415
  %v417 = vpop.f32.mrb[0].mxu0
  %v418 = vadd.f32 0.0, %v417
  %v419 = vpop.f32.mrb[0].mxu0
  %v420 = vadd.f32 0.0, %v419
  %v421 = vpop.f32.mrb[0].mxu0
  %v422 = vadd.f32 0.0, %v421
  %423 = vmatprep.mubr.bf16.mxu0 %v350
  %424 = vmatmul.mubr.bf16.gmra.mrb[0].mxu0 %v124
  %v425 = vpop.f32.mrb[0].mxu0
  %v426 = vadd.f32 0.0, %v425
  %v427 = vpop.f32.mrb[0].mxu0
  %v428 = vadd.f32 0.0, %v427
  %v429 = vpop.f32.mrb[0].mxu0
  %v430 = vadd.f32 0.0, %v429
  %v431 = vpop.f32.mrb[0].mxu0
  %v432 = vadd.f32 0.0, %v431
  %433 = vmatprep.mubr.bf16.mxu0 %v353
  %434 = vmatmul.mubr.bf16.gmra.mrb[0].mxu0 %v126
  %v435 = vpop.f32.mrb[0].mxu0
  %v436 = vadd.f32 0.0, %v435
  %v437 = vpop.f32.mrb[0].mxu0
  %v438 = vadd.f32 0.0, %v437
  %v439 = vpop.f32.mrb[0].mxu0
  %v440 = vadd.f32 0.0, %v439
  %v441 = vpop.f32.mrb[0].mxu0
  %v442 = vadd.f32 0.0, %v441
  %443 = vmatprep.mubr.bf16.mxu0 %v356
  %444 = vmatmul.mubr.bf16.gmra.mrb[0].mxu0 %v128
  %v445 = vpop.f32.mrb[0].mxu0
  %v446 = vadd.f32 0.0, %v445
  %v447 = vpop.f32.mrb[0].mxu0
  %v448 = vadd.f32 0.0, %v447
  %v449 = vpop.f32.mrb[0].mxu0
  %v450 = vadd.f32 0.0, %v449
  %v451 = vpop.f32.mrb[0].mxu0
  %v452 = vadd.f32 0.0, %v451
  %453 = vmatprep.mubr.bf16.mxu0 %v359
  %454 = vmatmul.mubr.bf16.gmra.mrb[0].mxu0 %v130
  %v455 = vpop.f32.mrb[0].mxu0
  %v456 = vadd.f32 0.0, %v455
  %v457 = vpop.f32.mrb[0].mxu0
  %v458 = vadd.f32 0.0, %v457
  %v459 = vpop.f32.mrb[0].mxu0
  %v460 = vadd.f32 0.0, %v459
  %v461 = vpop.f32.mrb[0].mxu0
  %v462 = vadd.f32 0.0, %v461
  %463 = vdwg.mxu0
  %464 = vmatprep.subr.bf16.mxu0 %v262
  %465 = vmatpush1.bf16.msra.mxu0 %v261
  %466 = vmatprep.subr.bf16.mxu0 %v266
  %467 = vmatpush1.bf16.msra.mxu0 %v265
  %468 = vmatprep.subr.bf16.mxu0 %v270
  %469 = vmatpush1.bf16.msra.mxu0 %v269
  %470 = vmatprep.subr.bf16.mxu0 %v274
  %471 = vmatpush1.bf16.msra.mxu0 %v273
  %472 = vmatprep.subr.bf16.mxu0 %v278
  %473 = vmatpush1.bf16.msra.mxu0 %v277
  %474 = vmatprep.subr.bf16.mxu0 %v282
  %475 = vmatpush1.bf16.msra.mxu0 %v281
  %476 = vmatprep.subr.bf16.mxu0 %v286
  %477 = vmatpush1.bf16.msra.mxu0 %v285
  %478 = vmatprep.subr.bf16.mxu0 %v290
  %479 = vmatpush1.bf16.msra.mxu0 %v289
  %480 = vmatprep.subr.bf16.mxu0 %v294
  %481 = vmatpush1.bf16.msra.mxu0 %v293
  %482 = vmatprep.subr.bf16.mxu0 %v298
  %483 = vmatpush1.bf16.msra.mxu0 %v297
  %484 = vmatprep.subr.bf16.mxu0 0
  %485 = vmatpush1.bf16.msra.mxu0 0
  %486 = vmatprep.subr.bf16.mxu0 0
  %487 = vmatpush1.bf16.msra.mxu0 0
  %488 = vmatprep.subr.bf16.mxu0 0
  %489 = vmatpush1.bf16.msra.mxu0 0
  %490 = vmatprep.subr.bf16.mxu0 0
  %491 = vmatpush1.bf16.msra.mxu0 0
  %492 = vmatprep.subr.bf16.mxu0 0
  %493 = vmatpush1.bf16.msra.mxu0 0
  %494 = vmatprep.subr.bf16.mxu0 0
  %495 = vmatpush1.bf16.msra.mxu0 0
  %496 = vmatprep.mubr.bf16.mxu0 %v341
  %497 = vmatmul.mubr.bf16.gmra.mrb[0].mxu0 %v118
  %v498 = vpop.f32.mrb[0].mxu0
  %v499 = vadd.f32 0.0, %v498
  %v500 = vpop.f32.mrb[0].mxu0
  %v501 = vadd.f32 0.0, %v500
  %v502 = vpop.f32.mrb[0].mxu0
  %v503 = vadd.f32 0.0, %v502
  %v504 = vpop.f32.mrb[0].mxu0
  %v505 = vadd.f32 0.0, %v504
  %506 = vmatprep.mubr.bf16.mxu0 %v344
  %507 = vmatmul.mubr.bf16.gmra.mrb[0].mxu0 %v120
  %v508 = vpop.f32.mrb[0].mxu0
  %v509 = vadd.f32 0.0, %v508
  %v510 = vpop.f32.mrb[0].mxu0
  %v511 = vadd.f32 0.0, %v510
  %v512 = vpop.f32.mrb[0].mxu0
  %v513 = vadd.f32 0.0, %v512
  %v514 = vpop.f32.mrb[0].mxu0
  %v515 = vadd.f32 0.0, %v514
  %516 = vmatprep.mubr.bf16.mxu0 %v347
  %517 = vmatmul.mubr.bf16.gmra.mrb[0].mxu0 %v122
  %v518 = vpop.f32.mrb[0].mxu0
  %v519 = vadd.f32 0.0, %v518
  %v520 = vpop.f32.mrb[0].mxu0
  %v521 = vadd.f32 0.0, %v520
  %v522 = vpop.f32.mrb[0].mxu0
  %v523 = vadd.f32 0.0, %v522
  %v524 = vpop.f32.mrb[0].mxu0
  %v525 = vadd.f32 0.0, %v524
  %526 = vmatprep.mubr.bf16.mxu0 %v350
  %527 = vmatmul.mubr.bf16.gmra.mrb[0].mxu0 %v124
  %v528 = vpop.f32.mrb[0].mxu0
  %v529 = vadd.f32 0.0, %v528
  %v530 = vpop.f32.mrb[0].mxu0
  %v531 = vadd.f32 0.0, %v530
  %v532 = vpop.f32.mrb[0].mxu0
  %v533 = vadd.f32 0.0, %v532
  %v534 = vpop.f32.mrb[0].mxu0
  %v535 = vadd.f32 0.0, %v534
  %536 = vmatprep.mubr.bf16.mxu0 %v353
  %537 = vmatmul.mubr.bf16.gmra.mrb[0].mxu0 %v126
  %v538 = vpop.f32.mrb[0].mxu0
  %v539 = vadd.f32 0.0, %v538
  %v540 = vpop.f32.mrb[0].mxu0
  %v541 = vadd.f32 0.0, %v540
  %v542 = vpop.f32.mrb[0].mxu0
  %v543 = vadd.f32 0.0, %v542
  %v544 = vpop.f32.mrb[0].mxu0
  %v545 = vadd.f32 0.0, %v544
  %546 = vmatprep.mubr.bf16.mxu0 %v356
  %547 = vmatmul.mubr.bf16.gmra.mrb[0].mxu0 %v128
  %v548 = vpop.f32.mrb[0].mxu0
  %v549 = vadd.f32 0.0, %v548
  %v550 = vpop.f32.mrb[0].mxu0
  %v551 = vadd.f32 0.0, %v550
  %v552 = vpop.f32.mrb[0].mxu0
  %v553 = vadd.f32 0.0, %v552
  %v554 = vpop.f32.mrb[0].mxu0
  %v555 = vadd.f32 0.0, %v554
  %556 = vmatprep.mubr.bf16.mxu0 %v359
  %557 = vmatmul.mubr.bf16.gmra.mrb[0].mxu0 %v130
  %v558 = vpop.f32.mrb[0].mxu0
  %v559 = vadd.f32 0.0, %v558
  %v560 = vpop.f32.mrb[0].mxu0
  %v561 = vadd.f32 0.0, %v560
  %v562 = vpop.f32.mrb[0].mxu0
  %v563 = vadd.f32 0.0, %v562
  %v564 = vpop.f32.mrb[0].mxu0
  %v565 = vadd.f32 0.0, %v564
  %566 = vdwg.mxu0
  %v567 = vld [vmem:[%s1] sm:$0xff]
  %v568 = vld [vmem:[%s1 + $0x8] sm:$0xff]
  %v569 = vld [vmem:[%s1 + $0x10] sm:$0xff]
  %v570 = vld [vmem:[%s1 + $0x18] sm:$0xff]
  %v571 = vld [vmem:[%s1 + $0x20] sm:$0xff]
  %v572 = vld [vmem:[%s1 + $0x28] sm:$0xff]
  %v573 = vld [vmem:[%s1 + $0x30] sm:$0xff]
  %v574 = vld [vmem:[%s1 + $0x38] sm:$0xff]
  %v575 = vld [vmem:[%s1 + $0x40] sm:$0xff]
  %v576 = vld [vmem:[%s1 + $0x48] sm:$0xff]
  %v577 = vld [vmem:[%s1 + $0x50] sm:$0xff]
  %v578 = vld [vmem:[%s1 + $0x58] sm:$0xff]
  %v579 = vld [vmem:[%s1 + $0x60] sm:$0xff]
  %v580 = vld [vmem:[%s1 + $0x68] sm:$0xff]
  %v595 = vunpack.c.l.b16 %v567
  %v596 = vunpack.c.h.b16 %v567
  %v597 = vunpack.c.l.b16 %v568
  %v598 = vunpack.c.h.b16 %v568
  %v599 = vunpack.c.l.b16 %v569
  %v600 = vunpack.c.h.b16 %v569
  %v601 = vunpack.c.l.b16 %v570
  %v602 = vunpack.c.h.b16 %v570
  %v603 = vunpack.c.l.b16 %v571
  %v604 = vunpack.c.h.b16 %v571
  %v605 = vunpack.c.l.b16 %v572
  %v606 = vunpack.c.h.b16 %v572
  %v607 = vunpack.c.l.b16 %v573
  %v608 = vunpack.c.h.b16 %v573
  %v609 = vunpack.c.l.b16 %v574
  %v610 = vunpack.c.h.b16 %v574
  %v611 = vunpack.c.l.b16 %v575
  %v612 = vunpack.c.h.b16 %v575
  %v613 = vunpack.c.l.b16 %v576
  %v614 = vunpack.c.h.b16 %v576
  %v615 = vunpack.c.l.b16 %v577
  %v616 = vunpack.c.h.b16 %v577
  %v617 = vunpack.c.l.b16 %v578
  %v618 = vunpack.c.h.b16 %v578
  %v619 = vunpack.c.l.b16 %v579
  %v620 = vunpack.c.h.b16 %v579
  %v621 = vunpack.c.l.b16 %v580
  %v622 = vunpack.c.h.b16 %v580
  %v623 = vpack.c.b16 %v597, %v595
  %v624 = vpack.c.b16 %v598, %v596
  %v625 = vpack.c.b16 %v601, %v599
  %v626 = vpack.c.b16 %v602, %v600
  %v627 = vpack.c.b16 %v605, %v603
  %v628 = vpack.c.b16 %v606, %v604
  %v629 = vpack.c.b16 %v609, %v607
  %v630 = vpack.c.b16 %v610, %v608
  %v631 = vpack.c.b16 %v613, %v611
  %v632 = vpack.c.b16 %v614, %v612
  %v633 = vpack.c.b16 %v617, %v615
  %v634 = vpack.c.b16 %v618, %v616
  %v635 = vpack.c.b16 %v621, %v619
  %v636 = vpack.c.b16 %v622, %v620
  %v645 = vsel %vm339, %v624, 0
  %v648 = vsel %vm339, %v626, 0
  %v651 = vsel %vm339, %v628, 0
  %v654 = vsel %vm339, %v630, 0
  %v657 = vsel %vm339, %v632, 0
  %v660 = vsel %vm339, %v634, 0
  %v663 = vsel %vm339, %v636, 0
  %665 = vmatprep.subr.bf16.mxu0 %v260
  %666 = vmatpush1.bf16.msra.mxu0 %v259
  %667 = vmatprep.subr.bf16.mxu0 %v264
  %668 = vmatpush1.bf16.msra.mxu0 %v263
  %669 = vmatprep.subr.bf16.mxu0 %v268
  %670 = vmatpush1.bf16.msra.mxu0 %v267
  %671 = vmatprep.subr.bf16.mxu0 %v272
  %672 = vmatpush1.bf16.msra.mxu0 %v271
  %673 = vmatprep.subr.bf16.mxu0 %v276
  %674 = vmatpush1.bf16.msra.mxu0 %v275
  %675 = vmatprep.subr.bf16.mxu0 %v280
  %676 = vmatpush1.bf16.msra.mxu0 %v279
  %677 = vmatprep.subr.bf16.mxu0 %v284
  %678 = vmatpush1.bf16.msra.mxu0 %v283
  %679 = vmatprep.subr.bf16.mxu0 %v288
  %680 = vmatpush1.bf16.msra.mxu0 %v287
  %681 = vmatprep.subr.bf16.mxu0 %v292
  %682 = vmatpush1.bf16.msra.mxu0 %v291
  %683 = vmatprep.subr.bf16.mxu0 %v296
  %684 = vmatpush1.bf16.msra.mxu0 %v295
  %685 = vmatprep.subr.bf16.mxu0 0
  %686 = vmatpush1.bf16.msra.mxu0 0
  %687 = vmatprep.subr.bf16.mxu0 0
  %688 = vmatpush1.bf16.msra.mxu0 0
  %689 = vmatprep.subr.bf16.mxu0 0
  %690 = vmatpush1.bf16.msra.mxu0 0
  %691 = vmatprep.subr.bf16.mxu0 0
  %692 = vmatpush1.bf16.msra.mxu0 0
  %693 = vmatprep.subr.bf16.mxu0 0
  %694 = vmatpush1.bf16.msra.mxu0 0
  %695 = vmatprep.subr.bf16.mxu0 0
  %696 = vmatpush1.bf16.msra.mxu0 0
  %697 = vmatprep.mubr.bf16.mxu0 %v645
  %698 = vmatmul.mubr.bf16.gmra.mrb[0].mxu0 %v623
  %v699 = vpop.f32.mrb[0].mxu0
  %v700 = vadd.f32 0.0, %v699
  %v701 = vpop.f32.mrb[0].mxu0
  %v702 = vadd.f32 0.0, %v701
  %v703 = vpop.f32.mrb[0].mxu0
  %v704 = vadd.f32 0.0, %v703
  %v705 = vpop.f32.mrb[0].mxu0
  %v706 = vadd.f32 0.0, %v705
  %707 = vmatprep.mubr.bf16.mxu0 %v648
  %708 = vmatmul.mubr.bf16.gmra.mrb[0].mxu0 %v625
  %v709 = vpop.f32.mrb[0].mxu0
  %v710 = vadd.f32 0.0, %v709
  %v711 = vpop.f32.mrb[0].mxu0
  %v712 = vadd.f32 0.0, %v711
  %v713 = vpop.f32.mrb[0].mxu0
  %v714 = vadd.f32 0.0, %v713
  %v715 = vpop.f32.mrb[0].mxu0
  %v716 = vadd.f32 0.0, %v715
  %717 = vmatprep.mubr.bf16.mxu0 %v651
  %718 = vmatmul.mubr.bf16.gmra.mrb[0].mxu0 %v627
  %v719 = vpop.f32.mrb[0].mxu0
  %v720 = vadd.f32 0.0, %v719
  %v721 = vpop.f32.mrb[0].mxu0
  %v722 = vadd.f32 0.0, %v721
  %v723 = vpop.f32.mrb[0].mxu0
  %v724 = vadd.f32 0.0, %v723
  %v725 = vpop.f32.mrb[0].mxu0
  %v726 = vadd.f32 0.0, %v725
  %727 = vmatprep.mubr.bf16.mxu0 %v654
  %728 = vmatmul.mubr.bf16.gmra.mrb[0].mxu0 %v629
  %v729 = vpop.f32.mrb[0].mxu0
  %v730 = vadd.f32 0.0, %v729
  %v731 = vpop.f32.mrb[0].mxu0
  %v732 = vadd.f32 0.0, %v731
  %v733 = vpop.f32.mrb[0].mxu0
  %v734 = vadd.f32 0.0, %v733
  %v735 = vpop.f32.mrb[0].mxu0
  %v736 = vadd.f32 0.0, %v735
  %737 = vmatprep.mubr.bf16.mxu0 %v657
  %738 = vmatmul.mubr.bf16.gmra.mrb[0].mxu0 %v631
  %v739 = vpop.f32.mrb[0].mxu0
  %v740 = vadd.f32 0.0, %v739
  %v741 = vpop.f32.mrb[0].mxu0
  %v742 = vadd.f32 0.0, %v741
  %v743 = vpop.f32.mrb[0].mxu0
  %v744 = vadd.f32 0.0, %v743
  %v745 = vpop.f32.mrb[0].mxu0
  %v746 = vadd.f32 0.0, %v745
  %747 = vmatprep.mubr.bf16.mxu0 %v660
  %748 = vmatmul.mubr.bf16.gmra.mrb[0].mxu0 %v633
  %v749 = vpop.f32.mrb[0].mxu0
  %v750 = vadd.f32 0.0, %v749
  %v751 = vpop.f32.mrb[0].mxu0
  %v752 = vadd.f32 0.0, %v751
  %v753 = vpop.f32.mrb[0].mxu0
  %v754 = vadd.f32 0.0, %v753
  %v755 = vpop.f32.mrb[0].mxu0
  %v756 = vadd.f32 0.0, %v755
  %757 = vmatprep.mubr.bf16.mxu0 %v663
  %758 = vmatmul.mubr.bf16.gmra.mrb[0].mxu0 %v635
  %v759 = vpop.f32.mrb[0].mxu0
  %v760 = vadd.f32 0.0, %v759
  %v761 = vpop.f32.mrb[0].mxu0
  %v762 = vadd.f32 0.0, %v761
  %v763 = vpop.f32.mrb[0].mxu0
  %v764 = vadd.f32 0.0, %v763
  %v765 = vpop.f32.mrb[0].mxu0
  %v766 = vadd.f32 0.0, %v765
  %767 = vdwg.mxu0
  %768 = vmatprep.subr.bf16.mxu0 %v262
  %769 = vmatpush1.bf16.msra.mxu0 %v261
  %770 = vmatprep.subr.bf16.mxu0 %v266
  %771 = vmatpush1.bf16.msra.mxu0 %v265
  %772 = vmatprep.subr.bf16.mxu0 %v270
  %773 = vmatpush1.bf16.msra.mxu0 %v269
  %774 = vmatprep.subr.bf16.mxu0 %v274
  %775 = vmatpush1.bf16.msra.mxu0 %v273
  %776 = vmatprep.subr.bf16.mxu0 %v278
  %777 = vmatpush1.bf16.msra.mxu0 %v277
  %778 = vmatprep.subr.bf16.mxu0 %v282
  %779 = vmatpush1.bf16.msra.mxu0 %v281
  %780 = vmatprep.subr.bf16.mxu0 %v286
  %781 = vmatpush1.bf16.msra.mxu0 %v285
  %782 = vmatprep.subr.bf16.mxu0 %v290
  %783 = vmatpush1.bf16.msra.mxu0 %v289
  %784 = vmatprep.subr.bf16.mxu0 %v294
  %785 = vmatpush1.bf16.msra.mxu0 %v293
  %786 = vmatprep.subr.bf16.mxu0 %v298
  %787 = vmatpush1.bf16.msra.mxu0 %v297
  %788 = vmatprep.subr.bf16.mxu0 0
  %789 = vmatpush1.bf16.msra.mxu0 0
  %790 = vmatprep.subr.bf16.mxu0 0
  %791 = vmatpush1.bf16.msra.mxu0 0
  %792 = vmatprep.subr.bf16.mxu0 0
  %793 = vmatpush1.bf16.msra.mxu0 0
  %794 = vmatprep.subr.bf16.mxu0 0
  %795 = vmatpush1.bf16.msra.mxu0 0
  %796 = vmatprep.subr.bf16.mxu0 0
  %797 = vmatpush1.bf16.msra.mxu0 0
  %798 = vmatprep.subr.bf16.mxu0 0
  %799 = vmatpush1.bf16.msra.mxu0 0
  %800 = vmatprep.mubr.bf16.mxu0 %v645
  %801 = vmatmul.mubr.bf16.gmra.mrb[0].mxu0 %v623
  %v802 = vpop.f32.mrb[0].mxu0
  %v803 = vadd.f32 0.0, %v802
  %v804 = vpop.f32.mrb[0].mxu0
  %v805 = vadd.f32 0.0, %v804
  %v806 = vpop.f32.mrb[0].mxu0
  %v807 = vadd.f32 0.0, %v806
  %v808 = vpop.f32.mrb[0].mxu0
  %v809 = vadd.f32 0.0, %v808
  %810 = vmatprep.mubr.bf16.mxu0 %v648
  %811 = vmatmul.mubr.bf16.gmra.mrb[0].mxu0 %v625
  %v812 = vpop.f32.mrb[0].mxu0
  %v813 = vadd.f32 0.0, %v812
  %v814 = vpop.f32.mrb[0].mxu0
  %v815 = vadd.f32 0.0, %v814
  %v816 = vpop.f32.mrb[0].mxu0
  %v817 = vadd.f32 0.0, %v816
  %v818 = vpop.f32.mrb[0].mxu0
  %v819 = vadd.f32 0.0, %v818
  %820 = vmatprep.mubr.bf16.mxu0 %v651
  %821 = vmatmul.mubr.bf16.gmra.mrb[0].mxu0 %v627
  %v822 = vpop.f32.mrb[0].mxu0
  %v823 = vadd.f32 0.0, %v822
  %v824 = vpop.f32.mrb[0].mxu0
  %v825 = vadd.f32 0.0, %v824
  %v826 = vpop.f32.mrb[0].mxu0
  %v827 = vadd.f32 0.0, %v826
  %v828 = vpop.f32.mrb[0].mxu0
  %v829 = vadd.f32 0.0, %v828
  %830 = vmatprep.mubr.bf16.mxu0 %v654
  %831 = vmatmul.mubr.bf16.gmra.mrb[0].mxu0 %v629
  %v832 = vpop.f32.mrb[0].mxu0
  %v833 = vadd.f32 0.0, %v832
  %v834 = vpop.f32.mrb[0].mxu0
  %v835 = vadd.f32 0.0, %v834
  %v836 = vpop.f32.mrb[0].mxu0
  %v837 = vadd.f32 0.0, %v836
  %v838 = vpop.f32.mrb[0].mxu0
  %v839 = vadd.f32 0.0, %v838
  %840 = vmatprep.mubr.bf16.mxu0 %v657
  %841 = vmatmul.mubr.bf16.gmra.mrb[0].mxu0 %v631
  %v842 = vpop.f32.mrb[0].mxu0
  %v843 = vadd.f32 0.0, %v842
  %v844 = vpop.f32.mrb[0].mxu0
  %v845 = vadd.f32 0.0, %v844
  %v846 = vpop.f32.mrb[0].mxu0
  %v847 = vadd.f32 0.0, %v846
  %v848 = vpop.f32.mrb[0].mxu0
  %v849 = vadd.f32 0.0, %v848
  %850 = vmatprep.mubr.bf16.mxu0 %v660
  %851 = vmatmul.mubr.bf16.gmra.mrb[0].mxu0 %v633
  %v852 = vpop.f32.mrb[0].mxu0
  %v853 = vadd.f32 0.0, %v852
  %v854 = vpop.f32.mrb[0].mxu0
  %v855 = vadd.f32 0.0, %v854
  %v856 = vpop.f32.mrb[0].mxu0
  %v857 = vadd.f32 0.0, %v856
  %v858 = vpop.f32.mrb[0].mxu0
  %v859 = vadd.f32 0.0, %v858
  %860 = vmatprep.mubr.bf16.mxu0 %v663
  %861 = vmatmul.mubr.bf16.gmra.mrb[0].mxu0 %v635
  %v862 = vpop.f32.mrb[0].mxu0
  %v863 = vadd.f32 0.0, %v862
  %v864 = vpop.f32.mrb[0].mxu0
  %v865 = vadd.f32 0.0, %v864
  %v866 = vpop.f32.mrb[0].mxu0
  %v867 = vadd.f32 0.0, %v866
  %v868 = vpop.f32.mrb[0].mxu0
  %v869 = vadd.f32 0.0, %v868
  %870 = vdwg.mxu0
  %871 = vst [vmem:[%s4] sm:$0xff] %v396
  %872 = vst [vmem:[%s4 + $0x8] sm:$0xff] %v398
  %873 = vst [vmem:[%s4 + $0x10] sm:$0xff] %v499
  %874 = vst [vmem:[%s4 + $0x18] sm:$0xff] %v501
  %875 = vst [vmem:[%s4 + $0x20] sm:$0xff] %v400
  %876 = vst [vmem:[%s4 + $0x28] sm:$0xff] %v402
  %877 = vst [vmem:[%s4 + $0x30] sm:$0xff] %v503
  %878 = vst [vmem:[%s4 + $0x38] sm:$0xff] %v505
  %879 = vst [vmem:[%s4 + $0x40] sm:$0xff] %v406
  %880 = vst [vmem:[%s4 + $0x48] sm:$0xff] %v408
  %881 = vst [vmem:[%s4 + $0x50] sm:$0xff] %v509
  %882 = vst [vmem:[%s4 + $0x58] sm:$0xff] %v511
  %883 = vst [vmem:[%s4 + $0x60] sm:$0xff] %v410
  %884 = vst [vmem:[%s4 + $0x68] sm:$0xff] %v412
  %885 = vst [vmem:[%s4 + $0x70] sm:$0xff] %v513
  %886 = vst [vmem:[%s4 + $0x78] sm:$0xff] %v515
  %887 = vst [vmem:[%s4 + $0x80] sm:$0xff] %v416
  %888 = vst [vmem:[%s4 + $0x88] sm:$0xff] %v418
  %889 = vst [vmem:[%s4 + $0x90] sm:$0xff] %v519
  %890 = vst [vmem:[%s4 + $0x98] sm:$0xff] %v521
  %891 = vst [vmem:[%s4 + $0xa0] sm:$0xff] %v420
  %892 = vst [vmem:[%s4 + $0xa8] sm:$0xff] %v422
  %893 = vst [vmem:[%s4 + $0xb0] sm:$0xff] %v523
  %894 = vst [vmem:[%s4 + $0xb8] sm:$0xff] %v525
  %895 = vst [vmem:[%s4 + $0xc0] sm:$0xff] %v426
  %896 = vst [vmem:[%s4 + $0xc8] sm:$0xff] %v428
  %897 = vst [vmem:[%s4 + $0xd0] sm:$0xff] %v529
  %898 = vst [vmem:[%s4 + $0xd8] sm:$0xff] %v531
  %899 = vst [vmem:[%s4 + $0xe0] sm:$0xff] %v430
  %900 = vst [vmem:[%s4 + $0xe8] sm:$0xff] %v432
  %901 = vst [vmem:[%s4 + $0xf0] sm:$0xff] %v533
  %902 = vst [vmem:[%s4 + $0xf8] sm:$0xff] %v535
  %903 = vst [vmem:[%s4 + $0x100] sm:$0xff] %v436
  %904 = vst [vmem:[%s4 + $0x108] sm:$0xff] %v438
  %905 = vst [vmem:[%s4 + $0x110] sm:$0xff] %v539
  %906 = vst [vmem:[%s4 + $0x118] sm:$0xff] %v541
  %907 = vst [vmem:[%s4 + $0x120] sm:$0xff] %v440
  %908 = vst [vmem:[%s4 + $0x128] sm:$0xff] %v442
  %909 = vst [vmem:[%s4 + $0x130] sm:$0xff] %v543
  %910 = vst [vmem:[%s4 + $0x138] sm:$0xff] %v545
  %911 = vst [vmem:[%s4 + $0x140] sm:$0xff] %v446
  %912 = vst [vmem:[%s4 + $0x148] sm:$0xff] %v448
  %913 = vst [vmem:[%s4 + $0x150] sm:$0xff] %v549
  %914 = vst [vmem:[%s4 + $0x158] sm:$0xff] %v551
  %915 = vst [vmem:[%s4 + $0x160] sm:$0xff] %v450
  %916 = vst [vmem:[%s4 + $0x168] sm:$0xff] %v452
  %917 = vst [vmem:[%s4 + $0x170] sm:$0xff] %v553
  %918 = vst [vmem:[%s4 + $0x178] sm:$0xff] %v555
  %919 = vst [vmem:[%s4 + $0x180] sm:$0xff] %v456
  %920 = vst [vmem:[%s4 + $0x188] sm:$0xff] %v458
  %921 = vst [vmem:[%s4 + $0x190] sm:$0xff] %v559
  %922 = vst [vmem:[%s4 + $0x198] sm:$0xff] %v561
  %923 = vst [vmem:[%s4 + $0x1a0] sm:$0xff] %v460
  %924 = vst [vmem:[%s4 + $0x1a8] sm:$0xff] %v462
  %925 = vst [vmem:[%s4 + $0x1b0] sm:$0xff] %v563
  %926 = vst [vmem:[%s4 + $0x1b8] sm:$0xff] %v565
  %927 = vst [vmem:[%s5] sm:$0xff] %v700
  %928 = vst [vmem:[%s5 + $0x8] sm:$0xff] %v702
  %929 = vst [vmem:[%s5 + $0x10] sm:$0xff] %v803
  %930 = vst [vmem:[%s5 + $0x18] sm:$0xff] %v805
  %931 = vst [vmem:[%s5 + $0x20] sm:$0xff] %v704
  %932 = vst [vmem:[%s5 + $0x28] sm:$0xff] %v706
  %933 = vst [vmem:[%s5 + $0x30] sm:$0xff] %v807
  %934 = vst [vmem:[%s5 + $0x38] sm:$0xff] %v809
  %935 = vst [vmem:[%s5 + $0x40] sm:$0xff] %v710
  %936 = vst [vmem:[%s5 + $0x48] sm:$0xff] %v712
  %937 = vst [vmem:[%s5 + $0x50] sm:$0xff] %v813
  %938 = vst [vmem:[%s5 + $0x58] sm:$0xff] %v815
  %939 = vst [vmem:[%s5 + $0x60] sm:$0xff] %v714
  %940 = vst [vmem:[%s5 + $0x68] sm:$0xff] %v716
  %941 = vst [vmem:[%s5 + $0x70] sm:$0xff] %v817
  %942 = vst [vmem:[%s5 + $0x78] sm:$0xff] %v819
  %943 = vst [vmem:[%s5 + $0x80] sm:$0xff] %v720
  %944 = vst [vmem:[%s5 + $0x88] sm:$0xff] %v722
  %945 = vst [vmem:[%s5 + $0x90] sm:$0xff] %v823
  %946 = vst [vmem:[%s5 + $0x98] sm:$0xff] %v825
  %947 = vst [vmem:[%s5 + $0xa0] sm:$0xff] %v724
  %948 = vst [vmem:[%s5 + $0xa8] sm:$0xff] %v726
  %949 = vst [vmem:[%s5 + $0xb0] sm:$0xff] %v827
  %950 = vst [vmem:[%s5 + $0xb8] sm:$0xff] %v829
  %951 = vst [vmem:[%s5 + $0xc0] sm:$0xff] %v730
  %952 = vst [vmem:[%s5 + $0xc8] sm:$0xff] %v732
  %953 = vst [vmem:[%s5 + $0xd0] sm:$0xff] %v833
  %954 = vst [vmem:[%s5 + $0xd8] sm:$0xff] %v835
  %955 = vst [vmem:[%s5 + $0xe0] sm:$0xff] %v734
  %956 = vst [vmem:[%s5 + $0xe8] sm:$0xff] %v736
  %957 = vst [vmem:[%s5 + $0xf0] sm:$0xff] %v837
  %958 = vst [vmem:[%s5 + $0xf8] sm:$0xff] %v839
  %959 = vst [vmem:[%s5 + $0x100] sm:$0xff] %v740
  %960 = vst [vmem:[%s5 + $0x108] sm:$0xff] %v742
  %961 = vst [vmem:[%s5 + $0x110] sm:$0xff] %v843
  %962 = vst [vmem:[%s5 + $0x118] sm:$0xff] %v845
  %963 = vst [vmem:[%s5 + $0x120] sm:$0xff] %v744
  %964 = vst [vmem:[%s5 + $0x128] sm:$0xff] %v746
  %965 = vst [vmem:[%s5 + $0x130] sm:$0xff] %v847
  %966 = vst [vmem:[%s5 + $0x138] sm:$0xff] %v849
  %967 = vst [vmem:[%s5 + $0x140] sm:$0xff] %v750
  %968 = vst [vmem:[%s5 + $0x148] sm:$0xff] %v752
  %969 = vst [vmem:[%s5 + $0x150] sm:$0xff] %v853
  %970 = vst [vmem:[%s5 + $0x158] sm:$0xff] %v855
  %971 = vst [vmem:[%s5 + $0x160] sm:$0xff] %v754
  %972 = vst [vmem:[%s5 + $0x168] sm:$0xff] %v756
  %973 = vst [vmem:[%s5 + $0x170] sm:$0xff] %v857
  %974 = vst [vmem:[%s5 + $0x178] sm:$0xff] %v859
  %975 = vst [vmem:[%s5 + $0x180] sm:$0xff] %v760
  %976 = vst [vmem:[%s5 + $0x188] sm:$0xff] %v762
  %977 = vst [vmem:[%s5 + $0x190] sm:$0xff] %v863
  %978 = vst [vmem:[%s5 + $0x198] sm:$0xff] %v865
  %979 = vst [vmem:[%s5 + $0x1a0] sm:$0xff] %v764
  %980 = vst [vmem:[%s5 + $0x1a8] sm:$0xff] %v766
  %981 = vst [vmem:[%s5 + $0x1b0] sm:$0xff] %v867
  %982 = vst [vmem:[%s5 + $0x1b8] sm:$0xff] %v869
  %v983 = vadd.f32 %v396, %v400
  %v984 = vadd.f32 %v983, %v406
  %v985 = vadd.f32 %v984, %v410
  %v986 = vadd.f32 %v985, %v416
  %v987 = vadd.f32 %v986, %v420
  %v988 = vadd.f32 %v987, %v426
  %v989 = vadd.f32 %v988, %v430
  %v990 = vadd.f32 %v989, %v436
  %v991 = vadd.f32 %v990, %v440
  %v992 = vadd.f32 %v991, %v446
  %v993 = vadd.f32 %v992, %v450
  %v994 = vadd.f32 %v993, %v456
  %v995 = vadd.f32 %v994, %v460
  %v996 = vrot.slane %v995, 4
  %v997 = vadd.f32 %v995, %v996
  %v998 = vrot.slane %v997, 2
  %v999 = vadd.f32 %v997, %v998
  %v1000 = vrot.slane %v999, 1
  %v1001 = vadd.f32 %v999, %v1000
  %v1002 = vadd.f32 %v398, %v402
  %v1003 = vadd.f32 %v1002, %v408
  %v1004 = vadd.f32 %v1003, %v412
  %v1005 = vadd.f32 %v1004, %v418
  %v1006 = vadd.f32 %v1005, %v422
  %v1007 = vadd.f32 %v1006, %v428
  %v1008 = vadd.f32 %v1007, %v432
  %v1009 = vadd.f32 %v1008, %v438
  %v1010 = vadd.f32 %v1009, %v442
  %v1011 = vadd.f32 %v1010, %v448
  %v1012 = vadd.f32 %v1011, %v452
  %v1013 = vadd.f32 %v1012, %v458
  %v1014 = vadd.f32 %v1013, %v462
  %v1015 = vrot.slane %v1014, 4
  %v1016 = vadd.f32 %v1014, %v1015
  %v1017 = vrot.slane %v1016, 2
  %v1018 = vadd.f32 %v1016, %v1017
  %v1019 = vrot.slane %v1018, 1
  %v1020 = vadd.f32 %v1018, %v1019
  %v1021 = vadd.f32 %v499, %v503
  %v1022 = vadd.f32 %v1021, %v509
  %v1023 = vadd.f32 %v1022, %v513
  %v1024 = vadd.f32 %v1023, %v519
  %v1025 = vadd.f32 %v1024, %v523
  %v1026 = vadd.f32 %v1025, %v529
  %v1027 = vadd.f32 %v1026, %v533
  %v1028 = vadd.f32 %v1027, %v539
  %v1029 = vadd.f32 %v1028, %v543
  %v1030 = vadd.f32 %v1029, %v549
  %v1031 = vadd.f32 %v1030, %v553
  %v1032 = vadd.f32 %v1031, %v559
  %v1033 = vadd.f32 %v1032, %v563
  %v1034 = vrot.slane %v1033, 4
  %v1035 = vadd.f32 %v1033, %v1034
  %v1036 = vrot.slane %v1035, 2
  %v1037 = vadd.f32 %v1035, %v1036
  %v1038 = vrot.slane %v1037, 1
  %v1039 = vadd.f32 %v1037, %v1038
  %v1040 = vadd.f32 %v501, %v505
  %v1041 = vadd.f32 %v1040, %v511
  %v1042 = vadd.f32 %v1041, %v515
  %v1043 = vadd.f32 %v1042, %v521
  %v1044 = vadd.f32 %v1043, %v525
  %v1045 = vadd.f32 %v1044, %v531
  %v1046 = vadd.f32 %v1045, %v535
  %v1047 = vadd.f32 %v1046, %v541
  %v1048 = vadd.f32 %v1047, %v545
  %v1049 = vadd.f32 %v1048, %v551
  %v1050 = vadd.f32 %v1049, %v555
  %v1051 = vadd.f32 %v1050, %v561
  %v1052 = vadd.f32 %v1051, %v565
  %v1053 = vrot.slane %v1052, 4
  %v1054 = vadd.f32 %v1052, %v1053
  %v1055 = vrot.slane %v1054, 2
  %v1056 = vadd.f32 %v1054, %v1055
  %v1057 = vrot.slane %v1056, 1
  %v1058 = vadd.f32 %v1056, %v1057
  %v1059 = vadd.f32 %v700, %v704
  %v1060 = vadd.f32 %v1059, %v710
  %v1061 = vadd.f32 %v1060, %v714
  %v1062 = vadd.f32 %v1061, %v720
  %v1063 = vadd.f32 %v1062, %v724
  %v1064 = vadd.f32 %v1063, %v730
  %v1065 = vadd.f32 %v1064, %v734
  %v1066 = vadd.f32 %v1065, %v740
  %v1067 = vadd.f32 %v1066, %v744
  %v1068 = vadd.f32 %v1067, %v750
  %v1069 = vadd.f32 %v1068, %v754
  %v1070 = vadd.f32 %v1069, %v760
  %v1071 = vadd.f32 %v1070, %v764
  %v1072 = vrot.slane %v1071, 4
  %v1073 = vadd.f32 %v1071, %v1072
  %v1074 = vrot.slane %v1073, 2
  %v1075 = vadd.f32 %v1073, %v1074
  %v1076 = vrot.slane %v1075, 1
  %v1077 = vadd.f32 %v1075, %v1076
  %v1078 = vadd.f32 %v702, %v706
  %v1079 = vadd.f32 %v1078, %v712
  %v1080 = vadd.f32 %v1079, %v716
  %v1081 = vadd.f32 %v1080, %v722
  %v1082 = vadd.f32 %v1081, %v726
  %v1083 = vadd.f32 %v1082, %v732
  %v1084 = vadd.f32 %v1083, %v736
  %v1085 = vadd.f32 %v1084, %v742
  %v1086 = vadd.f32 %v1085, %v746
  %v1087 = vadd.f32 %v1086, %v752
  %v1088 = vadd.f32 %v1087, %v756
  %v1089 = vadd.f32 %v1088, %v762
  %v1090 = vadd.f32 %v1089, %v766
  %v1091 = vrot.slane %v1090, 4
  %v1092 = vadd.f32 %v1090, %v1091
  %v1093 = vrot.slane %v1092, 2
  %v1094 = vadd.f32 %v1092, %v1093
  %v1095 = vrot.slane %v1094, 1
  %v1096 = vadd.f32 %v1094, %v1095
  %v1097 = vadd.f32 %v803, %v807
  %v1098 = vadd.f32 %v1097, %v813
  %v1099 = vadd.f32 %v1098, %v817
  %v1100 = vadd.f32 %v1099, %v823
  %v1101 = vadd.f32 %v1100, %v827
  %v1102 = vadd.f32 %v1101, %v833
  %v1103 = vadd.f32 %v1102, %v837
  %v1104 = vadd.f32 %v1103, %v843
  %v1105 = vadd.f32 %v1104, %v847
  %v1106 = vadd.f32 %v1105, %v853
  %v1107 = vadd.f32 %v1106, %v857
  %v1108 = vadd.f32 %v1107, %v863
  %v1109 = vadd.f32 %v1108, %v867
  %v1110 = vrot.slane %v1109, 4
  %v1111 = vadd.f32 %v1109, %v1110
  %v1112 = vrot.slane %v1111, 2
  %v1113 = vadd.f32 %v1111, %v1112
  %v1114 = vrot.slane %v1113, 1
  %v1115 = vadd.f32 %v1113, %v1114
  %v1116 = vadd.f32 %v805, %v809
  %v1117 = vadd.f32 %v1116, %v815
  %v1118 = vadd.f32 %v1117, %v819
  %v1119 = vadd.f32 %v1118, %v825
  %v1120 = vadd.f32 %v1119, %v829
  %v1121 = vadd.f32 %v1120, %v835
  %v1122 = vadd.f32 %v1121, %v839
  %v1123 = vadd.f32 %v1122, %v845
  %v1124 = vadd.f32 %v1123, %v849
  %v1125 = vadd.f32 %v1124, %v855
  %v1126 = vadd.f32 %v1125, %v859
  %v1127 = vadd.f32 %v1126, %v865
  %v1128 = vadd.f32 %v1127, %v869
  %v1129 = vrot.slane %v1128, 4
  %v1130 = vadd.f32 %v1128, %v1129
  %v1131 = vrot.slane %v1130, 2
  %v1132 = vadd.f32 %v1130, %v1131
  %v1133 = vrot.slane %v1132, 1
  %v1134 = vadd.f32 %v1132, %v1133
  %v1135 = vadd.f32 %v1001, %v1077
  %v1136 = vadd.f32 %v1020, %v1096
  %v1137 = vadd.f32 %v1039, %v1115
  %v1138 = vadd.f32 %v1058, %v1134
  %v1139 = vmul.f32 %v396, %v396
  %v1140 = vmul.f32 %v398, %v398
  %v1141 = vmul.f32 %v499, %v499
  %v1142 = vmul.f32 %v501, %v501
  %v1143 = vmul.f32 %v400, %v400
  %v1144 = vmul.f32 %v402, %v402
  %v1145 = vmul.f32 %v503, %v503
  %v1146 = vmul.f32 %v505, %v505
  %v1147 = vmul.f32 %v406, %v406
  %v1148 = vmul.f32 %v408, %v408
  %v1149 = vmul.f32 %v509, %v509
  %v1150 = vmul.f32 %v511, %v511
  %v1151 = vmul.f32 %v410, %v410
  %v1152 = vmul.f32 %v412, %v412
  %v1153 = vmul.f32 %v513, %v513
  %v1154 = vmul.f32 %v515, %v515
  %v1155 = vmul.f32 %v416, %v416
  %v1156 = vmul.f32 %v418, %v418
  %v1157 = vmul.f32 %v519, %v519
  %v1158 = vmul.f32 %v521, %v521
  %v1159 = vmul.f32 %v420, %v420
  %v1160 = vmul.f32 %v422, %v422
  %v1161 = vmul.f32 %v523, %v523
  %v1162 = vmul.f32 %v525, %v525
  %v1163 = vmul.f32 %v426, %v426
  %v1164 = vmul.f32 %v428, %v428
  %v1165 = vmul.f32 %v529, %v529
  %v1166 = vmul.f32 %v531, %v531
  %v1167 = vmul.f32 %v430, %v430
  %v1168 = vmul.f32 %v432, %v432
  %v1169 = vmul.f32 %v533, %v533
  %v1170 = vmul.f32 %v535, %v535
  %v1171 = vmul.f32 %v436, %v436
  %v1172 = vmul.f32 %v438, %v438
  %v1173 = vmul.f32 %v539, %v539
  %v1174 = vmul.f32 %v541, %v541
  %v1175 = vmul.f32 %v440, %v440
  %v1176 = vmul.f32 %v442, %v442
  %v1177 = vmul.f32 %v543, %v543
  %v1178 = vmul.f32 %v545, %v545
  %v1179 = vmul.f32 %v446, %v446
  %v1180 = vmul.f32 %v448, %v448
  %v1181 = vmul.f32 %v549, %v549
  %v1182 = vmul.f32 %v551, %v551
  %v1183 = vmul.f32 %v450, %v450
  %v1184 = vmul.f32 %v452, %v452
  %v1185 = vmul.f32 %v553, %v553
  %v1186 = vmul.f32 %v555, %v555
  %v1187 = vmul.f32 %v456, %v456
  %v1188 = vmul.f32 %v458, %v458
  %v1189 = vmul.f32 %v559, %v559
  %v1190 = vmul.f32 %v561, %v561
  %v1191 = vmul.f32 %v460, %v460
  %v1192 = vmul.f32 %v462, %v462
  %v1193 = vmul.f32 %v563, %v563
  %v1194 = vmul.f32 %v565, %v565
  %v1195 = vadd.f32 %v1139, %v1143
  %v1196 = vadd.f32 %v1195, %v1147
  %v1197 = vadd.f32 %v1196, %v1151
  %v1198 = vadd.f32 %v1197, %v1155
  %v1199 = vadd.f32 %v1198, %v1159
  %v1200 = vadd.f32 %v1199, %v1163
  %v1201 = vadd.f32 %v1200, %v1167
  %v1202 = vadd.f32 %v1201, %v1171
  %v1203 = vadd.f32 %v1202, %v1175
  %v1204 = vadd.f32 %v1203, %v1179
  %v1205 = vadd.f32 %v1204, %v1183
  %v1206 = vadd.f32 %v1205, %v1187
  %v1207 = vadd.f32 %v1206, %v1191
  %v1208 = vrot.slane %v1207, 4
  %v1209 = vadd.f32 %v1207, %v1208
  %v1210 = vrot.slane %v1209, 2
  %v1211 = vadd.f32 %v1209, %v1210
  %v1212 = vrot.slane %v1211, 1
  %v1213 = vadd.f32 %v1211, %v1212
  %v1214 = vadd.f32 %v1140, %v1144
  %v1215 = vadd.f32 %v1214, %v1148
  %v1216 = vadd.f32 %v1215, %v1152
  %v1217 = vadd.f32 %v1216, %v1156
  %v1218 = vadd.f32 %v1217, %v1160
  %v1219 = vadd.f32 %v1218, %v1164
  %v1220 = vadd.f32 %v1219, %v1168
  %v1221 = vadd.f32 %v1220, %v1172
  %v1222 = vadd.f32 %v1221, %v1176
  %v1223 = vadd.f32 %v1222, %v1180
  %v1224 = vadd.f32 %v1223, %v1184
  %v1225 = vadd.f32 %v1224, %v1188
  %v1226 = vadd.f32 %v1225, %v1192
  %v1227 = vrot.slane %v1226, 4
  %v1228 = vadd.f32 %v1226, %v1227
  %v1229 = vrot.slane %v1228, 2
  %v1230 = vadd.f32 %v1228, %v1229
  %v1231 = vrot.slane %v1230, 1
  %v1232 = vadd.f32 %v1230, %v1231
  %v1233 = vadd.f32 %v1141, %v1145
  %v1234 = vadd.f32 %v1233, %v1149
  %v1235 = vadd.f32 %v1234, %v1153
  %v1236 = vadd.f32 %v1235, %v1157
  %v1237 = vadd.f32 %v1236, %v1161
  %v1238 = vadd.f32 %v1237, %v1165
  %v1239 = vadd.f32 %v1238, %v1169
  %v1240 = vadd.f32 %v1239, %v1173
  %v1241 = vadd.f32 %v1240, %v1177
  %v1242 = vadd.f32 %v1241, %v1181
  %v1243 = vadd.f32 %v1242, %v1185
  %v1244 = vadd.f32 %v1243, %v1189
  %v1245 = vadd.f32 %v1244, %v1193
  %v1246 = vrot.slane %v1245, 4
  %v1247 = vadd.f32 %v1245, %v1246
  %v1248 = vrot.slane %v1247, 2
  %v1249 = vadd.f32 %v1247, %v1248
  %v1250 = vrot.slane %v1249, 1
  %v1251 = vadd.f32 %v1249, %v1250
  %v1252 = vadd.f32 %v1142, %v1146
  %v1253 = vadd.f32 %v1252, %v1150
  %v1254 = vadd.f32 %v1253, %v1154
  %v1255 = vadd.f32 %v1254, %v1158
  %v1256 = vadd.f32 %v1255, %v1162
  %v1257 = vadd.f32 %v1256, %v1166
  %v1258 = vadd.f32 %v1257, %v1170
  %v1259 = vadd.f32 %v1258, %v1174
  %v1260 = vadd.f32 %v1259, %v1178
  %v1261 = vadd.f32 %v1260, %v1182
  %v1262 = vadd.f32 %v1261, %v1186
  %v1263 = vadd.f32 %v1262, %v1190
  %v1264 = vadd.f32 %v1263, %v1194
  %v1265 = vrot.slane %v1264, 4
  %v1266 = vadd.f32 %v1264, %v1265
  %v1267 = vrot.slane %v1266, 2
  %v1268 = vadd.f32 %v1266, %v1267
  %v1269 = vrot.slane %v1268, 1
  %v1270 = vadd.f32 %v1268, %v1269
  %v1271 = vmul.f32 %v700, %v700
  %v1272 = vmul.f32 %v702, %v702
  %v1273 = vmul.f32 %v803, %v803
  %v1274 = vmul.f32 %v805, %v805
  %v1275 = vmul.f32 %v704, %v704
  %v1276 = vmul.f32 %v706, %v706
  %v1277 = vmul.f32 %v807, %v807
  %v1278 = vmul.f32 %v809, %v809
  %v1279 = vmul.f32 %v710, %v710
  %v1280 = vmul.f32 %v712, %v712
  %v1281 = vmul.f32 %v813, %v813
  %v1282 = vmul.f32 %v815, %v815
  %v1283 = vmul.f32 %v714, %v714
  %v1284 = vmul.f32 %v716, %v716
  %v1285 = vmul.f32 %v817, %v817
  %v1286 = vmul.f32 %v819, %v819
  %v1287 = vmul.f32 %v720, %v720
  %v1288 = vmul.f32 %v722, %v722
  %v1289 = vmul.f32 %v823, %v823
  %v1290 = vmul.f32 %v825, %v825
  %v1291 = vmul.f32 %v724, %v724
  %v1292 = vmul.f32 %v726, %v726
  %v1293 = vmul.f32 %v827, %v827
  %v1294 = vmul.f32 %v829, %v829
  %v1295 = vmul.f32 %v730, %v730
  %v1296 = vmul.f32 %v732, %v732
  %v1297 = vmul.f32 %v833, %v833
  %v1298 = vmul.f32 %v835, %v835
  %v1299 = vmul.f32 %v734, %v734
  %v1300 = vmul.f32 %v736, %v736
  %v1301 = vmul.f32 %v837, %v837
  %v1302 = vmul.f32 %v839, %v839
  %v1303 = vmul.f32 %v740, %v740
  %v1304 = vmul.f32 %v742, %v742
  %v1305 = vmul.f32 %v843, %v843
  %v1306 = vmul.f32 %v845, %v845
  %v1307 = vmul.f32 %v744, %v744
  %v1308 = vmul.f32 %v746, %v746
  %v1309 = vmul.f32 %v847, %v847
  %v1310 = vmul.f32 %v849, %v849
  %v1311 = vmul.f32 %v750, %v750
  %v1312 = vmul.f32 %v752, %v752
  %v1313 = vmul.f32 %v853, %v853
  %v1314 = vmul.f32 %v855, %v855
  %v1315 = vmul.f32 %v754, %v754
  %v1316 = vmul.f32 %v756, %v756
  %v1317 = vmul.f32 %v857, %v857
  %v1318 = vmul.f32 %v859, %v859
  %v1319 = vmul.f32 %v760, %v760
  %v1320 = vmul.f32 %v762, %v762
  %v1321 = vmul.f32 %v863, %v863
  %v1322 = vmul.f32 %v865, %v865
  %v1323 = vmul.f32 %v764, %v764
  %v1324 = vmul.f32 %v766, %v766
  %v1325 = vmul.f32 %v867, %v867
  %v1326 = vmul.f32 %v869, %v869
  %v1327 = vadd.f32 %v1271, %v1275
  %v1328 = vadd.f32 %v1327, %v1279
  %v1329 = vadd.f32 %v1328, %v1283
  %v1330 = vadd.f32 %v1329, %v1287
  %v1331 = vadd.f32 %v1330, %v1291
  %v1332 = vadd.f32 %v1331, %v1295
  %v1333 = vadd.f32 %v1332, %v1299
  %v1334 = vadd.f32 %v1333, %v1303
  %v1335 = vadd.f32 %v1334, %v1307
  %v1336 = vadd.f32 %v1335, %v1311
  %v1337 = vadd.f32 %v1336, %v1315
  %v1338 = vadd.f32 %v1337, %v1319
  %v1339 = vadd.f32 %v1338, %v1323
  %v1340 = vrot.slane %v1339, 4
  %v1341 = vadd.f32 %v1339, %v1340
  %v1342 = vrot.slane %v1341, 2
  %v1343 = vadd.f32 %v1341, %v1342
  %v1344 = vrot.slane %v1343, 1
  %v1345 = vadd.f32 %v1343, %v1344
  %v1346 = vadd.f32 %v1272, %v1276
  %v1347 = vadd.f32 %v1346, %v1280
  %v1348 = vadd.f32 %v1347, %v1284
  %v1349 = vadd.f32 %v1348, %v1288
  %v1350 = vadd.f32 %v1349, %v1292
  %v1351 = vadd.f32 %v1350, %v1296
  %v1352 = vadd.f32 %v1351, %v1300
  %v1353 = vadd.f32 %v1352, %v1304
  %v1354 = vadd.f32 %v1353, %v1308
  %v1355 = vadd.f32 %v1354, %v1312
  %v1356 = vadd.f32 %v1355, %v1316
  %v1357 = vadd.f32 %v1356, %v1320
  %v1358 = vadd.f32 %v1357, %v1324
  %v1359 = vrot.slane %v1358, 4
  %v1360 = vadd.f32 %v1358, %v1359
  %v1361 = vrot.slane %v1360, 2
  %v1362 = vadd.f32 %v1360, %v1361
  %v1363 = vrot.slane %v1362, 1
  %v1364 = vadd.f32 %v1362, %v1363
  %v1365 = vadd.f32 %v1273, %v1277
  %v1366 = vadd.f32 %v1365, %v1281
  %v1367 = vadd.f32 %v1366, %v1285
  %v1368 = vadd.f32 %v1367, %v1289
  %v1369 = vadd.f32 %v1368, %v1293
  %v1370 = vadd.f32 %v1369, %v1297
  %v1371 = vadd.f32 %v1370, %v1301
  %v1372 = vadd.f32 %v1371, %v1305
  %v1373 = vadd.f32 %v1372, %v1309
  %v1374 = vadd.f32 %v1373, %v1313
  %v1375 = vadd.f32 %v1374, %v1317
  %v1376 = vadd.f32 %v1375, %v1321
  %v1377 = vadd.f32 %v1376, %v1325
  %v1378 = vrot.slane %v1377, 4
  %v1379 = vadd.f32 %v1377, %v1378
  %v1380 = vrot.slane %v1379, 2
  %v1381 = vadd.f32 %v1379, %v1380
  %v1382 = vrot.slane %v1381, 1
  %v1383 = vadd.f32 %v1381, %v1382
  %v1384 = vadd.f32 %v1274, %v1278
  %v1385 = vadd.f32 %v1384, %v1282
  %v1386 = vadd.f32 %v1385, %v1286
  %v1387 = vadd.f32 %v1386, %v1290
  %v1388 = vadd.f32 %v1387, %v1294
  %v1389 = vadd.f32 %v1388, %v1298
  %v1390 = vadd.f32 %v1389, %v1302
  %v1391 = vadd.f32 %v1390, %v1306
  %v1392 = vadd.f32 %v1391, %v1310
  %v1393 = vadd.f32 %v1392, %v1314
  %v1394 = vadd.f32 %v1393, %v1318
  %v1395 = vadd.f32 %v1394, %v1322
  %v1396 = vadd.f32 %v1395, %v1326
  %v1397 = vrot.slane %v1396, 4
  %v1398 = vadd.f32 %v1396, %v1397
  %v1399 = vrot.slane %v1398, 2
  %v1400 = vadd.f32 %v1398, %v1399
  %v1401 = vrot.slane %v1400, 1
  %v1402 = vadd.f32 %v1400, %v1401
  %v1403 = vadd.f32 %v1213, %v1345
  %v1404 = vadd.f32 %v1232, %v1364
  %v1405 = vadd.f32 %v1251, %v1383
  %v1406 = vadd.f32 %v1270, %v1402
  %v1407 = vld [vmem:[%s3] sm:$0xff]
  %v1408 = vld [vmem:[%s3 + $0x8] sm:$0xff]
  %v1409 = vld [vmem:[%s3 + $0x10] sm:$0xff]
  %v1410 = vld [vmem:[%s3 + $0x18] sm:$0xff]
  %v1411 = vld [vmem:[%s3 + $0x20] sm:$0xff]
  %v1412 = vld [vmem:[%s3 + $0x28] sm:$0xff]
  %v1413 = vld [vmem:[%s3 + $0x30] sm:$0xff]
  %v1414 = vld [vmem:[%s3 + $0x38] sm:$0xff]
  %v1415 = vld [vmem:[%s3 + $0x40] sm:$0xff]
  %v1416 = vld [vmem:[%s3 + $0x48] sm:$0xff]
  %v1417 = vld [vmem:[%s3 + $0x50] sm:$0xff]
  %v1418 = vld [vmem:[%s3 + $0x58] sm:$0xff]
  %v1419 = vld [vmem:[%s3 + $0x60] sm:$0xff]
  %v1420 = vld [vmem:[%s3 + $0x68] sm:$0xff]
  %v1421 = vld [vmem:[%s3 + $0x70] sm:$0xff]
  %v1422 = vld [vmem:[%s3 + $0x78] sm:$0xff]
  %v1423 = vld [vmem:[%s3 + $0x80] sm:$0xff]
  %v1424 = vld [vmem:[%s3 + $0x88] sm:$0xff]
  %v1425 = vld [vmem:[%s3 + $0x90] sm:$0xff]
  %v1426 = vld [vmem:[%s3 + $0x98] sm:$0xff]
  %v1427 = vld [vmem:[%s3 + $0xa0] sm:$0xff]
  %v1428 = vld [vmem:[%s3 + $0xa8] sm:$0xff]
  %v1429 = vld [vmem:[%s3 + $0xb0] sm:$0xff]
  %v1430 = vld [vmem:[%s3 + $0xb8] sm:$0xff]
  %v1431 = vld [vmem:[%s3 + $0xc0] sm:$0xff]
  %v1432 = vld [vmem:[%s3 + $0xc8] sm:$0xff]
  %v1433 = vld [vmem:[%s3 + $0xd0] sm:$0xff]
  %v1434 = vld [vmem:[%s3 + $0xd8] sm:$0xff]
  %v1435 = vld [vmem:[%s3 + $0xe0] sm:$0xff]
  %v1436 = vld [vmem:[%s3 + $0xe8] sm:$0xff]
  %v1437 = vld [vmem:[%s3 + $0xf0] sm:$0xff]
  %v1438 = vld [vmem:[%s3 + $0xf8] sm:$0xff]
  %v1439 = vld [vmem:[%s3 + $0x100] sm:$0xff]
  %v1440 = vld [vmem:[%s3 + $0x108] sm:$0xff]
  %v1441 = vld [vmem:[%s3 + $0x110] sm:$0xff]
  %v1442 = vld [vmem:[%s3 + $0x118] sm:$0xff]
  %v1443 = vld [vmem:[%s3 + $0x120] sm:$0xff]
  %v1444 = vld [vmem:[%s3 + $0x128] sm:$0xff]
  %v1445 = vld [vmem:[%s3 + $0x130] sm:$0xff]
  %v1446 = vld [vmem:[%s3 + $0x138] sm:$0xff]
  %v1447 = vld [vmem:[%s3 + $0x140] sm:$0xff]
  %v1448 = vld [vmem:[%s3 + $0x148] sm:$0xff]
  %v1449 = vld [vmem:[%s3 + $0x150] sm:$0xff]
  %v1450 = vld [vmem:[%s3 + $0x158] sm:$0xff]
  %v1451 = vld [vmem:[%s3 + $0x160] sm:$0xff]
  %v1452 = vld [vmem:[%s3 + $0x168] sm:$0xff]
  %v1453 = vld [vmem:[%s3 + $0x170] sm:$0xff]
  %v1454 = vld [vmem:[%s3 + $0x178] sm:$0xff]
  %v1455 = vld [vmem:[%s3 + $0x180] sm:$0xff]
  %v1456 = vld [vmem:[%s3 + $0x188] sm:$0xff]
  %v1457 = vld [vmem:[%s3 + $0x190] sm:$0xff]
  %v1458 = vld [vmem:[%s3 + $0x198] sm:$0xff]
  %v1459 = vld [vmem:[%s3 + $0x1a0] sm:$0xff]
  %v1460 = vld [vmem:[%s3 + $0x1a8] sm:$0xff]
  %v1461 = vld [vmem:[%s3 + $0x1b0] sm:$0xff]
  %v1462 = vld [vmem:[%s3 + $0x1b8] sm:$0xff]
  %v1463 = vld [vmem:[%s3 + $0x1c0] sm:$0xff]
  %v1464 = vld [vmem:[%s3 + $0x1c8] sm:$0xff]
  %v1465 = vld [vmem:[%s3 + $0x1d0] sm:$0xff]
  %v1466 = vld [vmem:[%s3 + $0x1d8] sm:$0xff]
  %v1467 = vld [vmem:[%s3 + $0x1e0] sm:$0xff]
  %v1468 = vld [vmem:[%s3 + $0x1e8] sm:$0xff]
  %v1469 = vld [vmem:[%s3 + $0x1f0] sm:$0xff]
  %v1470 = vld [vmem:[%s3 + $0x1f8] sm:$0xff]
  %1471 = vmatprep.subr.mxu0 0.0
  %1472 = vmatpush1.msra.mxu0 %v1407
  %1473 = vmatprep.subr.mxu0 0.0
  %1474 = vmatpush1.msra.mxu0 %v1408
  %1475 = vmatprep.subr.mxu0 0.0
  %1476 = vmatpush1.msra.mxu0 %v1409
  %1477 = vmatprep.subr.mxu0 0.0
  %1478 = vmatpush1.msra.mxu0 %v1410
  %1479 = vmatprep.subr.mxu0 0.0
  %1480 = vmatpush1.msra.mxu0 %v1411
  %1481 = vmatprep.subr.mxu0 0.0
  %1482 = vmatpush1.msra.mxu0 %v1412
  %1483 = vmatprep.subr.mxu0 0.0
  %1484 = vmatpush1.msra.mxu0 %v1413
  %1485 = vmatprep.subr.mxu0 0.0
  %1486 = vmatpush1.msra.mxu0 %v1414
  %1487 = vmatprep.subr.mxu0 0.0
  %1488 = vmatpush1.msra.mxu0 %v1415
  %1489 = vmatprep.subr.mxu0 0.0
  %1490 = vmatpush1.msra.mxu0 %v1416
  %1491 = vmatprep.subr.mxu0 0.0
  %1492 = vmatpush1.msra.mxu0 %v1417
  %1493 = vmatprep.subr.mxu0 0.0
  %1494 = vmatpush1.msra.mxu0 %v1418
  %1495 = vmatprep.subr.mxu0 0.0
  %1496 = vmatpush1.msra.mxu0 %v1419
  %1497 = vmatprep.subr.mxu0 0.0
  %1498 = vmatpush1.msra.mxu0 %v1420
  %1499 = vmatprep.subr.mxu0 0.0
  %1500 = vmatpush1.msra.mxu0 %v1421
  %1501 = vmatprep.subr.mxu0 0.0
  %1502 = vmatpush1.msra.mxu0 %v1422
  %1503 = vmatprep.subr.mxu0 0.0
  %1504 = vmatpush1.msra.mxu0 %v1423
  %1505 = vmatprep.subr.mxu0 0.0
  %1506 = vmatpush1.msra.mxu0 %v1424
  %1507 = vmatprep.subr.mxu0 0.0
  %1508 = vmatpush1.msra.mxu0 %v1425
  %1509 = vmatprep.subr.mxu0 0.0
  %1510 = vmatpush1.msra.mxu0 %v1426
  %1511 = vmatprep.subr.mxu0 0.0
  %1512 = vmatpush1.msra.mxu0 %v1427
  %1513 = vmatprep.subr.mxu0 0.0
  %1514 = vmatpush1.msra.mxu0 %v1428
  %1515 = vmatprep.subr.mxu0 0.0
  %1516 = vmatpush1.msra.mxu0 %v1429
  %1517 = vmatprep.subr.mxu0 0.0
  %1518 = vmatpush1.msra.mxu0 %v1430
  %1519 = vmatprep.subr.mxu0 0.0
  %1520 = vmatpush1.msra.mxu0 %v1431
  %1521 = vmatprep.subr.mxu0 0.0
  %1522 = vmatpush1.msra.mxu0 %v1432
  %1523 = vmatprep.subr.mxu0 0.0
  %1524 = vmatpush1.msra.mxu0 %v1433
  %1525 = vmatprep.subr.mxu0 0.0
  %1526 = vmatpush1.msra.mxu0 %v1434
  %1527 = vmatprep.subr.mxu0 0.0
  %1528 = vmatpush1.msra.mxu0 %v1435
  %1529 = vmatprep.subr.mxu0 0.0
  %1530 = vmatpush1.msra.mxu0 %v1436
  %1531 = vmatprep.subr.mxu0 0.0
  %1532 = vmatpush1.msra.mxu0 %v1437
  %1533 = vmatprep.subr.mxu0 0.0
  %1534 = vmatpush1.msra.mxu0 %v1438
  %1535 = vmatprep.mubr.f32.mxu0 %v1136
  %1536 = vmatmul.mubr.f32.gmra.mrb[0].mxu0 %v1135
  %v1537 = vpop.f32.mrb[0].mxu0
  %v1538 = vadd.f32 0.0, %v1537
  %v1539 = vpop.f32.mrb[0].mxu0
  %1540 = vdwg.mxu0
  %1541 = vmatprep.subr.mxu0 0.0
  %1542 = vmatpush1.msra.mxu0 %v1439
  %1543 = vmatprep.subr.mxu0 0.0
  %1544 = vmatpush1.msra.mxu0 %v1440
  %1545 = vmatprep.subr.mxu0 0.0
  %1546 = vmatpush1.msra.mxu0 %v1441
  %1547 = vmatprep.subr.mxu0 0.0
  %1548 = vmatpush1.msra.mxu0 %v1442
  %1549 = vmatprep.subr.mxu0 0.0
  %1550 = vmatpush1.msra.mxu0 %v1443
  %1551 = vmatprep.subr.mxu0 0.0
  %1552 = vmatpush1.msra.mxu0 %v1444
  %1553 = vmatprep.subr.mxu0 0.0
  %1554 = vmatpush1.msra.mxu0 %v1445
  %1555 = vmatprep.subr.mxu0 0.0
  %1556 = vmatpush1.msra.mxu0 %v1446
  %1557 = vmatprep.subr.mxu0 0.0
  %1558 = vmatpush1.msra.mxu0 %v1447
  %1559 = vmatprep.subr.mxu0 0.0
  %1560 = vmatpush1.msra.mxu0 %v1448
  %1561 = vmatprep.subr.mxu0 0.0
  %1562 = vmatpush1.msra.mxu0 %v1449
  %1563 = vmatprep.subr.mxu0 0.0
  %1564 = vmatpush1.msra.mxu0 %v1450
  %1565 = vmatprep.subr.mxu0 0.0
  %1566 = vmatpush1.msra.mxu0 %v1451
  %1567 = vmatprep.subr.mxu0 0.0
  %1568 = vmatpush1.msra.mxu0 %v1452
  %1569 = vmatprep.subr.mxu0 0.0
  %1570 = vmatpush1.msra.mxu0 %v1453
  %1571 = vmatprep.subr.mxu0 0.0
  %1572 = vmatpush1.msra.mxu0 %v1454
  %1573 = vmatprep.subr.mxu0 0.0
  %1574 = vmatpush1.msra.mxu0 %v1455
  %1575 = vmatprep.subr.mxu0 0.0
  %1576 = vmatpush1.msra.mxu0 %v1456
  %1577 = vmatprep.subr.mxu0 0.0
  %1578 = vmatpush1.msra.mxu0 %v1457
  %1579 = vmatprep.subr.mxu0 0.0
  %1580 = vmatpush1.msra.mxu0 %v1458
  %1581 = vmatprep.subr.mxu0 0.0
  %1582 = vmatpush1.msra.mxu0 %v1459
  %1583 = vmatprep.subr.mxu0 0.0
  %1584 = vmatpush1.msra.mxu0 %v1460
  %1585 = vmatprep.subr.mxu0 0.0
  %1586 = vmatpush1.msra.mxu0 %v1461
  %1587 = vmatprep.subr.mxu0 0.0
  %1588 = vmatpush1.msra.mxu0 %v1462
  %1589 = vmatprep.subr.mxu0 0.0
  %1590 = vmatpush1.msra.mxu0 %v1463
  %1591 = vmatprep.subr.mxu0 0.0
  %1592 = vmatpush1.msra.mxu0 %v1464
  %1593 = vmatprep.subr.mxu0 0.0
  %1594 = vmatpush1.msra.mxu0 %v1465
  %1595 = vmatprep.subr.mxu0 0.0
  %1596 = vmatpush1.msra.mxu0 %v1466
  %1597 = vmatprep.subr.mxu0 0.0
  %1598 = vmatpush1.msra.mxu0 %v1467
  %1599 = vmatprep.subr.mxu0 0.0
  %1600 = vmatpush1.msra.mxu0 %v1468
  %1601 = vmatprep.subr.mxu0 0.0
  %1602 = vmatpush1.msra.mxu0 %v1469
  %1603 = vmatprep.subr.mxu0 0.0
  %1604 = vmatpush1.msra.mxu0 %v1470
  %1605 = vmatprep.mubr.f32.mxu0 %v1138
  %1606 = vmatmul.mubr.f32.gmra.mrb[0].mxu0 %v1137
  %v1607 = vpop.f32.mrb[0].mxu0
  %v1608 = vadd.f32 %v1538, %v1607
  %v1609 = vpop.f32.mrb[0].mxu0
  %1610 = vdwg.mxu0
  %1611 = vmatprep.subr.mxu0 0.0
  %1612 = vmatpush1.msra.mxu0 %v1407
  %1613 = vmatprep.subr.mxu0 0.0
  %1614 = vmatpush1.msra.mxu0 %v1408
  %1615 = vmatprep.subr.mxu0 0.0
  %1616 = vmatpush1.msra.mxu0 %v1409
  %1617 = vmatprep.subr.mxu0 0.0
  %1618 = vmatpush1.msra.mxu0 %v1410
  %1619 = vmatprep.subr.mxu0 0.0
  %1620 = vmatpush1.msra.mxu0 %v1411
  %1621 = vmatprep.subr.mxu0 0.0
  %1622 = vmatpush1.msra.mxu0 %v1412
  %1623 = vmatprep.subr.mxu0 0.0
  %1624 = vmatpush1.msra.mxu0 %v1413
  %1625 = vmatprep.subr.mxu0 0.0
  %1626 = vmatpush1.msra.mxu0 %v1414
  %1627 = vmatprep.subr.mxu0 0.0
  %1628 = vmatpush1.msra.mxu0 %v1415
  %1629 = vmatprep.subr.mxu0 0.0
  %1630 = vmatpush1.msra.mxu0 %v1416
  %1631 = vmatprep.subr.mxu0 0.0
  %1632 = vmatpush1.msra.mxu0 %v1417
  %1633 = vmatprep.subr.mxu0 0.0
  %1634 = vmatpush1.msra.mxu0 %v1418
  %1635 = vmatprep.subr.mxu0 0.0
  %1636 = vmatpush1.msra.mxu0 %v1419
  %1637 = vmatprep.subr.mxu0 0.0
  %1638 = vmatpush1.msra.mxu0 %v1420
  %1639 = vmatprep.subr.mxu0 0.0
  %1640 = vmatpush1.msra.mxu0 %v1421
  %1641 = vmatprep.subr.mxu0 0.0
  %1642 = vmatpush1.msra.mxu0 %v1422
  %1643 = vmatprep.subr.mxu0 0.0
  %1644 = vmatpush1.msra.mxu0 %v1423
  %1645 = vmatprep.subr.mxu0 0.0
  %1646 = vmatpush1.msra.mxu0 %v1424
  %1647 = vmatprep.subr.mxu0 0.0
  %1648 = vmatpush1.msra.mxu0 %v1425
  %1649 = vmatprep.subr.mxu0 0.0
  %1650 = vmatpush1.msra.mxu0 %v1426
  %1651 = vmatprep.subr.mxu0 0.0
  %1652 = vmatpush1.msra.mxu0 %v1427
  %1653 = vmatprep.subr.mxu0 0.0
  %1654 = vmatpush1.msra.mxu0 %v1428
  %1655 = vmatprep.subr.mxu0 0.0
  %1656 = vmatpush1.msra.mxu0 %v1429
  %1657 = vmatprep.subr.mxu0 0.0
  %1658 = vmatpush1.msra.mxu0 %v1430
  %1659 = vmatprep.subr.mxu0 0.0
  %1660 = vmatpush1.msra.mxu0 %v1431
  %1661 = vmatprep.subr.mxu0 0.0
  %1662 = vmatpush1.msra.mxu0 %v1432
  %1663 = vmatprep.subr.mxu0 0.0
  %1664 = vmatpush1.msra.mxu0 %v1433
  %1665 = vmatprep.subr.mxu0 0.0
  %1666 = vmatpush1.msra.mxu0 %v1434
  %1667 = vmatprep.subr.mxu0 0.0
  %1668 = vmatpush1.msra.mxu0 %v1435
  %1669 = vmatprep.subr.mxu0 0.0
  %1670 = vmatpush1.msra.mxu0 %v1436
  %1671 = vmatprep.subr.mxu0 0.0
  %1672 = vmatpush1.msra.mxu0 %v1437
  %1673 = vmatprep.subr.mxu0 0.0
  %1674 = vmatpush1.msra.mxu0 %v1438
  %1675 = vmatprep.mubr.f32.mxu0 %v1404
  %1676 = vmatmul.mubr.f32.gmra.mrb[0].mxu0 %v1403
  %v1677 = vpop.f32.mrb[0].mxu0
  %v1678 = vadd.f32 0.0, %v1677
  %v1679 = vpop.f32.mrb[0].mxu0
  %1680 = vdwg.mxu0
  %1681 = vmatprep.subr.mxu0 0.0
  %1682 = vmatpush1.msra.mxu0 %v1439
  %1683 = vmatprep.subr.mxu0 0.0
  %1684 = vmatpush1.msra.mxu0 %v1440
  %1685 = vmatprep.subr.mxu0 0.0
  %1686 = vmatpush1.msra.mxu0 %v1441
  %1687 = vmatprep.subr.mxu0 0.0
  %1688 = vmatpush1.msra.mxu0 %v1442
  %1689 = vmatprep.subr.mxu0 0.0
  %1690 = vmatpush1.msra.mxu0 %v1443
  %1691 = vmatprep.subr.mxu0 0.0
  %1692 = vmatpush1.msra.mxu0 %v1444
  %1693 = vmatprep.subr.mxu0 0.0
  %1694 = vmatpush1.msra.mxu0 %v1445
  %1695 = vmatprep.subr.mxu0 0.0
  %1696 = vmatpush1.msra.mxu0 %v1446
  %1697 = vmatprep.subr.mxu0 0.0
  %1698 = vmatpush1.msra.mxu0 %v1447
  %1699 = vmatprep.subr.mxu0 0.0
  %1700 = vmatpush1.msra.mxu0 %v1448
  %1701 = vmatprep.subr.mxu0 0.0
  %1702 = vmatpush1.msra.mxu0 %v1449
  %1703 = vmatprep.subr.mxu0 0.0
  %1704 = vmatpush1.msra.mxu0 %v1450
  %1705 = vmatprep.subr.mxu0 0.0
  %1706 = vmatpush1.msra.mxu0 %v1451
  %1707 = vmatprep.subr.mxu0 0.0
  %1708 = vmatpush1.msra.mxu0 %v1452
  %1709 = vmatprep.subr.mxu0 0.0
  %1710 = vmatpush1.msra.mxu0 %v1453
  %1711 = vmatprep.subr.mxu0 0.0
  %1712 = vmatpush1.msra.mxu0 %v1454
  %1713 = vmatprep.subr.mxu0 0.0
  %1714 = vmatpush1.msra.mxu0 %v1455
  %1715 = vmatprep.subr.mxu0 0.0
  %1716 = vmatpush1.msra.mxu0 %v1456
  %1717 = vmatprep.subr.mxu0 0.0
  %1718 = vmatpush1.msra.mxu0 %v1457
  %1719 = vmatprep.subr.mxu0 0.0
  %1720 = vmatpush1.msra.mxu0 %v1458
  %1721 = vmatprep.subr.mxu0 0.0
  %1722 = vmatpush1.msra.mxu0 %v1459
  %1723 = vmatprep.subr.mxu0 0.0
  %1724 = vmatpush1.msra.mxu0 %v1460
  %1725 = vmatprep.subr.mxu0 0.0
  %1726 = vmatpush1.msra.mxu0 %v1461
  %1727 = vmatprep.subr.mxu0 0.0
  %1728 = vmatpush1.msra.mxu0 %v1462
  %1729 = vmatprep.subr.mxu0 0.0
  %1730 = vmatpush1.msra.mxu0 %v1463
  %1731 = vmatprep.subr.mxu0 0.0
  %1732 = vmatpush1.msra.mxu0 %v1464
  %1733 = vmatprep.subr.mxu0 0.0
  %1734 = vmatpush1.msra.mxu0 %v1465
  %1735 = vmatprep.subr.mxu0 0.0
  %1736 = vmatpush1.msra.mxu0 %v1466
  %1737 = vmatprep.subr.mxu0 0.0
  %1738 = vmatpush1.msra.mxu0 %v1467
  %1739 = vmatprep.subr.mxu0 0.0
  %1740 = vmatpush1.msra.mxu0 %v1468
  %1741 = vmatprep.subr.mxu0 0.0
  %1742 = vmatpush1.msra.mxu0 %v1469
  %1743 = vmatprep.subr.mxu0 0.0
  %1744 = vmatpush1.msra.mxu0 %v1470
  %1745 = vmatprep.mubr.f32.mxu0 %v1406
  %1746 = vmatmul.mubr.f32.gmra.mrb[0].mxu0 %v1405
  %v1747 = vpop.f32.mrb[0].mxu0
  %v1748 = vadd.f32 %v1678, %v1747
  %v1749 = vpop.f32.mrb[0].mxu0
  %1750 = vdwg.mxu0
  %v1751 = vlaneseq
  %v1752 = vshrl.u32 %v1751, 7
  %v1753 = vsub.s32 0, %v1752
  %v1754 = vrot.slane %v1608, %v1753
  %1755 = vst [vmem:[%s6] sm:$0xff] %v1754
  %v1756 = vlaneseq
  %v1757 = vshrl.u32 %v1756, 7
  %v1758 = vsub.s32 0, %v1757
  %v1759 = vrot.slane %v1748, %v1758
  %1760 = vst [vmem:[%s7] sm:$0xff] %v1759
  // Predicated region
  $region18: #{conv_nn_forward.5} parent=0 // pred_check
    _
  $region19: #{conv_nn_forward.5} parent=0 // pred_check_branch
    %1762 = sbr.rel (0) target = $region21
  $region20: #{conv_nn_forward.5} parent=0 // pred_region
    _
  $region21: #{conv_nn_forward.5} parent=0 // pred_fallthru
    _
  // Predicated region
  $region22: #{conv_nn_forward.5} parent=0 // pred_check
    _
  $region23: #{conv_nn_forward.5} parent=0 // pred_check_branch
    %1764 = sbr.rel (0) target = $region25
  $region24: #{conv_nn_forward.5} parent=0 // pred_region
    _
  $region25: #{conv_nn_forward.5} parent=0 // pred_fallthru
    _
  // Predicated region
  $region26: #{conv_nn_forward.5} parent=0 // pred_check
    _
  $region27: #{conv_nn_forward.5} parent=0 // pred_check_branch
    %1766 = sbr.rel (0) target = $region29
  $region28: #{conv_nn_forward.5} parent=0 // pred_region
    _
  $region29: #{conv_nn_forward.5} parent=0 // pred_fallthru
    _
  // Predicated region
  $region30: #{conv_nn_forward.5} parent=0 // pred_check
    _
  $region31: #{conv_nn_forward.5} parent=0 // pred_check_branch
    %1768 = sbr.rel (0) target = $region33
  $region32: #{conv_nn_forward.5} parent=0 // pred_region
    _
  $region33: #{conv_nn_forward.5} parent=0 // pred_fallthru
    _
  // Predicated region
  $region34: #{conv_nn_forward.5} parent=0 // pred_check
    _
  $region35: #{conv_nn_forward.5} parent=0 // pred_check_branch
    %1770 = sbr.rel (0) target = $region37
  $region36: #{conv_nn_forward.5} parent=0 // pred_region
    _
  $region37: #{conv_nn_forward.5} parent=0 // pred_fallthru
    _
  // Predicated region
  $region38: #{conv_nn_forward.5} parent=0 // pred_check
    _
  $region39: #{conv_nn_forward.5} parent=0 // pred_check_branch
    %1772 = sbr.rel (0) target = $region41
  $region40: #{conv_nn_forward.5} parent=0 // pred_region
    _
  $region41: #{conv_nn_forward.5} parent=0 // pred_fallthru
    _
  // Predicated region
  $region42: #{conv_nn_forward.5} parent=0 // pred_check
    _
  $region43: #{conv_nn_forward.5} parent=0 // pred_check_branch
    %1774 = sbr.rel (0) target = $region45
  $region44: #{conv_nn_forward.5} parent=0 // pred_region
    _
  $region45: #{conv_nn_forward.5} parent=0 // pred_fallthru
    _
  // Predicated region
  $region46: #{conv_nn_forward.5} parent=0 // pred_check
    _
  $region47: #{conv_nn_forward.5} parent=0 // pred_check_branch
    %1776 = sbr.rel (0) target = $region49
  $region48: #{conv_nn_forward.5} parent=0 // pred_region
    _
  $region49: #{conv_nn_forward.5} parent=0 // pred_fallthru
    _

// kernel: tile.63
$region0: #{tile.63}
  #allocation0 [shape = 's32[1]{0}', space=sflag, size = 0x4, scoped, tag = 'scoped memory for tile.63']
  %s0 = inlined_call_operand.vmem [shape: f32[32], index: 0, kind: input, shape index: {}]
  %s1 = inlined_call_operand.vmem [shape: f32[7,32], index: 1, kind: output, shape index: {}]
  // Predicated region
  $region2: #{tile.63} parent=0 // pred_check
    _
  $region3: #{tile.63} parent=0 // pred_check_branch
    %3 = sbr.rel (0) target = $region5
  $region4: #{tile.63} parent=0 // pred_region
    _
  $region5: #{tile.63} parent=0 // pred_fallthru
    _
  %v4 = vld [vmem:[%s0] ss:$0 sm:$0xff]
  %5 = vst [vmem:[%s1] sm:$0xff] %v4

// kernel: tile.64
$region0: #{tile.64}
  %s0 = inlined_call_operand.vmem [shape: f32[7,32], index: 0, kind: input, shape index: {}]
  %s1 = inlined_call_operand.vmem [shape: f32[224], index: 1, kind: output, shape index: {}]
  $region1: #{tile.64} parent=0
    #allocation0 [shape = 'u8[4096]{0}', space=vmem, size = 0x1000, scoped, tag = 'scoped mem for output reshape']
    %s2 = smov 3
    %v3 = vld [vmem:[%s0] ss:$4 sm:%s2]
    %vm4 = vcmask 261120
    %5 = vst.msk [vmem:[#allocation0] sm:$0x3] %vm4, %v3
    %s6 = scalar_lea.vmem %s0, 3
    %v7 = vld [vmem:[%s6] sm:$0x1]
    %8 = vrot.lane.b32.xlu0 %v7, 96
    %v9 = vpop.permute.xlu0 %8
    %vm10 = vcmask 1048320
    %11 = vst.msk [vmem:[#allocation0] sm:$0x1] %vm10, %v9
    %s12 = scalar_lea.vmem %s0, 2
    %s13 = smov 3
    %v14 = vld [vmem:[%s12] ss:$4 sm:%s13]
    %15 = vrot.lane.b32.xlu0 %v14, 64
    %v16 = vpop.permute.xlu0 %15
    %vm17 = vcmask 785920
    %18 = vst.msk [vmem:[#allocation0] sm:$0x3] %vm17, %v16
    %s19 = scalar_lea.vmem %s0, 1
    %s20 = smov 3
    %v21 = vld [vmem:[%s19] ss:$4 sm:%s20]
    %22 = vrot.lane.b32.xlu0 %v21, 32
    %v23 = vpop.permute.xlu0 %22
    %vm24 = vcmask 523520
    %25 = vst.msk [vmem:[#allocation0] sm:$0x3] %vm24, %v23
    %s27 = sshllo.u32 0, 2
    %v29 = vld [vmem:[#allocation0] sm:%s27]
    %s30 = sshllo.u32 0, 2
    %31 = vst [vmem:[%s1] sm:%s30] %v29

// kernel: conv_nn_forward.8
$region0: #{conv_nn_forward.8}
  #allocation0 [shape = 'u32[]', space=smem, size = 0x4, offset = 0x4, fixed_abs, tag = 'smem constant byte address 0x4 - core index']
  #allocation1 [shape = 'u32[144,128]{1,0:T(1,128)}', space=vmem, size = 0x12000, scoped, tag = 'internal scratch']
  %s0 = inlined_call_operand.vmem [shape: f32[56,512], index: 0, kind: input, shape index: {}]
  %s1 = inlined_call_operand.vmem [shape: f32[56,512], index: 1, kind: input, shape index: {}]
  %s2 = inlined_call_operand.vmem [shape: f32[1,512], index: 2, kind: input, shape index: {}]
  %s3 = inlined_call_operand.vmem [shape: f32[1,512], index: 3, kind: input, shape index: {}]
  %s4 = inlined_call_operand.vmem [shape: bf16[56,256], index: 4, kind: output, shape index: {}]
  %s5 = sld [smem:[#allocation0]]
  $region26: #{conv_nn_forward.8} parent=0
    _
  %s7 = ssub.s32 1, %s5
  %s8 = scalar_select 0, %s7, %s5
  // Predicated region
  $region2: #{conv_nn_forward.8} parent=0 // pred_check
    _
  $region3: #{conv_nn_forward.8} parent=0 // pred_check_branch
    %10 = sbr.rel (0) target = $region5
  $region4: #{conv_nn_forward.8} parent=0 // pred_region
    _
  $region5: #{conv_nn_forward.8} parent=0 // pred_fallthru
    _
  // Predicated region
  $region6: #{conv_nn_forward.8} parent=0 // pred_check
    _
  $region7: #{conv_nn_forward.8} parent=0 // pred_check_branch
    %12 = sbr.rel (0) target = $region9
  $region8: #{conv_nn_forward.8} parent=0 // pred_region
    _
  $region9: #{conv_nn_forward.8} parent=0 // pred_fallthru
    _
  // Predicated region
  $region10: #{conv_nn_forward.8} parent=0 // pred_check
    _
  $region11: #{conv_nn_forward.8} parent=0 // pred_check_branch
    %14 = sbr.rel (0) target = $region13
  $region12: #{conv_nn_forward.8} parent=0 // pred_region
    _
  $region13: #{conv_nn_forward.8} parent=0 // pred_fallthru
    _
  // Predicated region
  $region14: #{conv_nn_forward.8} parent=0 // pred_check
    _
  $region15: #{conv_nn_forward.8} parent=0 // pred_check_branch
    %16 = sbr.rel (0) target = $region17
  $region16: #{conv_nn_forward.8} parent=0 // pred_region
    _
  $region17: #{conv_nn_forward.8} parent=0 // pred_fallthru
    _
  %v17 = vld [vmem:[%s2] sm:$0xf]
  %v18 = vld [vmem:[%s3] sm:$0xf]
  %v19 = vld [vmem:[%s0] sm:$0xff]
  %v20 = vld [vmem:[%s0 + $0x8] sm:$0xff]
  %v21 = vld [vmem:[%s0 + $0x10] sm:$0xff]
  %v22 = vld [vmem:[%s0 + $0x18] sm:$0xff]
  %v23 = vld [vmem:[%s0 + $0x20] sm:$0xff]
  %v24 = vld [vmem:[%s0 + $0x28] sm:$0xff]
  %v25 = vld [vmem:[%s0 + $0x30] sm:$0xff]
  %v26 = vld [vmem:[%s0 + $0x38] sm:$0xff]
  %v27 = vld [vmem:[%s0 + $0x40] sm:$0xff]
  %v28 = vld [vmem:[%s0 + $0x48] sm:$0xff]
  %v29 = vld [vmem:[%s0 + $0x50] sm:$0xff]
  %v30 = vld [vmem:[%s0 + $0x58] sm:$0xff]
  %v31 = vld [vmem:[%s0 + $0x60] sm:$0xff]
  %v32 = vld [vmem:[%s0 + $0x68] sm:$0xff]
  %v33 = vld [vmem:[%s0 + $0x70] sm:$0xff]
  %v34 = vld [vmem:[%s0 + $0x78] sm:$0xff]
  %v35 = vld [vmem:[%s0 + $0x80] sm:$0xff]
  %v36 = vld [vmem:[%s0 + $0x88] sm:$0xff]
  %v37 = vld [vmem:[%s0 + $0x90] sm:$0xff]
  %v38 = vld [vmem:[%s0 + $0x98] sm:$0xff]
  %v39 = vld [vmem:[%s0 + $0xa0] sm:$0xff]
  %v40 = vld [vmem:[%s0 + $0xa8] sm:$0xff]
  %v41 = vld [vmem:[%s0 + $0xb0] sm:$0xff]
  %v42 = vld [vmem:[%s0 + $0xb8] sm:$0xff]
  %v43 = vld [vmem:[%s0 + $0xc0] sm:$0xff]
  %v44 = vld [vmem:[%s0 + $0xc8] sm:$0xff]
  %v45 = vld [vmem:[%s0 + $0xd0] sm:$0xff]
  %v46 = vld [vmem:[%s0 + $0xd8] sm:$0xff]
  %v48 = vlaneseq
  %v49 = vshrl.u32 %v48, 7
  %v50 = vsub.s32 0, %v49
  %v51 = vrot.slane %v17, %v50
  %v52 = vlaneseq
  %v53 = vshrl.u32 %v52, 7
  %v54 = vsub.s32 1, %v53
  %v55 = vrot.slane %v17, %v54
  %v56 = vlaneseq
  %v57 = vshrl.u32 %v56, 7
  %v58 = vsub.s32 2, %v57
  %v59 = vrot.slane %v17, %v58
  %v60 = vlaneseq
  %v61 = vshrl.u32 %v60, 7
  %v62 = vsub.s32 3, %v61
  %v63 = vrot.slane %v17, %v62
  %v68 = vmul.f32 %v19, %v51
  %v69 = vmul.f32 %v20, %v55
  %v70 = vmul.f32 %v21, %v59
  %v71 = vmul.f32 %v22, %v63
  %v72 = vmul.f32 %v23, %v51
  %v73 = vmul.f32 %v24, %v55
  %v74 = vmul.f32 %v25, %v59
  %v75 = vmul.f32 %v26, %v63
  %v76 = vmul.f32 %v27, %v51
  %v77 = vmul.f32 %v28, %v55
  %v78 = vmul.f32 %v29, %v59
  %v79 = vmul.f32 %v30, %v63
  %v80 = vmul.f32 %v31, %v51
  %v81 = vmul.f32 %v32, %v55
  %v82 = vmul.f32 %v33, %v59
  %v83 = vmul.f32 %v34, %v63
  %v84 = vmul.f32 %v35, %v51
  %v85 = vmul.f32 %v36, %v55
  %v86 = vmul.f32 %v37, %v59
  %v87 = vmul.f32 %v38, %v63
  %v88 = vmul.f32 %v39, %v51
  %v89 = vmul.f32 %v40, %v55
  %v90 = vmul.f32 %v41, %v59
  %v91 = vmul.f32 %v42, %v63
  %v92 = vmul.f32 %v43, %v51
  %v93 = vmul.f32 %v44, %v55
  %v94 = vmul.f32 %v45, %v59
  %v95 = vmul.f32 %v46, %v63
  %v97 = vlaneseq
  %v98 = vshrl.u32 %v97, 7
  %v99 = vsub.s32 0, %v98
  %v100 = vrot.slane %v18, %v99
  %v101 = vlaneseq
  %v102 = vshrl.u32 %v101, 7
  %v103 = vsub.s32 1, %v102
  %v104 = vrot.slane %v18, %v103
  %v105 = vlaneseq
  %v106 = vshrl.u32 %v105, 7
  %v107 = vsub.s32 2, %v106
  %v108 = vrot.slane %v18, %v107
  %v109 = vlaneseq
  %v110 = vshrl.u32 %v109, 7
  %v111 = vsub.s32 3, %v110
  %v112 = vrot.slane %v18, %v111
  %v117 = vadd.f32 %v68, %v100
  %v118 = vadd.f32 %v69, %v104
  %v119 = vadd.f32 %v70, %v108
  %v120 = vadd.f32 %v71, %v112
  %v121 = vadd.f32 %v72, %v100
  %v122 = vadd.f32 %v73, %v104
  %v123 = vadd.f32 %v74, %v108
  %v124 = vadd.f32 %v75, %v112
  %v125 = vadd.f32 %v76, %v100
  %v126 = vadd.f32 %v77, %v104
  %v127 = vadd.f32 %v78, %v108
  %v128 = vadd.f32 %v79, %v112
  %v129 = vadd.f32 %v80, %v100
  %v130 = vadd.f32 %v81, %v104
  %v131 = vadd.f32 %v82, %v108
  %v132 = vadd.f32 %v83, %v112
  %v133 = vadd.f32 %v84, %v100
  %v134 = vadd.f32 %v85, %v104
  %v135 = vadd.f32 %v86, %v108
  %v136 = vadd.f32 %v87, %v112
  %v137 = vadd.f32 %v88, %v100
  %v138 = vadd.f32 %v89, %v104
  %v139 = vadd.f32 %v90, %v108
  %v140 = vadd.f32 %v91, %v112
  %v141 = vadd.f32 %v92, %v100
  %v142 = vadd.f32 %v93, %v104
  %v143 = vadd.f32 %v94, %v108
  %v144 = vadd.f32 %v95, %v112
  %v145 = vmax.f32 %v117, 0.0
  %v146 = vmax.f32 %v118, 0.0
  %v147 = vmax.f32 %v119, 0.0
  %v148 = vmax.f32 %v120, 0.0
  %v149 = vmax.f32 %v121, 0.0
  %v150 = vmax.f32 %v122, 0.0
  %v151 = vmax.f32 %v123, 0.0
  %v152 = vmax.f32 %v124, 0.0
  %v153 = vmax.f32 %v125, 0.0
  %v154 = vmax.f32 %v126, 0.0
  %v155 = vmax.f32 %v127, 0.0
  %v156 = vmax.f32 %v128, 0.0
  %v157 = vmax.f32 %v129, 0.0
  %v158 = vmax.f32 %v130, 0.0
  %v159 = vmax.f32 %v131, 0.0
  %v160 = vmax.f32 %v132, 0.0
  %v161 = vmax.f32 %v133, 0.0
  %v162 = vmax.f32 %v134, 0.0
  %v163 = vmax.f32 %v135, 0.0
  %v164 = vmax.f32 %v136, 0.0
  %v165 = vmax.f32 %v137, 0.0
  %v166 = vmax.f32 %v138, 0.0
  %v167 = vmax.f32 %v139, 0.0
  %v168 = vmax.f32 %v140, 0.0
  %v169 = vmax.f32 %v141, 0.0
  %v170 = vmax.f32 %v142, 0.0
  %v171 = vmax.f32 %v143, 0.0
  %v172 = vmax.f32 %v144, 0.0
  %v173 = vld [vmem:[%s1] sm:$0xff]
  %v174 = vld [vmem:[%s1 + $0x8] sm:$0xff]
  %v175 = vld [vmem:[%s1 + $0x10] sm:$0xff]
  %v176 = vld [vmem:[%s1 + $0x18] sm:$0xff]
  %v177 = vld [vmem:[%s1 + $0x20] sm:$0xff]
  %v178 = vld [vmem:[%s1 + $0x28] sm:$0xff]
  %v179 = vld [vmem:[%s1 + $0x30] sm:$0xff]
  %v180 = vld [vmem:[%s1 + $0x38] sm:$0xff]
  %v181 = vld [vmem:[%s1 + $0x40] sm:$0xff]
  %v182 = vld [vmem:[%s1 + $0x48] sm:$0xff]
  %v183 = vld [vmem:[%s1 + $0x50] sm:$0xff]
  %v184 = vld [vmem:[%s1 + $0x58] sm:$0xff]
  %v185 = vld [vmem:[%s1 + $0x60] sm:$0xff]
  %v186 = vld [vmem:[%s1 + $0x68] sm:$0xff]
  %v187 = vld [vmem:[%s1 + $0x70] sm:$0xff]
  %v188 = vld [vmem:[%s1 + $0x78] sm:$0xff]
  %v189 = vld [vmem:[%s1 + $0x80] sm:$0xff]
  %v190 = vld [vmem:[%s1 + $0x88] sm:$0xff]
  %v191 = vld [vmem:[%s1 + $0x90] sm:$0xff]
  %v192 = vld [vmem:[%s1 + $0x98] sm:$0xff]
  %v193 = vld [vmem:[%s1 + $0xa0] sm:$0xff]
  %v194 = vld [vmem:[%s1 + $0xa8] sm:$0xff]
  %v195 = vld [vmem:[%s1 + $0xb0] sm:$0xff]
  %v196 = vld [vmem:[%s1 + $0xb8] sm:$0xff]
  %v197 = vld [vmem:[%s1 + $0xc0] sm:$0xff]
  %v198 = vld [vmem:[%s1 + $0xc8] sm:$0xff]
  %v199 = vld [vmem:[%s1 + $0xd0] sm:$0xff]
  %v200 = vld [vmem:[%s1 + $0xd8] sm:$0xff]
  %v201 = vmul.f32 %v173, %v51
  %v202 = vmul.f32 %v174, %v55
  %v203 = vmul.f32 %v175, %v59
  %v204 = vmul.f32 %v176, %v63
  %v205 = vmul.f32 %v177, %v51
  %v206 = vmul.f32 %v178, %v55
  %v207 = vmul.f32 %v179, %v59
  %v208 = vmul.f32 %v180, %v63
  %v209 = vmul.f32 %v181, %v51
  %v210 = vmul.f32 %v182, %v55
  %v211 = vmul.f32 %v183, %v59
  %v212 = vmul.f32 %v184, %v63
  %v213 = vmul.f32 %v185, %v51
  %v214 = vmul.f32 %v186, %v55
  %v215 = vmul.f32 %v187, %v59
  %v216 = vmul.f32 %v188, %v63
  %v217 = vmul.f32 %v189, %v51
  %v218 = vmul.f32 %v190, %v55
  %v219 = vmul.f32 %v191, %v59
  %v220 = vmul.f32 %v192, %v63
  %v221 = vmul.f32 %v193, %v51
  %v222 = vmul.f32 %v194, %v55
  %v223 = vmul.f32 %v195, %v59
  %v224 = vmul.f32 %v196, %v63
  %v225 = vmul.f32 %v197, %v51
  %v226 = vmul.f32 %v198, %v55
  %v227 = vmul.f32 %v199, %v59
  %v228 = vmul.f32 %v200, %v63
  %v229 = vadd.f32 %v201, %v100
  %v230 = vadd.f32 %v202, %v104
  %v231 = vadd.f32 %v203, %v108
  %v232 = vadd.f32 %v204, %v112
  %v233 = vadd.f32 %v205, %v100
  %v234 = vadd.f32 %v206, %v104
  %v235 = vadd.f32 %v207, %v108
  %v236 = vadd.f32 %v208, %v112
  %v237 = vadd.f32 %v209, %v100
  %v238 = vadd.f32 %v210, %v104
  %v239 = vadd.f32 %v211, %v108
  %v240 = vadd.f32 %v212, %v112
  %v241 = vadd.f32 %v213, %v100
  %v242 = vadd.f32 %v214, %v104
  %v243 = vadd.f32 %v215, %v108
  %v244 = vadd.f32 %v216, %v112
  %v245 = vadd.f32 %v217, %v100
  %v246 = vadd.f32 %v218, %v104
  %v247 = vadd.f32 %v219, %v108
  %v248 = vadd.f32 %v220, %v112
  %v249 = vadd.f32 %v221, %v100
  %v250 = vadd.f32 %v222, %v104
  %v251 = vadd.f32 %v223, %v108
  %v252 = vadd.f32 %v224, %v112
  %v253 = vadd.f32 %v225, %v100
  %v254 = vadd.f32 %v226, %v104
  %v255 = vadd.f32 %v227, %v108
  %v256 = vadd.f32 %v228, %v112
  %v257 = vmax.f32 %v229, 0.0
  %v258 = vmax.f32 %v230, 0.0
  %v259 = vmax.f32 %v231, 0.0
  %v260 = vmax.f32 %v232, 0.0
  %v261 = vmax.f32 %v233, 0.0
  %v262 = vmax.f32 %v234, 0.0
  %v263 = vmax.f32 %v235, 0.0
  %v264 = vmax.f32 %v236, 0.0
  %v265 = vmax.f32 %v237, 0.0
  %v266 = vmax.f32 %v238, 0.0
  %v267 = vmax.f32 %v239, 0.0
  %v268 = vmax.f32 %v240, 0.0
  %v269 = vmax.f32 %v241, 0.0
  %v270 = vmax.f32 %v242, 0.0
  %v271 = vmax.f32 %v243, 0.0
  %v272 = vmax.f32 %v244, 0.0
  %v273 = vmax.f32 %v245, 0.0
  %v274 = vmax.f32 %v246, 0.0
  %v275 = vmax.f32 %v247, 0.0
  %v276 = vmax.f32 %v248, 0.0
  %v277 = vmax.f32 %v249, 0.0
  %v278 = vmax.f32 %v250, 0.0
  %v279 = vmax.f32 %v251, 0.0
  %v280 = vmax.f32 %v252, 0.0
  %v281 = vmax.f32 %v253, 0.0
  %v282 = vmax.f32 %v254, 0.0
  %v283 = vmax.f32 %v255, 0.0
  %v284 = vmax.f32 %v256, 0.0
  %v285 = vmax.f32 %v145, %v257
  %v286 = vmax.f32 %v146, %v258
  %v287 = vmax.f32 %v147, %v259
  %v288 = vmax.f32 %v148, %v260
  %v289 = vmax.f32 %v149, %v261
  %v290 = vmax.f32 %v150, %v262
  %v291 = vmax.f32 %v151, %v263
  %v292 = vmax.f32 %v152, %v264
  %v293 = vmax.f32 %v153, %v265
  %v294 = vmax.f32 %v154, %v266
  %v295 = vmax.f32 %v155, %v267
  %v296 = vmax.f32 %v156, %v268
  %v297 = vmax.f32 %v157, %v269
  %v298 = vmax.f32 %v158, %v270
  %v299 = vmax.f32 %v159, %v271
  %v300 = vmax.f32 %v160, %v272
  %v301 = vmax.f32 %v161, %v273
  %v302 = vmax.f32 %v162, %v274
  %v303 = vmax.f32 %v163, %v275
  %v304 = vmax.f32 %v164, %v276
  %v305 = vmax.f32 %v165, %v277
  %v306 = vmax.f32 %v166, %v278
  %v307 = vmax.f32 %v167, %v279
  %v308 = vmax.f32 %v168, %v280
  %v309 = vmax.f32 %v169, %v281
  %v310 = vmax.f32 %v170, %v282
  %v311 = vmax.f32 %v171, %v283
  %v312 = vmax.f32 %v172, %v284
  %v313 = vmax.f32 %v285, %v287
  %v314 = vmax.f32 %v286, %v288
  %v315 = vmax.f32 %v289, %v291
  %v316 = vmax.f32 %v290, %v292
  %v317 = vmax.f32 %v293, %v295
  %v318 = vmax.f32 %v294, %v296
  %v319 = vmax.f32 %v297, %v299
  %v320 = vmax.f32 %v298, %v300
  %v321 = vmax.f32 %v301, %v303
  %v322 = vmax.f32 %v302, %v304
  %v323 = vmax.f32 %v305, %v307
  %v324 = vmax.f32 %v306, %v308
  %v325 = vmax.f32 %v309, %v311
  %v326 = vmax.f32 %v310, %v312
  %v327 = vpack.c.bf16 %v315, %v313
  %v328 = vpack.c.bf16 %v316, %v314
  %v329 = vpack.c.bf16 %v319, %v317
  %v330 = vpack.c.bf16 %v320, %v318
  %v331 = vpack.c.bf16 %v323, %v321
  %v332 = vpack.c.bf16 %v324, %v322
  %v333 = vpack.c.bf16 %v325, %v325
  %v334 = vpack.c.bf16 %v326, %v326
  %v343 = vunpack.c.l.b16 %v327
  %v344 = vunpack.c.l.b16 %v328
  %v345 = vunpack.c.h.b16 %v327
  %v346 = vunpack.c.h.b16 %v328
  %v347 = vunpack.c.l.b16 %v329
  %v348 = vunpack.c.l.b16 %v330
  %v349 = vunpack.c.h.b16 %v329
  %v350 = vunpack.c.h.b16 %v330
  %v351 = vunpack.c.l.b16 %v331
  %v352 = vunpack.c.l.b16 %v332
  %v353 = vunpack.c.h.b16 %v331
  %v354 = vunpack.c.h.b16 %v332
  %v355 = vunpack.c.l.b16 %v333
  %v356 = vunpack.c.l.b16 %v334
  %v357 = vpack.c.b16 %v344, %v343
  %v358 = vpack.c.b16 %v346, %v345
  %v359 = vpack.c.b16 %v348, %v347
  %v360 = vpack.c.b16 %v350, %v349
  %v361 = vpack.c.b16 %v352, %v351
  %v362 = vpack.c.b16 %v354, %v353
  %v363 = vpack.c.b16 %v356, %v355
  %371 = vst [vmem:[%s4] sm:$0xff] %v357
  %372 = vst [vmem:[%s4 + $0x8] sm:$0xff] %v358
  %373 = vst [vmem:[%s4 + $0x10] sm:$0xff] %v359
  %374 = vst [vmem:[%s4 + $0x18] sm:$0xff] %v360
  %375 = vst [vmem:[%s4 + $0x20] sm:$0xff] %v361
  %376 = vst [vmem:[%s4 + $0x28] sm:$0xff] %v362
  %377 = vst [vmem:[%s4 + $0x30] sm:$0xff] %v363
  // Predicated region
  $region18: #{conv_nn_forward.8} parent=0 // pred_check
    _
  $region19: #{conv_nn_forward.8} parent=0 // pred_check_branch
    %379 = sbr.rel (0) target = $region21
  $region20: #{conv_nn_forward.8} parent=0 // pred_region
    _
  $region21: #{conv_nn_forward.8} parent=0 // pred_fallthru
    _
  // Predicated region
  $region22: #{conv_nn_forward.8} parent=0 // pred_check
    _
  $region23: #{conv_nn_forward.8} parent=0 // pred_check_branch
    %381 = sbr.rel (0) target = $region25
  $region24: #{conv_nn_forward.8} parent=0 // pred_region
    _
  $region25: #{conv_nn_forward.8} parent=0 // pred_fallthru
    _

// kernel: conv_nn_forward.7
$region0: #{conv_nn_forward.7}
  #allocation0 [shape = 'u32[]', space=smem, size = 0x4, offset = 0x4, fixed_abs, tag = 'smem constant byte address 0x4 - core index']
  #allocation1 [shape = 'u32[144,128]{1,0:T(1,128)}', space=vmem, size = 0x12000, scoped, tag = 'internal scratch']
  %s0 = inlined_call_operand.vmem [shape: bf16[56,1440], index: 0, kind: input, shape index: {}]
  %s1 = inlined_call_operand.vmem [shape: bf16[56,1440], index: 1, kind: input, shape index: {}]
  %s2 = inlined_call_operand.vmem [shape: bf16[1440,512], index: 2, kind: input, shape index: {}]
  %s3 = inlined_call_operand.vmem [shape: f32[512,128], index: 3, kind: input, shape index: {}]
  %s4 = inlined_call_operand.vmem [shape: f32[56,512], index: 4, kind: output, shape index: {0}]
  %s5 = inlined_call_operand.vmem [shape: f32[56,512], index: 5, kind: output, shape index: {1}]
  %s6 = inlined_call_operand.vmem [shape: f32[1,8,128], index: 6, kind: output, shape index: {2}]
  %s7 = inlined_call_operand.vmem [shape: f32[1,8,128], index: 7, kind: output, shape index: {3}]
  %8 = xla_tuple %s4, %s5, %s6, %s7
  %s9 = sld [smem:[#allocation0]]
  $region50: #{conv_nn_forward.7} parent=0
    _
  %s11 = ssub.s32 1, %s9
  %s12 = scalar_select 0, %s11, %s9
  // Predicated region
  $region2: #{conv_nn_forward.7} parent=0 // pred_check
    _
  $region3: #{conv_nn_forward.7} parent=0 // pred_check_branch
    %14 = sbr.rel (0) target = $region5
  $region4: #{conv_nn_forward.7} parent=0 // pred_region
    _
  $region5: #{conv_nn_forward.7} parent=0 // pred_fallthru
    _
  // Predicated region
  $region6: #{conv_nn_forward.7} parent=0 // pred_check
    _
  $region7: #{conv_nn_forward.7} parent=0 // pred_check_branch
    %16 = sbr.rel (0) target = $region9
  $region8: #{conv_nn_forward.7} parent=0 // pred_region
    _
  $region9: #{conv_nn_forward.7} parent=0 // pred_fallthru
    _
  // Predicated region
  $region10: #{conv_nn_forward.7} parent=0 // pred_check
    _
  $region11: #{conv_nn_forward.7} parent=0 // pred_check_branch
    %18 = sbr.rel (0) target = $region13
  $region12: #{conv_nn_forward.7} parent=0 // pred_region
    _
  $region13: #{conv_nn_forward.7} parent=0 // pred_fallthru
    _
  // Predicated region
  $region14: #{conv_nn_forward.7} parent=0 // pred_check
    _
  $region15: #{conv_nn_forward.7} parent=0 // pred_check_branch
    %20 = sbr.rel (0) target = $region17
  $region16: #{conv_nn_forward.7} parent=0 // pred_region
    _
  $region17: #{conv_nn_forward.7} parent=0 // pred_fallthru
    _
  %v22 = vld [vmem:[%s0] sm:$0xff]
  %v23 = vld [vmem:[%s0 + $0x8] sm:$0xff]
  %v24 = vld [vmem:[%s0 + $0x10] sm:$0xff]
  %v25 = vld [vmem:[%s0 + $0x18] sm:$0xff]
  %v26 = vld [vmem:[%s0 + $0x20] sm:$0xff]
  %v27 = vld [vmem:[%s0 + $0x28] sm:$0xff]
  %v28 = vld [vmem:[%s0 + $0x30] sm:$0xff]
  %v29 = vld [vmem:[%s0 + $0x38] sm:$0xff]
  %v30 = vld [vmem:[%s0 + $0x40] sm:$0xff]
  %v31 = vld [vmem:[%s0 + $0x48] sm:$0xff]
  %v32 = vld [vmem:[%s0 + $0x50] sm:$0xff]
  %v33 = vld [vmem:[%s0 + $0x58] sm:$0xff]
  %v34 = vld [vmem:[%s0 + $0x60] sm:$0xff]
  %v35 = vld [vmem:[%s0 + $0x68] sm:$0xff]
  %v36 = vld [vmem:[%s0 + $0x70] sm:$0xff]
  %v37 = vld [vmem:[%s0 + $0x78] sm:$0xff]
  %v38 = vld [vmem:[%s0 + $0x80] sm:$0xff]
  %v39 = vld [vmem:[%s0 + $0x88] sm:$0xff]
  %v40 = vld [vmem:[%s0 + $0x90] sm:$0xff]
  %v41 = vld [vmem:[%s0 + $0x98] sm:$0xff]
  %v42 = vld [vmem:[%s0 + $0xa0] sm:$0xff]
  %v43 = vld [vmem:[%s0 + $0xa8] sm:$0xff]
  %v44 = vld [vmem:[%s0 + $0xb0] sm:$0xff]
  %v45 = vld [vmem:[%s0 + $0xb8] sm:$0xff]
  %v46 = vld [vmem:[%s0 + $0xc0] sm:$0xff]
  %v47 = vld [vmem:[%s0 + $0xc8] sm:$0xff]
  %v48 = vld [vmem:[%s0 + $0xd0] sm:$0xff]
  %v49 = vld [vmem:[%s0 + $0xd8] sm:$0xff]
  %v50 = vld [vmem:[%s0 + $0xe0] sm:$0xff]
  %v51 = vld [vmem:[%s0 + $0xe8] sm:$0xff]
  %v52 = vld [vmem:[%s0 + $0xf0] sm:$0xff]
  %v53 = vld [vmem:[%s0 + $0xf8] sm:$0xff]
  %v54 = vld [vmem:[%s0 + $0x100] sm:$0xff]
  %v55 = vld [vmem:[%s0 + $0x108] sm:$0xff]
  %v56 = vld [vmem:[%s0 + $0x110] sm:$0xff]
  %v57 = vld [vmem:[%s0 + $0x118] sm:$0xff]
  %v58 = vld [vmem:[%s0 + $0x120] sm:$0xff]
  %v59 = vld [vmem:[%s0 + $0x128] sm:$0xff]
  %v60 = vld [vmem:[%s0 + $0x130] sm:$0xff]
  %v61 = vld [vmem:[%s0 + $0x138] sm:$0xff]
  %v62 = vld [vmem:[%s0 + $0x140] sm:$0xff]
  %v63 = vld [vmem:[%s0 + $0x148] sm:$0xff]
  %v64 = vld [vmem:[%s2] sm:$0xff]
  %v65 = vld [vmem:[%s2 + $0x8] sm:$0xff]
  %v66 = vld [vmem:[%s2 + $0x10] sm:$0xff]
  %v67 = vld [vmem:[%s2 + $0x18] sm:$0xff]
  %v68 = vld [vmem:[%s2 + $0x20] sm:$0xff]
  %v69 = vld [vmem:[%s2 + $0x28] sm:$0xff]
  %v70 = vld [vmem:[%s2 + $0x30] sm:$0xff]
  %v71 = vld [vmem:[%s2 + $0x38] sm:$0xff]
  %v72 = vld [vmem:[%s2 + $0x40] sm:$0xff]
  %v73 = vld [vmem:[%s2 + $0x48] sm:$0xff]
  %v74 = vld [vmem:[%s2 + $0x50] sm:$0xff]
  %v75 = vld [vmem:[%s2 + $0x58] sm:$0xff]
  %v76 = vld [vmem:[%s2 + $0x60] sm:$0xff]
  %v77 = vld [vmem:[%s2 + $0x68] sm:$0xff]
  %v78 = vld [vmem:[%s2 + $0x70] sm:$0xff]
  %v79 = vld [vmem:[%s2 + $0x78] sm:$0xff]
  %v80 = vld [vmem:[%s2 + $0x80] sm:$0xff]
  %v81 = vld [vmem:[%s2 + $0x88] sm:$0xff]
  %v82 = vld [vmem:[%s2 + $0x90] sm:$0xff]
  %v83 = vld [vmem:[%s2 + $0x98] sm:$0xff]
  %v84 = vld [vmem:[%s2 + $0xa0] sm:$0xff]
  %v85 = vld [vmem:[%s2 + $0xa8] sm:$0xff]
  %v86 = vld [vmem:[%s2 + $0xb0] sm:$0xff]
  %v87 = vld [vmem:[%s2 + $0xb8] sm:$0xff]
  %v88 = vld [vmem:[%s2 + $0xc0] sm:$0xff]
  %v89 = vld [vmem:[%s2 + $0xc8] sm:$0xff]
  %v90 = vld [vmem:[%s2 + $0xd0] sm:$0xff]
  %v91 = vld [vmem:[%s2 + $0xd8] sm:$0xff]
  %v92 = vld [vmem:[%s2 + $0xe0] sm:$0xff]
  %v93 = vld [vmem:[%s2 + $0xe8] sm:$0xff]
  %v94 = vld [vmem:[%s2 + $0xf0] sm:$0xff]
  %v95 = vld [vmem:[%s2 + $0xf8] sm:$0xff]
  %v96 = vld [vmem:[%s2 + $0x100] sm:$0xff]
  %v97 = vld [vmem:[%s2 + $0x108] sm:$0xff]
  %v98 = vld [vmem:[%s2 + $0x110] sm:$0xff]
  %v99 = vld [vmem:[%s2 + $0x118] sm:$0xff]
  %v100 = vld [vmem:[%s2 + $0x120] sm:$0xff]
  %v101 = vld [vmem:[%s2 + $0x128] sm:$0xff]
  %v102 = vld [vmem:[%s2 + $0x130] sm:$0xff]
  %v103 = vld [vmem:[%s2 + $0x138] sm:$0xff]
  %v104 = vld [vmem:[%s2 + $0x140] sm:$0xff]
  %v105 = vld [vmem:[%s2 + $0x148] sm:$0xff]
  %v106 = vld [vmem:[%s2 + $0x150] sm:$0xff]
  %v107 = vld [vmem:[%s2 + $0x158] sm:$0xff]
  %v108 = vld [vmem:[%s2 + $0x160] sm:$0xff]
  %v109 = vld [vmem:[%s2 + $0x168] sm:$0xff]
  %v110 = vld [vmem:[%s2 + $0x170] sm:$0xff]
  %v111 = vld [vmem:[%s2 + $0x178] sm:$0xff]
  %v112 = vld [vmem:[%s2 + $0x180] sm:$0xff]
  %v113 = vld [vmem:[%s2 + $0x188] sm:$0xff]
  %v114 = vld [vmem:[%s2 + $0x190] sm:$0xff]
  %v115 = vld [vmem:[%s2 + $0x198] sm:$0xff]
  %v116 = vld [vmem:[%s2 + $0x1a0] sm:$0xff]
  %v117 = vld [vmem:[%s2 + $0x1a8] sm:$0xff]
  %v118 = vld [vmem:[%s2 + $0x1b0] sm:$0xff]
  %v119 = vld [vmem:[%s2 + $0x1b8] sm:$0xff]
  %v120 = vld [vmem:[%s2 + $0x1c0] sm:$0xff]
  %v121 = vld [vmem:[%s2 + $0x1c8] sm:$0xff]
  %v122 = vld [vmem:[%s2 + $0x1d0] sm:$0xff]
  %v123 = vld [vmem:[%s2 + $0x1d8] sm:$0xff]
  %v124 = vld [vmem:[%s2 + $0x1e0] sm:$0xff]
  %v125 = vld [vmem:[%s2 + $0x1e8] sm:$0xff]
  %v126 = vld [vmem:[%s2 + $0x1f0] sm:$0xff]
  %v127 = vld [vmem:[%s2 + $0x1f8] sm:$0xff]
  %v128 = vld [vmem:[%s2 + $0x200] sm:$0xff]
  %v129 = vld [vmem:[%s2 + $0x208] sm:$0xff]
  %v130 = vld [vmem:[%s2 + $0x210] sm:$0xff]
  %v131 = vld [vmem:[%s2 + $0x218] sm:$0xff]
  %v132 = vld [vmem:[%s2 + $0x220] sm:$0xff]
  %v133 = vld [vmem:[%s2 + $0x228] sm:$0xff]
  %v134 = vld [vmem:[%s2 + $0x230] sm:$0xff]
  %v135 = vld [vmem:[%s2 + $0x238] sm:$0xff]
  %v136 = vld [vmem:[%s2 + $0x240] sm:$0xff]
  %v137 = vld [vmem:[%s2 + $0x248] sm:$0xff]
  %v138 = vld [vmem:[%s2 + $0x250] sm:$0xff]
  %v139 = vld [vmem:[%s2 + $0x258] sm:$0xff]
  %v140 = vld [vmem:[%s2 + $0x260] sm:$0xff]
  %v141 = vld [vmem:[%s2 + $0x268] sm:$0xff]
  %v142 = vld [vmem:[%s2 + $0x270] sm:$0xff]
  %v143 = vld [vmem:[%s2 + $0x278] sm:$0xff]
  %v144 = vld [vmem:[%s2 + $0x280] sm:$0xff]
  %v145 = vld [vmem:[%s2 + $0x288] sm:$0xff]
  %v146 = vld [vmem:[%s2 + $0x290] sm:$0xff]
  %v147 = vld [vmem:[%s2 + $0x298] sm:$0xff]
  %v148 = vld [vmem:[%s2 + $0x2a0] sm:$0xff]
  %v149 = vld [vmem:[%s2 + $0x2a8] sm:$0xff]
  %v150 = vld [vmem:[%s2 + $0x2b0] sm:$0xff]
  %v151 = vld [vmem:[%s2 + $0x2b8] sm:$0xff]
  %v152 = vld [vmem:[%s2 + $0x2c0] sm:$0xff]
  %v153 = vld [vmem:[%s2 + $0x2c8] sm:$0xff]
  %v154 = vld [vmem:[%s2 + $0x2d0] sm:$0xff]
  %v155 = vld [vmem:[%s2 + $0x2d8] sm:$0xff]
  %v156 = vld [vmem:[%s2 + $0x2e0] sm:$0xff]
  %v157 = vld [vmem:[%s2 + $0x2e8] sm:$0xff]
  %v158 = vld [vmem:[%s2 + $0x2f0] sm:$0xff]
  %v159 = vld [vmem:[%s2 + $0x2f8] sm:$0xff]
  %v160 = vld [vmem:[%s2 + $0x300] sm:$0xff]
  %v161 = vld [vmem:[%s2 + $0x308] sm:$0xff]
  %v162 = vld [vmem:[%s2 + $0x310] sm:$0xff]
  %v163 = vld [vmem:[%s2 + $0x318] sm:$0xff]
  %v164 = vld [vmem:[%s2 + $0x320] sm:$0xff]
  %v165 = vld [vmem:[%s2 + $0x328] sm:$0xff]
  %v166 = vld [vmem:[%s2 + $0x330] sm:$0xff]
  %v167 = vld [vmem:[%s2 + $0x338] sm:$0xff]
  %v168 = vld [vmem:[%s2 + $0x340] sm:$0xff]
  %v169 = vld [vmem:[%s2 + $0x348] sm:$0xff]
  %v170 = vld [vmem:[%s2 + $0x350] sm:$0xff]
  %v171 = vld [vmem:[%s2 + $0x358] sm:$0xff]
  %v172 = vld [vmem:[%s2 + $0x360] sm:$0xff]
  %v173 = vld [vmem:[%s2 + $0x368] sm:$0xff]
  %v174 = vld [vmem:[%s2 + $0x370] sm:$0xff]
  %v175 = vld [vmem:[%s2 + $0x378] sm:$0xff]
  %v176 = vld [vmem:[%s2 + $0x380] sm:$0xff]
  %v177 = vld [vmem:[%s2 + $0x388] sm:$0xff]
  %v178 = vld [vmem:[%s2 + $0x390] sm:$0xff]
  %v179 = vld [vmem:[%s2 + $0x398] sm:$0xff]
  %v180 = vld [vmem:[%s2 + $0x3a0] sm:$0xff]
  %v181 = vld [vmem:[%s2 + $0x3a8] sm:$0xff]
  %v182 = vld [vmem:[%s2 + $0x3b0] sm:$0xff]
  %v183 = vld [vmem:[%s2 + $0x3b8] sm:$0xff]
  %v184 = vld [vmem:[%s2 + $0x3c0] sm:$0xff]
  %v185 = vld [vmem:[%s2 + $0x3c8] sm:$0xff]
  %v186 = vld [vmem:[%s2 + $0x3d0] sm:$0xff]
  %v187 = vld [vmem:[%s2 + $0x3d8] sm:$0xff]
  %v188 = vld [vmem:[%s2 + $0x3e0] sm:$0xff]
  %v189 = vld [vmem:[%s2 + $0x3e8] sm:$0xff]
  %v190 = vld [vmem:[%s2 + $0x3f0] sm:$0xff]
  %v191 = vld [vmem:[%s2 + $0x3f8] sm:$0xff]
  %v192 = vld [vmem:[%s2 + $0x400] sm:$0xff]
  %v193 = vld [vmem:[%s2 + $0x408] sm:$0xff]
  %v194 = vld [vmem:[%s2 + $0x410] sm:$0xff]
  %v195 = vld [vmem:[%s2 + $0x418] sm:$0xff]
  %v196 = vld [vmem:[%s2 + $0x420] sm:$0xff]
  %v197 = vld [vmem:[%s2 + $0x428] sm:$0xff]
  %v198 = vld [vmem:[%s2 + $0x430] sm:$0xff]
  %v199 = vld [vmem:[%s2 + $0x438] sm:$0xff]
  %v200 = vld [vmem:[%s2 + $0x440] sm:$0xff]
  %v201 = vld [vmem:[%s2 + $0x448] sm:$0xff]
  %v202 = vld [vmem:[%s2 + $0x450] sm:$0xff]
  %v203 = vld [vmem:[%s2 + $0x458] sm:$0xff]
  %v204 = vld [vmem:[%s2 + $0x460] sm:$0xff]
  %v205 = vld [vmem:[%s2 + $0x468] sm:$0xff]
  %v206 = vld [vmem:[%s2 + $0x470] sm:$0xff]
  %v207 = vld [vmem:[%s2 + $0x478] sm:$0xff]
  %v208 = vld [vmem:[%s2 + $0x480] sm:$0xff]
  %v209 = vld [vmem:[%s2 + $0x488] sm:$0xff]
  %v210 = vld [vmem:[%s2 + $0x490] sm:$0xff]
  %v211 = vld [vmem:[%s2 + $0x498] sm:$0xff]
  %v212 = vld [vmem:[%s2 + $0x4a0] sm:$0xff]
  %v213 = vld [vmem:[%s2 + $0x4a8] sm:$0xff]
  %v214 = vld [vmem:[%s2 + $0x4b0] sm:$0xff]
  %v215 = vld [vmem:[%s2 + $0x4b8] sm:$0xff]
  %v216 = vld [vmem:[%s2 + $0x4c0] sm:$0xff]
  %v217 = vld [vmem:[%s2 + $0x4c8] sm:$0xff]
  %v218 = vld [vmem:[%s2 + $0x4d0] sm:$0xff]
  %v219 = vld [vmem:[%s2 + $0x4d8] sm:$0xff]
  %v220 = vld [vmem:[%s2 + $0x4e0] sm:$0xff]
  %v221 = vld [vmem:[%s2 + $0x4e8] sm:$0xff]
  %v222 = vld [vmem:[%s2 + $0x4f0] sm:$0xff]
  %v223 = vld [vmem:[%s2 + $0x4f8] sm:$0xff]
  %v224 = vld [vmem:[%s2 + $0x500] sm:$0xff]
  %v225 = vld [vmem:[%s2 + $0x508] sm:$0xff]
  %v226 = vld [vmem:[%s2 + $0x510] sm:$0xff]
  %v227 = vld [vmem:[%s2 + $0x518] sm:$0xff]
  %v228 = vld [vmem:[%s2 + $0x520] sm:$0xff]
  %v229 = vld [vmem:[%s2 + $0x528] sm:$0xff]
  %v230 = vld [vmem:[%s2 + $0x530] sm:$0xff]
  %v231 = vld [vmem:[%s2 + $0x538] sm:$0xff]
  %v232 = vld [vmem:[%s2 + $0x540] sm:$0xff]
  %v233 = vld [vmem:[%s2 + $0x548] sm:$0xff]
  %v234 = vld [vmem:[%s2 + $0x550] sm:$0xff]
  %v235 = vld [vmem:[%s2 + $0x558] sm:$0xff]
  %v236 = vld [vmem:[%s2 + $0x560] sm:$0xff]
  %v237 = vld [vmem:[%s2 + $0x568] sm:$0xff]
  %v238 = vld [vmem:[%s2 + $0x570] sm:$0xff]
  %v239 = vld [vmem:[%s2 + $0x578] sm:$0xff]
  %v240 = vld [vmem:[%s2 + $0x580] sm:$0xff]
  %v241 = vld [vmem:[%s2 + $0x588] sm:$0xff]
  %v242 = vld [vmem:[%s2 + $0x590] sm:$0xff]
  %v243 = vld [vmem:[%s2 + $0x598] sm:$0xff]
  %v244 = vld [vmem:[%s2 + $0x5a0] sm:$0xff]
  %v245 = vld [vmem:[%s2 + $0x5a8] sm:$0xff]
  %v246 = vld [vmem:[%s2 + $0x5b0] sm:$0xff]
  %v247 = vld [vmem:[%s2 + $0x5b8] sm:$0xff]
  %v248 = vld [vmem:[%s2 + $0x5c0] sm:$0xff]
  %v249 = vld [vmem:[%s2 + $0x5c8] sm:$0xff]
  %v250 = vld [vmem:[%s2 + $0x5d0] sm:$0xff]
  %v251 = vld [vmem:[%s2 + $0x5d8] sm:$0xff]
  %v252 = vld [vmem:[%s2 + $0x5e0] sm:$0xff]
  %v253 = vld [vmem:[%s2 + $0x5e8] sm:$0xff]
  %v254 = vld [vmem:[%s2 + $0x5f0] sm:$0xff]
  %v255 = vld [vmem:[%s2 + $0x5f8] sm:$0xff]
  %v256 = vld [vmem:[%s2 + $0x600] sm:$0xff]
  %v257 = vld [vmem:[%s2 + $0x608] sm:$0xff]
  %v258 = vld [vmem:[%s2 + $0x610] sm:$0xff]
  %v259 = vld [vmem:[%s2 + $0x618] sm:$0xff]
  %v260 = vld [vmem:[%s2 + $0x620] sm:$0xff]
  %v261 = vld [vmem:[%s2 + $0x628] sm:$0xff]
  %v262 = vld [vmem:[%s2 + $0x630] sm:$0xff]
  %v263 = vld [vmem:[%s2 + $0x638] sm:$0xff]
  %v264 = vld [vmem:[%s2 + $0x640] sm:$0xff]
  %v265 = vld [vmem:[%s2 + $0x648] sm:$0xff]
  %v266 = vld [vmem:[%s2 + $0x650] sm:$0xff]
  %v267 = vld [vmem:[%s2 + $0x658] sm:$0xff]
  %v268 = vld [vmem:[%s2 + $0x660] sm:$0xff]
  %v269 = vld [vmem:[%s2 + $0x668] sm:$0xff]
  %v270 = vld [vmem:[%s2 + $0x670] sm:$0xff]
  %v271 = vld [vmem:[%s2 + $0x678] sm:$0xff]
  %v272 = vld [vmem:[%s2 + $0x680] sm:$0xff]
  %v273 = vld [vmem:[%s2 + $0x688] sm:$0xff]
  %v274 = vld [vmem:[%s2 + $0x690] sm:$0xff]
  %v275 = vld [vmem:[%s2 + $0x698] sm:$0xff]
  %v276 = vld [vmem:[%s2 + $0x6a0] sm:$0xff]
  %v277 = vld [vmem:[%s2 + $0x6a8] sm:$0xff]
  %v278 = vld [vmem:[%s2 + $0x6b0] sm:$0xff]
  %v279 = vld [vmem:[%s2 + $0x6b8] sm:$0xff]
  %v280 = vld [vmem:[%s2 + $0x6c0] sm:$0xff]
  %v281 = vld [vmem:[%s2 + $0x6c8] sm:$0xff]
  %v282 = vld [vmem:[%s2 + $0x6d0] sm:$0xff]
  %v283 = vld [vmem:[%s2 + $0x6d8] sm:$0xff]
  %v284 = vld [vmem:[%s2 + $0x6e0] sm:$0xff]
  %v285 = vld [vmem:[%s2 + $0x6e8] sm:$0xff]
  %v286 = vld [vmem:[%s2 + $0x6f0] sm:$0xff]
  %v287 = vld [vmem:[%s2 + $0x6f8] sm:$0xff]
  %v288 = vld [vmem:[%s2 + $0x700] sm:$0xff]
  %v289 = vld [vmem:[%s2 + $0x708] sm:$0xff]
  %v290 = vld [vmem:[%s2 + $0x710] sm:$0xff]
  %v291 = vld [vmem:[%s2 + $0x718] sm:$0xff]
  %v292 = vld [vmem:[%s2 + $0x720] sm:$0xff]
  %v293 = vld [vmem:[%s2 + $0x728] sm:$0xff]
  %v294 = vld [vmem:[%s2 + $0x730] sm:$0xff]
  %v295 = vld [vmem:[%s2 + $0x738] sm:$0xff]
  %v296 = vld [vmem:[%s2 + $0x740] sm:$0xff]
  %v297 = vld [vmem:[%s2 + $0x748] sm:$0xff]
  %v298 = vld [vmem:[%s2 + $0x750] sm:$0xff]
  %v299 = vld [vmem:[%s2 + $0x758] sm:$0xff]
  %v300 = vld [vmem:[%s2 + $0x760] sm:$0xff]
  %v301 = vld [vmem:[%s2 + $0x768] sm:$0xff]
  %v302 = vld [vmem:[%s2 + $0x770] sm:$0xff]
  %v303 = vld [vmem:[%s2 + $0x778] sm:$0xff]
  %v304 = vld [vmem:[%s2 + $0x780] sm:$0xff]
  %v305 = vld [vmem:[%s2 + $0x788] sm:$0xff]
  %v306 = vld [vmem:[%s2 + $0x790] sm:$0xff]
  %v307 = vld [vmem:[%s2 + $0x798] sm:$0xff]
  %v308 = vld [vmem:[%s2 + $0x7a0] sm:$0xff]
  %v309 = vld [vmem:[%s2 + $0x7a8] sm:$0xff]
  %v310 = vld [vmem:[%s2 + $0x7b0] sm:$0xff]
  %v311 = vld [vmem:[%s2 + $0x7b8] sm:$0xff]
  %v312 = vld [vmem:[%s2 + $0x7c0] sm:$0xff]
  %v313 = vld [vmem:[%s2 + $0x7c8] sm:$0xff]
  %v314 = vld [vmem:[%s2 + $0x7d0] sm:$0xff]
  %v315 = vld [vmem:[%s2 + $0x7d8] sm:$0xff]
  %v316 = vld [vmem:[%s2 + $0x7e0] sm:$0xff]
  %v317 = vld [vmem:[%s2 + $0x7e8] sm:$0xff]
  %v318 = vld [vmem:[%s2 + $0x7f0] sm:$0xff]
  %v319 = vld [vmem:[%s2 + $0x7f8] sm:$0xff]
  %v320 = vld [vmem:[%s2 + $0x800] sm:$0xff]
  %v321 = vld [vmem:[%s2 + $0x808] sm:$0xff]
  %v322 = vld [vmem:[%s2 + $0x810] sm:$0xff]
  %v323 = vld [vmem:[%s2 + $0x818] sm:$0xff]
  %v324 = vld [vmem:[%s2 + $0x820] sm:$0xff]
  %v325 = vld [vmem:[%s2 + $0x828] sm:$0xff]
  %v326 = vld [vmem:[%s2 + $0x830] sm:$0xff]
  %v327 = vld [vmem:[%s2 + $0x838] sm:$0xff]
  %v328 = vld [vmem:[%s2 + $0x840] sm:$0xff]
  %v329 = vld [vmem:[%s2 + $0x848] sm:$0xff]
  %v330 = vld [vmem:[%s2 + $0x850] sm:$0xff]
  %v331 = vld [vmem:[%s2 + $0x858] sm:$0xff]
  %v332 = vld [vmem:[%s2 + $0x860] sm:$0xff]
  %v333 = vld [vmem:[%s2 + $0x868] sm:$0xff]
  %v334 = vld [vmem:[%s2 + $0x870] sm:$0xff]
  %v335 = vld [vmem:[%s2 + $0x878] sm:$0xff]
  %v336 = vld [vmem:[%s2 + $0x880] sm:$0xff]
  %v337 = vld [vmem:[%s2 + $0x888] sm:$0xff]
  %v338 = vld [vmem:[%s2 + $0x890] sm:$0xff]
  %v339 = vld [vmem:[%s2 + $0x898] sm:$0xff]
  %v340 = vld [vmem:[%s2 + $0x8a0] sm:$0xff]
  %v341 = vld [vmem:[%s2 + $0x8a8] sm:$0xff]
  %v342 = vld [vmem:[%s2 + $0x8b0] sm:$0xff]
  %v343 = vld [vmem:[%s2 + $0x8b8] sm:$0xff]
  %v344 = vld [vmem:[%s2 + $0x8c0] sm:$0xff]
  %v345 = vld [vmem:[%s2 + $0x8c8] sm:$0xff]
  %v346 = vld [vmem:[%s2 + $0x8d0] sm:$0xff]
  %v347 = vld [vmem:[%s2 + $0x8d8] sm:$0xff]
  %v348 = vld [vmem:[%s2 + $0x8e0] sm:$0xff]
  %v349 = vld [vmem:[%s2 + $0x8e8] sm:$0xff]
  %v350 = vld [vmem:[%s2 + $0x8f0] sm:$0xff]
  %v351 = vld [vmem:[%s2 + $0x8f8] sm:$0xff]
  %v352 = vld [vmem:[%s2 + $0x900] sm:$0xff]
  %v353 = vld [vmem:[%s2 + $0x908] sm:$0xff]
  %v354 = vld [vmem:[%s2 + $0x910] sm:$0xff]
  %v355 = vld [vmem:[%s2 + $0x918] sm:$0xff]
  %v356 = vld [vmem:[%s2 + $0x920] sm:$0xff]
  %v357 = vld [vmem:[%s2 + $0x928] sm:$0xff]
  %v358 = vld [vmem:[%s2 + $0x930] sm:$0xff]
  %v359 = vld [vmem:[%s2 + $0x938] sm:$0xff]
  %v360 = vld [vmem:[%s2 + $0x940] sm:$0xff]
  %v361 = vld [vmem:[%s2 + $0x948] sm:$0xff]
  %v362 = vld [vmem:[%s2 + $0x950] sm:$0xff]
  %v363 = vld [vmem:[%s2 + $0x958] sm:$0xff]
  %v364 = vld [vmem:[%s2 + $0x960] sm:$0xff]
  %v365 = vld [vmem:[%s2 + $0x968] sm:$0xff]
  %v366 = vld [vmem:[%s2 + $0x970] sm:$0xff]
  %v367 = vld [vmem:[%s2 + $0x978] sm:$0xff]
  %v368 = vld [vmem:[%s2 + $0x980] sm:$0xff]
  %v369 = vld [vmem:[%s2 + $0x988] sm:$0xff]
  %v370 = vld [vmem:[%s2 + $0x990] sm:$0xff]
  %v371 = vld [vmem:[%s2 + $0x998] sm:$0xff]
  %v372 = vld [vmem:[%s2 + $0x9a0] sm:$0xff]
  %v373 = vld [vmem:[%s2 + $0x9a8] sm:$0xff]
  %v374 = vld [vmem:[%s2 + $0x9b0] sm:$0xff]
  %v375 = vld [vmem:[%s2 + $0x9b8] sm:$0xff]
  %v376 = vld [vmem:[%s2 + $0x9c0] sm:$0xff]
  %v377 = vld [vmem:[%s2 + $0x9c8] sm:$0xff]
  %v378 = vld [vmem:[%s2 + $0x9d0] sm:$0xff]
  %v379 = vld [vmem:[%s2 + $0x9d8] sm:$0xff]
  %v380 = vld [vmem:[%s2 + $0x9e0] sm:$0xff]
  %v381 = vld [vmem:[%s2 + $0x9e8] sm:$0xff]
  %v382 = vld [vmem:[%s2 + $0x9f0] sm:$0xff]
  %v383 = vld [vmem:[%s2 + $0x9f8] sm:$0xff]
  %v384 = vld [vmem:[%s2 + $0xa00] sm:$0xff]
  %v385 = vld [vmem:[%s2 + $0xa08] sm:$0xff]
  %v386 = vld [vmem:[%s2 + $0xa10] sm:$0xff]
  %v387 = vld [vmem:[%s2 + $0xa18] sm:$0xff]
  %v388 = vld [vmem:[%s2 + $0xa20] sm:$0xff]
  %v389 = vld [vmem:[%s2 + $0xa28] sm:$0xff]
  %v390 = vld [vmem:[%s2 + $0xa30] sm:$0xff]
  %v391 = vld [vmem:[%s2 + $0xa38] sm:$0xff]
  %v392 = vld [vmem:[%s2 + $0xa40] sm:$0xff]
  %v393 = vld [vmem:[%s2 + $0xa48] sm:$0xff]
  %v394 = vld [vmem:[%s2 + $0xa50] sm:$0xff]
  %v395 = vld [vmem:[%s2 + $0xa58] sm:$0xff]
  %v396 = vld [vmem:[%s2 + $0xa60] sm:$0xff]
  %v397 = vld [vmem:[%s2 + $0xa68] sm:$0xff]
  %v398 = vld [vmem:[%s2 + $0xa70] sm:$0xff]
  %v399 = vld [vmem:[%s2 + $0xa78] sm:$0xff]
  %v400 = vld [vmem:[%s2 + $0xa80] sm:$0xff]
  %v401 = vld [vmem:[%s2 + $0xa88] sm:$0xff]
  %v402 = vld [vmem:[%s2 + $0xa90] sm:$0xff]
  %v403 = vld [vmem:[%s2 + $0xa98] sm:$0xff]
  %v404 = vld [vmem:[%s2 + $0xaa0] sm:$0xff]
  %v405 = vld [vmem:[%s2 + $0xaa8] sm:$0xff]
  %v406 = vld [vmem:[%s2 + $0xab0] sm:$0xff]
  %v407 = vld [vmem:[%s2 + $0xab8] sm:$0xff]
  %v408 = vld [vmem:[%s2 + $0xac0] sm:$0xff]
  %v409 = vld [vmem:[%s2 + $0xac8] sm:$0xff]
  %v410 = vld [vmem:[%s2 + $0xad0] sm:$0xff]
  %v411 = vld [vmem:[%s2 + $0xad8] sm:$0xff]
  %v412 = vld [vmem:[%s2 + $0xae0] sm:$0xff]
  %v413 = vld [vmem:[%s2 + $0xae8] sm:$0xff]
  %v414 = vld [vmem:[%s2 + $0xaf0] sm:$0xff]
  %v415 = vld [vmem:[%s2 + $0xaf8] sm:$0xff]
  %v416 = vld [vmem:[%s2 + $0xb00] sm:$0xff]
  %v417 = vld [vmem:[%s2 + $0xb08] sm:$0xff]
  %v418 = vld [vmem:[%s2 + $0xb10] sm:$0xff]
  %v419 = vld [vmem:[%s2 + $0xb18] sm:$0xff]
  %v420 = vld [vmem:[%s2 + $0xb20] sm:$0xff]
  %v421 = vld [vmem:[%s2 + $0xb28] sm:$0xff]
  %v422 = vld [vmem:[%s2 + $0xb30] sm:$0xff]
  %v423 = vld [vmem:[%s2 + $0xb38] sm:$0xff]
  %v466 = vunpack.c.l.b16 %v22
  %v467 = vunpack.c.h.b16 %v22
  %v468 = vunpack.c.l.b16 %v23
  %v469 = vunpack.c.h.b16 %v23
  %v470 = vunpack.c.l.b16 %v24
  %v471 = vunpack.c.h.b16 %v24
  %v472 = vunpack.c.l.b16 %v25
  %v473 = vunpack.c.h.b16 %v25
  %v474 = vunpack.c.l.b16 %v26
  %v475 = vunpack.c.h.b16 %v26
  %v476 = vunpack.c.l.b16 %v27
  %v477 = vunpack.c.h.b16 %v27
  %v478 = vunpack.c.l.b16 %v28
  %v479 = vunpack.c.h.b16 %v28
  %v480 = vunpack.c.l.b16 %v29
  %v481 = vunpack.c.h.b16 %v29
  %v482 = vunpack.c.l.b16 %v30
  %v483 = vunpack.c.h.b16 %v30
  %v484 = vunpack.c.l.b16 %v31
  %v485 = vunpack.c.h.b16 %v31
  %v486 = vunpack.c.l.b16 %v32
  %v487 = vunpack.c.h.b16 %v32
  %v488 = vunpack.c.l.b16 %v33
  %v489 = vunpack.c.h.b16 %v33
  %v490 = vunpack.c.l.b16 %v34
  %v491 = vunpack.c.h.b16 %v34
  %v492 = vunpack.c.l.b16 %v35
  %v493 = vunpack.c.h.b16 %v35
  %v494 = vunpack.c.l.b16 %v36
  %v495 = vunpack.c.h.b16 %v36
  %v496 = vunpack.c.l.b16 %v37
  %v497 = vunpack.c.h.b16 %v37
  %v498 = vunpack.c.l.b16 %v38
  %v499 = vunpack.c.h.b16 %v38
  %v500 = vunpack.c.l.b16 %v39
  %v501 = vunpack.c.h.b16 %v39
  %v502 = vunpack.c.l.b16 %v40
  %v503 = vunpack.c.h.b16 %v40
  %v504 = vunpack.c.l.b16 %v41
  %v505 = vunpack.c.h.b16 %v41
  %v506 = vunpack.c.l.b16 %v42
  %v507 = vunpack.c.h.b16 %v42
  %v508 = vunpack.c.l.b16 %v43
  %v509 = vunpack.c.h.b16 %v43
  %v510 = vunpack.c.l.b16 %v44
  %v511 = vunpack.c.h.b16 %v44
  %v512 = vunpack.c.l.b16 %v45
  %v513 = vunpack.c.h.b16 %v45
  %v514 = vunpack.c.l.b16 %v46
  %v515 = vunpack.c.h.b16 %v46
  %v516 = vunpack.c.l.b16 %v47
  %v517 = vunpack.c.h.b16 %v47
  %v518 = vunpack.c.l.b16 %v48
  %v519 = vunpack.c.h.b16 %v48
  %v520 = vunpack.c.l.b16 %v49
  %v521 = vunpack.c.h.b16 %v49
  %v522 = vunpack.c.l.b16 %v50
  %v523 = vunpack.c.h.b16 %v50
  %v524 = vunpack.c.l.b16 %v51
  %v525 = vunpack.c.h.b16 %v51
  %v526 = vunpack.c.l.b16 %v52
  %v527 = vunpack.c.h.b16 %v52
  %v528 = vunpack.c.l.b16 %v53
  %v529 = vunpack.c.h.b16 %v53
  %v530 = vunpack.c.l.b16 %v54
  %v531 = vunpack.c.h.b16 %v54
  %v532 = vunpack.c.l.b16 %v55
  %v533 = vunpack.c.h.b16 %v55
  %v534 = vunpack.c.l.b16 %v56
  %v535 = vunpack.c.h.b16 %v56
  %v536 = vunpack.c.l.b16 %v57
  %v537 = vunpack.c.h.b16 %v57
  %v538 = vunpack.c.l.b16 %v58
  %v539 = vunpack.c.h.b16 %v58
  %v540 = vunpack.c.l.b16 %v59
  %v541 = vunpack.c.h.b16 %v59
  %v542 = vunpack.c.l.b16 %v60
  %v543 = vunpack.c.h.b16 %v60
  %v544 = vunpack.c.l.b16 %v61
  %v545 = vunpack.c.h.b16 %v61
  %v546 = vunpack.c.l.b16 %v62
  %v547 = vunpack.c.h.b16 %v62
  %v548 = vunpack.c.l.b16 %v63
  %v549 = vunpack.c.h.b16 %v63
  %v550 = vpack.c.b16 %v478, %v466
  %v551 = vpack.c.b16 %v479, %v467
  %v552 = vpack.c.b16 %v480, %v468
  %v553 = vpack.c.b16 %v481, %v469
  %v554 = vpack.c.b16 %v482, %v470
  %v555 = vpack.c.b16 %v483, %v471
  %v556 = vpack.c.b16 %v484, %v472
  %v557 = vpack.c.b16 %v485, %v473
  %v558 = vpack.c.b16 %v486, %v474
  %v559 = vpack.c.b16 %v487, %v475
  %v560 = vpack.c.b16 %v488, %v476
  %v561 = vpack.c.b16 %v489, %v477
  %v562 = vpack.c.b16 %v502, %v490
  %v563 = vpack.c.b16 %v503, %v491
  %v564 = vpack.c.b16 %v504, %v492
  %v565 = vpack.c.b16 %v505, %v493
  %v566 = vpack.c.b16 %v506, %v494
  %v567 = vpack.c.b16 %v507, %v495
  %v568 = vpack.c.b16 %v508, %v496
  %v569 = vpack.c.b16 %v509, %v497
  %v570 = vpack.c.b16 %v510, %v498
  %v571 = vpack.c.b16 %v511, %v499
  %v572 = vpack.c.b16 %v512, %v500
  %v573 = vpack.c.b16 %v513, %v501
  %v574 = vpack.c.b16 %v526, %v514
  %v575 = vpack.c.b16 %v527, %v515
  %v576 = vpack.c.b16 %v528, %v516
  %v577 = vpack.c.b16 %v529, %v517
  %v578 = vpack.c.b16 %v530, %v518
  %v579 = vpack.c.b16 %v531, %v519
  %v580 = vpack.c.b16 %v532, %v520
  %v581 = vpack.c.b16 %v533, %v521
  %v582 = vpack.c.b16 %v534, %v522
  %v583 = vpack.c.b16 %v535, %v523
  %v584 = vpack.c.b16 %v536, %v524
  %v585 = vpack.c.b16 %v537, %v525
  %v586 = vpack.c.b16 %v538, %v538
  %v587 = vpack.c.b16 %v539, %v539
  %v588 = vpack.c.b16 %v540, %v540
  %v589 = vpack.c.b16 %v541, %v541
  %v590 = vpack.c.b16 %v542, %v542
  %v591 = vpack.c.b16 %v543, %v543
  %v592 = vpack.c.b16 %v544, %v544
  %v593 = vpack.c.b16 %v545, %v545
  %v594 = vpack.c.b16 %v546, %v546
  %v595 = vpack.c.b16 %v547, %v547
  %v596 = vpack.c.b16 %v548, %v548
  %v597 = vpack.c.b16 %v549, %v549
  %v1002 = vunpack.c.l.b16 %v64
  %v1003 = vunpack.c.h.b16 %v64
  %v1004 = vunpack.c.l.b16 %v65
  %v1005 = vunpack.c.h.b16 %v65
  %v1006 = vunpack.c.l.b16 %v66
  %v1007 = vunpack.c.h.b16 %v66
  %v1008 = vunpack.c.l.b16 %v67
  %v1009 = vunpack.c.h.b16 %v67
  %v1010 = vunpack.c.l.b16 %v68
  %v1011 = vunpack.c.h.b16 %v68
  %v1012 = vunpack.c.l.b16 %v69
  %v1013 = vunpack.c.h.b16 %v69
  %v1014 = vunpack.c.l.b16 %v70
  %v1015 = vunpack.c.h.b16 %v70
  %v1016 = vunpack.c.l.b16 %v71
  %v1017 = vunpack.c.h.b16 %v71
  %v1018 = vunpack.c.l.b16 %v72
  %v1019 = vunpack.c.h.b16 %v72
  %v1020 = vunpack.c.l.b16 %v73
  %v1021 = vunpack.c.h.b16 %v73
  %v1022 = vunpack.c.l.b16 %v74
  %v1023 = vunpack.c.h.b16 %v74
  %v1024 = vunpack.c.l.b16 %v75
  %v1025 = vunpack.c.h.b16 %v75
  %v1026 = vunpack.c.l.b16 %v76
  %v1027 = vunpack.c.h.b16 %v76
  %v1028 = vunpack.c.l.b16 %v77
  %v1029 = vunpack.c.h.b16 %v77
  %v1030 = vunpack.c.l.b16 %v78
  %v1031 = vunpack.c.h.b16 %v78
  %v1032 = vunpack.c.l.b16 %v79
  %v1033 = vunpack.c.h.b16 %v79
  %v1034 = vunpack.c.l.b16 %v80
  %v1035 = vunpack.c.h.b16 %v80
  %v1036 = vunpack.c.l.b16 %v81
  %v1037 = vunpack.c.h.b16 %v81
  %v1038 = vunpack.c.l.b16 %v82
  %v1039 = vunpack.c.h.b16 %v82
  %v1040 = vunpack.c.l.b16 %v83
  %v1041 = vunpack.c.h.b16 %v83
  %v1042 = vunpack.c.l.b16 %v84
  %v1043 = vunpack.c.h.b16 %v84
  %v1044 = vunpack.c.l.b16 %v85
  %v1045 = vunpack.c.h.b16 %v85
  %v1046 = vunpack.c.l.b16 %v86
  %v1047 = vunpack.c.h.b16 %v86
  %v1048 = vunpack.c.l.b16 %v87
  %v1049 = vunpack.c.h.b16 %v87
  %v1050 = vunpack.c.l.b16 %v88
  %v1051 = vunpack.c.h.b16 %v88
  %v1052 = vunpack.c.l.b16 %v89
  %v1053 = vunpack.c.h.b16 %v89
  %v1054 = vunpack.c.l.b16 %v90
  %v1055 = vunpack.c.h.b16 %v90
  %v1056 = vunpack.c.l.b16 %v91
  %v1057 = vunpack.c.h.b16 %v91
  %v1058 = vunpack.c.l.b16 %v92
  %v1059 = vunpack.c.h.b16 %v92
  %v1060 = vunpack.c.l.b16 %v93
  %v1061 = vunpack.c.h.b16 %v93
  %v1062 = vunpack.c.l.b16 %v94
  %v1063 = vunpack.c.h.b16 %v94
  %v1064 = vunpack.c.l.b16 %v95
  %v1065 = vunpack.c.h.b16 %v95
  %v1066 = vunpack.c.l.b16 %v96
  %v1067 = vunpack.c.h.b16 %v96
  %v1068 = vunpack.c.l.b16 %v97
  %v1069 = vunpack.c.h.b16 %v97
  %v1070 = vunpack.c.l.b16 %v98
  %v1071 = vunpack.c.h.b16 %v98
  %v1072 = vunpack.c.l.b16 %v99
  %v1073 = vunpack.c.h.b16 %v99
  %v1074 = vunpack.c.l.b16 %v100
  %v1075 = vunpack.c.h.b16 %v100
  %v1076 = vunpack.c.l.b16 %v101
  %v1077 = vunpack.c.h.b16 %v101
  %v1078 = vunpack.c.l.b16 %v102
  %v1079 = vunpack.c.h.b16 %v102
  %v1080 = vunpack.c.l.b16 %v103
  %v1081 = vunpack.c.h.b16 %v103
  %v1082 = vunpack.c.l.b16 %v104
  %v1083 = vunpack.c.h.b16 %v104
  %v1084 = vunpack.c.l.b16 %v105
  %v1085 = vunpack.c.h.b16 %v105
  %v1086 = vunpack.c.l.b16 %v106
  %v1087 = vunpack.c.h.b16 %v106
  %v1088 = vunpack.c.l.b16 %v107
  %v1089 = vunpack.c.h.b16 %v107
  %v1090 = vunpack.c.l.b16 %v108
  %v1091 = vunpack.c.h.b16 %v108
  %v1092 = vunpack.c.l.b16 %v109
  %v1093 = vunpack.c.h.b16 %v109
  %v1094 = vunpack.c.l.b16 %v110
  %v1095 = vunpack.c.h.b16 %v110
  %v1096 = vunpack.c.l.b16 %v111
  %v1097 = vunpack.c.h.b16 %v111
  %v1098 = vunpack.c.l.b16 %v112
  %v1099 = vunpack.c.h.b16 %v112
  %v1100 = vunpack.c.l.b16 %v113
  %v1101 = vunpack.c.h.b16 %v113
  %v1102 = vunpack.c.l.b16 %v114
  %v1103 = vunpack.c.h.b16 %v114
  %v1104 = vunpack.c.l.b16 %v115
  %v1105 = vunpack.c.h.b16 %v115
  %v1106 = vunpack.c.l.b16 %v116
  %v1107 = vunpack.c.h.b16 %v116
  %v1108 = vunpack.c.l.b16 %v117
  %v1109 = vunpack.c.h.b16 %v117
  %v1110 = vunpack.c.l.b16 %v118
  %v1111 = vunpack.c.h.b16 %v118
  %v1112 = vunpack.c.l.b16 %v119
  %v1113 = vunpack.c.h.b16 %v119
  %v1114 = vunpack.c.l.b16 %v120
  %v1115 = vunpack.c.h.b16 %v120
  %v1116 = vunpack.c.l.b16 %v121
  %v1117 = vunpack.c.h.b16 %v121
  %v1118 = vunpack.c.l.b16 %v122
  %v1119 = vunpack.c.h.b16 %v122
  %v1120 = vunpack.c.l.b16 %v123
  %v1121 = vunpack.c.h.b16 %v123
  %v1122 = vunpack.c.l.b16 %v124
  %v1123 = vunpack.c.h.b16 %v124
  %v1124 = vunpack.c.l.b16 %v125
  %v1125 = vunpack.c.h.b16 %v125
  %v1126 = vunpack.c.l.b16 %v126
  %v1127 = vunpack.c.h.b16 %v126
  %v1128 = vunpack.c.l.b16 %v127
  %v1129 = vunpack.c.h.b16 %v127
  %v1130 = vunpack.c.l.b16 %v128
  %v1131 = vunpack.c.h.b16 %v128
  %v1132 = vunpack.c.l.b16 %v129
  %v1133 = vunpack.c.h.b16 %v129
  %v1134 = vunpack.c.l.b16 %v130
  %v1135 = vunpack.c.h.b16 %v130
  %v1136 = vunpack.c.l.b16 %v131
  %v1137 = vunpack.c.h.b16 %v131
  %v1138 = vunpack.c.l.b16 %v132
  %v1139 = vunpack.c.h.b16 %v132
  %v1140 = vunpack.c.l.b16 %v133
  %v1141 = vunpack.c.h.b16 %v133
  %v1142 = vunpack.c.l.b16 %v134
  %v1143 = vunpack.c.h.b16 %v134
  %v1144 = vunpack.c.l.b16 %v135
  %v1145 = vunpack.c.h.b16 %v135
  %v1146 = vunpack.c.l.b16 %v136
  %v1147 = vunpack.c.h.b16 %v136
  %v1148 = vunpack.c.l.b16 %v137
  %v1149 = vunpack.c.h.b16 %v137
  %v1150 = vunpack.c.l.b16 %v138
  %v1151 = vunpack.c.h.b16 %v138
  %v1152 = vunpack.c.l.b16 %v139
  %v1153 = vunpack.c.h.b16 %v139
  %v1154 = vunpack.c.l.b16 %v140
  %v1155 = vunpack.c.h.b16 %v140
  %v1156 = vunpack.c.l.b16 %v141
  %v1157 = vunpack.c.h.b16 %v141
  %v1158 = vunpack.c.l.b16 %v142
  %v1159 = vunpack.c.h.b16 %v142
  %v1160 = vunpack.c.l.b16 %v143
  %v1161 = vunpack.c.h.b16 %v143
  %v1162 = vunpack.c.l.b16 %v144
  %v1163 = vunpack.c.h.b16 %v144
  %v1164 = vunpack.c.l.b16 %v145
  %v1165 = vunpack.c.h.b16 %v145
  %v1166 = vunpack.c.l.b16 %v146
  %v1167 = vunpack.c.h.b16 %v146
  %v1168 = vunpack.c.l.b16 %v147
  %v1169 = vunpack.c.h.b16 %v147
  %v1170 = vunpack.c.l.b16 %v148
  %v1171 = vunpack.c.h.b16 %v148
  %v1172 = vunpack.c.l.b16 %v149
  %v1173 = vunpack.c.h.b16 %v149
  %v1174 = vunpack.c.l.b16 %v150
  %v1175 = vunpack.c.h.b16 %v150
  %v1176 = vunpack.c.l.b16 %v151
  %v1177 = vunpack.c.h.b16 %v151
  %v1178 = vunpack.c.l.b16 %v152
  %v1179 = vunpack.c.h.b16 %v152
  %v1180 = vunpack.c.l.b16 %v153
  %v1181 = vunpack.c.h.b16 %v153
  %v1182 = vunpack.c.l.b16 %v154
  %v1183 = vunpack.c.h.b16 %v154
  %v1184 = vunpack.c.l.b16 %v155
  %v1185 = vunpack.c.h.b16 %v155
  %v1186 = vunpack.c.l.b16 %v156
  %v1187 = vunpack.c.h.b16 %v156
  %v1188 = vunpack.c.l.b16 %v157
  %v1189 = vunpack.c.h.b16 %v157
  %v1190 = vunpack.c.l.b16 %v158
  %v1191 = vunpack.c.h.b16 %v158
  %v1192 = vunpack.c.l.b16 %v159
  %v1193 = vunpack.c.h.b16 %v159
  %v1194 = vunpack.c.l.b16 %v160
  %v1195 = vunpack.c.h.b16 %v160
  %v1196 = vunpack.c.l.b16 %v161
  %v1197 = vunpack.c.h.b16 %v161
  %v1198 = vunpack.c.l.b16 %v162
  %v1199 = vunpack.c.h.b16 %v162
  %v1200 = vunpack.c.l.b16 %v163
  %v1201 = vunpack.c.h.b16 %v163
  %v1202 = vunpack.c.l.b16 %v164
  %v1203 = vunpack.c.h.b16 %v164
  %v1204 = vunpack.c.l.b16 %v165
  %v1205 = vunpack.c.h.b16 %v165
  %v1206 = vunpack.c.l.b16 %v166
  %v1207 = vunpack.c.h.b16 %v166
  %v1208 = vunpack.c.l.b16 %v167
  %v1209 = vunpack.c.h.b16 %v167
  %v1210 = vunpack.c.l.b16 %v168
  %v1211 = vunpack.c.h.b16 %v168
  %v1212 = vunpack.c.l.b16 %v169
  %v1213 = vunpack.c.h.b16 %v169
  %v1214 = vunpack.c.l.b16 %v170
  %v1215 = vunpack.c.h.b16 %v170
  %v1216 = vunpack.c.l.b16 %v171
  %v1217 = vunpack.c.h.b16 %v171
  %v1218 = vunpack.c.l.b16 %v172
  %v1219 = vunpack.c.h.b16 %v172
  %v1220 = vunpack.c.l.b16 %v173
  %v1221 = vunpack.c.h.b16 %v173
  %v1222 = vunpack.c.l.b16 %v174
  %v1223 = vunpack.c.h.b16 %v174
  %v1224 = vunpack.c.l.b16 %v175
  %v1225 = vunpack.c.h.b16 %v175
  %v1226 = vunpack.c.l.b16 %v176
  %v1227 = vunpack.c.h.b16 %v176
  %v1228 = vunpack.c.l.b16 %v177
  %v1229 = vunpack.c.h.b16 %v177
  %v1230 = vunpack.c.l.b16 %v178
  %v1231 = vunpack.c.h.b16 %v178
  %v1232 = vunpack.c.l.b16 %v179
  %v1233 = vunpack.c.h.b16 %v179
  %v1234 = vunpack.c.l.b16 %v180
  %v1235 = vunpack.c.h.b16 %v180
  %v1236 = vunpack.c.l.b16 %v181
  %v1237 = vunpack.c.h.b16 %v181
  %v1238 = vunpack.c.l.b16 %v182
  %v1239 = vunpack.c.h.b16 %v182
  %v1240 = vunpack.c.l.b16 %v183
  %v1241 = vunpack.c.h.b16 %v183
  %v1242 = vunpack.c.l.b16 %v184
  %v1243 = vunpack.c.h.b16 %v184
  %v1244 = vunpack.c.l.b16 %v185
  %v1245 = vunpack.c.h.b16 %v185
  %v1246 = vunpack.c.l.b16 %v186
  %v1247 = vunpack.c.h.b16 %v186
  %v1248 = vunpack.c.l.b16 %v187
  %v1249 = vunpack.c.h.b16 %v187
  %v1250 = vunpack.c.l.b16 %v188
  %v1251 = vunpack.c.h.b16 %v188
  %v1252 = vunpack.c.l.b16 %v189
  %v1253 = vunpack.c.h.b16 %v189
  %v1254 = vunpack.c.l.b16 %v190
  %v1255 = vunpack.c.h.b16 %v190
  %v1256 = vunpack.c.l.b16 %v191
  %v1257 = vunpack.c.h.b16 %v191
  %v1258 = vunpack.c.l.b16 %v192
  %v1259 = vunpack.c.h.b16 %v192
  %v1260 = vunpack.c.l.b16 %v193
  %v1261 = vunpack.c.h.b16 %v193
  %v1262 = vunpack.c.l.b16 %v194
  %v1263 = vunpack.c.h.b16 %v194
  %v1264 = vunpack.c.l.b16 %v195
  %v1265 = vunpack.c.h.b16 %v195
  %v1266 = vunpack.c.l.b16 %v196
  %v1267 = vunpack.c.h.b16 %v196
  %v1268 = vunpack.c.l.b16 %v197
  %v1269 = vunpack.c.h.b16 %v197
  %v1270 = vunpack.c.l.b16 %v198
  %v1271 = vunpack.c.h.b16 %v198
  %v1272 = vunpack.c.l.b16 %v199
  %v1273 = vunpack.c.h.b16 %v199
  %v1274 = vunpack.c.l.b16 %v200
  %v1275 = vunpack.c.h.b16 %v200
  %v1276 = vunpack.c.l.b16 %v201
  %v1277 = vunpack.c.h.b16 %v201
  %v1278 = vunpack.c.l.b16 %v202
  %v1279 = vunpack.c.h.b16 %v202
  %v1280 = vunpack.c.l.b16 %v203
  %v1281 = vunpack.c.h.b16 %v203
  %v1282 = vunpack.c.l.b16 %v204
  %v1283 = vunpack.c.h.b16 %v204
  %v1284 = vunpack.c.l.b16 %v205
  %v1285 = vunpack.c.h.b16 %v205
  %v1286 = vunpack.c.l.b16 %v206
  %v1287 = vunpack.c.h.b16 %v206
  %v1288 = vunpack.c.l.b16 %v207
  %v1289 = vunpack.c.h.b16 %v207
  %v1290 = vunpack.c.l.b16 %v208
  %v1291 = vunpack.c.h.b16 %v208
  %v1292 = vunpack.c.l.b16 %v209
  %v1293 = vunpack.c.h.b16 %v209
  %v1294 = vunpack.c.l.b16 %v210
  %v1295 = vunpack.c.h.b16 %v210
  %v1296 = vunpack.c.l.b16 %v211
  %v1297 = vunpack.c.h.b16 %v211
  %v1298 = vunpack.c.l.b16 %v212
  %v1299 = vunpack.c.h.b16 %v212
  %v1300 = vunpack.c.l.b16 %v213
  %v1301 = vunpack.c.h.b16 %v213
  %v1302 = vunpack.c.l.b16 %v214
  %v1303 = vunpack.c.h.b16 %v214
  %v1304 = vunpack.c.l.b16 %v215
  %v1305 = vunpack.c.h.b16 %v215
  %v1306 = vunpack.c.l.b16 %v216
  %v1307 = vunpack.c.h.b16 %v216
  %v1308 = vunpack.c.l.b16 %v217
  %v1309 = vunpack.c.h.b16 %v217
  %v1310 = vunpack.c.l.b16 %v218
  %v1311 = vunpack.c.h.b16 %v218
  %v1312 = vunpack.c.l.b16 %v219
  %v1313 = vunpack.c.h.b16 %v219
  %v1314 = vunpack.c.l.b16 %v220
  %v1315 = vunpack.c.h.b16 %v220
  %v1316 = vunpack.c.l.b16 %v221
  %v1317 = vunpack.c.h.b16 %v221
  %v1318 = vunpack.c.l.b16 %v222
  %v1319 = vunpack.c.h.b16 %v222
  %v1320 = vunpack.c.l.b16 %v223
  %v1321 = vunpack.c.h.b16 %v223
  %v1322 = vunpack.c.l.b16 %v224
  %v1323 = vunpack.c.h.b16 %v224
  %v1324 = vunpack.c.l.b16 %v225
  %v1325 = vunpack.c.h.b16 %v225
  %v1326 = vunpack.c.l.b16 %v226
  %v1327 = vunpack.c.h.b16 %v226
  %v1328 = vunpack.c.l.b16 %v227
  %v1329 = vunpack.c.h.b16 %v227
  %v1330 = vunpack.c.l.b16 %v228
  %v1331 = vunpack.c.h.b16 %v228
  %v1332 = vunpack.c.l.b16 %v229
  %v1333 = vunpack.c.h.b16 %v229
  %v1334 = vunpack.c.l.b16 %v230
  %v1335 = vunpack.c.h.b16 %v230
  %v1336 = vunpack.c.l.b16 %v231
  %v1337 = vunpack.c.h.b16 %v231
  %v1338 = vunpack.c.l.b16 %v232
  %v1339 = vunpack.c.h.b16 %v232
  %v1340 = vunpack.c.l.b16 %v233
  %v1341 = vunpack.c.h.b16 %v233
  %v1342 = vunpack.c.l.b16 %v234
  %v1343 = vunpack.c.h.b16 %v234
  %v1344 = vunpack.c.l.b16 %v235
  %v1345 = vunpack.c.h.b16 %v235
  %v1346 = vunpack.c.l.b16 %v236
  %v1347 = vunpack.c.h.b16 %v236
  %v1348 = vunpack.c.l.b16 %v237
  %v1349 = vunpack.c.h.b16 %v237
  %v1350 = vunpack.c.l.b16 %v238
  %v1351 = vunpack.c.h.b16 %v238
  %v1352 = vunpack.c.l.b16 %v239
  %v1353 = vunpack.c.h.b16 %v239
  %v1354 = vunpack.c.l.b16 %v240
  %v1355 = vunpack.c.h.b16 %v240
  %v1356 = vunpack.c.l.b16 %v241
  %v1357 = vunpack.c.h.b16 %v241
  %v1358 = vunpack.c.l.b16 %v242
  %v1359 = vunpack.c.h.b16 %v242
  %v1360 = vunpack.c.l.b16 %v243
  %v1361 = vunpack.c.h.b16 %v243
  %v1362 = vunpack.c.l.b16 %v244
  %v1363 = vunpack.c.h.b16 %v244
  %v1364 = vunpack.c.l.b16 %v245
  %v1365 = vunpack.c.h.b16 %v245
  %v1366 = vunpack.c.l.b16 %v246
  %v1367 = vunpack.c.h.b16 %v246
  %v1368 = vunpack.c.l.b16 %v247
  %v1369 = vunpack.c.h.b16 %v247
  %v1370 = vunpack.c.l.b16 %v248
  %v1371 = vunpack.c.h.b16 %v248
  %v1372 = vunpack.c.l.b16 %v249
  %v1373 = vunpack.c.h.b16 %v249
  %v1374 = vunpack.c.l.b16 %v250
  %v1375 = vunpack.c.h.b16 %v250
  %v1376 = vunpack.c.l.b16 %v251
  %v1377 = vunpack.c.h.b16 %v251
  %v1378 = vunpack.c.l.b16 %v252
  %v1379 = vunpack.c.h.b16 %v252
  %v1380 = vunpack.c.l.b16 %v253
  %v1381 = vunpack.c.h.b16 %v253
  %v1382 = vunpack.c.l.b16 %v254
  %v1383 = vunpack.c.h.b16 %v254
  %v1384 = vunpack.c.l.b16 %v255
  %v1385 = vunpack.c.h.b16 %v255
  %v1386 = vunpack.c.l.b16 %v256
  %v1387 = vunpack.c.h.b16 %v256
  %v1388 = vunpack.c.l.b16 %v257
  %v1389 = vunpack.c.h.b16 %v257
  %v1390 = vunpack.c.l.b16 %v258
  %v1391 = vunpack.c.h.b16 %v258
  %v1392 = vunpack.c.l.b16 %v259
  %v1393 = vunpack.c.h.b16 %v259
  %v1394 = vunpack.c.l.b16 %v260
  %v1395 = vunpack.c.h.b16 %v260
  %v1396 = vunpack.c.l.b16 %v261
  %v1397 = vunpack.c.h.b16 %v261
  %v1398 = vunpack.c.l.b16 %v262
  %v1399 = vunpack.c.h.b16 %v262
  %v1400 = vunpack.c.l.b16 %v263
  %v1401 = vunpack.c.h.b16 %v263
  %v1402 = vunpack.c.l.b16 %v264
  %v1403 = vunpack.c.h.b16 %v264
  %v1404 = vunpack.c.l.b16 %v265
  %v1405 = vunpack.c.h.b16 %v265
  %v1406 = vunpack.c.l.b16 %v266
  %v1407 = vunpack.c.h.b16 %v266
  %v1408 = vunpack.c.l.b16 %v267
  %v1409 = vunpack.c.h.b16 %v267
  %v1410 = vunpack.c.l.b16 %v268
  %v1411 = vunpack.c.h.b16 %v268
  %v1412 = vunpack.c.l.b16 %v269
  %v1413 = vunpack.c.h.b16 %v269
  %v1414 = vunpack.c.l.b16 %v270
  %v1415 = vunpack.c.h.b16 %v270
  %v1416 = vunpack.c.l.b16 %v271
  %v1417 = vunpack.c.h.b16 %v271
  %v1418 = vunpack.c.l.b16 %v272
  %v1419 = vunpack.c.h.b16 %v272
  %v1420 = vunpack.c.l.b16 %v273
  %v1421 = vunpack.c.h.b16 %v273
  %v1422 = vunpack.c.l.b16 %v274
  %v1423 = vunpack.c.h.b16 %v274
  %v1424 = vunpack.c.l.b16 %v275
  %v1425 = vunpack.c.h.b16 %v275
  %v1426 = vunpack.c.l.b16 %v276
  %v1427 = vunpack.c.h.b16 %v276
  %v1428 = vunpack.c.l.b16 %v277
  %v1429 = vunpack.c.h.b16 %v277
  %v1430 = vunpack.c.l.b16 %v278
  %v1431 = vunpack.c.h.b16 %v278
  %v1432 = vunpack.c.l.b16 %v279
  %v1433 = vunpack.c.h.b16 %v279
  %v1434 = vunpack.c.l.b16 %v280
  %v1435 = vunpack.c.h.b16 %v280
  %v1436 = vunpack.c.l.b16 %v281
  %v1437 = vunpack.c.h.b16 %v281
  %v1438 = vunpack.c.l.b16 %v282
  %v1439 = vunpack.c.h.b16 %v282
  %v1440 = vunpack.c.l.b16 %v283
  %v1441 = vunpack.c.h.b16 %v283
  %v1442 = vunpack.c.l.b16 %v284
  %v1443 = vunpack.c.h.b16 %v284
  %v1444 = vunpack.c.l.b16 %v285
  %v1445 = vunpack.c.h.b16 %v285
  %v1446 = vunpack.c.l.b16 %v286
  %v1447 = vunpack.c.h.b16 %v286
  %v1448 = vunpack.c.l.b16 %v287
  %v1449 = vunpack.c.h.b16 %v287
  %v1450 = vunpack.c.l.b16 %v288
  %v1451 = vunpack.c.h.b16 %v288
  %v1452 = vunpack.c.l.b16 %v289
  %v1453 = vunpack.c.h.b16 %v289
  %v1454 = vunpack.c.l.b16 %v290
  %v1455 = vunpack.c.h.b16 %v290
  %v1456 = vunpack.c.l.b16 %v291
  %v1457 = vunpack.c.h.b16 %v291
  %v1458 = vunpack.c.l.b16 %v292
  %v1459 = vunpack.c.h.b16 %v292
  %v1460 = vunpack.c.l.b16 %v293
  %v1461 = vunpack.c.h.b16 %v293
  %v1462 = vunpack.c.l.b16 %v294
  %v1463 = vunpack.c.h.b16 %v294
  %v1464 = vunpack.c.l.b16 %v295
  %v1465 = vunpack.c.h.b16 %v295
  %v1466 = vunpack.c.l.b16 %v296
  %v1467 = vunpack.c.h.b16 %v296
  %v1468 = vunpack.c.l.b16 %v297
  %v1469 = vunpack.c.h.b16 %v297
  %v1470 = vunpack.c.l.b16 %v298
  %v1471 = vunpack.c.h.b16 %v298
  %v1472 = vunpack.c.l.b16 %v299
  %v1473 = vunpack.c.h.b16 %v299
  %v1474 = vunpack.c.l.b16 %v300
  %v1475 = vunpack.c.h.b16 %v300
  %v1476 = vunpack.c.l.b16 %v301
  %v1477 = vunpack.c.h.b16 %v301
  %v1478 = vunpack.c.l.b16 %v302
  %v1479 = vunpack.c.h.b16 %v302
  %v1480 = vunpack.c.l.b16 %v303
  %v1481 = vunpack.c.h.b16 %v303
  %v1482 = vunpack.c.l.b16 %v304
  %v1483 = vunpack.c.h.b16 %v304
  %v1484 = vunpack.c.l.b16 %v305
  %v1485 = vunpack.c.h.b16 %v305
  %v1486 = vunpack.c.l.b16 %v306
  %v1487 = vunpack.c.h.b16 %v306
  %v1488 = vunpack.c.l.b16 %v307
  %v1489 = vunpack.c.h.b16 %v307
  %v1490 = vunpack.c.l.b16 %v308
  %v1491 = vunpack.c.h.b16 %v308
  %v1492 = vunpack.c.l.b16 %v309
  %v1493 = vunpack.c.h.b16 %v309
  %v1494 = vunpack.c.l.b16 %v310
  %v1495 = vunpack.c.h.b16 %v310
  %v1496 = vunpack.c.l.b16 %v311
  %v1497 = vunpack.c.h.b16 %v311
  %v1498 = vunpack.c.l.b16 %v312
  %v1499 = vunpack.c.h.b16 %v312
  %v1500 = vunpack.c.l.b16 %v313
  %v1501 = vunpack.c.h.b16 %v313
  %v1502 = vunpack.c.l.b16 %v314
  %v1503 = vunpack.c.h.b16 %v314
  %v1504 = vunpack.c.l.b16 %v315
  %v1505 = vunpack.c.h.b16 %v315
  %v1506 = vunpack.c.l.b16 %v316
  %v1507 = vunpack.c.h.b16 %v316
  %v1508 = vunpack.c.l.b16 %v317
  %v1509 = vunpack.c.h.b16 %v317
  %v1510 = vunpack.c.l.b16 %v318
  %v1511 = vunpack.c.h.b16 %v318
  %v1512 = vunpack.c.l.b16 %v319
  %v1513 = vunpack.c.h.b16 %v319
  %v1514 = vunpack.c.l.b16 %v320
  %v1515 = vunpack.c.h.b16 %v320
  %v1516 = vunpack.c.l.b16 %v321
  %v1517 = vunpack.c.h.b16 %v321
  %v1518 = vunpack.c.l.b16 %v322
  %v1519 = vunpack.c.h.b16 %v322
  %v1520 = vunpack.c.l.b16 %v323
  %v1521 = vunpack.c.h.b16 %v323
  %v1522 = vunpack.c.l.b16 %v324
  %v1523 = vunpack.c.h.b16 %v324
  %v1524 = vunpack.c.l.b16 %v325
  %v1525 = vunpack.c.h.b16 %v325
  %v1526 = vunpack.c.l.b16 %v326
  %v1527 = vunpack.c.h.b16 %v326
  %v1528 = vunpack.c.l.b16 %v327
  %v1529 = vunpack.c.h.b16 %v327
  %v1530 = vunpack.c.l.b16 %v328
  %v1531 = vunpack.c.h.b16 %v328
  %v1532 = vunpack.c.l.b16 %v329
  %v1533 = vunpack.c.h.b16 %v329
  %v1534 = vunpack.c.l.b16 %v330
  %v1535 = vunpack.c.h.b16 %v330
  %v1536 = vunpack.c.l.b16 %v331
  %v1537 = vunpack.c.h.b16 %v331
  %v1538 = vunpack.c.l.b16 %v332
  %v1539 = vunpack.c.h.b16 %v332
  %v1540 = vunpack.c.l.b16 %v333
  %v1541 = vunpack.c.h.b16 %v333
  %v1542 = vunpack.c.l.b16 %v334
  %v1543 = vunpack.c.h.b16 %v334
  %v1544 = vunpack.c.l.b16 %v335
  %v1545 = vunpack.c.h.b16 %v335
  %v1546 = vunpack.c.l.b16 %v336
  %v1547 = vunpack.c.h.b16 %v336
  %v1548 = vunpack.c.l.b16 %v337
  %v1549 = vunpack.c.h.b16 %v337
  %v1550 = vunpack.c.l.b16 %v338
  %v1551 = vunpack.c.h.b16 %v338
  %v1552 = vunpack.c.l.b16 %v339
  %v1553 = vunpack.c.h.b16 %v339
  %v1554 = vunpack.c.l.b16 %v340
  %v1555 = vunpack.c.h.b16 %v340
  %v1556 = vunpack.c.l.b16 %v341
  %v1557 = vunpack.c.h.b16 %v341
  %v1558 = vunpack.c.l.b16 %v342
  %v1559 = vunpack.c.h.b16 %v342
  %v1560 = vunpack.c.l.b16 %v343
  %v1561 = vunpack.c.h.b16 %v343
  %v1562 = vunpack.c.l.b16 %v344
  %v1563 = vunpack.c.h.b16 %v344
  %v1564 = vunpack.c.l.b16 %v345
  %v1565 = vunpack.c.h.b16 %v345
  %v1566 = vunpack.c.l.b16 %v346
  %v1567 = vunpack.c.h.b16 %v346
  %v1568 = vunpack.c.l.b16 %v347
  %v1569 = vunpack.c.h.b16 %v347
  %v1570 = vunpack.c.l.b16 %v348
  %v1571 = vunpack.c.h.b16 %v348
  %v1572 = vunpack.c.l.b16 %v349
  %v1573 = vunpack.c.h.b16 %v349
  %v1574 = vunpack.c.l.b16 %v350
  %v1575 = vunpack.c.h.b16 %v350
  %v1576 = vunpack.c.l.b16 %v351
  %v1577 = vunpack.c.h.b16 %v351
  %v1578 = vunpack.c.l.b16 %v352
  %v1579 = vunpack.c.h.b16 %v352
  %v1580 = vunpack.c.l.b16 %v353
  %v1581 = vunpack.c.h.b16 %v353
  %v1582 = vunpack.c.l.b16 %v354
  %v1583 = vunpack.c.h.b16 %v354
  %v1584 = vunpack.c.l.b16 %v355
  %v1585 = vunpack.c.h.b16 %v355
  %v1586 = vunpack.c.l.b16 %v356
  %v1587 = vunpack.c.h.b16 %v356
  %v1588 = vunpack.c.l.b16 %v357
  %v1589 = vunpack.c.h.b16 %v357
  %v1590 = vunpack.c.l.b16 %v358
  %v1591 = vunpack.c.h.b16 %v358
  %v1592 = vunpack.c.l.b16 %v359
  %v1593 = vunpack.c.h.b16 %v359
  %v1594 = vunpack.c.l.b16 %v360
  %v1595 = vunpack.c.h.b16 %v360
  %v1596 = vunpack.c.l.b16 %v361
  %v1597 = vunpack.c.h.b16 %v361
  %v1598 = vunpack.c.l.b16 %v362
  %v1599 = vunpack.c.h.b16 %v362
  %v1600 = vunpack.c.l.b16 %v363
  %v1601 = vunpack.c.h.b16 %v363
  %v1602 = vunpack.c.l.b16 %v364
  %v1603 = vunpack.c.h.b16 %v364
  %v1604 = vunpack.c.l.b16 %v365
  %v1605 = vunpack.c.h.b16 %v365
  %v1606 = vunpack.c.l.b16 %v366
  %v1607 = vunpack.c.h.b16 %v366
  %v1608 = vunpack.c.l.b16 %v367
  %v1609 = vunpack.c.h.b16 %v367
  %v1610 = vunpack.c.l.b16 %v368
  %v1611 = vunpack.c.h.b16 %v368
  %v1612 = vunpack.c.l.b16 %v369
  %v1613 = vunpack.c.h.b16 %v369
  %v1614 = vunpack.c.l.b16 %v370
  %v1615 = vunpack.c.h.b16 %v370
  %v1616 = vunpack.c.l.b16 %v371
  %v1617 = vunpack.c.h.b16 %v371
  %v1618 = vunpack.c.l.b16 %v372
  %v1619 = vunpack.c.h.b16 %v372
  %v1620 = vunpack.c.l.b16 %v373
  %v1621 = vunpack.c.h.b16 %v373
  %v1622 = vunpack.c.l.b16 %v374
  %v1623 = vunpack.c.h.b16 %v374
  %v1624 = vunpack.c.l.b16 %v375
  %v1625 = vunpack.c.h.b16 %v375
  %v1626 = vunpack.c.l.b16 %v376
  %v1627 = vunpack.c.h.b16 %v376
  %v1628 = vunpack.c.l.b16 %v377
  %v1629 = vunpack.c.h.b16 %v377
  %v1630 = vunpack.c.l.b16 %v378
  %v1631 = vunpack.c.h.b16 %v378
  %v1632 = vunpack.c.l.b16 %v379
  %v1633 = vunpack.c.h.b16 %v379
  %v1634 = vunpack.c.l.b16 %v380
  %v1635 = vunpack.c.h.b16 %v380
  %v1636 = vunpack.c.l.b16 %v381
  %v1637 = vunpack.c.h.b16 %v381
  %v1638 = vunpack.c.l.b16 %v382
  %v1639 = vunpack.c.h.b16 %v382
  %v1640 = vunpack.c.l.b16 %v383
  %v1641 = vunpack.c.h.b16 %v383
  %v1642 = vunpack.c.l.b16 %v384
  %v1643 = vunpack.c.h.b16 %v384
  %v1644 = vunpack.c.l.b16 %v385
  %v1645 = vunpack.c.h.b16 %v385
  %v1646 = vunpack.c.l.b16 %v386
  %v1647 = vunpack.c.h.b16 %v386
  %v1648 = vunpack.c.l.b16 %v387
  %v1649 = vunpack.c.h.b16 %v387
  %v1650 = vunpack.c.l.b16 %v388
  %v1651 = vunpack.c.h.b16 %v388
  %v1652 = vunpack.c.l.b16 %v389
  %v1653 = vunpack.c.h.b16 %v389
  %v1654 = vunpack.c.l.b16 %v390
  %v1655 = vunpack.c.h.b16 %v390
  %v1656 = vunpack.c.l.b16 %v391
  %v1657 = vunpack.c.h.b16 %v391
  %v1658 = vunpack.c.l.b16 %v392
  %v1659 = vunpack.c.h.b16 %v392
  %v1660 = vunpack.c.l.b16 %v393
  %v1661 = vunpack.c.h.b16 %v393
  %v1662 = vunpack.c.l.b16 %v394
  %v1663 = vunpack.c.h.b16 %v394
  %v1664 = vunpack.c.l.b16 %v395
  %v1665 = vunpack.c.h.b16 %v395
  %v1666 = vunpack.c.l.b16 %v396
  %v1667 = vunpack.c.h.b16 %v396
  %v1668 = vunpack.c.l.b16 %v397
  %v1669 = vunpack.c.h.b16 %v397
  %v1670 = vunpack.c.l.b16 %v398
  %v1671 = vunpack.c.h.b16 %v398
  %v1672 = vunpack.c.l.b16 %v399
  %v1673 = vunpack.c.h.b16 %v399
  %v1674 = vunpack.c.l.b16 %v400
  %v1675 = vunpack.c.h.b16 %v400
  %v1676 = vunpack.c.l.b16 %v401
  %v1677 = vunpack.c.h.b16 %v401
  %v1678 = vunpack.c.l.b16 %v402
  %v1679 = vunpack.c.h.b16 %v402
  %v1680 = vunpack.c.l.b16 %v403
  %v1681 = vunpack.c.h.b16 %v403
  %v1682 = vunpack.c.l.b16 %v404
  %v1683 = vunpack.c.h.b16 %v404
  %v1684 = vunpack.c.l.b16 %v405
  %v1685 = vunpack.c.h.b16 %v405
  %v1686 = vunpack.c.l.b16 %v406
  %v1687 = vunpack.c.h.b16 %v406
  %v1688 = vunpack.c.l.b16 %v407
  %v1689 = vunpack.c.h.b16 %v407
  %v1690 = vunpack.c.l.b16 %v408
  %v1691 = vunpack.c.h.b16 %v408
  %v1692 = vunpack.c.l.b16 %v409
  %v1693 = vunpack.c.h.b16 %v409
  %v1694 = vunpack.c.l.b16 %v410
  %v1695 = vunpack.c.h.b16 %v410
  %v1696 = vunpack.c.l.b16 %v411
  %v1697 = vunpack.c.h.b16 %v411
  %v1698 = vunpack.c.l.b16 %v412
  %v1699 = vunpack.c.h.b16 %v412
  %v1700 = vunpack.c.l.b16 %v413
  %v1701 = vunpack.c.h.b16 %v413
  %v1702 = vunpack.c.l.b16 %v414
  %v1703 = vunpack.c.h.b16 %v414
  %v1704 = vunpack.c.l.b16 %v415
  %v1705 = vunpack.c.h.b16 %v415
  %v1706 = vunpack.c.l.b16 %v416
  %v1707 = vunpack.c.h.b16 %v416
  %v1708 = vunpack.c.l.b16 %v417
  %v1709 = vunpack.c.h.b16 %v417
  %v1710 = vunpack.c.l.b16 %v418
  %v1711 = vunpack.c.h.b16 %v418
  %v1712 = vunpack.c.l.b16 %v419
  %v1713 = vunpack.c.h.b16 %v419
  %v1714 = vunpack.c.l.b16 %v420
  %v1715 = vunpack.c.h.b16 %v420
  %v1716 = vunpack.c.l.b16 %v421
  %v1717 = vunpack.c.h.b16 %v421
  %v1718 = vunpack.c.l.b16 %v422
  %v1719 = vunpack.c.h.b16 %v422
  %v1720 = vunpack.c.l.b16 %v423
  %v1721 = vunpack.c.h.b16 %v423
  %v1722 = vpack.c.b16 %v1006, %v1002
  %v1723 = vpack.c.b16 %v1007, %v1003
  %v1724 = vpack.c.b16 %v1008, %v1004
  %v1725 = vpack.c.b16 %v1009, %v1005
  %v1726 = vpack.c.b16 %v1014, %v1010
  %v1727 = vpack.c.b16 %v1015, %v1011
  %v1728 = vpack.c.b16 %v1016, %v1012
  %v1729 = vpack.c.b16 %v1017, %v1013
  %v1730 = vpack.c.b16 %v1022, %v1018
  %v1731 = vpack.c.b16 %v1023, %v1019
  %v1732 = vpack.c.b16 %v1024, %v1020
  %v1733 = vpack.c.b16 %v1025, %v1021
  %v1734 = vpack.c.b16 %v1030, %v1026
  %v1735 = vpack.c.b16 %v1031, %v1027
  %v1736 = vpack.c.b16 %v1032, %v1028
  %v1737 = vpack.c.b16 %v1033, %v1029
  %v1738 = vpack.c.b16 %v1038, %v1034
  %v1739 = vpack.c.b16 %v1039, %v1035
  %v1740 = vpack.c.b16 %v1040, %v1036
  %v1741 = vpack.c.b16 %v1041, %v1037
  %v1742 = vpack.c.b16 %v1046, %v1042
  %v1743 = vpack.c.b16 %v1047, %v1043
  %v1744 = vpack.c.b16 %v1048, %v1044
  %v1745 = vpack.c.b16 %v1049, %v1045
  %v1746 = vpack.c.b16 %v1054, %v1050
  %v1747 = vpack.c.b16 %v1055, %v1051
  %v1748 = vpack.c.b16 %v1056, %v1052
  %v1749 = vpack.c.b16 %v1057, %v1053
  %v1750 = vpack.c.b16 %v1062, %v1058
  %v1751 = vpack.c.b16 %v1063, %v1059
  %v1752 = vpack.c.b16 %v1064, %v1060
  %v1753 = vpack.c.b16 %v1065, %v1061
  %v1754 = vpack.c.b16 %v1070, %v1066
  %v1755 = vpack.c.b16 %v1071, %v1067
  %v1756 = vpack.c.b16 %v1072, %v1068
  %v1757 = vpack.c.b16 %v1073, %v1069
  %v1758 = vpack.c.b16 %v1078, %v1074
  %v1759 = vpack.c.b16 %v1079, %v1075
  %v1760 = vpack.c.b16 %v1080, %v1076
  %v1761 = vpack.c.b16 %v1081, %v1077
  %v1762 = vpack.c.b16 %v1086, %v1082
  %v1763 = vpack.c.b16 %v1087, %v1083
  %v1764 = vpack.c.b16 %v1088, %v1084
  %v1765 = vpack.c.b16 %v1089, %v1085
  %v1766 = vpack.c.b16 %v1094, %v1090
  %v1767 = vpack.c.b16 %v1095, %v1091
  %v1768 = vpack.c.b16 %v1096, %v1092
  %v1769 = vpack.c.b16 %v1097, %v1093
  %v1770 = vpack.c.b16 %v1102, %v1098
  %v1771 = vpack.c.b16 %v1103, %v1099
  %v1772 = vpack.c.b16 %v1104, %v1100
  %v1773 = vpack.c.b16 %v1105, %v1101
  %v1774 = vpack.c.b16 %v1110, %v1106
  %v1775 = vpack.c.b16 %v1111, %v1107
  %v1776 = vpack.c.b16 %v1112, %v1108
  %v1777 = vpack.c.b16 %v1113, %v1109
  %v1778 = vpack.c.b16 %v1118, %v1114
  %v1779 = vpack.c.b16 %v1119, %v1115
  %v1780 = vpack.c.b16 %v1120, %v1116
  %v1781 = vpack.c.b16 %v1121, %v1117
  %v1782 = vpack.c.b16 %v1126, %v1122
  %v1783 = vpack.c.b16 %v1127, %v1123
  %v1784 = vpack.c.b16 %v1128, %v1124
  %v1785 = vpack.c.b16 %v1129, %v1125
  %v1786 = vpack.c.b16 %v1134, %v1130
  %v1787 = vpack.c.b16 %v1135, %v1131
  %v1788 = vpack.c.b16 %v1136, %v1132
  %v1789 = vpack.c.b16 %v1137, %v1133
  %v1790 = vpack.c.b16 %v1142, %v1138
  %v1791 = vpack.c.b16 %v1143, %v1139
  %v1792 = vpack.c.b16 %v1144, %v1140
  %v1793 = vpack.c.b16 %v1145, %v1141
  %v1794 = vpack.c.b16 %v1150, %v1146
  %v1795 = vpack.c.b16 %v1151, %v1147
  %v1796 = vpack.c.b16 %v1152, %v1148
  %v1797 = vpack.c.b16 %v1153, %v1149
  %v1798 = vpack.c.b16 %v1158, %v1154
  %v1799 = vpack.c.b16 %v1159, %v1155
  %v1800 = vpack.c.b16 %v1160, %v1156
  %v1801 = vpack.c.b16 %v1161, %v1157
  %v1802 = vpack.c.b16 %v1166, %v1162
  %v1803 = vpack.c.b16 %v1167, %v1163
  %v1804 = vpack.c.b16 %v1168, %v1164
  %v1805 = vpack.c.b16 %v1169, %v1165
  %v1806 = vpack.c.b16 %v1174, %v1170
  %v1807 = vpack.c.b16 %v1175, %v1171
  %v1808 = vpack.c.b16 %v1176, %v1172
  %v1809 = vpack.c.b16 %v1177, %v1173
  %v1810 = vpack.c.b16 %v1182, %v1178
  %v1811 = vpack.c.b16 %v1183, %v1179
  %v1812 = vpack.c.b16 %v1184, %v1180
  %v1813 = vpack.c.b16 %v1185, %v1181
  %v1814 = vpack.c.b16 %v1190, %v1186
  %v1815 = vpack.c.b16 %v1191, %v1187
  %v1816 = vpack.c.b16 %v1192, %v1188
  %v1817 = vpack.c.b16 %v1193, %v1189
  %v1818 = vpack.c.b16 %v1198, %v1194
  %v1819 = vpack.c.b16 %v1199, %v1195
  %v1820 = vpack.c.b16 %v1200, %v1196
  %v1821 = vpack.c.b16 %v1201, %v1197
  %v1822 = vpack.c.b16 %v1206, %v1202
  %v1823 = vpack.c.b16 %v1207, %v1203
  %v1824 = vpack.c.b16 %v1208, %v1204
  %v1825 = vpack.c.b16 %v1209, %v1205
  %v1826 = vpack.c.b16 %v1214, %v1210
  %v1827 = vpack.c.b16 %v1215, %v1211
  %v1828 = vpack.c.b16 %v1216, %v1212
  %v1829 = vpack.c.b16 %v1217, %v1213
  %v1830 = vpack.c.b16 %v1222, %v1218
  %v1831 = vpack.c.b16 %v1223, %v1219
  %v1832 = vpack.c.b16 %v1224, %v1220
  %v1833 = vpack.c.b16 %v1225, %v1221
  %v1834 = vpack.c.b16 %v1230, %v1226
  %v1835 = vpack.c.b16 %v1231, %v1227
  %v1836 = vpack.c.b16 %v1232, %v1228
  %v1837 = vpack.c.b16 %v1233, %v1229
  %v1838 = vpack.c.b16 %v1238, %v1234
  %v1839 = vpack.c.b16 %v1239, %v1235
  %v1840 = vpack.c.b16 %v1240, %v1236
  %v1841 = vpack.c.b16 %v1241, %v1237
  %v1842 = vpack.c.b16 %v1246, %v1242
  %v1843 = vpack.c.b16 %v1247, %v1243
  %v1844 = vpack.c.b16 %v1248, %v1244
  %v1845 = vpack.c.b16 %v1249, %v1245
  %v1846 = vpack.c.b16 %v1254, %v1250
  %v1847 = vpack.c.b16 %v1255, %v1251
  %v1848 = vpack.c.b16 %v1256, %v1252
  %v1849 = vpack.c.b16 %v1257, %v1253
  %v1850 = vpack.c.b16 %v1262, %v1258
  %v1851 = vpack.c.b16 %v1263, %v1259
  %v1852 = vpack.c.b16 %v1264, %v1260
  %v1853 = vpack.c.b16 %v1265, %v1261
  %v1854 = vpack.c.b16 %v1270, %v1266
  %v1855 = vpack.c.b16 %v1271, %v1267
  %v1856 = vpack.c.b16 %v1272, %v1268
  %v1857 = vpack.c.b16 %v1273, %v1269
  %v1858 = vpack.c.b16 %v1278, %v1274
  %v1859 = vpack.c.b16 %v1279, %v1275
  %v1860 = vpack.c.b16 %v1280, %v1276
  %v1861 = vpack.c.b16 %v1281, %v1277
  %v1862 = vpack.c.b16 %v1286, %v1282
  %v1863 = vpack.c.b16 %v1287, %v1283
  %v1864 = vpack.c.b16 %v1288, %v1284
  %v1865 = vpack.c.b16 %v1289, %v1285
  %v1866 = vpack.c.b16 %v1294, %v1290
  %v1867 = vpack.c.b16 %v1295, %v1291
  %v1868 = vpack.c.b16 %v1296, %v1292
  %v1869 = vpack.c.b16 %v1297, %v1293
  %v1870 = vpack.c.b16 %v1302, %v1298
  %v1871 = vpack.c.b16 %v1303, %v1299
  %v1872 = vpack.c.b16 %v1304, %v1300
  %v1873 = vpack.c.b16 %v1305, %v1301
  %v1874 = vpack.c.b16 %v1310, %v1306
  %v1875 = vpack.c.b16 %v1311, %v1307
  %v1876 = vpack.c.b16 %v1312, %v1308
  %v1877 = vpack.c.b16 %v1313, %v1309
  %v1878 = vpack.c.b16 %v1318, %v1314
  %v1879 = vpack.c.b16 %v1319, %v1315
  %v1880 = vpack.c.b16 %v1320, %v1316
  %v1881 = vpack.c.b16 %v1321, %v1317
  %v1882 = vpack.c.b16 %v1326, %v1322
  %v1883 = vpack.c.b16 %v1327, %v1323
  %v1884 = vpack.c.b16 %v1328, %v1324
  %v1885 = vpack.c.b16 %v1329, %v1325
  %v1886 = vpack.c.b16 %v1334, %v1330
  %v1887 = vpack.c.b16 %v1335, %v1331
  %v1888 = vpack.c.b16 %v1336, %v1332
  %v1889 = vpack.c.b16 %v1337, %v1333
  %v1890 = vpack.c.b16 %v1342, %v1338
  %v1891 = vpack.c.b16 %v1343, %v1339
  %v1892 = vpack.c.b16 %v1344, %v1340
  %v1893 = vpack.c.b16 %v1345, %v1341
  %v1894 = vpack.c.b16 %v1350, %v1346
  %v1895 = vpack.c.b16 %v1351, %v1347
  %v1896 = vpack.c.b16 %v1352, %v1348
  %v1897 = vpack.c.b16 %v1353, %v1349
  %v1898 = vpack.c.b16 %v1358, %v1354
  %v1899 = vpack.c.b16 %v1359, %v1355
  %v1900 = vpack.c.b16 %v1360, %v1356
  %v1901 = vpack.c.b16 %v1361, %v1357
  %v1902 = vpack.c.b16 %v1366, %v1362
  %v1903 = vpack.c.b16 %v1367, %v1363
  %v1904 = vpack.c.b16 %v1368, %v1364
  %v1905 = vpack.c.b16 %v1369, %v1365
  %v1906 = vpack.c.b16 %v1374, %v1370
  %v1907 = vpack.c.b16 %v1375, %v1371
  %v1908 = vpack.c.b16 %v1376, %v1372
  %v1909 = vpack.c.b16 %v1377, %v1373
  %v1910 = vpack.c.b16 %v1382, %v1378
  %v1911 = vpack.c.b16 %v1383, %v1379
  %v1912 = vpack.c.b16 %v1384, %v1380
  %v1913 = vpack.c.b16 %v1385, %v1381
  %v1914 = vpack.c.b16 %v1390, %v1386
  %v1915 = vpack.c.b16 %v1391, %v1387
  %v1916 = vpack.c.b16 %v1392, %v1388
  %v1917 = vpack.c.b16 %v1393, %v1389
  %v1918 = vpack.c.b16 %v1398, %v1394
  %v1919 = vpack.c.b16 %v1399, %v1395
  %v1920 = vpack.c.b16 %v1400, %v1396
  %v1921 = vpack.c.b16 %v1401, %v1397
  %v1922 = vpack.c.b16 %v1406, %v1402
  %v1923 = vpack.c.b16 %v1407, %v1403
  %v1924 = vpack.c.b16 %v1408, %v1404
  %v1925 = vpack.c.b16 %v1409, %v1405
  %v1926 = vpack.c.b16 %v1414, %v1410
  %v1927 = vpack.c.b16 %v1415, %v1411
  %v1928 = vpack.c.b16 %v1416, %v1412
  %v1929 = vpack.c.b16 %v1417, %v1413
  %v1930 = vpack.c.b16 %v1422, %v1418
  %v1931 = vpack.c.b16 %v1423, %v1419
  %v1932 = vpack.c.b16 %v1424, %v1420
  %v1933 = vpack.c.b16 %v1425, %v1421
  %v1934 = vpack.c.b16 %v1430, %v1426
  %v1935 = vpack.c.b16 %v1431, %v1427
  %v1936 = vpack.c.b16 %v1432, %v1428
  %v1937 = vpack.c.b16 %v1433, %v1429
  %v1938 = vpack.c.b16 %v1438, %v1434
  %v1939 = vpack.c.b16 %v1439, %v1435
  %v1940 = vpack.c.b16 %v1440, %v1436
  %v1941 = vpack.c.b16 %v1441, %v1437
  %v1942 = vpack.c.b16 %v1446, %v1442
  %v1943 = vpack.c.b16 %v1447, %v1443
  %v1944 = vpack.c.b16 %v1448, %v1444
  %v1945 = vpack.c.b16 %v1449, %v1445
  %v1946 = vpack.c.b16 %v1454, %v1450
  %v1947 = vpack.c.b16 %v1455, %v1451
  %v1948 = vpack.c.b16 %v1456, %v1452
  %v1949 = vpack.c.b16 %v1457, %v1453
  %v1950 = vpack.c.b16 %v1462, %v1458
  %v1951 = vpack.c.b16 %v1463, %v1459
  %v1952 = vpack.c.b16 %v1464, %v1460
  %v1953 = vpack.c.b16 %v1465, %v1461
  %v1954 = vpack.c.b16 %v1470, %v1466
  %v1955 = vpack.c.b16 %v1471, %v1467
  %v1956 = vpack.c.b16 %v1472, %v1468
  %v1957 = vpack.c.b16 %v1473, %v1469
  %v1958 = vpack.c.b16 %v1478, %v1474
  %v1959 = vpack.c.b16 %v1479, %v1475
  %v1960 = vpack.c.b16 %v1480, %v1476
  %v1961 = vpack.c.b16 %v1481, %v1477
  %v1962 = vpack.c.b16 %v1486, %v1482
  %v1963 = vpack.c.b16 %v1487, %v1483
  %v1964 = vpack.c.b16 %v1488, %v1484
  %v1965 = vpack.c.b16 %v1489, %v1485
  %v1966 = vpack.c.b16 %v1494, %v1490
  %v1967 = vpack.c.b16 %v1495, %v1491
  %v1968 = vpack.c.b16 %v1496, %v1492
  %v1969 = vpack.c.b16 %v1497, %v1493
  %v1970 = vpack.c.b16 %v1502, %v1498
  %v1971 = vpack.c.b16 %v1503, %v1499
  %v1972 = vpack.c.b16 %v1504, %v1500
  %v1973 = vpack.c.b16 %v1505, %v1501
  %v1974 = vpack.c.b16 %v1510, %v1506
  %v1975 = vpack.c.b16 %v1511, %v1507
  %v1976 = vpack.c.b16 %v1512, %v1508
  %v1977 = vpack.c.b16 %v1513, %v1509
  %v1978 = vpack.c.b16 %v1518, %v1514
  %v1979 = vpack.c.b16 %v1519, %v1515
  %v1980 = vpack.c.b16 %v1520, %v1516
  %v1981 = vpack.c.b16 %v1521, %v1517
  %v1982 = vpack.c.b16 %v1526, %v1522
  %v1983 = vpack.c.b16 %v1527, %v1523
  %v1984 = vpack.c.b16 %v1528, %v1524
  %v1985 = vpack.c.b16 %v1529, %v1525
  %v1986 = vpack.c.b16 %v1534, %v1530
  %v1987 = vpack.c.b16 %v1535, %v1531
  %v1988 = vpack.c.b16 %v1536, %v1532
  %v1989 = vpack.c.b16 %v1537, %v1533
  %v1990 = vpack.c.b16 %v1542, %v1538
  %v1991 = vpack.c.b16 %v1543, %v1539
  %v1992 = vpack.c.b16 %v1544, %v1540
  %v1993 = vpack.c.b16 %v1545, %v1541
  %v1994 = vpack.c.b16 %v1550, %v1546
  %v1995 = vpack.c.b16 %v1551, %v1547
  %v1996 = vpack.c.b16 %v1552, %v1548
  %v1997 = vpack.c.b16 %v1553, %v1549
  %v1998 = vpack.c.b16 %v1558, %v1554
  %v1999 = vpack.c.b16 %v1559, %v1555
  %v2000 = vpack.c.b16 %v1560, %v1556
  %v2001 = vpack.c.b16 %v1561, %v1557
  %v2002 = vpack.c.b16 %v1566, %v1562
  %v2003 = vpack.c.b16 %v1567, %v1563
  %v2004 = vpack.c.b16 %v1568, %v1564
  %v2005 = vpack.c.b16 %v1569, %v1565
  %v2006 = vpack.c.b16 %v1574, %v1570
  %v2007 = vpack.c.b16 %v1575, %v1571
  %v2008 = vpack.c.b16 %v1576, %v1572
  %v2009 = vpack.c.b16 %v1577, %v1573
  %v2010 = vpack.c.b16 %v1582, %v1578
  %v2011 = vpack.c.b16 %v1583, %v1579
  %v2012 = vpack.c.b16 %v1584, %v1580
  %v2013 = vpack.c.b16 %v1585, %v1581
  %v2014 = vpack.c.b16 %v1590, %v1586
  %v2015 = vpack.c.b16 %v1591, %v1587
  %v2016 = vpack.c.b16 %v1592, %v1588
  %v2017 = vpack.c.b16 %v1593, %v1589
  %v2018 = vpack.c.b16 %v1598, %v1594
  %v2019 = vpack.c.b16 %v1599, %v1595
  %v2020 = vpack.c.b16 %v1600, %v1596
  %v2021 = vpack.c.b16 %v1601, %v1597
  %v2022 = vpack.c.b16 %v1606, %v1602
  %v2023 = vpack.c.b16 %v1607, %v1603
  %v2024 = vpack.c.b16 %v1608, %v1604
  %v2025 = vpack.c.b16 %v1609, %v1605
  %v2026 = vpack.c.b16 %v1614, %v1610
  %v2027 = vpack.c.b16 %v1615, %v1611
  %v2028 = vpack.c.b16 %v1616, %v1612
  %v2029 = vpack.c.b16 %v1617, %v1613
  %v2030 = vpack.c.b16 %v1622, %v1618
  %v2031 = vpack.c.b16 %v1623, %v1619
  %v2032 = vpack.c.b16 %v1624, %v1620
  %v2033 = vpack.c.b16 %v1625, %v1621
  %v2034 = vpack.c.b16 %v1630, %v1626
  %v2035 = vpack.c.b16 %v1631, %v1627
  %v2036 = vpack.c.b16 %v1632, %v1628
  %v2037 = vpack.c.b16 %v1633, %v1629
  %v2038 = vpack.c.b16 %v1638, %v1634
  %v2039 = vpack.c.b16 %v1639, %v1635
  %v2040 = vpack.c.b16 %v1640, %v1636
  %v2041 = vpack.c.b16 %v1641, %v1637
  %v2042 = vpack.c.b16 %v1646, %v1642
  %v2043 = vpack.c.b16 %v1647, %v1643
  %v2044 = vpack.c.b16 %v1648, %v1644
  %v2045 = vpack.c.b16 %v1649, %v1645
  %v2046 = vpack.c.b16 %v1654, %v1650
  %v2047 = vpack.c.b16 %v1655, %v1651
  %v2048 = vpack.c.b16 %v1656, %v1652
  %v2049 = vpack.c.b16 %v1657, %v1653
  %v2050 = vpack.c.b16 %v1662, %v1658
  %v2051 = vpack.c.b16 %v1663, %v1659
  %v2052 = vpack.c.b16 %v1664, %v1660
  %v2053 = vpack.c.b16 %v1665, %v1661
  %v2054 = vpack.c.b16 %v1670, %v1666
  %v2055 = vpack.c.b16 %v1671, %v1667
  %v2056 = vpack.c.b16 %v1672, %v1668
  %v2057 = vpack.c.b16 %v1673, %v1669
  %v2058 = vpack.c.b16 %v1678, %v1674
  %v2059 = vpack.c.b16 %v1679, %v1675
  %v2060 = vpack.c.b16 %v1680, %v1676
  %v2061 = vpack.c.b16 %v1681, %v1677
  %v2062 = vpack.c.b16 %v1686, %v1682
  %v2063 = vpack.c.b16 %v1687, %v1683
  %v2064 = vpack.c.b16 %v1688, %v1684
  %v2065 = vpack.c.b16 %v1689, %v1685
  %v2066 = vpack.c.b16 %v1694, %v1690
  %v2067 = vpack.c.b16 %v1695, %v1691
  %v2068 = vpack.c.b16 %v1696, %v1692
  %v2069 = vpack.c.b16 %v1697, %v1693
  %v2070 = vpack.c.b16 %v1702, %v1698
  %v2071 = vpack.c.b16 %v1703, %v1699
  %v2072 = vpack.c.b16 %v1704, %v1700
  %v2073 = vpack.c.b16 %v1705, %v1701
  %v2074 = vpack.c.b16 %v1710, %v1706
  %v2075 = vpack.c.b16 %v1711, %v1707
  %v2076 = vpack.c.b16 %v1712, %v1708
  %v2077 = vpack.c.b16 %v1713, %v1709
  %v2078 = vpack.c.b16 %v1718, %v1714
  %v2079 = vpack.c.b16 %v1719, %v1715
  %v2080 = vpack.c.b16 %v1720, %v1716
  %v2081 = vpack.c.b16 %v1721, %v1717
  %vm2442 = vcmask 261120
  %v2444 = vsel %vm2442, %v561, 0
  %v2447 = vsel %vm2442, %v573, 0
  %v2450 = vsel %vm2442, %v585, 0
  %v2453 = vsel %vm2442, %v597, 0
  %2455 = vmatprep.subr.bf16.mxu0 %v1723
  %2456 = vmatpush1.bf16.msra.mxu0 %v1722
  %2457 = vmatprep.subr.bf16.mxu0 %v1727
  %2458 = vmatpush1.bf16.msra.mxu0 %v1726
  %2459 = vmatprep.subr.bf16.mxu0 %v1731
  %2460 = vmatpush1.bf16.msra.mxu0 %v1730
  %2461 = vmatprep.subr.bf16.mxu0 %v1735
  %2462 = vmatpush1.bf16.msra.mxu0 %v1734
  %2463 = vmatprep.subr.bf16.mxu0 %v1739
  %2464 = vmatpush1.bf16.msra.mxu0 %v1738
  %2465 = vmatprep.subr.bf16.mxu0 %v1743
  %2466 = vmatpush1.bf16.msra.mxu0 %v1742
  %2467 = vmatprep.subr.bf16.mxu0 %v1747
  %2468 = vmatpush1.bf16.msra.mxu0 %v1746
  %2469 = vmatprep.subr.bf16.mxu0 %v1751
  %2470 = vmatpush1.bf16.msra.mxu0 %v1750
  %2471 = vmatprep.subr.bf16.mxu0 %v1755
  %2472 = vmatpush1.bf16.msra.mxu0 %v1754
  %2473 = vmatprep.subr.bf16.mxu0 %v1759
  %2474 = vmatpush1.bf16.msra.mxu0 %v1758
  %2475 = vmatprep.subr.bf16.mxu0 %v1763
  %2476 = vmatpush1.bf16.msra.mxu0 %v1762
  %2477 = vmatprep.subr.bf16.mxu0 %v1767
  %2478 = vmatpush1.bf16.msra.mxu0 %v1766
  %2479 = vmatprep.subr.bf16.mxu0 %v1771
  %2480 = vmatpush1.bf16.msra.mxu0 %v1770
  %2481 = vmatprep.subr.bf16.mxu0 %v1775
  %2482 = vmatpush1.bf16.msra.mxu0 %v1774
  %2483 = vmatprep.subr.bf16.mxu0 %v1779
  %2484 = vmatpush1.bf16.msra.mxu0 %v1778
  %2485 = vmatprep.subr.bf16.mxu0 %v1783
  %2486 = vmatpush1.bf16.msra.mxu0 %v1782
  %2487 = vmatprep.mubr.bf16.mxu0 %v551
  %2488 = vmatmul.mubr.bf16.gmra.mrb[0].mxu0 %v550
  %v2489 = vpop.f32.mrb[0].mxu0
  %v2490 = vadd.f32 0.0, %v2489
  %v2491 = vpop.f32.mrb[0].mxu0
  %v2492 = vadd.f32 0.0, %v2491
  %v2493 = vpop.f32.mrb[0].mxu0
  %v2494 = vadd.f32 0.0, %v2493
  %v2495 = vpop.f32.mrb[0].mxu0
  %v2496 = vadd.f32 0.0, %v2495
  %2497 = vmatprep.mubr.bf16.mxu0 %v563
  %2498 = vmatmul.mubr.bf16.gmra.mrb[0].mxu0 %v562
  %v2499 = vpop.f32.mrb[0].mxu0
  %v2500 = vadd.f32 0.0, %v2499
  %v2501 = vpop.f32.mrb[0].mxu0
  %v2502 = vadd.f32 0.0, %v2501
  %v2503 = vpop.f32.mrb[0].mxu0
  %v2504 = vadd.f32 0.0, %v2503
  %v2505 = vpop.f32.mrb[0].mxu0
  %v2506 = vadd.f32 0.0, %v2505
  %2507 = vmatprep.mubr.bf16.mxu0 %v575
  %2508 = vmatmul.mubr.bf16.gmra.mrb[0].mxu0 %v574
  %v2509 = vpop.f32.mrb[0].mxu0
  %v2510 = vadd.f32 0.0, %v2509
  %v2511 = vpop.f32.mrb[0].mxu0
  %v2512 = vadd.f32 0.0, %v2511
  %v2513 = vpop.f32.mrb[0].mxu0
  %v2514 = vadd.f32 0.0, %v2513
  %v2515 = vpop.f32.mrb[0].mxu0
  %v2516 = vadd.f32 0.0, %v2515
  %2517 = vmatprep.mubr.bf16.mxu0 %v587
  %2518 = vmatmul.mubr.bf16.gmra.mrb[0].mxu0 %v586
  %v2519 = vpop.f32.mrb[0].mxu0
  %v2520 = vadd.f32 0.0, %v2519
  %v2521 = vpop.f32.mrb[0].mxu0
  %v2522 = vadd.f32 0.0, %v2521
  %v2523 = vpop.f32.mrb[0].mxu0
  %v2524 = vpop.f32.mrb[0].mxu0
  %2525 = vdwg.mxu0
  %2526 = vmatprep.subr.bf16.mxu0 %v1787
  %2527 = vmatpush1.bf16.msra.mxu0 %v1786
  %2528 = vmatprep.subr.bf16.mxu0 %v1791
  %2529 = vmatpush1.bf16.msra.mxu0 %v1790
  %2530 = vmatprep.subr.bf16.mxu0 %v1795
  %2531 = vmatpush1.bf16.msra.mxu0 %v1794
  %2532 = vmatprep.subr.bf16.mxu0 %v1799
  %2533 = vmatpush1.bf16.msra.mxu0 %v1798
  %2534 = vmatprep.subr.bf16.mxu0 %v1803
  %2535 = vmatpush1.bf16.msra.mxu0 %v1802
  %2536 = vmatprep.subr.bf16.mxu0 %v1807
  %2537 = vmatpush1.bf16.msra.mxu0 %v1806
  %2538 = vmatprep.subr.bf16.mxu0 %v1811
  %2539 = vmatpush1.bf16.msra.mxu0 %v1810
  %2540 = vmatprep.subr.bf16.mxu0 %v1815
  %2541 = vmatpush1.bf16.msra.mxu0 %v1814
  %2542 = vmatprep.subr.bf16.mxu0 %v1819
  %2543 = vmatpush1.bf16.msra.mxu0 %v1818
  %2544 = vmatprep.subr.bf16.mxu0 %v1823
  %2545 = vmatpush1.bf16.msra.mxu0 %v1822
  %2546 = vmatprep.subr.bf16.mxu0 %v1827
  %2547 = vmatpush1.bf16.msra.mxu0 %v1826
  %2548 = vmatprep.subr.bf16.mxu0 %v1831
  %2549 = vmatpush1.bf16.msra.mxu0 %v1830
  %2550 = vmatprep.subr.bf16.mxu0 %v1835
  %2551 = vmatpush1.bf16.msra.mxu0 %v1834
  %2552 = vmatprep.subr.bf16.mxu0 %v1839
  %2553 = vmatpush1.bf16.msra.mxu0 %v1838
  %2554 = vmatprep.subr.bf16.mxu0 %v1843
  %2555 = vmatpush1.bf16.msra.mxu0 %v1842
  %2556 = vmatprep.subr.bf16.mxu0 %v1847
  %2557 = vmatpush1.bf16.msra.mxu0 %v1846
  %2558 = vmatprep.mubr.bf16.mxu0 %v553
  %2559 = vmatmul.mubr.bf16.gmra.mrb[0].mxu0 %v552
  %v2560 = vpop.f32.mrb[0].mxu0
  %v2561 = vadd.f32 %v2490, %v2560
  %v2562 = vpop.f32.mrb[0].mxu0
  %v2563 = vadd.f32 %v2492, %v2562
  %v2564 = vpop.f32.mrb[0].mxu0
  %v2565 = vadd.f32 %v2494, %v2564
  %v2566 = vpop.f32.mrb[0].mxu0
  %v2567 = vadd.f32 %v2496, %v2566
  %2568 = vmatprep.mubr.bf16.mxu0 %v565
  %2569 = vmatmul.mubr.bf16.gmra.mrb[0].mxu0 %v564
  %v2570 = vpop.f32.mrb[0].mxu0
  %v2571 = vadd.f32 %v2500, %v2570
  %v2572 = vpop.f32.mrb[0].mxu0
  %v2573 = vadd.f32 %v2502, %v2572
  %v2574 = vpop.f32.mrb[0].mxu0
  %v2575 = vadd.f32 %v2504, %v2574
  %v2576 = vpop.f32.mrb[0].mxu0
  %v2577 = vadd.f32 %v2506, %v2576
  %2578 = vmatprep.mubr.bf16.mxu0 %v577
  %2579 = vmatmul.mubr.bf16.gmra.mrb[0].mxu0 %v576
  %v2580 = vpop.f32.mrb[0].mxu0
  %v2581 = vadd.f32 %v2510, %v2580
  %v2582 = vpop.f32.mrb[0].mxu0
  %v2583 = vadd.f32 %v2512, %v2582
  %v2584 = vpop.f32.mrb[0].mxu0
  %v2585 = vadd.f32 %v2514, %v2584
  %v2586 = vpop.f32.mrb[0].mxu0
  %v2587 = vadd.f32 %v2516, %v2586
  %2588 = vmatprep.mubr.bf16.mxu0 %v589
  %2589 = vmatmul.mubr.bf16.gmra.mrb[0].mxu0 %v588
  %v2590 = vpop.f32.mrb[0].mxu0
  %v2591 = vadd.f32 %v2520, %v2590
  %v2592 = vpop.f32.mrb[0].mxu0
  %v2593 = vadd.f32 %v2522, %v2592
  %v2594 = vpop.f32.mrb[0].mxu0
  %v2595 = vpop.f32.mrb[0].mxu0
  %2596 = vdwg.mxu0
  %2597 = vmatprep.subr.bf16.mxu0 %v1851
  %2598 = vmatpush1.bf16.msra.mxu0 %v1850
  %2599 = vmatprep.subr.bf16.mxu0 %v1855
  %2600 = vmatpush1.bf16.msra.mxu0 %v1854
  %2601 = vmatprep.subr.bf16.mxu0 %v1859
  %2602 = vmatpush1.bf16.msra.mxu0 %v1858
  %2603 = vmatprep.subr.bf16.mxu0 %v1863
  %2604 = vmatpush1.bf16.msra.mxu0 %v1862
  %2605 = vmatprep.subr.bf16.mxu0 %v1867
  %2606 = vmatpush1.bf16.msra.mxu0 %v1866
  %2607 = vmatprep.subr.bf16.mxu0 %v1871
  %2608 = vmatpush1.bf16.msra.mxu0 %v1870
  %2609 = vmatprep.subr.bf16.mxu0 %v1875
  %2610 = vmatpush1.bf16.msra.mxu0 %v1874
  %2611 = vmatprep.subr.bf16.mxu0 %v1879
  %2612 = vmatpush1.bf16.msra.mxu0 %v1878
  %2613 = vmatprep.subr.bf16.mxu0 %v1883
  %2614 = vmatpush1.bf16.msra.mxu0 %v1882
  %2615 = vmatprep.subr.bf16.mxu0 %v1887
  %2616 = vmatpush1.bf16.msra.mxu0 %v1886
  %2617 = vmatprep.subr.bf16.mxu0 %v1891
  %2618 = vmatpush1.bf16.msra.mxu0 %v1890
  %2619 = vmatprep.subr.bf16.mxu0 %v1895
  %2620 = vmatpush1.bf16.msra.mxu0 %v1894
  %2621 = vmatprep.subr.bf16.mxu0 %v1899
  %2622 = vmatpush1.bf16.msra.mxu0 %v1898
  %2623 = vmatprep.subr.bf16.mxu0 %v1903
  %2624 = vmatpush1.bf16.msra.mxu0 %v1902
  %2625 = vmatprep.subr.bf16.mxu0 %v1907
  %2626 = vmatpush1.bf16.msra.mxu0 %v1906
  %2627 = vmatprep.subr.bf16.mxu0 %v1911
  %2628 = vmatpush1.bf16.msra.mxu0 %v1910
  %2629 = vmatprep.mubr.bf16.mxu0 %v555
  %2630 = vmatmul.mubr.bf16.gmra.mrb[0].mxu0 %v554
  %v2631 = vpop.f32.mrb[0].mxu0
  %v2632 = vadd.f32 %v2561, %v2631
  %v2633 = vpop.f32.mrb[0].mxu0
  %v2634 = vadd.f32 %v2563, %v2633
  %v2635 = vpop.f32.mrb[0].mxu0
  %v2636 = vadd.f32 %v2565, %v2635
  %v2637 = vpop.f32.mrb[0].mxu0
  %v2638 = vadd.f32 %v2567, %v2637
  %2639 = vmatprep.mubr.bf16.mxu0 %v567
  %2640 = vmatmul.mubr.bf16.gmra.mrb[0].mxu0 %v566
  %v2641 = vpop.f32.mrb[0].mxu0
  %v2642 = vadd.f32 %v2571, %v2641
  %v2643 = vpop.f32.mrb[0].mxu0
  %v2644 = vadd.f32 %v2573, %v2643
  %v2645 = vpop.f32.mrb[0].mxu0
  %v2646 = vadd.f32 %v2575, %v2645
  %v2647 = vpop.f32.mrb[0].mxu0
  %v2648 = vadd.f32 %v2577, %v2647
  %2649 = vmatprep.mubr.bf16.mxu0 %v579
  %2650 = vmatmul.mubr.bf16.gmra.mrb[0].mxu0 %v578
  %v2651 = vpop.f32.mrb[0].mxu0
  %v2652 = vadd.f32 %v2581, %v2651
  %v2653 = vpop.f32.mrb[0].mxu0
  %v2654 = vadd.f32 %v2583, %v2653
  %v2655 = vpop.f32.mrb[0].mxu0
  %v2656 = vadd.f32 %v2585, %v2655
  %v2657 = vpop.f32.mrb[0].mxu0
  %v2658 = vadd.f32 %v2587, %v2657
  %2659 = vmatprep.mubr.bf16.mxu0 %v591
  %2660 = vmatmul.mubr.bf16.gmra.mrb[0].mxu0 %v590
  %v2661 = vpop.f32.mrb[0].mxu0
  %v2662 = vadd.f32 %v2591, %v2661
  %v2663 = vpop.f32.mrb[0].mxu0
  %v2664 = vadd.f32 %v2593, %v2663
  %v2665 = vpop.f32.mrb[0].mxu0
  %v2666 = vpop.f32.mrb[0].mxu0
  %2667 = vdwg.mxu0
  %2668 = vmatprep.subr.bf16.mxu0 %v1915
  %2669 = vmatpush1.bf16.msra.mxu0 %v1914
  %2670 = vmatprep.subr.bf16.mxu0 %v1919
  %2671 = vmatpush1.bf16.msra.mxu0 %v1918
  %2672 = vmatprep.subr.bf16.mxu0 %v1923
  %2673 = vmatpush1.bf16.msra.mxu0 %v1922
  %2674 = vmatprep.subr.bf16.mxu0 %v1927
  %2675 = vmatpush1.bf16.msra.mxu0 %v1926
  %2676 = vmatprep.subr.bf16.mxu0 %v1931
  %2677 = vmatpush1.bf16.msra.mxu0 %v1930
  %2678 = vmatprep.subr.bf16.mxu0 %v1935
  %2679 = vmatpush1.bf16.msra.mxu0 %v1934
  %2680 = vmatprep.subr.bf16.mxu0 %v1939
  %2681 = vmatpush1.bf16.msra.mxu0 %v1938
  %2682 = vmatprep.subr.bf16.mxu0 %v1943
  %2683 = vmatpush1.bf16.msra.mxu0 %v1942
  %2684 = vmatprep.subr.bf16.mxu0 %v1947
  %2685 = vmatpush1.bf16.msra.mxu0 %v1946
  %2686 = vmatprep.subr.bf16.mxu0 %v1951
  %2687 = vmatpush1.bf16.msra.mxu0 %v1950
  %2688 = vmatprep.subr.bf16.mxu0 %v1955
  %2689 = vmatpush1.bf16.msra.mxu0 %v1954
  %2690 = vmatprep.subr.bf16.mxu0 %v1959
  %2691 = vmatpush1.bf16.msra.mxu0 %v1958
  %2692 = vmatprep.subr.bf16.mxu0 %v1963
  %2693 = vmatpush1.bf16.msra.mxu0 %v1962
  %2694 = vmatprep.subr.bf16.mxu0 %v1967
  %2695 = vmatpush1.bf16.msra.mxu0 %v1966
  %2696 = vmatprep.subr.bf16.mxu0 %v1971
  %2697 = vmatpush1.bf16.msra.mxu0 %v1970
  %2698 = vmatprep.subr.bf16.mxu0 %v1975
  %2699 = vmatpush1.bf16.msra.mxu0 %v1974
  %2700 = vmatprep.mubr.bf16.mxu0 %v557
  %2701 = vmatmul.mubr.bf16.gmra.mrb[0].mxu0 %v556
  %v2702 = vpop.f32.mrb[0].mxu0
  %v2703 = vadd.f32 %v2632, %v2702
  %v2704 = vpop.f32.mrb[0].mxu0
  %v2705 = vadd.f32 %v2634, %v2704
  %v2706 = vpop.f32.mrb[0].mxu0
  %v2707 = vadd.f32 %v2636, %v2706
  %v2708 = vpop.f32.mrb[0].mxu0
  %v2709 = vadd.f32 %v2638, %v2708
  %2710 = vmatprep.mubr.bf16.mxu0 %v569
  %2711 = vmatmul.mubr.bf16.gmra.mrb[0].mxu0 %v568
  %v2712 = vpop.f32.mrb[0].mxu0
  %v2713 = vadd.f32 %v2642, %v2712
  %v2714 = vpop.f32.mrb[0].mxu0
  %v2715 = vadd.f32 %v2644, %v2714
  %v2716 = vpop.f32.mrb[0].mxu0
  %v2717 = vadd.f32 %v2646, %v2716
  %v2718 = vpop.f32.mrb[0].mxu0
  %v2719 = vadd.f32 %v2648, %v2718
  %2720 = vmatprep.mubr.bf16.mxu0 %v581
  %2721 = vmatmul.mubr.bf16.gmra.mrb[0].mxu0 %v580
  %v2722 = vpop.f32.mrb[0].mxu0
  %v2723 = vadd.f32 %v2652, %v2722
  %v2724 = vpop.f32.mrb[0].mxu0
  %v2725 = vadd.f32 %v2654, %v2724
  %v2726 = vpop.f32.mrb[0].mxu0
  %v2727 = vadd.f32 %v2656, %v2726
  %v2728 = vpop.f32.mrb[0].mxu0
  %v2729 = vadd.f32 %v2658, %v2728
  %2730 = vmatprep.mubr.bf16.mxu0 %v593
  %2731 = vmatmul.mubr.bf16.gmra.mrb[0].mxu0 %v592
  %v2732 = vpop.f32.mrb[0].mxu0
  %v2733 = vadd.f32 %v2662, %v2732
  %v2734 = vpop.f32.mrb[0].mxu0
  %v2735 = vadd.f32 %v2664, %v2734
  %v2736 = vpop.f32.mrb[0].mxu0
  %v2737 = vpop.f32.mrb[0].mxu0
  %2738 = vdwg.mxu0
  %2739 = vmatprep.subr.bf16.mxu0 %v1979
  %2740 = vmatpush1.bf16.msra.mxu0 %v1978
  %2741 = vmatprep.subr.bf16.mxu0 %v1983
  %2742 = vmatpush1.bf16.msra.mxu0 %v1982
  %2743 = vmatprep.subr.bf16.mxu0 %v1987
  %2744 = vmatpush1.bf16.msra.mxu0 %v1986
  %2745 = vmatprep.subr.bf16.mxu0 %v1991
  %2746 = vmatpush1.bf16.msra.mxu0 %v1990
  %2747 = vmatprep.subr.bf16.mxu0 %v1995
  %2748 = vmatpush1.bf16.msra.mxu0 %v1994
  %2749 = vmatprep.subr.bf16.mxu0 %v1999
  %2750 = vmatpush1.bf16.msra.mxu0 %v1998
  %2751 = vmatprep.subr.bf16.mxu0 %v2003
  %2752 = vmatpush1.bf16.msra.mxu0 %v2002
  %2753 = vmatprep.subr.bf16.mxu0 %v2007
  %2754 = vmatpush1.bf16.msra.mxu0 %v2006
  %2755 = vmatprep.subr.bf16.mxu0 %v2011
  %2756 = vmatpush1.bf16.msra.mxu0 %v2010
  %2757 = vmatprep.subr.bf16.mxu0 %v2015
  %2758 = vmatpush1.bf16.msra.mxu0 %v2014
  %2759 = vmatprep.subr.bf16.mxu0 %v2019
  %2760 = vmatpush1.bf16.msra.mxu0 %v2018
  %2761 = vmatprep.subr.bf16.mxu0 %v2023
  %2762 = vmatpush1.bf16.msra.mxu0 %v2022
  %2763 = vmatprep.subr.bf16.mxu0 %v2027
  %2764 = vmatpush1.bf16.msra.mxu0 %v2026
  %2765 = vmatprep.subr.bf16.mxu0 %v2031
  %2766 = vmatpush1.bf16.msra.mxu0 %v2030
  %2767 = vmatprep.subr.bf16.mxu0 %v2035
  %2768 = vmatpush1.bf16.msra.mxu0 %v2034
  %2769 = vmatprep.subr.bf16.mxu0 %v2039
  %2770 = vmatpush1.bf16.msra.mxu0 %v2038
  %2771 = vmatprep.mubr.bf16.mxu0 %v559
  %2772 = vmatmul.mubr.bf16.gmra.mrb[0].mxu0 %v558
  %v2773 = vpop.f32.mrb[0].mxu0
  %v2774 = vadd.f32 %v2703, %v2773
  %v2775 = vpop.f32.mrb[0].mxu0
  %v2776 = vadd.f32 %v2705, %v2775
  %v2777 = vpop.f32.mrb[0].mxu0
  %v2778 = vadd.f32 %v2707, %v2777
  %v2779 = vpop.f32.mrb[0].mxu0
  %v2780 = vadd.f32 %v2709, %v2779
  %2781 = vmatprep.mubr.bf16.mxu0 %v571
  %2782 = vmatmul.mubr.bf16.gmra.mrb[0].mxu0 %v570
  %v2783 = vpop.f32.mrb[0].mxu0
  %v2784 = vadd.f32 %v2713, %v2783
  %v2785 = vpop.f32.mrb[0].mxu0
  %v2786 = vadd.f32 %v2715, %v2785
  %v2787 = vpop.f32.mrb[0].mxu0
  %v2788 = vadd.f32 %v2717, %v2787
  %v2789 = vpop.f32.mrb[0].mxu0
  %v2790 = vadd.f32 %v2719, %v2789
  %2791 = vmatprep.mubr.bf16.mxu0 %v583
  %2792 = vmatmul.mubr.bf16.gmra.mrb[0].mxu0 %v582
  %v2793 = vpop.f32.mrb[0].mxu0
  %v2794 = vadd.f32 %v2723, %v2793
  %v2795 = vpop.f32.mrb[0].mxu0
  %v2796 = vadd.f32 %v2725, %v2795
  %v2797 = vpop.f32.mrb[0].mxu0
  %v2798 = vadd.f32 %v2727, %v2797
  %v2799 = vpop.f32.mrb[0].mxu0
  %v2800 = vadd.f32 %v2729, %v2799
  %2801 = vmatprep.mubr.bf16.mxu0 %v595
  %2802 = vmatmul.mubr.bf16.gmra.mrb[0].mxu0 %v594
  %v2803 = vpop.f32.mrb[0].mxu0
  %v2804 = vadd.f32 %v2733, %v2803
  %v2805 = vpop.f32.mrb[0].mxu0
  %v2806 = vadd.f32 %v2735, %v2805
  %v2807 = vpop.f32.mrb[0].mxu0
  %v2808 = vpop.f32.mrb[0].mxu0
  %2809 = vdwg.mxu0
  %2810 = vmatprep.subr.bf16.mxu0 %v2043
  %2811 = vmatpush1.bf16.msra.mxu0 %v2042
  %2812 = vmatprep.subr.bf16.mxu0 %v2047
  %2813 = vmatpush1.bf16.msra.mxu0 %v2046
  %2814 = vmatprep.subr.bf16.mxu0 %v2051
  %2815 = vmatpush1.bf16.msra.mxu0 %v2050
  %2816 = vmatprep.subr.bf16.mxu0 %v2055
  %2817 = vmatpush1.bf16.msra.mxu0 %v2054
  %2818 = vmatprep.subr.bf16.mxu0 %v2059
  %2819 = vmatpush1.bf16.msra.mxu0 %v2058
  %2820 = vmatprep.subr.bf16.mxu0 %v2063
  %2821 = vmatpush1.bf16.msra.mxu0 %v2062
  %2822 = vmatprep.subr.bf16.mxu0 %v2067
  %2823 = vmatpush1.bf16.msra.mxu0 %v2066
  %2824 = vmatprep.subr.bf16.mxu0 %v2071
  %2825 = vmatpush1.bf16.msra.mxu0 %v2070
  %2826 = vmatprep.subr.bf16.mxu0 %v2075
  %2827 = vmatpush1.bf16.msra.mxu0 %v2074
  %2828 = vmatprep.subr.bf16.mxu0 %v2079
  %2829 = vmatpush1.bf16.msra.mxu0 %v2078
  %2830 = vmatprep.subr.bf16.mxu0 0
  %2831 = vmatpush1.bf16.msra.mxu0 0
  %2832 = vmatprep.subr.bf16.mxu0 0
  %2833 = vmatpush1.bf16.msra.mxu0 0
  %2834 = vmatprep.subr.bf16.mxu0 0
  %2835 = vmatpush1.bf16.msra.mxu0 0
  %2836 = vmatprep.subr.bf16.mxu0 0
  %2837 = vmatpush1.bf16.msra.mxu0 0
  %2838 = vmatprep.subr.bf16.mxu0 0
  %2839 = vmatpush1.bf16.msra.mxu0 0
  %2840 = vmatprep.subr.bf16.mxu0 0
  %2841 = vmatpush1.bf16.msra.mxu0 0
  %2842 = vmatprep.mubr.bf16.mxu0 %v2444
  %2843 = vmatmul.mubr.bf16.gmra.mrb[0].mxu0 %v560
  %v2844 = vpop.f32.mrb[0].mxu0
  %v2845 = vadd.f32 %v2774, %v2844
  %v2846 = vpop.f32.mrb[0].mxu0
  %v2847 = vadd.f32 %v2776, %v2846
  %v2848 = vpop.f32.mrb[0].mxu0
  %v2849 = vadd.f32 %v2778, %v2848
  %v2850 = vpop.f32.mrb[0].mxu0
  %v2851 = vadd.f32 %v2780, %v2850
  %2852 = vmatprep.mubr.bf16.mxu0 %v2447
  %2853 = vmatmul.mubr.bf16.gmra.mrb[0].mxu0 %v572
  %v2854 = vpop.f32.mrb[0].mxu0
  %v2855 = vadd.f32 %v2784, %v2854
  %v2856 = vpop.f32.mrb[0].mxu0
  %v2857 = vadd.f32 %v2786, %v2856
  %v2858 = vpop.f32.mrb[0].mxu0
  %v2859 = vadd.f32 %v2788, %v2858
  %v2860 = vpop.f32.mrb[0].mxu0
  %v2861 = vadd.f32 %v2790, %v2860
  %2862 = vmatprep.mubr.bf16.mxu0 %v2450
  %2863 = vmatmul.mubr.bf16.gmra.mrb[0].mxu0 %v584
  %v2864 = vpop.f32.mrb[0].mxu0
  %v2865 = vadd.f32 %v2794, %v2864
  %v2866 = vpop.f32.mrb[0].mxu0
  %v2867 = vadd.f32 %v2796, %v2866
  %v2868 = vpop.f32.mrb[0].mxu0
  %v2869 = vadd.f32 %v2798, %v2868
  %v2870 = vpop.f32.mrb[0].mxu0
  %v2871 = vadd.f32 %v2800, %v2870
  %2872 = vmatprep.mubr.bf16.mxu0 %v2453
  %2873 = vmatmul.mubr.bf16.gmra.mrb[0].mxu0 %v596
  %v2874 = vpop.f32.mrb[0].mxu0
  %v2875 = vadd.f32 %v2804, %v2874
  %v2876 = vpop.f32.mrb[0].mxu0
  %v2877 = vadd.f32 %v2806, %v2876
  %v2878 = vpop.f32.mrb[0].mxu0
  %v2879 = vpop.f32.mrb[0].mxu0
  %2880 = vdwg.mxu0
  %2881 = vmatprep.subr.bf16.mxu0 %v1725
  %2882 = vmatpush1.bf16.msra.mxu0 %v1724
  %2883 = vmatprep.subr.bf16.mxu0 %v1729
  %2884 = vmatpush1.bf16.msra.mxu0 %v1728
  %2885 = vmatprep.subr.bf16.mxu0 %v1733
  %2886 = vmatpush1.bf16.msra.mxu0 %v1732
  %2887 = vmatprep.subr.bf16.mxu0 %v1737
  %2888 = vmatpush1.bf16.msra.mxu0 %v1736
  %2889 = vmatprep.subr.bf16.mxu0 %v1741
  %2890 = vmatpush1.bf16.msra.mxu0 %v1740
  %2891 = vmatprep.subr.bf16.mxu0 %v1745
  %2892 = vmatpush1.bf16.msra.mxu0 %v1744
  %2893 = vmatprep.subr.bf16.mxu0 %v1749
  %2894 = vmatpush1.bf16.msra.mxu0 %v1748
  %2895 = vmatprep.subr.bf16.mxu0 %v1753
  %2896 = vmatpush1.bf16.msra.mxu0 %v1752
  %2897 = vmatprep.subr.bf16.mxu0 %v1757
  %2898 = vmatpush1.bf16.msra.mxu0 %v1756
  %2899 = vmatprep.subr.bf16.mxu0 %v1761
  %2900 = vmatpush1.bf16.msra.mxu0 %v1760
  %2901 = vmatprep.subr.bf16.mxu0 %v1765
  %2902 = vmatpush1.bf16.msra.mxu0 %v1764
  %2903 = vmatprep.subr.bf16.mxu0 %v1769
  %2904 = vmatpush1.bf16.msra.mxu0 %v1768
  %2905 = vmatprep.subr.bf16.mxu0 %v1773
  %2906 = vmatpush1.bf16.msra.mxu0 %v1772
  %2907 = vmatprep.subr.bf16.mxu0 %v1777
  %2908 = vmatpush1.bf16.msra.mxu0 %v1776
  %2909 = vmatprep.subr.bf16.mxu0 %v1781
  %2910 = vmatpush1.bf16.msra.mxu0 %v1780
  %2911 = vmatprep.subr.bf16.mxu0 %v1785
  %2912 = vmatpush1.bf16.msra.mxu0 %v1784
  %2913 = vmatprep.mubr.bf16.mxu0 %v551
  %2914 = vmatmul.mubr.bf16.gmra.mrb[0].mxu0 %v550
  %v2915 = vpop.f32.mrb[0].mxu0
  %v2916 = vadd.f32 0.0, %v2915
  %v2917 = vpop.f32.mrb[0].mxu0
  %v2918 = vadd.f32 0.0, %v2917
  %v2919 = vpop.f32.mrb[0].mxu0
  %v2920 = vadd.f32 0.0, %v2919
  %v2921 = vpop.f32.mrb[0].mxu0
  %v2922 = vadd.f32 0.0, %v2921
  %2923 = vmatprep.mubr.bf16.mxu0 %v563
  %2924 = vmatmul.mubr.bf16.gmra.mrb[0].mxu0 %v562
  %v2925 = vpop.f32.mrb[0].mxu0
  %v2926 = vadd.f32 0.0, %v2925
  %v2927 = vpop.f32.mrb[0].mxu0
  %v2928 = vadd.f32 0.0, %v2927
  %v2929 = vpop.f32.mrb[0].mxu0
  %v2930 = vadd.f32 0.0, %v2929
  %v2931 = vpop.f32.mrb[0].mxu0
  %v2932 = vadd.f32 0.0, %v2931
  %2933 = vmatprep.mubr.bf16.mxu0 %v575
  %2934 = vmatmul.mubr.bf16.gmra.mrb[0].mxu0 %v574
  %v2935 = vpop.f32.mrb[0].mxu0
  %v2936 = vadd.f32 0.0, %v2935
  %v2937 = vpop.f32.mrb[0].mxu0
  %v2938 = vadd.f32 0.0, %v2937
  %v2939 = vpop.f32.mrb[0].mxu0
  %v2940 = vadd.f32 0.0, %v2939
  %v2941 = vpop.f32.mrb[0].mxu0
  %v2942 = vadd.f32 0.0, %v2941
  %2943 = vmatprep.mubr.bf16.mxu0 %v587
  %2944 = vmatmul.mubr.bf16.gmra.mrb[0].mxu0 %v586
  %v2945 = vpop.f32.mrb[0].mxu0
  %v2946 = vadd.f32 0.0, %v2945
  %v2947 = vpop.f32.mrb[0].mxu0
  %v2948 = vadd.f32 0.0, %v2947
  %v2949 = vpop.f32.mrb[0].mxu0
  %v2950 = vpop.f32.mrb[0].mxu0
  %2951 = vdwg.mxu0
  %2952 = vmatprep.subr.bf16.mxu0 %v1789
  %2953 = vmatpush1.bf16.msra.mxu0 %v1788
  %2954 = vmatprep.subr.bf16.mxu0 %v1793
  %2955 = vmatpush1.bf16.msra.mxu0 %v1792
  %2956 = vmatprep.subr.bf16.mxu0 %v1797
  %2957 = vmatpush1.bf16.msra.mxu0 %v1796
  %2958 = vmatprep.subr.bf16.mxu0 %v1801
  %2959 = vmatpush1.bf16.msra.mxu0 %v1800
  %2960 = vmatprep.subr.bf16.mxu0 %v1805
  %2961 = vmatpush1.bf16.msra.mxu0 %v1804
  %2962 = vmatprep.subr.bf16.mxu0 %v1809
  %2963 = vmatpush1.bf16.msra.mxu0 %v1808
  %2964 = vmatprep.subr.bf16.mxu0 %v1813
  %2965 = vmatpush1.bf16.msra.mxu0 %v1812
  %2966 = vmatprep.subr.bf16.mxu0 %v1817
  %2967 = vmatpush1.bf16.msra.mxu0 %v1816
  %2968 = vmatprep.subr.bf16.mxu0 %v1821
  %2969 = vmatpush1.bf16.msra.mxu0 %v1820
  %2970 = vmatprep.subr.bf16.mxu0 %v1825
  %2971 = vmatpush1.bf16.msra.mxu0 %v1824
  %2972 = vmatprep.subr.bf16.mxu0 %v1829
  %2973 = vmatpush1.bf16.msra.mxu0 %v1828
  %2974 = vmatprep.subr.bf16.mxu0 %v1833
  %2975 = vmatpush1.bf16.msra.mxu0 %v1832
  %2976 = vmatprep.subr.bf16.mxu0 %v1837
  %2977 = vmatpush1.bf16.msra.mxu0 %v1836
  %2978 = vmatprep.subr.bf16.mxu0 %v1841
  %2979 = vmatpush1.bf16.msra.mxu0 %v1840
  %2980 = vmatprep.subr.bf16.mxu0 %v1845
  %2981 = vmatpush1.bf16.msra.mxu0 %v1844
  %2982 = vmatprep.subr.bf16.mxu0 %v1849
  %2983 = vmatpush1.bf16.msra.mxu0 %v1848
  %2984 = vmatprep.mubr.bf16.mxu0 %v553
  %2985 = vmatmul.mubr.bf16.gmra.mrb[0].mxu0 %v552
  %v2986 = vpop.f32.mrb[0].mxu0
  %v2987 = vadd.f32 %v2916, %v2986
  %v2988 = vpop.f32.mrb[0].mxu0
  %v2989 = vadd.f32 %v2918, %v2988
  %v2990 = vpop.f32.mrb[0].mxu0
  %v2991 = vadd.f32 %v2920, %v2990
  %v2992 = vpop.f32.mrb[0].mxu0
  %v2993 = vadd.f32 %v2922, %v2992
  %2994 = vmatprep.mubr.bf16.mxu0 %v565
  %2995 = vmatmul.mubr.bf16.gmra.mrb[0].mxu0 %v564
  %v2996 = vpop.f32.mrb[0].mxu0
  %v2997 = vadd.f32 %v2926, %v2996
  %v2998 = vpop.f32.mrb[0].mxu0
  %v2999 = vadd.f32 %v2928, %v2998
  %v3000 = vpop.f32.mrb[0].mxu0
  %v3001 = vadd.f32 %v2930, %v3000
  %v3002 = vpop.f32.mrb[0].mxu0
  %v3003 = vadd.f32 %v2932, %v3002
  %3004 = vmatprep.mubr.bf16.mxu0 %v577
  %3005 = vmatmul.mubr.bf16.gmra.mrb[0].mxu0 %v576
  %v3006 = vpop.f32.mrb[0].mxu0
  %v3007 = vadd.f32 %v2936, %v3006
  %v3008 = vpop.f32.mrb[0].mxu0
  %v3009 = vadd.f32 %v2938, %v3008
  %v3010 = vpop.f32.mrb[0].mxu0
  %v3011 = vadd.f32 %v2940, %v3010
  %v3012 = vpop.f32.mrb[0].mxu0
  %v3013 = vadd.f32 %v2942, %v3012
  %3014 = vmatprep.mubr.bf16.mxu0 %v589
  %3015 = vmatmul.mubr.bf16.gmra.mrb[0].mxu0 %v588
  %v3016 = vpop.f32.mrb[0].mxu0
  %v3017 = vadd.f32 %v2946, %v3016
  %v3018 = vpop.f32.mrb[0].mxu0
  %v3019 = vadd.f32 %v2948, %v3018
  %v3020 = vpop.f32.mrb[0].mxu0
  %v3021 = vpop.f32.mrb[0].mxu0
  %3022 = vdwg.mxu0
  %3023 = vmatprep.subr.bf16.mxu0 %v1853
  %3024 = vmatpush1.bf16.msra.mxu0 %v1852
  %3025 = vmatprep.subr.bf16.mxu0 %v1857
  %3026 = vmatpush1.bf16.msra.mxu0 %v1856
  %3027 = vmatprep.subr.bf16.mxu0 %v1861
  %3028 = vmatpush1.bf16.msra.mxu0 %v1860
  %3029 = vmatprep.subr.bf16.mxu0 %v1865
  %3030 = vmatpush1.bf16.msra.mxu0 %v1864
  %3031 = vmatprep.subr.bf16.mxu0 %v1869
  %3032 = vmatpush1.bf16.msra.mxu0 %v1868
  %3033 = vmatprep.subr.bf16.mxu0 %v1873
  %3034 = vmatpush1.bf16.msra.mxu0 %v1872
  %3035 = vmatprep.subr.bf16.mxu0 %v1877
  %3036 = vmatpush1.bf16.msra.mxu0 %v1876
  %3037 = vmatprep.subr.bf16.mxu0 %v1881
  %3038 = vmatpush1.bf16.msra.mxu0 %v1880
  %3039 = vmatprep.subr.bf16.mxu0 %v1885
  %3040 = vmatpush1.bf16.msra.mxu0 %v1884
  %3041 = vmatprep.subr.bf16.mxu0 %v1889
  %3042 = vmatpush1.bf16.msra.mxu0 %v1888
  %3043 = vmatprep.subr.bf16.mxu0 %v1893
  %3044 = vmatpush1.bf16.msra.mxu0 %v1892
  %3045 = vmatprep.subr.bf16.mxu0 %v1897
  %3046 = vmatpush1.bf16.msra.mxu0 %v1896
  %3047 = vmatprep.subr.bf16.mxu0 %v1901
  %3048 = vmatpush1.bf16.msra.mxu0 %v1900
  %3049 = vmatprep.subr.bf16.mxu0 %v1905
  %3050 = vmatpush1.bf16.msra.mxu0 %v1904
  %3051 = vmatprep.subr.bf16.mxu0 %v1909
  %3052 = vmatpush1.bf16.msra.mxu0 %v1908
  %3053 = vmatprep.subr.bf16.mxu0 %v1913
  %3054 = vmatpush1.bf16.msra.mxu0 %v1912
  %3055 = vmatprep.mubr.bf16.mxu0 %v555
  %3056 = vmatmul.mubr.bf16.gmra.mrb[0].mxu0 %v554
  %v3057 = vpop.f32.mrb[0].mxu0
  %v3058 = vadd.f32 %v2987, %v3057
  %v3059 = vpop.f32.mrb[0].mxu0
  %v3060 = vadd.f32 %v2989, %v3059
  %v3061 = vpop.f32.mrb[0].mxu0
  %v3062 = vadd.f32 %v2991, %v3061
  %v3063 = vpop.f32.mrb[0].mxu0
  %v3064 = vadd.f32 %v2993, %v3063
  %3065 = vmatprep.mubr.bf16.mxu0 %v567
  %3066 = vmatmul.mubr.bf16.gmra.mrb[0].mxu0 %v566
  %v3067 = vpop.f32.mrb[0].mxu0
  %v3068 = vadd.f32 %v2997, %v3067
  %v3069 = vpop.f32.mrb[0].mxu0
  %v3070 = vadd.f32 %v2999, %v3069
  %v3071 = vpop.f32.mrb[0].mxu0
  %v3072 = vadd.f32 %v3001, %v3071
  %v3073 = vpop.f32.mrb[0].mxu0
  %v3074 = vadd.f32 %v3003, %v3073
  %3075 = vmatprep.mubr.bf16.mxu0 %v579
  %3076 = vmatmul.mubr.bf16.gmra.mrb[0].mxu0 %v578
  %v3077 = vpop.f32.mrb[0].mxu0
  %v3078 = vadd.f32 %v3007, %v3077
  %v3079 = vpop.f32.mrb[0].mxu0
  %v3080 = vadd.f32 %v3009, %v3079
  %v3081 = vpop.f32.mrb[0].mxu0
  %v3082 = vadd.f32 %v3011, %v3081
  %v3083 = vpop.f32.mrb[0].mxu0
  %v3084 = vadd.f32 %v3013, %v3083
  %3085 = vmatprep.mubr.bf16.mxu0 %v591
  %3086 = vmatmul.mubr.bf16.gmra.mrb[0].mxu0 %v590
  %v3087 = vpop.f32.mrb[0].mxu0
  %v3088 = vadd.f32 %v3017, %v3087
  %v3089 = vpop.f32.mrb[0].mxu0
  %v3090 = vadd.f32 %v3019, %v3089
  %v3091 = vpop.f32.mrb[0].mxu0
  %v3092 = vpop.f32.mrb[0].mxu0
  %3093 = vdwg.mxu0
  %3094 = vmatprep.subr.bf16.mxu0 %v1917
  %3095 = vmatpush1.bf16.msra.mxu0 %v1916
  %3096 = vmatprep.subr.bf16.mxu0 %v1921
  %3097 = vmatpush1.bf16.msra.mxu0 %v1920
  %3098 = vmatprep.subr.bf16.mxu0 %v1925
  %3099 = vmatpush1.bf16.msra.mxu0 %v1924
  %3100 = vmatprep.subr.bf16.mxu0 %v1929
  %3101 = vmatpush1.bf16.msra.mxu0 %v1928
  %3102 = vmatprep.subr.bf16.mxu0 %v1933
  %3103 = vmatpush1.bf16.msra.mxu0 %v1932
  %3104 = vmatprep.subr.bf16.mxu0 %v1937
  %3105 = vmatpush1.bf16.msra.mxu0 %v1936
  %3106 = vmatprep.subr.bf16.mxu0 %v1941
  %3107 = vmatpush1.bf16.msra.mxu0 %v1940
  %3108 = vmatprep.subr.bf16.mxu0 %v1945
  %3109 = vmatpush1.bf16.msra.mxu0 %v1944
  %3110 = vmatprep.subr.bf16.mxu0 %v1949
  %3111 = vmatpush1.bf16.msra.mxu0 %v1948
  %3112 = vmatprep.subr.bf16.mxu0 %v1953
  %3113 = vmatpush1.bf16.msra.mxu0 %v1952
  %3114 = vmatprep.subr.bf16.mxu0 %v1957
  %3115 = vmatpush1.bf16.msra.mxu0 %v1956
  %3116 = vmatprep.subr.bf16.mxu0 %v1961
  %3117 = vmatpush1.bf16.msra.mxu0 %v1960
  %3118 = vmatprep.subr.bf16.mxu0 %v1965
  %3119 = vmatpush1.bf16.msra.mxu0 %v1964
  %3120 = vmatprep.subr.bf16.mxu0 %v1969
  %3121 = vmatpush1.bf16.msra.mxu0 %v1968
  %3122 = vmatprep.subr.bf16.mxu0 %v1973
  %3123 = vmatpush1.bf16.msra.mxu0 %v1972
  %3124 = vmatprep.subr.bf16.mxu0 %v1977
  %3125 = vmatpush1.bf16.msra.mxu0 %v1976
  %3126 = vmatprep.mubr.bf16.mxu0 %v557
  %3127 = vmatmul.mubr.bf16.gmra.mrb[0].mxu0 %v556
  %v3128 = vpop.f32.mrb[0].mxu0
  %v3129 = vadd.f32 %v3058, %v3128
  %v3130 = vpop.f32.mrb[0].mxu0
  %v3131 = vadd.f32 %v3060, %v3130
  %v3132 = vpop.f32.mrb[0].mxu0
  %v3133 = vadd.f32 %v3062, %v3132
  %v3134 = vpop.f32.mrb[0].mxu0
  %v3135 = vadd.f32 %v3064, %v3134
  %3136 = vmatprep.mubr.bf16.mxu0 %v569
  %3137 = vmatmul.mubr.bf16.gmra.mrb[0].mxu0 %v568
  %v3138 = vpop.f32.mrb[0].mxu0
  %v3139 = vadd.f32 %v3068, %v3138
  %v3140 = vpop.f32.mrb[0].mxu0
  %v3141 = vadd.f32 %v3070, %v3140
  %v3142 = vpop.f32.mrb[0].mxu0
  %v3143 = vadd.f32 %v3072, %v3142
  %v3144 = vpop.f32.mrb[0].mxu0
  %v3145 = vadd.f32 %v3074, %v3144
  %3146 = vmatprep.mubr.bf16.mxu0 %v581
  %3147 = vmatmul.mubr.bf16.gmra.mrb[0].mxu0 %v580
  %v3148 = vpop.f32.mrb[0].mxu0
  %v3149 = vadd.f32 %v3078, %v3148
  %v3150 = vpop.f32.mrb[0].mxu0
  %v3151 = vadd.f32 %v3080, %v3150
  %v3152 = vpop.f32.mrb[0].mxu0
  %v3153 = vadd.f32 %v3082, %v3152
  %v3154 = vpop.f32.mrb[0].mxu0
  %v3155 = vadd.f32 %v3084, %v3154
  %3156 = vmatprep.mubr.bf16.mxu0 %v593
  %3157 = vmatmul.mubr.bf16.gmra.mrb[0].mxu0 %v592
  %v3158 = vpop.f32.mrb[0].mxu0
  %v3159 = vadd.f32 %v3088, %v3158
  %v3160 = vpop.f32.mrb[0].mxu0
  %v3161 = vadd.f32 %v3090, %v3160
  %v3162 = vpop.f32.mrb[0].mxu0
  %v3163 = vpop.f32.mrb[0].mxu0
  %3164 = vdwg.mxu0
  %3165 = vmatprep.subr.bf16.mxu0 %v1981
  %3166 = vmatpush1.bf16.msra.mxu0 %v1980
  %3167 = vmatprep.subr.bf16.mxu0 %v1985
  %3168 = vmatpush1.bf16.msra.mxu0 %v1984
  %3169 = vmatprep.subr.bf16.mxu0 %v1989
  %3170 = vmatpush1.bf16.msra.mxu0 %v1988
  %3171 = vmatprep.subr.bf16.mxu0 %v1993
  %3172 = vmatpush1.bf16.msra.mxu0 %v1992
  %3173 = vmatprep.subr.bf16.mxu0 %v1997
  %3174 = vmatpush1.bf16.msra.mxu0 %v1996
  %3175 = vmatprep.subr.bf16.mxu0 %v2001
  %3176 = vmatpush1.bf16.msra.mxu0 %v2000
  %3177 = vmatprep.subr.bf16.mxu0 %v2005
  %3178 = vmatpush1.bf16.msra.mxu0 %v2004
  %3179 = vmatprep.subr.bf16.mxu0 %v2009
  %3180 = vmatpush1.bf16.msra.mxu0 %v2008
  %3181 = vmatprep.subr.bf16.mxu0 %v2013
  %3182 = vmatpush1.bf16.msra.mxu0 %v2012
  %3183 = vmatprep.subr.bf16.mxu0 %v2017
  %3184 = vmatpush1.bf16.msra.mxu0 %v2016
  %3185 = vmatprep.subr.bf16.mxu0 %v2021
  %3186 = vmatpush1.bf16.msra.mxu0 %v2020
  %3187 = vmatprep.subr.bf16.mxu0 %v2025
  %3188 = vmatpush1.bf16.msra.mxu0 %v2024
  %3189 = vmatprep.subr.bf16.mxu0 %v2029
  %3190 = vmatpush1.bf16.msra.mxu0 %v2028
  %3191 = vmatprep.subr.bf16.mxu0 %v2033
  %3192 = vmatpush1.bf16.msra.mxu0 %v2032
  %3193 = vmatprep.subr.bf16.mxu0 %v2037
  %3194 = vmatpush1.bf16.msra.mxu0 %v2036
  %3195 = vmatprep.subr.bf16.mxu0 %v2041
  %3196 = vmatpush1.bf16.msra.mxu0 %v2040
  %3197 = vmatprep.mubr.bf16.mxu0 %v559
  %3198 = vmatmul.mubr.bf16.gmra.mrb[0].mxu0 %v558
  %v3199 = vpop.f32.mrb[0].mxu0
  %v3200 = vadd.f32 %v3129, %v3199
  %v3201 = vpop.f32.mrb[0].mxu0
  %v3202 = vadd.f32 %v3131, %v3201
  %v3203 = vpop.f32.mrb[0].mxu0
  %v3204 = vadd.f32 %v3133, %v3203
  %v3205 = vpop.f32.mrb[0].mxu0
  %v3206 = vadd.f32 %v3135, %v3205
  %3207 = vmatprep.mubr.bf16.mxu0 %v571
  %3208 = vmatmul.mubr.bf16.gmra.mrb[0].mxu0 %v570
  %v3209 = vpop.f32.mrb[0].mxu0
  %v3210 = vadd.f32 %v3139, %v3209
  %v3211 = vpop.f32.mrb[0].mxu0
  %v3212 = vadd.f32 %v3141, %v3211
  %v3213 = vpop.f32.mrb[0].mxu0
  %v3214 = vadd.f32 %v3143, %v3213
  %v3215 = vpop.f32.mrb[0].mxu0
  %v3216 = vadd.f32 %v3145, %v3215
  %3217 = vmatprep.mubr.bf16.mxu0 %v583
  %3218 = vmatmul.mubr.bf16.gmra.mrb[0].mxu0 %v582
  %v3219 = vpop.f32.mrb[0].mxu0
  %v3220 = vadd.f32 %v3149, %v3219
  %v3221 = vpop.f32.mrb[0].mxu0
  %v3222 = vadd.f32 %v3151, %v3221
  %v3223 = vpop.f32.mrb[0].mxu0
  %v3224 = vadd.f32 %v3153, %v3223
  %v3225 = vpop.f32.mrb[0].mxu0
  %v3226 = vadd.f32 %v3155, %v3225
  %3227 = vmatprep.mubr.bf16.mxu0 %v595
  %3228 = vmatmul.mubr.bf16.gmra.mrb[0].mxu0 %v594
  %v3229 = vpop.f32.mrb[0].mxu0
  %v3230 = vadd.f32 %v3159, %v3229
  %v3231 = vpop.f32.mrb[0].mxu0
  %v3232 = vadd.f32 %v3161, %v3231
  %v3233 = vpop.f32.mrb[0].mxu0
  %v3234 = vpop.f32.mrb[0].mxu0
  %3235 = vdwg.mxu0
  %3236 = vmatprep.subr.bf16.mxu0 %v2045
  %3237 = vmatpush1.bf16.msra.mxu0 %v2044
  %3238 = vmatprep.subr.bf16.mxu0 %v2049
  %3239 = vmatpush1.bf16.msra.mxu0 %v2048
  %3240 = vmatprep.subr.bf16.mxu0 %v2053
  %3241 = vmatpush1.bf16.msra.mxu0 %v2052
  %3242 = vmatprep.subr.bf16.mxu0 %v2057
  %3243 = vmatpush1.bf16.msra.mxu0 %v2056
  %3244 = vmatprep.subr.bf16.mxu0 %v2061
  %3245 = vmatpush1.bf16.msra.mxu0 %v2060
  %3246 = vmatprep.subr.bf16.mxu0 %v2065
  %3247 = vmatpush1.bf16.msra.mxu0 %v2064
  %3248 = vmatprep.subr.bf16.mxu0 %v2069
  %3249 = vmatpush1.bf16.msra.mxu0 %v2068
  %3250 = vmatprep.subr.bf16.mxu0 %v2073
  %3251 = vmatpush1.bf16.msra.mxu0 %v2072
  %3252 = vmatprep.subr.bf16.mxu0 %v2077
  %3253 = vmatpush1.bf16.msra.mxu0 %v2076
  %3254 = vmatprep.subr.bf16.mxu0 %v2081
  %3255 = vmatpush1.bf16.msra.mxu0 %v2080
  %3256 = vmatprep.subr.bf16.mxu0 0
  %3257 = vmatpush1.bf16.msra.mxu0 0
  %3258 = vmatprep.subr.bf16.mxu0 0
  %3259 = vmatpush1.bf16.msra.mxu0 0
  %3260 = vmatprep.subr.bf16.mxu0 0
  %3261 = vmatpush1.bf16.msra.mxu0 0
  %3262 = vmatprep.subr.bf16.mxu0 0
  %3263 = vmatpush1.bf16.msra.mxu0 0
  %3264 = vmatprep.subr.bf16.mxu0 0
  %3265 = vmatpush1.bf16.msra.mxu0 0
  %3266 = vmatprep.subr.bf16.mxu0 0
  %3267 = vmatpush1.bf16.msra.mxu0 0
  %3268 = vmatprep.mubr.bf16.mxu0 %v2444
  %3269 = vmatmul.mubr.bf16.gmra.mrb[0].mxu0 %v560
  %v3270 = vpop.f32.mrb[0].mxu0
  %v3271 = vadd.f32 %v3200, %v3270
  %v3272 = vpop.f32.mrb[0].mxu0
  %v3273 = vadd.f32 %v3202, %v3272
  %v3274 = vpop.f32.mrb[0].mxu0
  %v3275 = vadd.f32 %v3204, %v3274
  %v3276 = vpop.f32.mrb[0].mxu0
  %v3277 = vadd.f32 %v3206, %v3276
  %3278 = vmatprep.mubr.bf16.mxu0 %v2447
  %3279 = vmatmul.mubr.bf16.gmra.mrb[0].mxu0 %v572
  %v3280 = vpop.f32.mrb[0].mxu0
  %v3281 = vadd.f32 %v3210, %v3280
  %v3282 = vpop.f32.mrb[0].mxu0
  %v3283 = vadd.f32 %v3212, %v3282
  %v3284 = vpop.f32.mrb[0].mxu0
  %v3285 = vadd.f32 %v3214, %v3284
  %v3286 = vpop.f32.mrb[0].mxu0
  %v3287 = vadd.f32 %v3216, %v3286
  %3288 = vmatprep.mubr.bf16.mxu0 %v2450
  %3289 = vmatmul.mubr.bf16.gmra.mrb[0].mxu0 %v584
  %v3290 = vpop.f32.mrb[0].mxu0
  %v3291 = vadd.f32 %v3220, %v3290
  %v3292 = vpop.f32.mrb[0].mxu0
  %v3293 = vadd.f32 %v3222, %v3292
  %v3294 = vpop.f32.mrb[0].mxu0
  %v3295 = vadd.f32 %v3224, %v3294
  %v3296 = vpop.f32.mrb[0].mxu0
  %v3297 = vadd.f32 %v3226, %v3296
  %3298 = vmatprep.mubr.bf16.mxu0 %v2453
  %3299 = vmatmul.mubr.bf16.gmra.mrb[0].mxu0 %v596
  %v3300 = vpop.f32.mrb[0].mxu0
  %v3301 = vadd.f32 %v3230, %v3300
  %v3302 = vpop.f32.mrb[0].mxu0
  %v3303 = vadd.f32 %v3232, %v3302
  %v3304 = vpop.f32.mrb[0].mxu0
  %v3305 = vpop.f32.mrb[0].mxu0
  %3306 = vdwg.mxu0
  %v3307 = vld [vmem:[%s1] sm:$0xff]
  %v3308 = vld [vmem:[%s1 + $0x8] sm:$0xff]
  %v3309 = vld [vmem:[%s1 + $0x10] sm:$0xff]
  %v3310 = vld [vmem:[%s1 + $0x18] sm:$0xff]
  %v3311 = vld [vmem:[%s1 + $0x20] sm:$0xff]
  %v3312 = vld [vmem:[%s1 + $0x28] sm:$0xff]
  %v3313 = vld [vmem:[%s1 + $0x30] sm:$0xff]
  %v3314 = vld [vmem:[%s1 + $0x38] sm:$0xff]
  %v3315 = vld [vmem:[%s1 + $0x40] sm:$0xff]
  %v3316 = vld [vmem:[%s1 + $0x48] sm:$0xff]
  %v3317 = vld [vmem:[%s1 + $0x50] sm:$0xff]
  %v3318 = vld [vmem:[%s1 + $0x58] sm:$0xff]
  %v3319 = vld [vmem:[%s1 + $0x60] sm:$0xff]
  %v3320 = vld [vmem:[%s1 + $0x68] sm:$0xff]
  %v3321 = vld [vmem:[%s1 + $0x70] sm:$0xff]
  %v3322 = vld [vmem:[%s1 + $0x78] sm:$0xff]
  %v3323 = vld [vmem:[%s1 + $0x80] sm:$0xff]
  %v3324 = vld [vmem:[%s1 + $0x88] sm:$0xff]
  %v3325 = vld [vmem:[%s1 + $0x90] sm:$0xff]
  %v3326 = vld [vmem:[%s1 + $0x98] sm:$0xff]
  %v3327 = vld [vmem:[%s1 + $0xa0] sm:$0xff]
  %v3328 = vld [vmem:[%s1 + $0xa8] sm:$0xff]
  %v3329 = vld [vmem:[%s1 + $0xb0] sm:$0xff]
  %v3330 = vld [vmem:[%s1 + $0xb8] sm:$0xff]
  %v3331 = vld [vmem:[%s1 + $0xc0] sm:$0xff]
  %v3332 = vld [vmem:[%s1 + $0xc8] sm:$0xff]
  %v3333 = vld [vmem:[%s1 + $0xd0] sm:$0xff]
  %v3334 = vld [vmem:[%s1 + $0xd8] sm:$0xff]
  %v3335 = vld [vmem:[%s1 + $0xe0] sm:$0xff]
  %v3336 = vld [vmem:[%s1 + $0xe8] sm:$0xff]
  %v3337 = vld [vmem:[%s1 + $0xf0] sm:$0xff]
  %v3338 = vld [vmem:[%s1 + $0xf8] sm:$0xff]
  %v3339 = vld [vmem:[%s1 + $0x100] sm:$0xff]
  %v3340 = vld [vmem:[%s1 + $0x108] sm:$0xff]
  %v3341 = vld [vmem:[%s1 + $0x110] sm:$0xff]
  %v3342 = vld [vmem:[%s1 + $0x118] sm:$0xff]
  %v3343 = vld [vmem:[%s1 + $0x120] sm:$0xff]
  %v3344 = vld [vmem:[%s1 + $0x128] sm:$0xff]
  %v3345 = vld [vmem:[%s1 + $0x130] sm:$0xff]
  %v3346 = vld [vmem:[%s1 + $0x138] sm:$0xff]
  %v3347 = vld [vmem:[%s1 + $0x140] sm:$0xff]
  %v3348 = vld [vmem:[%s1 + $0x148] sm:$0xff]
  %v3391 = vunpack.c.l.b16 %v3307
  %v3392 = vunpack.c.h.b16 %v3307
  %v3393 = vunpack.c.l.b16 %v3308
  %v3394 = vunpack.c.h.b16 %v3308
  %v3395 = vunpack.c.l.b16 %v3309
  %v3396 = vunpack.c.h.b16 %v3309
  %v3397 = vunpack.c.l.b16 %v3310
  %v3398 = vunpack.c.h.b16 %v3310
  %v3399 = vunpack.c.l.b16 %v3311
  %v3400 = vunpack.c.h.b16 %v3311
  %v3401 = vunpack.c.l.b16 %v3312
  %v3402 = vunpack.c.h.b16 %v3312
  %v3403 = vunpack.c.l.b16 %v3313
  %v3404 = vunpack.c.h.b16 %v3313
  %v3405 = vunpack.c.l.b16 %v3314
  %v3406 = vunpack.c.h.b16 %v3314
  %v3407 = vunpack.c.l.b16 %v3315
  %v3408 = vunpack.c.h.b16 %v3315
  %v3409 = vunpack.c.l.b16 %v3316
  %v3410 = vunpack.c.h.b16 %v3316
  %v3411 = vunpack.c.l.b16 %v3317
  %v3412 = vunpack.c.h.b16 %v3317
  %v3413 = vunpack.c.l.b16 %v3318
  %v3414 = vunpack.c.h.b16 %v3318
  %v3415 = vunpack.c.l.b16 %v3319
  %v3416 = vunpack.c.h.b16 %v3319
  %v3417 = vunpack.c.l.b16 %v3320
  %v3418 = vunpack.c.h.b16 %v3320
  %v3419 = vunpack.c.l.b16 %v3321
  %v3420 = vunpack.c.h.b16 %v3321
  %v3421 = vunpack.c.l.b16 %v3322
  %v3422 = vunpack.c.h.b16 %v3322
  %v3423 = vunpack.c.l.b16 %v3323
  %v3424 = vunpack.c.h.b16 %v3323
  %v3425 = vunpack.c.l.b16 %v3324
  %v3426 = vunpack.c.h.b16 %v3324
  %v3427 = vunpack.c.l.b16 %v3325
  %v3428 = vunpack.c.h.b16 %v3325
  %v3429 = vunpack.c.l.b16 %v3326
  %v3430 = vunpack.c.h.b16 %v3326
  %v3431 = vunpack.c.l.b16 %v3327
  %v3432 = vunpack.c.h.b16 %v3327
  %v3433 = vunpack.c.l.b16 %v3328
  %v3434 = vunpack.c.h.b16 %v3328
  %v3435 = vunpack.c.l.b16 %v3329
  %v3436 = vunpack.c.h.b16 %v3329
  %v3437 = vunpack.c.l.b16 %v3330
  %v3438 = vunpack.c.h.b16 %v3330
  %v3439 = vunpack.c.l.b16 %v3331
  %v3440 = vunpack.c.h.b16 %v3331
  %v3441 = vunpack.c.l.b16 %v3332
  %v3442 = vunpack.c.h.b16 %v3332
  %v3443 = vunpack.c.l.b16 %v3333
  %v3444 = vunpack.c.h.b16 %v3333
  %v3445 = vunpack.c.l.b16 %v3334
  %v3446 = vunpack.c.h.b16 %v3334
  %v3447 = vunpack.c.l.b16 %v3335
  %v3448 = vunpack.c.h.b16 %v3335
  %v3449 = vunpack.c.l.b16 %v3336
  %v3450 = vunpack.c.h.b16 %v3336
  %v3451 = vunpack.c.l.b16 %v3337
  %v3452 = vunpack.c.h.b16 %v3337
  %v3453 = vunpack.c.l.b16 %v3338
  %v3454 = vunpack.c.h.b16 %v3338
  %v3455 = vunpack.c.l.b16 %v3339
  %v3456 = vunpack.c.h.b16 %v3339
  %v3457 = vunpack.c.l.b16 %v3340
  %v3458 = vunpack.c.h.b16 %v3340
  %v3459 = vunpack.c.l.b16 %v3341
  %v3460 = vunpack.c.h.b16 %v3341
  %v3461 = vunpack.c.l.b16 %v3342
  %v3462 = vunpack.c.h.b16 %v3342
  %v3463 = vunpack.c.l.b16 %v3343
  %v3464 = vunpack.c.h.b16 %v3343
  %v3465 = vunpack.c.l.b16 %v3344
  %v3466 = vunpack.c.h.b16 %v3344
  %v3467 = vunpack.c.l.b16 %v3345
  %v3468 = vunpack.c.h.b16 %v3345
  %v3469 = vunpack.c.l.b16 %v3346
  %v3470 = vunpack.c.h.b16 %v3346
  %v3471 = vunpack.c.l.b16 %v3347
  %v3472 = vunpack.c.h.b16 %v3347
  %v3473 = vunpack.c.l.b16 %v3348
  %v3474 = vunpack.c.h.b16 %v3348
  %v3475 = vpack.c.b16 %v3403, %v3391
  %v3476 = vpack.c.b16 %v3404, %v3392
  %v3477 = vpack.c.b16 %v3405, %v3393
  %v3478 = vpack.c.b16 %v3406, %v3394
  %v3479 = vpack.c.b16 %v3407, %v3395
  %v3480 = vpack.c.b16 %v3408, %v3396
  %v3481 = vpack.c.b16 %v3409, %v3397
  %v3482 = vpack.c.b16 %v3410, %v3398
  %v3483 = vpack.c.b16 %v3411, %v3399
  %v3484 = vpack.c.b16 %v3412, %v3400
  %v3485 = vpack.c.b16 %v3413, %v3401
  %v3486 = vpack.c.b16 %v3414, %v3402
  %v3487 = vpack.c.b16 %v3427, %v3415
  %v3488 = vpack.c.b16 %v3428, %v3416
  %v3489 = vpack.c.b16 %v3429, %v3417
  %v3490 = vpack.c.b16 %v3430, %v3418
  %v3491 = vpack.c.b16 %v3431, %v3419
  %v3492 = vpack.c.b16 %v3432, %v3420
  %v3493 = vpack.c.b16 %v3433, %v3421
  %v3494 = vpack.c.b16 %v3434, %v3422
  %v3495 = vpack.c.b16 %v3435, %v3423
  %v3496 = vpack.c.b16 %v3436, %v3424
  %v3497 = vpack.c.b16 %v3437, %v3425
  %v3498 = vpack.c.b16 %v3438, %v3426
  %v3499 = vpack.c.b16 %v3451, %v3439
  %v3500 = vpack.c.b16 %v3452, %v3440
  %v3501 = vpack.c.b16 %v3453, %v3441
  %v3502 = vpack.c.b16 %v3454, %v3442
  %v3503 = vpack.c.b16 %v3455, %v3443
  %v3504 = vpack.c.b16 %v3456, %v3444
  %v3505 = vpack.c.b16 %v3457, %v3445
  %v3506 = vpack.c.b16 %v3458, %v3446
  %v3507 = vpack.c.b16 %v3459, %v3447
  %v3508 = vpack.c.b16 %v3460, %v3448
  %v3509 = vpack.c.b16 %v3461, %v3449
  %v3510 = vpack.c.b16 %v3462, %v3450
  %v3511 = vpack.c.b16 %v3463, %v3463
  %v3512 = vpack.c.b16 %v3464, %v3464
  %v3513 = vpack.c.b16 %v3465, %v3465
  %v3514 = vpack.c.b16 %v3466, %v3466
  %v3515 = vpack.c.b16 %v3467, %v3467
  %v3516 = vpack.c.b16 %v3468, %v3468
  %v3517 = vpack.c.b16 %v3469, %v3469
  %v3518 = vpack.c.b16 %v3470, %v3470
  %v3519 = vpack.c.b16 %v3471, %v3471
  %v3520 = vpack.c.b16 %v3472, %v3472
  %v3521 = vpack.c.b16 %v3473, %v3473
  %v3522 = vpack.c.b16 %v3474, %v3474
  %v3568 = vsel %vm2442, %v3486, 0
  %v3571 = vsel %vm2442, %v3498, 0
  %v3574 = vsel %vm2442, %v3510, 0
  %v3577 = vsel %vm2442, %v3522, 0
  %3579 = vmatprep.subr.bf16.mxu0 %v1723
  %3580 = vmatpush1.bf16.msra.mxu0 %v1722
  %3581 = vmatprep.subr.bf16.mxu0 %v1727
  %3582 = vmatpush1.bf16.msra.mxu0 %v1726
  %3583 = vmatprep.subr.bf16.mxu0 %v1731
  %3584 = vmatpush1.bf16.msra.mxu0 %v1730
  %3585 = vmatprep.subr.bf16.mxu0 %v1735
  %3586 = vmatpush1.bf16.msra.mxu0 %v1734
  %3587 = vmatprep.subr.bf16.mxu0 %v1739
  %3588 = vmatpush1.bf16.msra.mxu0 %v1738
  %3589 = vmatprep.subr.bf16.mxu0 %v1743
  %3590 = vmatpush1.bf16.msra.mxu0 %v1742
  %3591 = vmatprep.subr.bf16.mxu0 %v1747
  %3592 = vmatpush1.bf16.msra.mxu0 %v1746
  %3593 = vmatprep.subr.bf16.mxu0 %v1751
  %3594 = vmatpush1.bf16.msra.mxu0 %v1750
  %3595 = vmatprep.subr.bf16.mxu0 %v1755
  %3596 = vmatpush1.bf16.msra.mxu0 %v1754
  %3597 = vmatprep.subr.bf16.mxu0 %v1759
  %3598 = vmatpush1.bf16.msra.mxu0 %v1758
  %3599 = vmatprep.subr.bf16.mxu0 %v1763
  %3600 = vmatpush1.bf16.msra.mxu0 %v1762
  %3601 = vmatprep.subr.bf16.mxu0 %v1767
  %3602 = vmatpush1.bf16.msra.mxu0 %v1766
  %3603 = vmatprep.subr.bf16.mxu0 %v1771
  %3604 = vmatpush1.bf16.msra.mxu0 %v1770
  %3605 = vmatprep.subr.bf16.mxu0 %v1775
  %3606 = vmatpush1.bf16.msra.mxu0 %v1774
  %3607 = vmatprep.subr.bf16.mxu0 %v1779
  %3608 = vmatpush1.bf16.msra.mxu0 %v1778
  %3609 = vmatprep.subr.bf16.mxu0 %v1783
  %3610 = vmatpush1.bf16.msra.mxu0 %v1782
  %3611 = vmatprep.mubr.bf16.mxu0 %v3476
  %3612 = vmatmul.mubr.bf16.gmra.mrb[0].mxu0 %v3475
  %v3613 = vpop.f32.mrb[0].mxu0
  %v3614 = vadd.f32 0.0, %v3613
  %v3615 = vpop.f32.mrb[0].mxu0
  %v3616 = vadd.f32 0.0, %v3615
  %v3617 = vpop.f32.mrb[0].mxu0
  %v3618 = vadd.f32 0.0, %v3617
  %v3619 = vpop.f32.mrb[0].mxu0
  %v3620 = vadd.f32 0.0, %v3619
  %3621 = vmatprep.mubr.bf16.mxu0 %v3488
  %3622 = vmatmul.mubr.bf16.gmra.mrb[0].mxu0 %v3487
  %v3623 = vpop.f32.mrb[0].mxu0
  %v3624 = vadd.f32 0.0, %v3623
  %v3625 = vpop.f32.mrb[0].mxu0
  %v3626 = vadd.f32 0.0, %v3625
  %v3627 = vpop.f32.mrb[0].mxu0
  %v3628 = vadd.f32 0.0, %v3627
  %v3629 = vpop.f32.mrb[0].mxu0
  %v3630 = vadd.f32 0.0, %v3629
  %3631 = vmatprep.mubr.bf16.mxu0 %v3500
  %3632 = vmatmul.mubr.bf16.gmra.mrb[0].mxu0 %v3499
  %v3633 = vpop.f32.mrb[0].mxu0
  %v3634 = vadd.f32 0.0, %v3633
  %v3635 = vpop.f32.mrb[0].mxu0
  %v3636 = vadd.f32 0.0, %v3635
  %v3637 = vpop.f32.mrb[0].mxu0
  %v3638 = vadd.f32 0.0, %v3637
  %v3639 = vpop.f32.mrb[0].mxu0
  %v3640 = vadd.f32 0.0, %v3639
  %3641 = vmatprep.mubr.bf16.mxu0 %v3512
  %3642 = vmatmul.mubr.bf16.gmra.mrb[0].mxu0 %v3511
  %v3643 = vpop.f32.mrb[0].mxu0
  %v3644 = vadd.f32 0.0, %v3643
  %v3645 = vpop.f32.mrb[0].mxu0
  %v3646 = vadd.f32 0.0, %v3645
  %v3647 = vpop.f32.mrb[0].mxu0
  %v3648 = vpop.f32.mrb[0].mxu0
  %3649 = vdwg.mxu0
  %3650 = vmatprep.subr.bf16.mxu0 %v1787
  %3651 = vmatpush1.bf16.msra.mxu0 %v1786
  %3652 = vmatprep.subr.bf16.mxu0 %v1791
  %3653 = vmatpush1.bf16.msra.mxu0 %v1790
  %3654 = vmatprep.subr.bf16.mxu0 %v1795
  %3655 = vmatpush1.bf16.msra.mxu0 %v1794
  %3656 = vmatprep.subr.bf16.mxu0 %v1799
  %3657 = vmatpush1.bf16.msra.mxu0 %v1798
  %3658 = vmatprep.subr.bf16.mxu0 %v1803
  %3659 = vmatpush1.bf16.msra.mxu0 %v1802
  %3660 = vmatprep.subr.bf16.mxu0 %v1807
  %3661 = vmatpush1.bf16.msra.mxu0 %v1806
  %3662 = vmatprep.subr.bf16.mxu0 %v1811
  %3663 = vmatpush1.bf16.msra.mxu0 %v1810
  %3664 = vmatprep.subr.bf16.mxu0 %v1815
  %3665 = vmatpush1.bf16.msra.mxu0 %v1814
  %3666 = vmatprep.subr.bf16.mxu0 %v1819
  %3667 = vmatpush1.bf16.msra.mxu0 %v1818
  %3668 = vmatprep.subr.bf16.mxu0 %v1823
  %3669 = vmatpush1.bf16.msra.mxu0 %v1822
  %3670 = vmatprep.subr.bf16.mxu0 %v1827
  %3671 = vmatpush1.bf16.msra.mxu0 %v1826
  %3672 = vmatprep.subr.bf16.mxu0 %v1831
  %3673 = vmatpush1.bf16.msra.mxu0 %v1830
  %3674 = vmatprep.subr.bf16.mxu0 %v1835
  %3675 = vmatpush1.bf16.msra.mxu0 %v1834
  %3676 = vmatprep.subr.bf16.mxu0 %v1839
  %3677 = vmatpush1.bf16.msra.mxu0 %v1838
  %3678 = vmatprep.subr.bf16.mxu0 %v1843
  %3679 = vmatpush1.bf16.msra.mxu0 %v1842
  %3680 = vmatprep.subr.bf16.mxu0 %v1847
  %3681 = vmatpush1.bf16.msra.mxu0 %v1846
  %3682 = vmatprep.mubr.bf16.mxu0 %v3478
  %3683 = vmatmul.mubr.bf16.gmra.mrb[0].mxu0 %v3477
  %v3684 = vpop.f32.mrb[0].mxu0
  %v3685 = vadd.f32 %v3614, %v3684
  %v3686 = vpop.f32.mrb[0].mxu0
  %v3687 = vadd.f32 %v3616, %v3686
  %v3688 = vpop.f32.mrb[0].mxu0
  %v3689 = vadd.f32 %v3618, %v3688
  %v3690 = vpop.f32.mrb[0].mxu0
  %v3691 = vadd.f32 %v3620, %v3690
  %3692 = vmatprep.mubr.bf16.mxu0 %v3490
  %3693 = vmatmul.mubr.bf16.gmra.mrb[0].mxu0 %v3489
  %v3694 = vpop.f32.mrb[0].mxu0
  %v3695 = vadd.f32 %v3624, %v3694
  %v3696 = vpop.f32.mrb[0].mxu0
  %v3697 = vadd.f32 %v3626, %v3696
  %v3698 = vpop.f32.mrb[0].mxu0
  %v3699 = vadd.f32 %v3628, %v3698
  %v3700 = vpop.f32.mrb[0].mxu0
  %v3701 = vadd.f32 %v3630, %v3700
  %3702 = vmatprep.mubr.bf16.mxu0 %v3502
  %3703 = vmatmul.mubr.bf16.gmra.mrb[0].mxu0 %v3501
  %v3704 = vpop.f32.mrb[0].mxu0
  %v3705 = vadd.f32 %v3634, %v3704
  %v3706 = vpop.f32.mrb[0].mxu0
  %v3707 = vadd.f32 %v3636, %v3706
  %v3708 = vpop.f32.mrb[0].mxu0
  %v3709 = vadd.f32 %v3638, %v3708
  %v3710 = vpop.f32.mrb[0].mxu0
  %v3711 = vadd.f32 %v3640, %v3710
  %3712 = vmatprep.mubr.bf16.mxu0 %v3514
  %3713 = vmatmul.mubr.bf16.gmra.mrb[0].mxu0 %v3513
  %v3714 = vpop.f32.mrb[0].mxu0
  %v3715 = vadd.f32 %v3644, %v3714
  %v3716 = vpop.f32.mrb[0].mxu0
  %v3717 = vadd.f32 %v3646, %v3716
  %v3718 = vpop.f32.mrb[0].mxu0
  %v3719 = vpop.f32.mrb[0].mxu0
  %3720 = vdwg.mxu0
  %3721 = vmatprep.subr.bf16.mxu0 %v1851
  %3722 = vmatpush1.bf16.msra.mxu0 %v1850
  %3723 = vmatprep.subr.bf16.mxu0 %v1855
  %3724 = vmatpush1.bf16.msra.mxu0 %v1854
  %3725 = vmatprep.subr.bf16.mxu0 %v1859
  %3726 = vmatpush1.bf16.msra.mxu0 %v1858
  %3727 = vmatprep.subr.bf16.mxu0 %v1863
  %3728 = vmatpush1.bf16.msra.mxu0 %v1862
  %3729 = vmatprep.subr.bf16.mxu0 %v1867
  %3730 = vmatpush1.bf16.msra.mxu0 %v1866
  %3731 = vmatprep.subr.bf16.mxu0 %v1871
  %3732 = vmatpush1.bf16.msra.mxu0 %v1870
  %3733 = vmatprep.subr.bf16.mxu0 %v1875
  %3734 = vmatpush1.bf16.msra.mxu0 %v1874
  %3735 = vmatprep.subr.bf16.mxu0 %v1879
  %3736 = vmatpush1.bf16.msra.mxu0 %v1878
  %3737 = vmatprep.subr.bf16.mxu0 %v1883
  %3738 = vmatpush1.bf16.msra.mxu0 %v1882
  %3739 = vmatprep.subr.bf16.mxu0 %v1887
  %3740 = vmatpush1.bf16.msra.mxu0 %v1886
  %3741 = vmatprep.subr.bf16.mxu0 %v1891
  %3742 = vmatpush1.bf16.msra.mxu0 %v1890
  %3743 = vmatprep.subr.bf16.mxu0 %v1895
  %3744 = vmatpush1.bf16.msra.mxu0 %v1894
  %3745 = vmatprep.subr.bf16.mxu0 %v1899
  %3746 = vmatpush1.bf16.msra.mxu0 %v1898
  %3747 = vmatprep.subr.bf16.mxu0 %v1903
  %3748 = vmatpush1.bf16.msra.mxu0 %v1902
  %3749 = vmatprep.subr.bf16.mxu0 %v1907
  %3750 = vmatpush1.bf16.msra.mxu0 %v1906
  %3751 = vmatprep.subr.bf16.mxu0 %v1911
  %3752 = vmatpush1.bf16.msra.mxu0 %v1910
  %3753 = vmatprep.mubr.bf16.mxu0 %v3480
  %3754 = vmatmul.mubr.bf16.gmra.mrb[0].mxu0 %v3479
  %v3755 = vpop.f32.mrb[0].mxu0
  %v3756 = vadd.f32 %v3685, %v3755
  %v3757 = vpop.f32.mrb[0].mxu0
  %v3758 = vadd.f32 %v3687, %v3757
  %v3759 = vpop.f32.mrb[0].mxu0
  %v3760 = vadd.f32 %v3689, %v3759
  %v3761 = vpop.f32.mrb[0].mxu0
  %v3762 = vadd.f32 %v3691, %v3761
  %3763 = vmatprep.mubr.bf16.mxu0 %v3492
  %3764 = vmatmul.mubr.bf16.gmra.mrb[0].mxu0 %v3491
  %v3765 = vpop.f32.mrb[0].mxu0
  %v3766 = vadd.f32 %v3695, %v3765
  %v3767 = vpop.f32.mrb[0].mxu0
  %v3768 = vadd.f32 %v3697, %v3767
  %v3769 = vpop.f32.mrb[0].mxu0
  %v3770 = vadd.f32 %v3699, %v3769
  %v3771 = vpop.f32.mrb[0].mxu0
  %v3772 = vadd.f32 %v3701, %v3771
  %3773 = vmatprep.mubr.bf16.mxu0 %v3504
  %3774 = vmatmul.mubr.bf16.gmra.mrb[0].mxu0 %v3503
  %v3775 = vpop.f32.mrb[0].mxu0
  %v3776 = vadd.f32 %v3705, %v3775
  %v3777 = vpop.f32.mrb[0].mxu0
  %v3778 = vadd.f32 %v3707, %v3777
  %v3779 = vpop.f32.mrb[0].mxu0
  %v3780 = vadd.f32 %v3709, %v3779
  %v3781 = vpop.f32.mrb[0].mxu0
  %v3782 = vadd.f32 %v3711, %v3781
  %3783 = vmatprep.mubr.bf16.mxu0 %v3516
  %3784 = vmatmul.mubr.bf16.gmra.mrb[0].mxu0 %v3515
  %v3785 = vpop.f32.mrb[0].mxu0
  %v3786 = vadd.f32 %v3715, %v3785
  %v3787 = vpop.f32.mrb[0].mxu0
  %v3788 = vadd.f32 %v3717, %v3787
  %v3789 = vpop.f32.mrb[0].mxu0
  %v3790 = vpop.f32.mrb[0].mxu0
  %3791 = vdwg.mxu0
  %3792 = vmatprep.subr.bf16.mxu0 %v1915
  %3793 = vmatpush1.bf16.msra.mxu0 %v1914
  %3794 = vmatprep.subr.bf16.mxu0 %v1919
  %3795 = vmatpush1.bf16.msra.mxu0 %v1918
  %3796 = vmatprep.subr.bf16.mxu0 %v1923
  %3797 = vmatpush1.bf16.msra.mxu0 %v1922
  %3798 = vmatprep.subr.bf16.mxu0 %v1927
  %3799 = vmatpush1.bf16.msra.mxu0 %v1926
  %3800 = vmatprep.subr.bf16.mxu0 %v1931
  %3801 = vmatpush1.bf16.msra.mxu0 %v1930
  %3802 = vmatprep.subr.bf16.mxu0 %v1935
  %3803 = vmatpush1.bf16.msra.mxu0 %v1934
  %3804 = vmatprep.subr.bf16.mxu0 %v1939
  %3805 = vmatpush1.bf16.msra.mxu0 %v1938
  %3806 = vmatprep.subr.bf16.mxu0 %v1943
  %3807 = vmatpush1.bf16.msra.mxu0 %v1942
  %3808 = vmatprep.subr.bf16.mxu0 %v1947
  %3809 = vmatpush1.bf16.msra.mxu0 %v1946
  %3810 = vmatprep.subr.bf16.mxu0 %v1951
  %3811 = vmatpush1.bf16.msra.mxu0 %v1950
  %3812 = vmatprep.subr.bf16.mxu0 %v1955
  %3813 = vmatpush1.bf16.msra.mxu0 %v1954
  %3814 = vmatprep.subr.bf16.mxu0 %v1959
  %3815 = vmatpush1.bf16.msra.mxu0 %v1958
  %3816 = vmatprep.subr.bf16.mxu0 %v1963
  %3817 = vmatpush1.bf16.msra.mxu0 %v1962
  %3818 = vmatprep.subr.bf16.mxu0 %v1967
  %3819 = vmatpush1.bf16.msra.mxu0 %v1966
  %3820 = vmatprep.subr.bf16.mxu0 %v1971
  %3821 = vmatpush1.bf16.msra.mxu0 %v1970
  %3822 = vmatprep.subr.bf16.mxu0 %v1975
  %3823 = vmatpush1.bf16.msra.mxu0 %v1974
  %3824 = vmatprep.mubr.bf16.mxu0 %v3482
  %3825 = vmatmul.mubr.bf16.gmra.mrb[0].mxu0 %v3481
  %v3826 = vpop.f32.mrb[0].mxu0
  %v3827 = vadd.f32 %v3756, %v3826
  %v3828 = vpop.f32.mrb[0].mxu0
  %v3829 = vadd.f32 %v3758, %v3828
  %v3830 = vpop.f32.mrb[0].mxu0
  %v3831 = vadd.f32 %v3760, %v3830
  %v3832 = vpop.f32.mrb[0].mxu0
  %v3833 = vadd.f32 %v3762, %v3832
  %3834 = vmatprep.mubr.bf16.mxu0 %v3494
  %3835 = vmatmul.mubr.bf16.gmra.mrb[0].mxu0 %v3493
  %v3836 = vpop.f32.mrb[0].mxu0
  %v3837 = vadd.f32 %v3766, %v3836
  %v3838 = vpop.f32.mrb[0].mxu0
  %v3839 = vadd.f32 %v3768, %v3838
  %v3840 = vpop.f32.mrb[0].mxu0
  %v3841 = vadd.f32 %v3770, %v3840
  %v3842 = vpop.f32.mrb[0].mxu0
  %v3843 = vadd.f32 %v3772, %v3842
  %3844 = vmatprep.mubr.bf16.mxu0 %v3506
  %3845 = vmatmul.mubr.bf16.gmra.mrb[0].mxu0 %v3505
  %v3846 = vpop.f32.mrb[0].mxu0
  %v3847 = vadd.f32 %v3776, %v3846
  %v3848 = vpop.f32.mrb[0].mxu0
  %v3849 = vadd.f32 %v3778, %v3848
  %v3850 = vpop.f32.mrb[0].mxu0
  %v3851 = vadd.f32 %v3780, %v3850
  %v3852 = vpop.f32.mrb[0].mxu0
  %v3853 = vadd.f32 %v3782, %v3852
  %3854 = vmatprep.mubr.bf16.mxu0 %v3518
  %3855 = vmatmul.mubr.bf16.gmra.mrb[0].mxu0 %v3517
  %v3856 = vpop.f32.mrb[0].mxu0
  %v3857 = vadd.f32 %v3786, %v3856
  %v3858 = vpop.f32.mrb[0].mxu0
  %v3859 = vadd.f32 %v3788, %v3858
  %v3860 = vpop.f32.mrb[0].mxu0
  %v3861 = vpop.f32.mrb[0].mxu0
  %3862 = vdwg.mxu0
  %3863 = vmatprep.subr.bf16.mxu0 %v1979
  %3864 = vmatpush1.bf16.msra.mxu0 %v1978
  %3865 = vmatprep.subr.bf16.mxu0 %v1983
  %3866 = vmatpush1.bf16.msra.mxu0 %v1982
  %3867 = vmatprep.subr.bf16.mxu0 %v1987
  %3868 = vmatpush1.bf16.msra.mxu0 %v1986
  %3869 = vmatprep.subr.bf16.mxu0 %v1991
  %3870 = vmatpush1.bf16.msra.mxu0 %v1990
  %3871 = vmatprep.subr.bf16.mxu0 %v1995
  %3872 = vmatpush1.bf16.msra.mxu0 %v1994
  %3873 = vmatprep.subr.bf16.mxu0 %v1999
  %3874 = vmatpush1.bf16.msra.mxu0 %v1998
  %3875 = vmatprep.subr.bf16.mxu0 %v2003
  %3876 = vmatpush1.bf16.msra.mxu0 %v2002
  %3877 = vmatprep.subr.bf16.mxu0 %v2007
  %3878 = vmatpush1.bf16.msra.mxu0 %v2006
  %3879 = vmatprep.subr.bf16.mxu0 %v2011
  %3880 = vmatpush1.bf16.msra.mxu0 %v2010
  %3881 = vmatprep.subr.bf16.mxu0 %v2015
  %3882 = vmatpush1.bf16.msra.mxu0 %v2014
  %3883 = vmatprep.subr.bf16.mxu0 %v2019
  %3884 = vmatpush1.bf16.msra.mxu0 %v2018
  %3885 = vmatprep.subr.bf16.mxu0 %v2023
  %3886 = vmatpush1.bf16.msra.mxu0 %v2022
  %3887 = vmatprep.subr.bf16.mxu0 %v2027
  %3888 = vmatpush1.bf16.msra.mxu0 %v2026
  %3889 = vmatprep.subr.bf16.mxu0 %v2031
  %3890 = vmatpush1.bf16.msra.mxu0 %v2030
  %3891 = vmatprep.subr.bf16.mxu0 %v2035
  %3892 = vmatpush1.bf16.msra.mxu0 %v2034
  %3893 = vmatprep.subr.bf16.mxu0 %v2039
  %3894 = vmatpush1.bf16.msra.mxu0 %v2038
  %3895 = vmatprep.mubr.bf16.mxu0 %v3484
  %3896 = vmatmul.mubr.bf16.gmra.mrb[0].mxu0 %v3483
  %v3897 = vpop.f32.mrb[0].mxu0
  %v3898 = vadd.f32 %v3827, %v3897
  %v3899 = vpop.f32.mrb[0].mxu0
  %v3900 = vadd.f32 %v3829, %v3899
  %v3901 = vpop.f32.mrb[0].mxu0
  %v3902 = vadd.f32 %v3831, %v3901
  %v3903 = vpop.f32.mrb[0].mxu0
  %v3904 = vadd.f32 %v3833, %v3903
  %3905 = vmatprep.mubr.bf16.mxu0 %v3496
  %3906 = vmatmul.mubr.bf16.gmra.mrb[0].mxu0 %v3495
  %v3907 = vpop.f32.mrb[0].mxu0
  %v3908 = vadd.f32 %v3837, %v3907
  %v3909 = vpop.f32.mrb[0].mxu0
  %v3910 = vadd.f32 %v3839, %v3909
  %v3911 = vpop.f32.mrb[0].mxu0
  %v3912 = vadd.f32 %v3841, %v3911
  %v3913 = vpop.f32.mrb[0].mxu0
  %v3914 = vadd.f32 %v3843, %v3913
  %3915 = vmatprep.mubr.bf16.mxu0 %v3508
  %3916 = vmatmul.mubr.bf16.gmra.mrb[0].mxu0 %v3507
  %v3917 = vpop.f32.mrb[0].mxu0
  %v3918 = vadd.f32 %v3847, %v3917
  %v3919 = vpop.f32.mrb[0].mxu0
  %v3920 = vadd.f32 %v3849, %v3919
  %v3921 = vpop.f32.mrb[0].mxu0
  %v3922 = vadd.f32 %v3851, %v3921
  %v3923 = vpop.f32.mrb[0].mxu0
  %v3924 = vadd.f32 %v3853, %v3923
  %3925 = vmatprep.mubr.bf16.mxu0 %v3520
  %3926 = vmatmul.mubr.bf16.gmra.mrb[0].mxu0 %v3519
  %v3927 = vpop.f32.mrb[0].mxu0
  %v3928 = vadd.f32 %v3857, %v3927
  %v3929 = vpop.f32.mrb[0].mxu0
  %v3930 = vadd.f32 %v3859, %v3929
  %v3931 = vpop.f32.mrb[0].mxu0
  %v3932 = vpop.f32.mrb[0].mxu0
  %3933 = vdwg.mxu0
  %3934 = vmatprep.subr.bf16.mxu0 %v2043
  %3935 = vmatpush1.bf16.msra.mxu0 %v2042
  %3936 = vmatprep.subr.bf16.mxu0 %v2047
  %3937 = vmatpush1.bf16.msra.mxu0 %v2046
  %3938 = vmatprep.subr.bf16.mxu0 %v2051
  %3939 = vmatpush1.bf16.msra.mxu0 %v2050
  %3940 = vmatprep.subr.bf16.mxu0 %v2055
  %3941 = vmatpush1.bf16.msra.mxu0 %v2054
  %3942 = vmatprep.subr.bf16.mxu0 %v2059
  %3943 = vmatpush1.bf16.msra.mxu0 %v2058
  %3944 = vmatprep.subr.bf16.mxu0 %v2063
  %3945 = vmatpush1.bf16.msra.mxu0 %v2062
  %3946 = vmatprep.subr.bf16.mxu0 %v2067
  %3947 = vmatpush1.bf16.msra.mxu0 %v2066
  %3948 = vmatprep.subr.bf16.mxu0 %v2071
  %3949 = vmatpush1.bf16.msra.mxu0 %v2070
  %3950 = vmatprep.subr.bf16.mxu0 %v2075
  %3951 = vmatpush1.bf16.msra.mxu0 %v2074
  %3952 = vmatprep.subr.bf16.mxu0 %v2079
  %3953 = vmatpush1.bf16.msra.mxu0 %v2078
  %3954 = vmatprep.subr.bf16.mxu0 0
  %3955 = vmatpush1.bf16.msra.mxu0 0
  %3956 = vmatprep.subr.bf16.mxu0 0
  %3957 = vmatpush1.bf16.msra.mxu0 0
  %3958 = vmatprep.subr.bf16.mxu0 0
  %3959 = vmatpush1.bf16.msra.mxu0 0
  %3960 = vmatprep.subr.bf16.mxu0 0
  %3961 = vmatpush1.bf16.msra.mxu0 0
  %3962 = vmatprep.subr.bf16.mxu0 0
  %3963 = vmatpush1.bf16.msra.mxu0 0
  %3964 = vmatprep.subr.bf16.mxu0 0
  %3965 = vmatpush1.bf16.msra.mxu0 0
  %3966 = vmatprep.mubr.bf16.mxu0 %v3568
  %3967 = vmatmul.mubr.bf16.gmra.mrb[0].mxu0 %v3485
  %v3968 = vpop.f32.mrb[0].mxu0
  %v3969 = vadd.f32 %v3898, %v3968
  %v3970 = vpop.f32.mrb[0].mxu0
  %v3971 = vadd.f32 %v3900, %v3970
  %v3972 = vpop.f32.mrb[0].mxu0
  %v3973 = vadd.f32 %v3902, %v3972
  %v3974 = vpop.f32.mrb[0].mxu0
  %v3975 = vadd.f32 %v3904, %v3974
  %3976 = vmatprep.mubr.bf16.mxu0 %v3571
  %3977 = vmatmul.mubr.bf16.gmra.mrb[0].mxu0 %v3497
  %v3978 = vpop.f32.mrb[0].mxu0
  %v3979 = vadd.f32 %v3908, %v3978
  %v3980 = vpop.f32.mrb[0].mxu0
  %v3981 = vadd.f32 %v3910, %v3980
  %v3982 = vpop.f32.mrb[0].mxu0
  %v3983 = vadd.f32 %v3912, %v3982
  %v3984 = vpop.f32.mrb[0].mxu0
  %v3985 = vadd.f32 %v3914, %v3984
  %3986 = vmatprep.mubr.bf16.mxu0 %v3574
  %3987 = vmatmul.mubr.bf16.gmra.mrb[0].mxu0 %v3509
  %v3988 = vpop.f32.mrb[0].mxu0
  %v3989 = vadd.f32 %v3918, %v3988
  %v3990 = vpop.f32.mrb[0].mxu0
  %v3991 = vadd.f32 %v3920, %v3990
  %v3992 = vpop.f32.mrb[0].mxu0
  %v3993 = vadd.f32 %v3922, %v3992
  %v3994 = vpop.f32.mrb[0].mxu0
  %v3995 = vadd.f32 %v3924, %v3994
  %3996 = vmatprep.mubr.bf16.mxu0 %v3577
  %3997 = vmatmul.mubr.bf16.gmra.mrb[0].mxu0 %v3521
  %v3998 = vpop.f32.mrb[0].mxu0
  %v3999 = vadd.f32 %v3928, %v3998
  %v4000 = vpop.f32.mrb[0].mxu0
  %v4001 = vadd.f32 %v3930, %v4000
  %v4002 = vpop.f32.mrb[0].mxu0
  %v4003 = vpop.f32.mrb[0].mxu0
  %4004 = vdwg.mxu0
  %4005 = vmatprep.subr.bf16.mxu0 %v1725
  %4006 = vmatpush1.bf16.msra.mxu0 %v1724
  %4007 = vmatprep.subr.bf16.mxu0 %v1729
  %4008 = vmatpush1.bf16.msra.mxu0 %v1728
  %4009 = vmatprep.subr.bf16.mxu0 %v1733
  %4010 = vmatpush1.bf16.msra.mxu0 %v1732
  %4011 = vmatprep.subr.bf16.mxu0 %v1737
  %4012 = vmatpush1.bf16.msra.mxu0 %v1736
  %4013 = vmatprep.subr.bf16.mxu0 %v1741
  %4014 = vmatpush1.bf16.msra.mxu0 %v1740
  %4015 = vmatprep.subr.bf16.mxu0 %v1745
  %4016 = vmatpush1.bf16.msra.mxu0 %v1744
  %4017 = vmatprep.subr.bf16.mxu0 %v1749
  %4018 = vmatpush1.bf16.msra.mxu0 %v1748
  %4019 = vmatprep.subr.bf16.mxu0 %v1753
  %4020 = vmatpush1.bf16.msra.mxu0 %v1752
  %4021 = vmatprep.subr.bf16.mxu0 %v1757
  %4022 = vmatpush1.bf16.msra.mxu0 %v1756
  %4023 = vmatprep.subr.bf16.mxu0 %v1761
  %4024 = vmatpush1.bf16.msra.mxu0 %v1760
  %4025 = vmatprep.subr.bf16.mxu0 %v1765
  %4026 = vmatpush1.bf16.msra.mxu0 %v1764
  %4027 = vmatprep.subr.bf16.mxu0 %v1769
  %4028 = vmatpush1.bf16.msra.mxu0 %v1768
  %4029 = vmatprep.subr.bf16.mxu0 %v1773
  %4030 = vmatpush1.bf16.msra.mxu0 %v1772
  %4031 = vmatprep.subr.bf16.mxu0 %v1777
  %4032 = vmatpush1.bf16.msra.mxu0 %v1776
  %4033 = vmatprep.subr.bf16.mxu0 %v1781
  %4034 = vmatpush1.bf16.msra.mxu0 %v1780
  %4035 = vmatprep.subr.bf16.mxu0 %v1785
  %4036 = vmatpush1.bf16.msra.mxu0 %v1784
  %4037 = vmatprep.mubr.bf16.mxu0 %v3476
  %4038 = vmatmul.mubr.bf16.gmra.mrb[0].mxu0 %v3475
  %v4039 = vpop.f32.mrb[0].mxu0
  %v4040 = vadd.f32 0.0, %v4039
  %v4041 = vpop.f32.mrb[0].mxu0
  %v4042 = vadd.f32 0.0, %v4041
  %v4043 = vpop.f32.mrb[0].mxu0
  %v4044 = vadd.f32 0.0, %v4043
  %v4045 = vpop.f32.mrb[0].mxu0
  %v4046 = vadd.f32 0.0, %v4045
  %4047 = vmatprep.mubr.bf16.mxu0 %v3488
  %4048 = vmatmul.mubr.bf16.gmra.mrb[0].mxu0 %v3487
  %v4049 = vpop.f32.mrb[0].mxu0
  %v4050 = vadd.f32 0.0, %v4049
  %v4051 = vpop.f32.mrb[0].mxu0
  %v4052 = vadd.f32 0.0, %v4051
  %v4053 = vpop.f32.mrb[0].mxu0
  %v4054 = vadd.f32 0.0, %v4053
  %v4055 = vpop.f32.mrb[0].mxu0
  %v4056 = vadd.f32 0.0, %v4055
  %4057 = vmatprep.mubr.bf16.mxu0 %v3500
  %4058 = vmatmul.mubr.bf16.gmra.mrb[0].mxu0 %v3499
  %v4059 = vpop.f32.mrb[0].mxu0
  %v4060 = vadd.f32 0.0, %v4059
  %v4061 = vpop.f32.mrb[0].mxu0
  %v4062 = vadd.f32 0.0, %v4061
  %v4063 = vpop.f32.mrb[0].mxu0
  %v4064 = vadd.f32 0.0, %v4063
  %v4065 = vpop.f32.mrb[0].mxu0
  %v4066 = vadd.f32 0.0, %v4065
  %4067 = vmatprep.mubr.bf16.mxu0 %v3512
  %4068 = vmatmul.mubr.bf16.gmra.mrb[0].mxu0 %v3511
  %v4069 = vpop.f32.mrb[0].mxu0
  %v4070 = vadd.f32 0.0, %v4069
  %v4071 = vpop.f32.mrb[0].mxu0
  %v4072 = vadd.f32 0.0, %v4071
  %v4073 = vpop.f32.mrb[0].mxu0
  %v4074 = vpop.f32.mrb[0].mxu0
  %4075 = vdwg.mxu0
  %4076 = vmatprep.subr.bf16.mxu0 %v1789
  %4077 = vmatpush1.bf16.msra.mxu0 %v1788
  %4078 = vmatprep.subr.bf16.mxu0 %v1793
  %4079 = vmatpush1.bf16.msra.mxu0 %v1792
  %4080 = vmatprep.subr.bf16.mxu0 %v1797
  %4081 = vmatpush1.bf16.msra.mxu0 %v1796
  %4082 = vmatprep.subr.bf16.mxu0 %v1801
  %4083 = vmatpush1.bf16.msra.mxu0 %v1800
  %4084 = vmatprep.subr.bf16.mxu0 %v1805
  %4085 = vmatpush1.bf16.msra.mxu0 %v1804
  %4086 = vmatprep.subr.bf16.mxu0 %v1809
  %4087 = vmatpush1.bf16.msra.mxu0 %v1808
  %4088 = vmatprep.subr.bf16.mxu0 %v1813
  %4089 = vmatpush1.bf16.msra.mxu0 %v1812
  %4090 = vmatprep.subr.bf16.mxu0 %v1817
  %4091 = vmatpush1.bf16.msra.mxu0 %v1816
  %4092 = vmatprep.subr.bf16.mxu0 %v1821
  %4093 = vmatpush1.bf16.msra.mxu0 %v1820
  %4094 = vmatprep.subr.bf16.mxu0 %v1825
  %4095 = vmatpush1.bf16.msra.mxu0 %v1824
  %4096 = vmatprep.subr.bf16.mxu0 %v1829
  %4097 = vmatpush1.bf16.msra.mxu0 %v1828
  %4098 = vmatprep.subr.bf16.mxu0 %v1833
  %4099 = vmatpush1.bf16.msra.mxu0 %v1832
  %4100 = vmatprep.subr.bf16.mxu0 %v1837
  %4101 = vmatpush1.bf16.msra.mxu0 %v1836
  %4102 = vmatprep.subr.bf16.mxu0 %v1841
  %4103 = vmatpush1.bf16.msra.mxu0 %v1840
  %4104 = vmatprep.subr.bf16.mxu0 %v1845
  %4105 = vmatpush1.bf16.msra.mxu0 %v1844
  %4106 = vmatprep.subr.bf16.mxu0 %v1849
  %4107 = vmatpush1.bf16.msra.mxu0 %v1848
  %4108 = vmatprep.mubr.bf16.mxu0 %v3478
  %4109 = vmatmul.mubr.bf16.gmra.mrb[0].mxu0 %v3477
  %v4110 = vpop.f32.mrb[0].mxu0
  %v4111 = vadd.f32 %v4040, %v4110
  %v4112 = vpop.f32.mrb[0].mxu0
  %v4113 = vadd.f32 %v4042, %v4112
  %v4114 = vpop.f32.mrb[0].mxu0
  %v4115 = vadd.f32 %v4044, %v4114
  %v4116 = vpop.f32.mrb[0].mxu0
  %v4117 = vadd.f32 %v4046, %v4116
  %4118 = vmatprep.mubr.bf16.mxu0 %v3490
  %4119 = vmatmul.mubr.bf16.gmra.mrb[0].mxu0 %v3489
  %v4120 = vpop.f32.mrb[0].mxu0
  %v4121 = vadd.f32 %v4050, %v4120
  %v4122 = vpop.f32.mrb[0].mxu0
  %v4123 = vadd.f32 %v4052, %v4122
  %v4124 = vpop.f32.mrb[0].mxu0
  %v4125 = vadd.f32 %v4054, %v4124
  %v4126 = vpop.f32.mrb[0].mxu0
  %v4127 = vadd.f32 %v4056, %v4126
  %4128 = vmatprep.mubr.bf16.mxu0 %v3502
  %4129 = vmatmul.mubr.bf16.gmra.mrb[0].mxu0 %v3501
  %v4130 = vpop.f32.mrb[0].mxu0
  %v4131 = vadd.f32 %v4060, %v4130
  %v4132 = vpop.f32.mrb[0].mxu0
  %v4133 = vadd.f32 %v4062, %v4132
  %v4134 = vpop.f32.mrb[0].mxu0
  %v4135 = vadd.f32 %v4064, %v4134
  %v4136 = vpop.f32.mrb[0].mxu0
  %v4137 = vadd.f32 %v4066, %v4136
  %4138 = vmatprep.mubr.bf16.mxu0 %v3514
  %4139 = vmatmul.mubr.bf16.gmra.mrb[0].mxu0 %v3513
  %v4140 = vpop.f32.mrb[0].mxu0
  %v4141 = vadd.f32 %v4070, %v4140
  %v4142 = vpop.f32.mrb[0].mxu0
  %v4143 = vadd.f32 %v4072, %v4142
  %v4144 = vpop.f32.mrb[0].mxu0
  %v4145 = vpop.f32.mrb[0].mxu0
  %4146 = vdwg.mxu0
  %4147 = vmatprep.subr.bf16.mxu0 %v1853
  %4148 = vmatpush1.bf16.msra.mxu0 %v1852
  %4149 = vmatprep.subr.bf16.mxu0 %v1857
  %4150 = vmatpush1.bf16.msra.mxu0 %v1856
  %4151 = vmatprep.subr.bf16.mxu0 %v1861
  %4152 = vmatpush1.bf16.msra.mxu0 %v1860
  %4153 = vmatprep.subr.bf16.mxu0 %v1865
  %4154 = vmatpush1.bf16.msra.mxu0 %v1864
  %4155 = vmatprep.subr.bf16.mxu0 %v1869
  %4156 = vmatpush1.bf16.msra.mxu0 %v1868
  %4157 = vmatprep.subr.bf16.mxu0 %v1873
  %4158 = vmatpush1.bf16.msra.mxu0 %v1872
  %4159 = vmatprep.subr.bf16.mxu0 %v1877
  %4160 = vmatpush1.bf16.msra.mxu0 %v1876
  %4161 = vmatprep.subr.bf16.mxu0 %v1881
  %4162 = vmatpush1.bf16.msra.mxu0 %v1880
  %4163 = vmatprep.subr.bf16.mxu0 %v1885
  %4164 = vmatpush1.bf16.msra.mxu0 %v1884
  %4165 = vmatprep.subr.bf16.mxu0 %v1889
  %4166 = vmatpush1.bf16.msra.mxu0 %v1888
  %4167 = vmatprep.subr.bf16.mxu0 %v1893
  %4168 = vmatpush1.bf16.msra.mxu0 %v1892
  %4169 = vmatprep.subr.bf16.mxu0 %v1897
  %4170 = vmatpush1.bf16.msra.mxu0 %v1896
  %4171 = vmatprep.subr.bf16.mxu0 %v1901
  %4172 = vmatpush1.bf16.msra.mxu0 %v1900
  %4173 = vmatprep.subr.bf16.mxu0 %v1905
  %4174 = vmatpush1.bf16.msra.mxu0 %v1904
  %4175 = vmatprep.subr.bf16.mxu0 %v1909
  %4176 = vmatpush1.bf16.msra.mxu0 %v1908
  %4177 = vmatprep.subr.bf16.mxu0 %v1913
  %4178 = vmatpush1.bf16.msra.mxu0 %v1912
  %4179 = vmatprep.mubr.bf16.mxu0 %v3480
  %4180 = vmatmul.mubr.bf16.gmra.mrb[0].mxu0 %v3479
  %v4181 = vpop.f32.mrb[0].mxu0
  %v4182 = vadd.f32 %v4111, %v4181
  %v4183 = vpop.f32.mrb[0].mxu0
  %v4184 = vadd.f32 %v4113, %v4183
  %v4185 = vpop.f32.mrb[0].mxu0
  %v4186 = vadd.f32 %v4115, %v4185
  %v4187 = vpop.f32.mrb[0].mxu0
  %v4188 = vadd.f32 %v4117, %v4187
  %4189 = vmatprep.mubr.bf16.mxu0 %v3492
  %4190 = vmatmul.mubr.bf16.gmra.mrb[0].mxu0 %v3491
  %v4191 = vpop.f32.mrb[0].mxu0
  %v4192 = vadd.f32 %v4121, %v4191
  %v4193 = vpop.f32.mrb[0].mxu0
  %v4194 = vadd.f32 %v4123, %v4193
  %v4195 = vpop.f32.mrb[0].mxu0
  %v4196 = vadd.f32 %v4125, %v4195
  %v4197 = vpop.f32.mrb[0].mxu0
  %v4198 = vadd.f32 %v4127, %v4197
  %4199 = vmatprep.mubr.bf16.mxu0 %v3504
  %4200 = vmatmul.mubr.bf16.gmra.mrb[0].mxu0 %v3503
  %v4201 = vpop.f32.mrb[0].mxu0
  %v4202 = vadd.f32 %v4131, %v4201
  %v4203 = vpop.f32.mrb[0].mxu0
  %v4204 = vadd.f32 %v4133, %v4203
  %v4205 = vpop.f32.mrb[0].mxu0
  %v4206 = vadd.f32 %v4135, %v4205
  %v4207 = vpop.f32.mrb[0].mxu0
  %v4208 = vadd.f32 %v4137, %v4207
  %4209 = vmatprep.mubr.bf16.mxu0 %v3516
  %4210 = vmatmul.mubr.bf16.gmra.mrb[0].mxu0 %v3515
  %v4211 = vpop.f32.mrb[0].mxu0
  %v4212 = vadd.f32 %v4141, %v4211
  %v4213 = vpop.f32.mrb[0].mxu0
  %v4214 = vadd.f32 %v4143, %v4213
  %v4215 = vpop.f32.mrb[0].mxu0
  %v4216 = vpop.f32.mrb[0].mxu0
  %4217 = vdwg.mxu0
  %4218 = vmatprep.subr.bf16.mxu0 %v1917
  %4219 = vmatpush1.bf16.msra.mxu0 %v1916
  %4220 = vmatprep.subr.bf16.mxu0 %v1921
  %4221 = vmatpush1.bf16.msra.mxu0 %v1920
  %4222 = vmatprep.subr.bf16.mxu0 %v1925
  %4223 = vmatpush1.bf16.msra.mxu0 %v1924
  %4224 = vmatprep.subr.bf16.mxu0 %v1929
  %4225 = vmatpush1.bf16.msra.mxu0 %v1928
  %4226 = vmatprep.subr.bf16.mxu0 %v1933
  %4227 = vmatpush1.bf16.msra.mxu0 %v1932
  %4228 = vmatprep.subr.bf16.mxu0 %v1937
  %4229 = vmatpush1.bf16.msra.mxu0 %v1936
  %4230 = vmatprep.subr.bf16.mxu0 %v1941
  %4231 = vmatpush1.bf16.msra.mxu0 %v1940
  %4232 = vmatprep.subr.bf16.mxu0 %v1945
  %4233 = vmatpush1.bf16.msra.mxu0 %v1944
  %4234 = vmatprep.subr.bf16.mxu0 %v1949
  %4235 = vmatpush1.bf16.msra.mxu0 %v1948
  %4236 = vmatprep.subr.bf16.mxu0 %v1953
  %4237 = vmatpush1.bf16.msra.mxu0 %v1952
  %4238 = vmatprep.subr.bf16.mxu0 %v1957
  %4239 = vmatpush1.bf16.msra.mxu0 %v1956
  %4240 = vmatprep.subr.bf16.mxu0 %v1961
  %4241 = vmatpush1.bf16.msra.mxu0 %v1960
  %4242 = vmatprep.subr.bf16.mxu0 %v1965
  %4243 = vmatpush1.bf16.msra.mxu0 %v1964
  %4244 = vmatprep.subr.bf16.mxu0 %v1969
  %4245 = vmatpush1.bf16.msra.mxu0 %v1968
  %4246 = vmatprep.subr.bf16.mxu0 %v1973
  %4247 = vmatpush1.bf16.msra.mxu0 %v1972
  %4248 = vmatprep.subr.bf16.mxu0 %v1977
  %4249 = vmatpush1.bf16.msra.mxu0 %v1976
  %4250 = vmatprep.mubr.bf16.mxu0 %v3482
  %4251 = vmatmul.mubr.bf16.gmra.mrb[0].mxu0 %v3481
  %v4252 = vpop.f32.mrb[0].mxu0
  %v4253 = vadd.f32 %v4182, %v4252
  %v4254 = vpop.f32.mrb[0].mxu0
  %v4255 = vadd.f32 %v4184, %v4254
  %v4256 = vpop.f32.mrb[0].mxu0
  %v4257 = vadd.f32 %v4186, %v4256
  %v4258 = vpop.f32.mrb[0].mxu0
  %v4259 = vadd.f32 %v4188, %v4258
  %4260 = vmatprep.mubr.bf16.mxu0 %v3494
  %4261 = vmatmul.mubr.bf16.gmra.mrb[0].mxu0 %v3493
  %v4262 = vpop.f32.mrb[0].mxu0
  %v4263 = vadd.f32 %v4192, %v4262
  %v4264 = vpop.f32.mrb[0].mxu0
  %v4265 = vadd.f32 %v4194, %v4264
  %v4266 = vpop.f32.mrb[0].mxu0
  %v4267 = vadd.f32 %v4196, %v4266
  %v4268 = vpop.f32.mrb[0].mxu0
  %v4269 = vadd.f32 %v4198, %v4268
  %4270 = vmatprep.mubr.bf16.mxu0 %v3506
  %4271 = vmatmul.mubr.bf16.gmra.mrb[0].mxu0 %v3505
  %v4272 = vpop.f32.mrb[0].mxu0
  %v4273 = vadd.f32 %v4202, %v4272
  %v4274 = vpop.f32.mrb[0].mxu0
  %v4275 = vadd.f32 %v4204, %v4274
  %v4276 = vpop.f32.mrb[0].mxu0
  %v4277 = vadd.f32 %v4206, %v4276
  %v4278 = vpop.f32.mrb[0].mxu0
  %v4279 = vadd.f32 %v4208, %v4278
  %4280 = vmatprep.mubr.bf16.mxu0 %v3518
  %4281 = vmatmul.mubr.bf16.gmra.mrb[0].mxu0 %v3517
  %v4282 = vpop.f32.mrb[0].mxu0
  %v4283 = vadd.f32 %v4212, %v4282
  %v4284 = vpop.f32.mrb[0].mxu0
  %v4285 = vadd.f32 %v4214, %v4284
  %v4286 = vpop.f32.mrb[0].mxu0
  %v4287 = vpop.f32.mrb[0].mxu0
  %4288 = vdwg.mxu0
  %4289 = vmatprep.subr.bf16.mxu0 %v1981
  %4290 = vmatpush1.bf16.msra.mxu0 %v1980
  %4291 = vmatprep.subr.bf16.mxu0 %v1985
  %4292 = vmatpush1.bf16.msra.mxu0 %v1984
  %4293 = vmatprep.subr.bf16.mxu0 %v1989
  %4294 = vmatpush1.bf16.msra.mxu0 %v1988
  %4295 = vmatprep.subr.bf16.mxu0 %v1993
  %4296 = vmatpush1.bf16.msra.mxu0 %v1992
  %4297 = vmatprep.subr.bf16.mxu0 %v1997
  %4298 = vmatpush1.bf16.msra.mxu0 %v1996
  %4299 = vmatprep.subr.bf16.mxu0 %v2001
  %4300 = vmatpush1.bf16.msra.mxu0 %v2000
  %4301 = vmatprep.subr.bf16.mxu0 %v2005
  %4302 = vmatpush1.bf16.msra.mxu0 %v2004
  %4303 = vmatprep.subr.bf16.mxu0 %v2009
  %4304 = vmatpush1.bf16.msra.mxu0 %v2008
  %4305 = vmatprep.subr.bf16.mxu0 %v2013
  %4306 = vmatpush1.bf16.msra.mxu0 %v2012
  %4307 = vmatprep.subr.bf16.mxu0 %v2017
  %4308 = vmatpush1.bf16.msra.mxu0 %v2016
  %4309 = vmatprep.subr.bf16.mxu0 %v2021
  %4310 = vmatpush1.bf16.msra.mxu0 %v2020
  %4311 = vmatprep.subr.bf16.mxu0 %v2025
  %4312 = vmatpush1.bf16.msra.mxu0 %v2024
  %4313 = vmatprep.subr.bf16.mxu0 %v2029
  %4314 = vmatpush1.bf16.msra.mxu0 %v2028
  %4315 = vmatprep.subr.bf16.mxu0 %v2033
  %4316 = vmatpush1.bf16.msra.mxu0 %v2032
  %4317 = vmatprep.subr.bf16.mxu0 %v2037
  %4318 = vmatpush1.bf16.msra.mxu0 %v2036
  %4319 = vmatprep.subr.bf16.mxu0 %v2041
  %4320 = vmatpush1.bf16.msra.mxu0 %v2040
  %4321 = vmatprep.mubr.bf16.mxu0 %v3484
  %4322 = vmatmul.mubr.bf16.gmra.mrb[0].mxu0 %v3483
  %v4323 = vpop.f32.mrb[0].mxu0
  %v4324 = vadd.f32 %v4253, %v4323
  %v4325 = vpop.f32.mrb[0].mxu0
  %v4326 = vadd.f32 %v4255, %v4325
  %v4327 = vpop.f32.mrb[0].mxu0
  %v4328 = vadd.f32 %v4257, %v4327
  %v4329 = vpop.f32.mrb[0].mxu0
  %v4330 = vadd.f32 %v4259, %v4329
  %4331 = vmatprep.mubr.bf16.mxu0 %v3496
  %4332 = vmatmul.mubr.bf16.gmra.mrb[0].mxu0 %v3495
  %v4333 = vpop.f32.mrb[0].mxu0
  %v4334 = vadd.f32 %v4263, %v4333
  %v4335 = vpop.f32.mrb[0].mxu0
  %v4336 = vadd.f32 %v4265, %v4335
  %v4337 = vpop.f32.mrb[0].mxu0
  %v4338 = vadd.f32 %v4267, %v4337
  %v4339 = vpop.f32.mrb[0].mxu0
  %v4340 = vadd.f32 %v4269, %v4339
  %4341 = vmatprep.mubr.bf16.mxu0 %v3508
  %4342 = vmatmul.mubr.bf16.gmra.mrb[0].mxu0 %v3507
  %v4343 = vpop.f32.mrb[0].mxu0
  %v4344 = vadd.f32 %v4273, %v4343
  %v4345 = vpop.f32.mrb[0].mxu0
  %v4346 = vadd.f32 %v4275, %v4345
  %v4347 = vpop.f32.mrb[0].mxu0
  %v4348 = vadd.f32 %v4277, %v4347
  %v4349 = vpop.f32.mrb[0].mxu0
  %v4350 = vadd.f32 %v4279, %v4349
  %4351 = vmatprep.mubr.bf16.mxu0 %v3520
  %4352 = vmatmul.mubr.bf16.gmra.mrb[0].mxu0 %v3519
  %v4353 = vpop.f32.mrb[0].mxu0
  %v4354 = vadd.f32 %v4283, %v4353
  %v4355 = vpop.f32.mrb[0].mxu0
  %v4356 = vadd.f32 %v4285, %v4355
  %v4357 = vpop.f32.mrb[0].mxu0
  %v4358 = vpop.f32.mrb[0].mxu0
  %4359 = vdwg.mxu0
  %4360 = vmatprep.subr.bf16.mxu0 %v2045
  %4361 = vmatpush1.bf16.msra.mxu0 %v2044
  %4362 = vmatprep.subr.bf16.mxu0 %v2049
  %4363 = vmatpush1.bf16.msra.mxu0 %v2048
  %4364 = vmatprep.subr.bf16.mxu0 %v2053
  %4365 = vmatpush1.bf16.msra.mxu0 %v2052
  %4366 = vmatprep.subr.bf16.mxu0 %v2057
  %4367 = vmatpush1.bf16.msra.mxu0 %v2056
  %4368 = vmatprep.subr.bf16.mxu0 %v2061
  %4369 = vmatpush1.bf16.msra.mxu0 %v2060
  %4370 = vmatprep.subr.bf16.mxu0 %v2065
  %4371 = vmatpush1.bf16.msra.mxu0 %v2064
  %4372 = vmatprep.subr.bf16.mxu0 %v2069
  %4373 = vmatpush1.bf16.msra.mxu0 %v2068
  %4374 = vmatprep.subr.bf16.mxu0 %v2073
  %4375 = vmatpush1.bf16.msra.mxu0 %v2072
  %4376 = vmatprep.subr.bf16.mxu0 %v2077
  %4377 = vmatpush1.bf16.msra.mxu0 %v2076
  %4378 = vmatprep.subr.bf16.mxu0 %v2081
  %4379 = vmatpush1.bf16.msra.mxu0 %v2080
  %4380 = vmatprep.subr.bf16.mxu0 0
  %4381 = vmatpush1.bf16.msra.mxu0 0
  %4382 = vmatprep.subr.bf16.mxu0 0
  %4383 = vmatpush1.bf16.msra.mxu0 0
  %4384 = vmatprep.subr.bf16.mxu0 0
  %4385 = vmatpush1.bf16.msra.mxu0 0
  %4386 = vmatprep.subr.bf16.mxu0 0
  %4387 = vmatpush1.bf16.msra.mxu0 0
  %4388 = vmatprep.subr.bf16.mxu0 0
  %4389 = vmatpush1.bf16.msra.mxu0 0
  %4390 = vmatprep.subr.bf16.mxu0 0
  %4391 = vmatpush1.bf16.msra.mxu0 0
  %4392 = vmatprep.mubr.bf16.mxu0 %v3568
  %4393 = vmatmul.mubr.bf16.gmra.mrb[0].mxu0 %v3485
  %v4394 = vpop.f32.mrb[0].mxu0
  %v4395 = vadd.f32 %v4324, %v4394
  %v4396 = vpop.f32.mrb[0].mxu0
  %v4397 = vadd.f32 %v4326, %v4396
  %v4398 = vpop.f32.mrb[0].mxu0
  %v4399 = vadd.f32 %v4328, %v4398
  %v4400 = vpop.f32.mrb[0].mxu0
  %v4401 = vadd.f32 %v4330, %v4400
  %4402 = vmatprep.mubr.bf16.mxu0 %v3571
  %4403 = vmatmul.mubr.bf16.gmra.mrb[0].mxu0 %v3497
  %v4404 = vpop.f32.mrb[0].mxu0
  %v4405 = vadd.f32 %v4334, %v4404
  %v4406 = vpop.f32.mrb[0].mxu0
  %v4407 = vadd.f32 %v4336, %v4406
  %v4408 = vpop.f32.mrb[0].mxu0
  %v4409 = vadd.f32 %v4338, %v4408
  %v4410 = vpop.f32.mrb[0].mxu0
  %v4411 = vadd.f32 %v4340, %v4410
  %4412 = vmatprep.mubr.bf16.mxu0 %v3574
  %4413 = vmatmul.mubr.bf16.gmra.mrb[0].mxu0 %v3509
  %v4414 = vpop.f32.mrb[0].mxu0
  %v4415 = vadd.f32 %v4344, %v4414
  %v4416 = vpop.f32.mrb[0].mxu0
  %v4417 = vadd.f32 %v4346, %v4416
  %v4418 = vpop.f32.mrb[0].mxu0
  %v4419 = vadd.f32 %v4348, %v4418
  %v4420 = vpop.f32.mrb[0].mxu0
  %v4421 = vadd.f32 %v4350, %v4420
  %4422 = vmatprep.mubr.bf16.mxu0 %v3577
  %4423 = vmatmul.mubr.bf16.gmra.mrb[0].mxu0 %v3521
  %v4424 = vpop.f32.mrb[0].mxu0
  %v4425 = vadd.f32 %v4354, %v4424
  %v4426 = vpop.f32.mrb[0].mxu0
  %v4427 = vadd.f32 %v4356, %v4426
  %v4428 = vpop.f32.mrb[0].mxu0
  %v4429 = vpop.f32.mrb[0].mxu0
  %4430 = vdwg.mxu0
  %4431 = vst [vmem:[%s4] sm:$0xff] %v2845
  %4432 = vst [vmem:[%s4 + $0x8] sm:$0xff] %v2847
  %4433 = vst [vmem:[%s4 + $0x10] sm:$0xff] %v3271
  %4434 = vst [vmem:[%s4 + $0x18] sm:$0xff] %v3273
  %4435 = vst [vmem:[%s4 + $0x20] sm:$0xff] %v2849
  %4436 = vst [vmem:[%s4 + $0x28] sm:$0xff] %v2851
  %4437 = vst [vmem:[%s4 + $0x30] sm:$0xff] %v3275
  %4438 = vst [vmem:[%s4 + $0x38] sm:$0xff] %v3277
  %4439 = vst [vmem:[%s4 + $0x40] sm:$0xff] %v2855
  %4440 = vst [vmem:[%s4 + $0x48] sm:$0xff] %v2857
  %4441 = vst [vmem:[%s4 + $0x50] sm:$0xff] %v3281
  %4442 = vst [vmem:[%s4 + $0x58] sm:$0xff] %v3283
  %4443 = vst [vmem:[%s4 + $0x60] sm:$0xff] %v2859
  %4444 = vst [vmem:[%s4 + $0x68] sm:$0xff] %v2861
  %4445 = vst [vmem:[%s4 + $0x70] sm:$0xff] %v3285
  %4446 = vst [vmem:[%s4 + $0x78] sm:$0xff] %v3287
  %4447 = vst [vmem:[%s4 + $0x80] sm:$0xff] %v2865
  %4448 = vst [vmem:[%s4 + $0x88] sm:$0xff] %v2867
  %4449 = vst [vmem:[%s4 + $0x90] sm:$0xff] %v3291
  %4450 = vst [vmem:[%s4 + $0x98] sm:$0xff] %v3293
  %4451 = vst [vmem:[%s4 + $0xa0] sm:$0xff] %v2869
  %4452 = vst [vmem:[%s4 + $0xa8] sm:$0xff] %v2871
  %4453 = vst [vmem:[%s4 + $0xb0] sm:$0xff] %v3295
  %4454 = vst [vmem:[%s4 + $0xb8] sm:$0xff] %v3297
  %4455 = vst [vmem:[%s4 + $0xc0] sm:$0xff] %v2875
  %4456 = vst [vmem:[%s4 + $0xc8] sm:$0xff] %v2877
  %4457 = vst [vmem:[%s4 + $0xd0] sm:$0xff] %v3301
  %4458 = vst [vmem:[%s4 + $0xd8] sm:$0xff] %v3303
  %4459 = vst [vmem:[%s5] sm:$0xff] %v3969
  %4460 = vst [vmem:[%s5 + $0x8] sm:$0xff] %v3971
  %4461 = vst [vmem:[%s5 + $0x10] sm:$0xff] %v4395
  %4462 = vst [vmem:[%s5 + $0x18] sm:$0xff] %v4397
  %4463 = vst [vmem:[%s5 + $0x20] sm:$0xff] %v3973
  %4464 = vst [vmem:[%s5 + $0x28] sm:$0xff] %v3975
  %4465 = vst [vmem:[%s5 + $0x30] sm:$0xff] %v4399
  %4466 = vst [vmem:[%s5 + $0x38] sm:$0xff] %v4401
  %4467 = vst [vmem:[%s5 + $0x40] sm:$0xff] %v3979
  %4468 = vst [vmem:[%s5 + $0x48] sm:$0xff] %v3981
  %4469 = vst [vmem:[%s5 + $0x50] sm:$0xff] %v4405
  %4470 = vst [vmem:[%s5 + $0x58] sm:$0xff] %v4407
  %4471 = vst [vmem:[%s5 + $0x60] sm:$0xff] %v3983
  %4472 = vst [vmem:[%s5 + $0x68] sm:$0xff] %v3985
  %4473 = vst [vmem:[%s5 + $0x70] sm:$0xff] %v4409
  %4474 = vst [vmem:[%s5 + $0x78] sm:$0xff] %v4411
  %4475 = vst [vmem:[%s5 + $0x80] sm:$0xff] %v3989
  %4476 = vst [vmem:[%s5 + $0x88] sm:$0xff] %v3991
  %4477 = vst [vmem:[%s5 + $0x90] sm:$0xff] %v4415
  %4478 = vst [vmem:[%s5 + $0x98] sm:$0xff] %v4417
  %4479 = vst [vmem:[%s5 + $0xa0] sm:$0xff] %v3993
  %4480 = vst [vmem:[%s5 + $0xa8] sm:$0xff] %v3995
  %4481 = vst [vmem:[%s5 + $0xb0] sm:$0xff] %v4419
  %4482 = vst [vmem:[%s5 + $0xb8] sm:$0xff] %v4421
  %4483 = vst [vmem:[%s5 + $0xc0] sm:$0xff] %v3999
  %4484 = vst [vmem:[%s5 + $0xc8] sm:$0xff] %v4001
  %4485 = vst [vmem:[%s5 + $0xd0] sm:$0xff] %v4425
  %4486 = vst [vmem:[%s5 + $0xd8] sm:$0xff] %v4427
  %v4487 = vadd.f32 %v2845, %v2849
  %v4488 = vadd.f32 %v4487, %v2855
  %v4489 = vadd.f32 %v4488, %v2859
  %v4490 = vadd.f32 %v4489, %v2865
  %v4491 = vadd.f32 %v4490, %v2869
  %v4492 = vadd.f32 %v4491, %v2875
  %v4493 = vrot.slane %v4492, 4
  %v4494 = vadd.f32 %v4492, %v4493
  %v4495 = vrot.slane %v4494, 2
  %v4496 = vadd.f32 %v4494, %v4495
  %v4497 = vrot.slane %v4496, 1
  %v4498 = vadd.f32 %v4496, %v4497
  %v4499 = vadd.f32 %v2847, %v2851
  %v4500 = vadd.f32 %v4499, %v2857
  %v4501 = vadd.f32 %v4500, %v2861
  %v4502 = vadd.f32 %v4501, %v2867
  %v4503 = vadd.f32 %v4502, %v2871
  %v4504 = vadd.f32 %v4503, %v2877
  %v4505 = vrot.slane %v4504, 4
  %v4506 = vadd.f32 %v4504, %v4505
  %v4507 = vrot.slane %v4506, 2
  %v4508 = vadd.f32 %v4506, %v4507
  %v4509 = vrot.slane %v4508, 1
  %v4510 = vadd.f32 %v4508, %v4509
  %v4511 = vadd.f32 %v3271, %v3275
  %v4512 = vadd.f32 %v4511, %v3281
  %v4513 = vadd.f32 %v4512, %v3285
  %v4514 = vadd.f32 %v4513, %v3291
  %v4515 = vadd.f32 %v4514, %v3295
  %v4516 = vadd.f32 %v4515, %v3301
  %v4517 = vrot.slane %v4516, 4
  %v4518 = vadd.f32 %v4516, %v4517
  %v4519 = vrot.slane %v4518, 2
  %v4520 = vadd.f32 %v4518, %v4519
  %v4521 = vrot.slane %v4520, 1
  %v4522 = vadd.f32 %v4520, %v4521
  %v4523 = vadd.f32 %v3273, %v3277
  %v4524 = vadd.f32 %v4523, %v3283
  %v4525 = vadd.f32 %v4524, %v3287
  %v4526 = vadd.f32 %v4525, %v3293
  %v4527 = vadd.f32 %v4526, %v3297
  %v4528 = vadd.f32 %v4527, %v3303
  %v4529 = vrot.slane %v4528, 4
  %v4530 = vadd.f32 %v4528, %v4529
  %v4531 = vrot.slane %v4530, 2
  %v4532 = vadd.f32 %v4530, %v4531
  %v4533 = vrot.slane %v4532, 1
  %v4534 = vadd.f32 %v4532, %v4533
  %v4535 = vadd.f32 %v3969, %v3973
  %v4536 = vadd.f32 %v4535, %v3979
  %v4537 = vadd.f32 %v4536, %v3983
  %v4538 = vadd.f32 %v4537, %v3989
  %v4539 = vadd.f32 %v4538, %v3993
  %v4540 = vadd.f32 %v4539, %v3999
  %v4541 = vrot.slane %v4540, 4
  %v4542 = vadd.f32 %v4540, %v4541
  %v4543 = vrot.slane %v4542, 2
  %v4544 = vadd.f32 %v4542, %v4543
  %v4545 = vrot.slane %v4544, 1
  %v4546 = vadd.f32 %v4544, %v4545
  %v4547 = vadd.f32 %v3971, %v3975
  %v4548 = vadd.f32 %v4547, %v3981
  %v4549 = vadd.f32 %v4548, %v3985
  %v4550 = vadd.f32 %v4549, %v3991
  %v4551 = vadd.f32 %v4550, %v3995
  %v4552 = vadd.f32 %v4551, %v4001
  %v4553 = vrot.slane %v4552, 4
  %v4554 = vadd.f32 %v4552, %v4553
  %v4555 = vrot.slane %v4554, 2
  %v4556 = vadd.f32 %v4554, %v4555
  %v4557 = vrot.slane %v4556, 1
  %v4558 = vadd.f32 %v4556, %v4557
  %v4559 = vadd.f32 %v4395, %v4399
  %v4560 = vadd.f32 %v4559, %v4405
  %v4561 = vadd.f32 %v4560, %v4409
  %v4562 = vadd.f32 %v4561, %v4415
  %v4563 = vadd.f32 %v4562, %v4419
  %v4564 = vadd.f32 %v4563, %v4425
  %v4565 = vrot.slane %v4564, 4
  %v4566 = vadd.f32 %v4564, %v4565
  %v4567 = vrot.slane %v4566, 2
  %v4568 = vadd.f32 %v4566, %v4567
  %v4569 = vrot.slane %v4568, 1
  %v4570 = vadd.f32 %v4568, %v4569
  %v4571 = vadd.f32 %v4397, %v4401
  %v4572 = vadd.f32 %v4571, %v4407
  %v4573 = vadd.f32 %v4572, %v4411
  %v4574 = vadd.f32 %v4573, %v4417
  %v4575 = vadd.f32 %v4574, %v4421
  %v4576 = vadd.f32 %v4575, %v4427
  %v4577 = vrot.slane %v4576, 4
  %v4578 = vadd.f32 %v4576, %v4577
  %v4579 = vrot.slane %v4578, 2
  %v4580 = vadd.f32 %v4578, %v4579
  %v4581 = vrot.slane %v4580, 1
  %v4582 = vadd.f32 %v4580, %v4581
  %v4583 = vadd.f32 %v4498, %v4546
  %v4584 = vadd.f32 %v4510, %v4558
  %v4585 = vadd.f32 %v4522, %v4570
  %v4586 = vadd.f32 %v4534, %v4582
  %v4587 = vmul.f32 %v2845, %v2845
  %v4588 = vmul.f32 %v2847, %v2847
  %v4589 = vmul.f32 %v3271, %v3271
  %v4590 = vmul.f32 %v3273, %v3273
  %v4591 = vmul.f32 %v2849, %v2849
  %v4592 = vmul.f32 %v2851, %v2851
  %v4593 = vmul.f32 %v3275, %v3275
  %v4594 = vmul.f32 %v3277, %v3277
  %v4595 = vmul.f32 %v2855, %v2855
  %v4596 = vmul.f32 %v2857, %v2857
  %v4597 = vmul.f32 %v3281, %v3281
  %v4598 = vmul.f32 %v3283, %v3283
  %v4599 = vmul.f32 %v2859, %v2859
  %v4600 = vmul.f32 %v2861, %v2861
  %v4601 = vmul.f32 %v3285, %v3285
  %v4602 = vmul.f32 %v3287, %v3287
  %v4603 = vmul.f32 %v2865, %v2865
  %v4604 = vmul.f32 %v2867, %v2867
  %v4605 = vmul.f32 %v3291, %v3291
  %v4606 = vmul.f32 %v3293, %v3293
  %v4607 = vmul.f32 %v2869, %v2869
  %v4608 = vmul.f32 %v2871, %v2871
  %v4609 = vmul.f32 %v3295, %v3295
  %v4610 = vmul.f32 %v3297, %v3297
  %v4611 = vmul.f32 %v2875, %v2875
  %v4612 = vmul.f32 %v2877, %v2877
  %v4613 = vmul.f32 %v3301, %v3301
  %v4614 = vmul.f32 %v3303, %v3303
  %v4615 = vadd.f32 %v4587, %v4591
  %v4616 = vadd.f32 %v4615, %v4595
  %v4617 = vadd.f32 %v4616, %v4599
  %v4618 = vadd.f32 %v4617, %v4603
  %v4619 = vadd.f32 %v4618, %v4607
  %v4620 = vadd.f32 %v4619, %v4611
  %v4621 = vrot.slane %v4620, 4
  %v4622 = vadd.f32 %v4620, %v4621
  %v4623 = vrot.slane %v4622, 2
  %v4624 = vadd.f32 %v4622, %v4623
  %v4625 = vrot.slane %v4624, 1
  %v4626 = vadd.f32 %v4624, %v4625
  %v4627 = vadd.f32 %v4588, %v4592
  %v4628 = vadd.f32 %v4627, %v4596
  %v4629 = vadd.f32 %v4628, %v4600
  %v4630 = vadd.f32 %v4629, %v4604
  %v4631 = vadd.f32 %v4630, %v4608
  %v4632 = vadd.f32 %v4631, %v4612
  %v4633 = vrot.slane %v4632, 4
  %v4634 = vadd.f32 %v4632, %v4633
  %v4635 = vrot.slane %v4634, 2
  %v4636 = vadd.f32 %v4634, %v4635
  %v4637 = vrot.slane %v4636, 1
  %v4638 = vadd.f32 %v4636, %v4637
  %v4639 = vadd.f32 %v4589, %v4593
  %v4640 = vadd.f32 %v4639, %v4597
  %v4641 = vadd.f32 %v4640, %v4601
  %v4642 = vadd.f32 %v4641, %v4605
  %v4643 = vadd.f32 %v4642, %v4609
  %v4644 = vadd.f32 %v4643, %v4613
  %v4645 = vrot.slane %v4644, 4
  %v4646 = vadd.f32 %v4644, %v4645
  %v4647 = vrot.slane %v4646, 2
  %v4648 = vadd.f32 %v4646, %v4647
  %v4649 = vrot.slane %v4648, 1
  %v4650 = vadd.f32 %v4648, %v4649
  %v4651 = vadd.f32 %v4590, %v4594
  %v4652 = vadd.f32 %v4651, %v4598
  %v4653 = vadd.f32 %v4652, %v4602
  %v4654 = vadd.f32 %v4653, %v4606
  %v4655 = vadd.f32 %v4654, %v4610
  %v4656 = vadd.f32 %v4655, %v4614
  %v4657 = vrot.slane %v4656, 4
  %v4658 = vadd.f32 %v4656, %v4657
  %v4659 = vrot.slane %v4658, 2
  %v4660 = vadd.f32 %v4658, %v4659
  %v4661 = vrot.slane %v4660, 1
  %v4662 = vadd.f32 %v4660, %v4661
  %v4663 = vmul.f32 %v3969, %v3969
  %v4664 = vmul.f32 %v3971, %v3971
  %v4665 = vmul.f32 %v4395, %v4395
  %v4666 = vmul.f32 %v4397, %v4397
  %v4667 = vmul.f32 %v3973, %v3973
  %v4668 = vmul.f32 %v3975, %v3975
  %v4669 = vmul.f32 %v4399, %v4399
  %v4670 = vmul.f32 %v4401, %v4401
  %v4671 = vmul.f32 %v3979, %v3979
  %v4672 = vmul.f32 %v3981, %v3981
  %v4673 = vmul.f32 %v4405, %v4405
  %v4674 = vmul.f32 %v4407, %v4407
  %v4675 = vmul.f32 %v3983, %v3983
  %v4676 = vmul.f32 %v3985, %v3985
  %v4677 = vmul.f32 %v4409, %v4409
  %v4678 = vmul.f32 %v4411, %v4411
  %v4679 = vmul.f32 %v3989, %v3989
  %v4680 = vmul.f32 %v3991, %v3991
  %v4681 = vmul.f32 %v4415, %v4415
  %v4682 = vmul.f32 %v4417, %v4417
  %v4683 = vmul.f32 %v3993, %v3993
  %v4684 = vmul.f32 %v3995, %v3995
  %v4685 = vmul.f32 %v4419, %v4419
  %v4686 = vmul.f32 %v4421, %v4421
  %v4687 = vmul.f32 %v3999, %v3999
  %v4688 = vmul.f32 %v4001, %v4001
  %v4689 = vmul.f32 %v4425, %v4425
  %v4690 = vmul.f32 %v4427, %v4427
  %v4691 = vadd.f32 %v4663, %v4667
  %v4692 = vadd.f32 %v4691, %v4671
  %v4693 = vadd.f32 %v4692, %v4675
  %v4694 = vadd.f32 %v4693, %v4679
  %v4695 = vadd.f32 %v4694, %v4683
  %v4696 = vadd.f32 %v4695, %v4687
  %v4697 = vrot.slane %v4696, 4
  %v4698 = vadd.f32 %v4696, %v4697
  %v4699 = vrot.slane %v4698, 2
  %v4700 = vadd.f32 %v4698, %v4699
  %v4701 = vrot.slane %v4700, 1
  %v4702 = vadd.f32 %v4700, %v4701
  %v4703 = vadd.f32 %v4664, %v4668
  %v4704 = vadd.f32 %v4703, %v4672
  %v4705 = vadd.f32 %v4704, %v4676
  %v4706 = vadd.f32 %v4705, %v4680
  %v4707 = vadd.f32 %v4706, %v4684
  %v4708 = vadd.f32 %v4707, %v4688
  %v4709 = vrot.slane %v4708, 4
  %v4710 = vadd.f32 %v4708, %v4709
  %v4711 = vrot.slane %v4710, 2
  %v4712 = vadd.f32 %v4710, %v4711
  %v4713 = vrot.slane %v4712, 1
  %v4714 = vadd.f32 %v4712, %v4713
  %v4715 = vadd.f32 %v4665, %v4669
  %v4716 = vadd.f32 %v4715, %v4673
  %v4717 = vadd.f32 %v4716, %v4677
  %v4718 = vadd.f32 %v4717, %v4681
  %v4719 = vadd.f32 %v4718, %v4685
  %v4720 = vadd.f32 %v4719, %v4689
  %v4721 = vrot.slane %v4720, 4
  %v4722 = vadd.f32 %v4720, %v4721
  %v4723 = vrot.slane %v4722, 2
  %v4724 = vadd.f32 %v4722, %v4723
  %v4725 = vrot.slane %v4724, 1
  %v4726 = vadd.f32 %v4724, %v4725
  %v4727 = vadd.f32 %v4666, %v4670
  %v4728 = vadd.f32 %v4727, %v4674
  %v4729 = vadd.f32 %v4728, %v4678
  %v4730 = vadd.f32 %v4729, %v4682
  %v4731 = vadd.f32 %v4730, %v4686
  %v4732 = vadd.f32 %v4731, %v4690
  %v4733 = vrot.slane %v4732, 4
  %v4734 = vadd.f32 %v4732, %v4733
  %v4735 = vrot.slane %v4734, 2
  %v4736 = vadd.f32 %v4734, %v4735
  %v4737 = vrot.slane %v4736, 1
  %v4738 = vadd.f32 %v4736, %v4737
  %v4739 = vadd.f32 %v4626, %v4702
  %v4740 = vadd.f32 %v4638, %v4714
  %v4741 = vadd.f32 %v4650, %v4726
  %v4742 = vadd.f32 %v4662, %v4738
  %v4743 = vld [vmem:[%s3] sm:$0xff]
  %v4744 = vld [vmem:[%s3 + $0x8] sm:$0xff]
  %v4745 = vld [vmem:[%s3 + $0x10] sm:$0xff]
  %v4746 = vld [vmem:[%s3 + $0x18] sm:$0xff]
  %v4747 = vld [vmem:[%s3 + $0x20] sm:$0xff]
  %v4748 = vld [vmem:[%s3 + $0x28] sm:$0xff]
  %v4749 = vld [vmem:[%s3 + $0x30] sm:$0xff]
  %v4750 = vld [vmem:[%s3 + $0x38] sm:$0xff]
  %v4751 = vld [vmem:[%s3 + $0x40] sm:$0xff]
  %v4752 = vld [vmem:[%s3 + $0x48] sm:$0xff]
  %v4753 = vld [vmem:[%s3 + $0x50] sm:$0xff]
  %v4754 = vld [vmem:[%s3 + $0x58] sm:$0xff]
  %v4755 = vld [vmem:[%s3 + $0x60] sm:$0xff]
  %v4756 = vld [vmem:[%s3 + $0x68] sm:$0xff]
  %v4757 = vld [vmem:[%s3 + $0x70] sm:$0xff]
  %v4758 = vld [vmem:[%s3 + $0x78] sm:$0xff]
  %v4759 = vld [vmem:[%s3 + $0x80] sm:$0xff]
  %v4760 = vld [vmem:[%s3 + $0x88] sm:$0xff]
  %v4761 = vld [vmem:[%s3 + $0x90] sm:$0xff]
  %v4762 = vld [vmem:[%s3 + $0x98] sm:$0xff]
  %v4763 = vld [vmem:[%s3 + $0xa0] sm:$0xff]
  %v4764 = vld [vmem:[%s3 + $0xa8] sm:$0xff]
  %v4765 = vld [vmem:[%s3 + $0xb0] sm:$0xff]
  %v4766 = vld [vmem:[%s3 + $0xb8] sm:$0xff]
  %v4767 = vld [vmem:[%s3 + $0xc0] sm:$0xff]
  %v4768 = vld [vmem:[%s3 + $0xc8] sm:$0xff]
  %v4769 = vld [vmem:[%s3 + $0xd0] sm:$0xff]
  %v4770 = vld [vmem:[%s3 + $0xd8] sm:$0xff]
  %v4771 = vld [vmem:[%s3 + $0xe0] sm:$0xff]
  %v4772 = vld [vmem:[%s3 + $0xe8] sm:$0xff]
  %v4773 = vld [vmem:[%s3 + $0xf0] sm:$0xff]
  %v4774 = vld [vmem:[%s3 + $0xf8] sm:$0xff]
  %v4775 = vld [vmem:[%s3 + $0x100] sm:$0xff]
  %v4776 = vld [vmem:[%s3 + $0x108] sm:$0xff]
  %v4777 = vld [vmem:[%s3 + $0x110] sm:$0xff]
  %v4778 = vld [vmem:[%s3 + $0x118] sm:$0xff]
  %v4779 = vld [vmem:[%s3 + $0x120] sm:$0xff]
  %v4780 = vld [vmem:[%s3 + $0x128] sm:$0xff]
  %v4781 = vld [vmem:[%s3 + $0x130] sm:$0xff]
  %v4782 = vld [vmem:[%s3 + $0x138] sm:$0xff]
  %v4783 = vld [vmem:[%s3 + $0x140] sm:$0xff]
  %v4784 = vld [vmem:[%s3 + $0x148] sm:$0xff]
  %v4785 = vld [vmem:[%s3 + $0x150] sm:$0xff]
  %v4786 = vld [vmem:[%s3 + $0x158] sm:$0xff]
  %v4787 = vld [vmem:[%s3 + $0x160] sm:$0xff]
  %v4788 = vld [vmem:[%s3 + $0x168] sm:$0xff]
  %v4789 = vld [vmem:[%s3 + $0x170] sm:$0xff]
  %v4790 = vld [vmem:[%s3 + $0x178] sm:$0xff]
  %v4791 = vld [vmem:[%s3 + $0x180] sm:$0xff]
  %v4792 = vld [vmem:[%s3 + $0x188] sm:$0xff]
  %v4793 = vld [vmem:[%s3 + $0x190] sm:$0xff]
  %v4794 = vld [vmem:[%s3 + $0x198] sm:$0xff]
  %v4795 = vld [vmem:[%s3 + $0x1a0] sm:$0xff]
  %v4796 = vld [vmem:[%s3 + $0x1a8] sm:$0xff]
  %v4797 = vld [vmem:[%s3 + $0x1b0] sm:$0xff]
  %v4798 = vld [vmem:[%s3 + $0x1b8] sm:$0xff]
  %v4799 = vld [vmem:[%s3 + $0x1c0] sm:$0xff]
  %v4800 = vld [vmem:[%s3 + $0x1c8] sm:$0xff]
  %v4801 = vld [vmem:[%s3 + $0x1d0] sm:$0xff]
  %v4802 = vld [vmem:[%s3 + $0x1d8] sm:$0xff]
  %v4803 = vld [vmem:[%s3 + $0x1e0] sm:$0xff]
  %v4804 = vld [vmem:[%s3 + $0x1e8] sm:$0xff]
  %v4805 = vld [vmem:[%s3 + $0x1f0] sm:$0xff]
  %v4806 = vld [vmem:[%s3 + $0x1f8] sm:$0xff]
  %4807 = vmatprep.subr.mxu0 0.0
  %4808 = vmatpush1.msra.mxu0 %v4743
  %4809 = vmatprep.subr.mxu0 0.0
  %4810 = vmatpush1.msra.mxu0 %v4744
  %4811 = vmatprep.subr.mxu0 0.0
  %4812 = vmatpush1.msra.mxu0 %v4745
  %4813 = vmatprep.subr.mxu0 0.0
  %4814 = vmatpush1.msra.mxu0 %v4746
  %4815 = vmatprep.subr.mxu0 0.0
  %4816 = vmatpush1.msra.mxu0 %v4747
  %4817 = vmatprep.subr.mxu0 0.0
  %4818 = vmatpush1.msra.mxu0 %v4748
  %4819 = vmatprep.subr.mxu0 0.0
  %4820 = vmatpush1.msra.mxu0 %v4749
  %4821 = vmatprep.subr.mxu0 0.0
  %4822 = vmatpush1.msra.mxu0 %v4750
  %4823 = vmatprep.subr.mxu0 0.0
  %4824 = vmatpush1.msra.mxu0 %v4751
  %4825 = vmatprep.subr.mxu0 0.0
  %4826 = vmatpush1.msra.mxu0 %v4752
  %4827 = vmatprep.subr.mxu0 0.0
  %4828 = vmatpush1.msra.mxu0 %v4753
  %4829 = vmatprep.subr.mxu0 0.0
  %4830 = vmatpush1.msra.mxu0 %v4754
  %4831 = vmatprep.subr.mxu0 0.0
  %4832 = vmatpush1.msra.mxu0 %v4755
  %4833 = vmatprep.subr.mxu0 0.0
  %4834 = vmatpush1.msra.mxu0 %v4756
  %4835 = vmatprep.subr.mxu0 0.0
  %4836 = vmatpush1.msra.mxu0 %v4757
  %4837 = vmatprep.subr.mxu0 0.0
  %4838 = vmatpush1.msra.mxu0 %v4758
  %4839 = vmatprep.subr.mxu0 0.0
  %4840 = vmatpush1.msra.mxu0 %v4759
  %4841 = vmatprep.subr.mxu0 0.0
  %4842 = vmatpush1.msra.mxu0 %v4760
  %4843 = vmatprep.subr.mxu0 0.0
  %4844 = vmatpush1.msra.mxu0 %v4761
  %4845 = vmatprep.subr.mxu0 0.0
  %4846 = vmatpush1.msra.mxu0 %v4762
  %4847 = vmatprep.subr.mxu0 0.0
  %4848 = vmatpush1.msra.mxu0 %v4763
  %4849 = vmatprep.subr.mxu0 0.0
  %4850 = vmatpush1.msra.mxu0 %v4764
  %4851 = vmatprep.subr.mxu0 0.0
  %4852 = vmatpush1.msra.mxu0 %v4765
  %4853 = vmatprep.subr.mxu0 0.0
  %4854 = vmatpush1.msra.mxu0 %v4766
  %4855 = vmatprep.subr.mxu0 0.0
  %4856 = vmatpush1.msra.mxu0 %v4767
  %4857 = vmatprep.subr.mxu0 0.0
  %4858 = vmatpush1.msra.mxu0 %v4768
  %4859 = vmatprep.subr.mxu0 0.0
  %4860 = vmatpush1.msra.mxu0 %v4769
  %4861 = vmatprep.subr.mxu0 0.0
  %4862 = vmatpush1.msra.mxu0 %v4770
  %4863 = vmatprep.subr.mxu0 0.0
  %4864 = vmatpush1.msra.mxu0 %v4771
  %4865 = vmatprep.subr.mxu0 0.0
  %4866 = vmatpush1.msra.mxu0 %v4772
  %4867 = vmatprep.subr.mxu0 0.0
  %4868 = vmatpush1.msra.mxu0 %v4773
  %4869 = vmatprep.subr.mxu0 0.0
  %4870 = vmatpush1.msra.mxu0 %v4774
  %4871 = vmatprep.mubr.f32.mxu0 %v4584
  %4872 = vmatmul.mubr.f32.gmra.mrb[0].mxu0 %v4583
  %v4873 = vpop.f32.mrb[0].mxu0
  %v4874 = vadd.f32 0.0, %v4873
  %v4875 = vpop.f32.mrb[0].mxu0
  %4876 = vdwg.mxu0
  %4877 = vmatprep.subr.mxu0 0.0
  %4878 = vmatpush1.msra.mxu0 %v4775
  %4879 = vmatprep.subr.mxu0 0.0
  %4880 = vmatpush1.msra.mxu0 %v4776
  %4881 = vmatprep.subr.mxu0 0.0
  %4882 = vmatpush1.msra.mxu0 %v4777
  %4883 = vmatprep.subr.mxu0 0.0
  %4884 = vmatpush1.msra.mxu0 %v4778
  %4885 = vmatprep.subr.mxu0 0.0
  %4886 = vmatpush1.msra.mxu0 %v4779
  %4887 = vmatprep.subr.mxu0 0.0
  %4888 = vmatpush1.msra.mxu0 %v4780
  %4889 = vmatprep.subr.mxu0 0.0
  %4890 = vmatpush1.msra.mxu0 %v4781
  %4891 = vmatprep.subr.mxu0 0.0
  %4892 = vmatpush1.msra.mxu0 %v4782
  %4893 = vmatprep.subr.mxu0 0.0
  %4894 = vmatpush1.msra.mxu0 %v4783
  %4895 = vmatprep.subr.mxu0 0.0
  %4896 = vmatpush1.msra.mxu0 %v4784
  %4897 = vmatprep.subr.mxu0 0.0
  %4898 = vmatpush1.msra.mxu0 %v4785
  %4899 = vmatprep.subr.mxu0 0.0
  %4900 = vmatpush1.msra.mxu0 %v4786
  %4901 = vmatprep.subr.mxu0 0.0
  %4902 = vmatpush1.msra.mxu0 %v4787
  %4903 = vmatprep.subr.mxu0 0.0
  %4904 = vmatpush1.msra.mxu0 %v4788
  %4905 = vmatprep.subr.mxu0 0.0
  %4906 = vmatpush1.msra.mxu0 %v4789
  %4907 = vmatprep.subr.mxu0 0.0
  %4908 = vmatpush1.msra.mxu0 %v4790
  %4909 = vmatprep.subr.mxu0 0.0
  %4910 = vmatpush1.msra.mxu0 %v4791
  %4911 = vmatprep.subr.mxu0 0.0
  %4912 = vmatpush1.msra.mxu0 %v4792
  %4913 = vmatprep.subr.mxu0 0.0
  %4914 = vmatpush1.msra.mxu0 %v4793
  %4915 = vmatprep.subr.mxu0 0.0
  %4916 = vmatpush1.msra.mxu0 %v4794
  %4917 = vmatprep.subr.mxu0 0.0
  %4918 = vmatpush1.msra.mxu0 %v4795
  %4919 = vmatprep.subr.mxu0 0.0
  %4920 = vmatpush1.msra.mxu0 %v4796
  %4921 = vmatprep.subr.mxu0 0.0
  %4922 = vmatpush1.msra.mxu0 %v4797
  %4923 = vmatprep.subr.mxu0 0.0
  %4924 = vmatpush1.msra.mxu0 %v4798
  %4925 = vmatprep.subr.mxu0 0.0
  %4926 = vmatpush1.msra.mxu0 %v4799
  %4927 = vmatprep.subr.mxu0 0.0
  %4928 = vmatpush1.msra.mxu0 %v4800
  %4929 = vmatprep.subr.mxu0 0.0
  %4930 = vmatpush1.msra.mxu0 %v4801
  %4931 = vmatprep.subr.mxu0 0.0
  %4932 = vmatpush1.msra.mxu0 %v4802
  %4933 = vmatprep.subr.mxu0 0.0
  %4934 = vmatpush1.msra.mxu0 %v4803
  %4935 = vmatprep.subr.mxu0 0.0
  %4936 = vmatpush1.msra.mxu0 %v4804
  %4937 = vmatprep.subr.mxu0 0.0
  %4938 = vmatpush1.msra.mxu0 %v4805
  %4939 = vmatprep.subr.mxu0 0.0
  %4940 = vmatpush1.msra.mxu0 %v4806
  %4941 = vmatprep.mubr.f32.mxu0 %v4586
  %4942 = vmatmul.mubr.f32.gmra.mrb[0].mxu0 %v4585
  %v4943 = vpop.f32.mrb[0].mxu0
  %v4944 = vadd.f32 %v4874, %v4943
  %v4945 = vpop.f32.mrb[0].mxu0
  %4946 = vdwg.mxu0
  %4947 = vmatprep.subr.mxu0 0.0
  %4948 = vmatpush1.msra.mxu0 %v4743
  %4949 = vmatprep.subr.mxu0 0.0
  %4950 = vmatpush1.msra.mxu0 %v4744
  %4951 = vmatprep.subr.mxu0 0.0
  %4952 = vmatpush1.msra.mxu0 %v4745
  %4953 = vmatprep.subr.mxu0 0.0
  %4954 = vmatpush1.msra.mxu0 %v4746
  %4955 = vmatprep.subr.mxu0 0.0
  %4956 = vmatpush1.msra.mxu0 %v4747
  %4957 = vmatprep.subr.mxu0 0.0
  %4958 = vmatpush1.msra.mxu0 %v4748
  %4959 = vmatprep.subr.mxu0 0.0
  %4960 = vmatpush1.msra.mxu0 %v4749
  %4961 = vmatprep.subr.mxu0 0.0
  %4962 = vmatpush1.msra.mxu0 %v4750
  %4963 = vmatprep.subr.mxu0 0.0
  %4964 = vmatpush1.msra.mxu0 %v4751
  %4965 = vmatprep.subr.mxu0 0.0
  %4966 = vmatpush1.msra.mxu0 %v4752
  %4967 = vmatprep.subr.mxu0 0.0
  %4968 = vmatpush1.msra.mxu0 %v4753
  %4969 = vmatprep.subr.mxu0 0.0
  %4970 = vmatpush1.msra.mxu0 %v4754
  %4971 = vmatprep.subr.mxu0 0.0
  %4972 = vmatpush1.msra.mxu0 %v4755
  %4973 = vmatprep.subr.mxu0 0.0
  %4974 = vmatpush1.msra.mxu0 %v4756
  %4975 = vmatprep.subr.mxu0 0.0
  %4976 = vmatpush1.msra.mxu0 %v4757
  %4977 = vmatprep.subr.mxu0 0.0
  %4978 = vmatpush1.msra.mxu0 %v4758
  %4979 = vmatprep.subr.mxu0 0.0
  %4980 = vmatpush1.msra.mxu0 %v4759
  %4981 = vmatprep.subr.mxu0 0.0
  %4982 = vmatpush1.msra.mxu0 %v4760
  %4983 = vmatprep.subr.mxu0 0.0
  %4984 = vmatpush1.msra.mxu0 %v4761
  %4985 = vmatprep.subr.mxu0 0.0
  %4986 = vmatpush1.msra.mxu0 %v4762
  %4987 = vmatprep.subr.mxu0 0.0
  %4988 = vmatpush1.msra.mxu0 %v4763
  %4989 = vmatprep.subr.mxu0 0.0
  %4990 = vmatpush1.msra.mxu0 %v4764
  %4991 = vmatprep.subr.mxu0 0.0
  %4992 = vmatpush1.msra.mxu0 %v4765
  %4993 = vmatprep.subr.mxu0 0.0
  %4994 = vmatpush1.msra.mxu0 %v4766
  %4995 = vmatprep.subr.mxu0 0.0
  %4996 = vmatpush1.msra.mxu0 %v4767
  %4997 = vmatprep.subr.mxu0 0.0
  %4998 = vmatpush1.msra.mxu0 %v4768
  %4999 = vmatprep.subr.mxu0 0.0
  %5000 = vmatpush1.msra.mxu0 %v4769
  %5001 = vmatprep.subr.mxu0 0.0
  %5002 = vmatpush1.msra.mxu0 %v4770
  %5003 = vmatprep.subr.mxu0 0.0
  %5004 = vmatpush1.msra.mxu0 %v4771
  %5005 = vmatprep.subr.mxu0 0.0
  %5006 = vmatpush1.msra.mxu0 %v4772
  %5007 = vmatprep.subr.mxu0 0.0
  %5008 = vmatpush1.msra.mxu0 %v4773
  %5009 = vmatprep.subr.mxu0 0.0
  %5010 = vmatpush1.msra.mxu0 %v4774
  %5011 = vmatprep.mubr.f32.mxu0 %v4740
  %5012 = vmatmul.mubr.f32.gmra.mrb[0].mxu0 %v4739
  %v5013 = vpop.f32.mrb[0].mxu0
  %v5014 = vadd.f32 0.0, %v5013
  %v5015 = vpop.f32.mrb[0].mxu0
  %5016 = vdwg.mxu0
  %5017 = vmatprep.subr.mxu0 0.0
  %5018 = vmatpush1.msra.mxu0 %v4775
  %5019 = vmatprep.subr.mxu0 0.0
  %5020 = vmatpush1.msra.mxu0 %v4776
  %5021 = vmatprep.subr.mxu0 0.0
  %5022 = vmatpush1.msra.mxu0 %v4777
  %5023 = vmatprep.subr.mxu0 0.0
  %5024 = vmatpush1.msra.mxu0 %v4778
  %5025 = vmatprep.subr.mxu0 0.0
  %5026 = vmatpush1.msra.mxu0 %v4779
  %5027 = vmatprep.subr.mxu0 0.0
  %5028 = vmatpush1.msra.mxu0 %v4780
  %5029 = vmatprep.subr.mxu0 0.0
  %5030 = vmatpush1.msra.mxu0 %v4781
  %5031 = vmatprep.subr.mxu0 0.0
  %5032 = vmatpush1.msra.mxu0 %v4782
  %5033 = vmatprep.subr.mxu0 0.0
  %5034 = vmatpush1.msra.mxu0 %v4783
  %5035 = vmatprep.subr.mxu0 0.0
  %5036 = vmatpush1.msra.mxu0 %v4784
  %5037 = vmatprep.subr.mxu0 0.0
  %5038 = vmatpush1.msra.mxu0 %v4785
  %5039 = vmatprep.subr.mxu0 0.0
  %5040 = vmatpush1.msra.mxu0 %v4786
  %5041 = vmatprep.subr.mxu0 0.0
  %5042 = vmatpush1.msra.mxu0 %v4787
  %5043 = vmatprep.subr.mxu0 0.0
  %5044 = vmatpush1.msra.mxu0 %v4788
  %5045 = vmatprep.subr.mxu0 0.0
  %5046 = vmatpush1.msra.mxu0 %v4789
  %5047 = vmatprep.subr.mxu0 0.0
  %5048 = vmatpush1.msra.mxu0 %v4790
  %5049 = vmatprep.subr.mxu0 0.0
  %5050 = vmatpush1.msra.mxu0 %v4791
  %5051 = vmatprep.subr.mxu0 0.0
  %5052 = vmatpush1.msra.mxu0 %v4792
  %5053 = vmatprep.subr.mxu0 0.0
  %5054 = vmatpush1.msra.mxu0 %v4793
  %5055 = vmatprep.subr.mxu0 0.0
  %5056 = vmatpush1.msra.mxu0 %v4794
  %5057 = vmatprep.subr.mxu0 0.0
  %5058 = vmatpush1.msra.mxu0 %v4795
  %5059 = vmatprep.subr.mxu0 0.0
  %5060 = vmatpush1.msra.mxu0 %v4796
  %5061 = vmatprep.subr.mxu0 0.0
  %5062 = vmatpush1.msra.mxu0 %v4797
  %5063 = vmatprep.subr.mxu0 0.0
  %5064 = vmatpush1.msra.mxu0 %v4798
  %5065 = vmatprep.subr.mxu0 0.0
  %5066 = vmatpush1.msra.mxu0 %v4799
  %5067 = vmatprep.subr.mxu0 0.0
  %5068 = vmatpush1.msra.mxu0 %v4800
  %5069 = vmatprep.subr.mxu0 0.0
  %5070 = vmatpush1.msra.mxu0 %v4801
  %5071 = vmatprep.subr.mxu0 0.0
  %5072 = vmatpush1.msra.mxu0 %v4802
  %5073 = vmatprep.subr.mxu0 0.0
  %5074 = vmatpush1.msra.mxu0 %v4803
  %5075 = vmatprep.subr.mxu0 0.0
  %5076 = vmatpush1.msra.mxu0 %v4804
  %5077 = vmatprep.subr.mxu0 0.0
  %5078 = vmatpush1.msra.mxu0 %v4805
  %5079 = vmatprep.subr.mxu0 0.0
  %5080 = vmatpush1.msra.mxu0 %v4806
  %5081 = vmatprep.mubr.f32.mxu0 %v4742
  %5082 = vmatmul.mubr.f32.gmra.mrb[0].mxu0 %v4741
  %v5083 = vpop.f32.mrb[0].mxu0
  %v5084 = vadd.f32 %v5014, %v5083
  %v5085 = vpop.f32.mrb[0].mxu0
  %5086 = vdwg.mxu0
  %v5087 = vlaneseq
  %v5088 = vshrl.u32 %v5087, 7
  %v5089 = vsub.s32 0, %v5088
  %v5090 = vrot.slane %v4944, %v5089
  %5091 = vst [vmem:[%s6] sm:$0xff] %v5090
  %v5092 = vlaneseq
  %v5093 = vshrl.u32 %v5092, 7
  %v5094 = vsub.s32 0, %v5093
  %v5095 = vrot.slane %v5084, %v5094
  %5096 = vst [vmem:[%s7] sm:$0xff] %v5095
  // Predicated region
  $region18: #{conv_nn_forward.7} parent=0 // pred_check
    _
  $region19: #{conv_nn_forward.7} parent=0 // pred_check_branch
    %5098 = sbr.rel (0) target = $region21
  $region20: #{conv_nn_forward.7} parent=0 // pred_region
    _
  $region21: #{conv_nn_forward.7} parent=0 // pred_fallthru
    _
  // Predicated region
  $region22: #{conv_nn_forward.7} parent=0 // pred_check
    _
  $region23: #{conv_nn_forward.7} parent=0 // pred_check_branch
    %5100 = sbr.rel (0) target = $region25
  $region24: #{conv_nn_forward.7} parent=0 // pred_region
    _
  $region25: #{conv_nn_forward.7} parent=0 // pred_fallthru
    _
  // Predicated region
  $region26: #{conv_nn_forward.7} parent=0 // pred_check
    _
  $region27: #{conv_nn_forward.7} parent=0 // pred_check_branch
    %5102 = sbr.rel (0) target = $region29
  $region28: #{conv_nn_forward.7} parent=0 // pred_region
    _
  $region29: #{conv_nn_forward.7} parent=0 // pred_fallthru
    _
  // Predicated region
  $region30: #{conv_nn_forward.7} parent=0 // pred_check
    _
  $region31: #{conv_nn_forward.7} parent=0 // pred_check_branch
    %5104 = sbr.rel (0) target = $region33
  $region32: #{conv_nn_forward.7} parent=0 // pred_region
    _
  $region33: #{conv_nn_forward.7} parent=0 // pred_fallthru
    _
  // Predicated region
  $region34: #{conv_nn_forward.7} parent=0 // pred_check
    _
  $region35: #{conv_nn_forward.7} parent=0 // pred_check_branch
    %5106 = sbr.rel (0) target = $region37
  $region36: #{conv_nn_forward.7} parent=0 // pred_region
    _
  $region37: #{conv_nn_forward.7} parent=0 // pred_fallthru
    _
  // Predicated region
  $region38: #{conv_nn_forward.7} parent=0 // pred_check
    _
  $region39: #{conv_nn_forward.7} parent=0 // pred_check_branch
    %5108 = sbr.rel (0) target = $region41
  $region40: #{conv_nn_forward.7} parent=0 // pred_region
    _
  $region41: #{conv_nn_forward.7} parent=0 // pred_fallthru
    _
  // Predicated region
  $region42: #{conv_nn_forward.7} parent=0 // pred_check
    _
  $region43: #{conv_nn_forward.7} parent=0 // pred_check_branch
    %5110 = sbr.rel (0) target = $region45
  $region44: #{conv_nn_forward.7} parent=0 // pred_region
    _
  $region45: #{conv_nn_forward.7} parent=0 // pred_fallthru
    _
  // Predicated region
  $region46: #{conv_nn_forward.7} parent=0 // pred_check
    _
  $region47: #{conv_nn_forward.7} parent=0 // pred_check_branch
    %5112 = sbr.rel (0) target = $region49
  $region48: #{conv_nn_forward.7} parent=0 // pred_region
    _
  $region49: #{conv_nn_forward.7} parent=0 // pred_fallthru
    _

// kernel: conv_nn_forward.9
$region0: #{conv_nn_forward.9}
  #allocation0 [shape = 'u32[]', space=smem, size = 0x4, offset = 0x4, fixed_abs, tag = 'smem constant byte address 0x4 - core index']
  #allocation1 [shape = 'u32[144,128]{1,0:T(1,128)}', space=vmem, size = 0x12000, scoped, tag = 'internal scratch']
  %s0 = inlined_call_operand.vmem [shape: bf16[8,1568], index: 0, kind: input, shape index: {}]
  %s1 = inlined_call_operand.vmem [shape: bf16[1568,128], index: 1, kind: input, shape index: {}]
  %s2 = inlined_call_operand.vmem [shape: f32[1,128], index: 2, kind: input, shape index: {}]
  %s3 = inlined_call_operand.hbm [shape: f32[8,128], index: 3, kind: output, shape index: {}]
  %s4 = sld [smem:[#allocation0]]
  $region22: #{conv_nn_forward.9} parent=0
    _
  %s6 = ssub.s32 1, %s4
  %s7 = scalar_select 0, %s6, %s4
  $region1: #{conv_nn_forward.9} parent=0
    #allocation2 [shape = 'u8[4096]{0}', space=vmem, size = 0x1000, scoped, tag = 'output window, operand 0, single buffered']
    #allocation3 [shape = 's32[1]{0}', space=sflag, size = 0x4, scoped, tag = 'scoped memory for conv_nn_forward.9']
    %8 = vsyncpa [#allocation3], 0
    // Predicated region
    $region2: #{conv_nn_forward.9} parent=1 // pred_check
      _
    $region3: #{conv_nn_forward.9} parent=1 // pred_check_branch
      %10 = sbr.rel (0) target = $region5
    $region4: #{conv_nn_forward.9} parent=1 // pred_region
      _
    $region5: #{conv_nn_forward.9} parent=1 // pred_fallthru
      _
    // Predicated region
    $region6: #{conv_nn_forward.9} parent=1 // pred_check
      _
    $region7: #{conv_nn_forward.9} parent=1 // pred_check_branch
      %12 = sbr.rel (0) target = $region9
    $region8: #{conv_nn_forward.9} parent=1 // pred_region
      _
    $region9: #{conv_nn_forward.9} parent=1 // pred_fallthru
      _
    // Predicated region
    $region10: #{conv_nn_forward.9} parent=1 // pred_check
      _
    $region11: #{conv_nn_forward.9} parent=1 // pred_check_branch
      %14 = sbr.rel (0) target = $region13
    $region12: #{conv_nn_forward.9} parent=1 // pred_region
      _
    $region13: #{conv_nn_forward.9} parent=1 // pred_fallthru
      _
    %v16 = vld [vmem:[%s0] sm:$0xff]
    %v17 = vld [vmem:[%s0 + $0x8] sm:$0xff]
    %v18 = vld [vmem:[%s0 + $0x10] sm:$0xff]
    %v19 = vld [vmem:[%s0 + $0x18] sm:$0xff]
    %v20 = vld [vmem:[%s0 + $0x20] sm:$0xff]
    %v21 = vld [vmem:[%s0 + $0x28] sm:$0xff]
    %v22 = vld [vmem:[%s0 + $0x30] sm:$0xf]
    %v23 = vld [vmem:[%s1] sm:$0xf]
    %v24 = vld [vmem:[%s1 + $0x4] sm:$0xf]
    %v25 = vld [vmem:[%s1 + $0x8] sm:$0xf]
    %v26 = vld [vmem:[%s1 + $0xc] sm:$0xf]
    %v27 = vld [vmem:[%s1 + $0x10] sm:$0xf]
    %v28 = vld [vmem:[%s1 + $0x14] sm:$0xf]
    %v29 = vld [vmem:[%s1 + $0x18] sm:$0xf]
    %v30 = vld [vmem:[%s1 + $0x1c] sm:$0xf]
    %v31 = vld [vmem:[%s1 + $0x20] sm:$0xf]
    %v32 = vld [vmem:[%s1 + $0x24] sm:$0xf]
    %v33 = vld [vmem:[%s1 + $0x28] sm:$0xf]
    %v34 = vld [vmem:[%s1 + $0x2c] sm:$0xf]
    %v35 = vld [vmem:[%s1 + $0x30] sm:$0xf]
    %v36 = vld [vmem:[%s1 + $0x34] sm:$0xf]
    %v37 = vld [vmem:[%s1 + $0x38] sm:$0xf]
    %v38 = vld [vmem:[%s1 + $0x3c] sm:$0xf]
    %v39 = vld [vmem:[%s1 + $0x40] sm:$0xf]
    %v40 = vld [vmem:[%s1 + $0x44] sm:$0xf]
    %v41 = vld [vmem:[%s1 + $0x48] sm:$0xf]
    %v42 = vld [vmem:[%s1 + $0x4c] sm:$0xf]
    %v43 = vld [vmem:[%s1 + $0x50] sm:$0xf]
    %v44 = vld [vmem:[%s1 + $0x54] sm:$0xf]
    %v45 = vld [vmem:[%s1 + $0x58] sm:$0xf]
    %v46 = vld [vmem:[%s1 + $0x5c] sm:$0xf]
    %v47 = vld [vmem:[%s1 + $0x60] sm:$0xf]
    %v48 = vld [vmem:[%s1 + $0x64] sm:$0xf]
    %v49 = vld [vmem:[%s1 + $0x68] sm:$0xf]
    %v50 = vld [vmem:[%s1 + $0x6c] sm:$0xf]
    %v51 = vld [vmem:[%s1 + $0x70] sm:$0xf]
    %v52 = vld [vmem:[%s1 + $0x74] sm:$0xf]
    %v53 = vld [vmem:[%s1 + $0x78] sm:$0xf]
    %v54 = vld [vmem:[%s1 + $0x7c] sm:$0xf]
    %v55 = vld [vmem:[%s1 + $0x80] sm:$0xf]
    %v56 = vld [vmem:[%s1 + $0x84] sm:$0xf]
    %v57 = vld [vmem:[%s1 + $0x88] sm:$0xf]
    %v58 = vld [vmem:[%s1 + $0x8c] sm:$0xf]
    %v59 = vld [vmem:[%s1 + $0x90] sm:$0xf]
    %v60 = vld [vmem:[%s1 + $0x94] sm:$0xf]
    %v61 = vld [vmem:[%s1 + $0x98] sm:$0xf]
    %v62 = vld [vmem:[%s1 + $0x9c] sm:$0xf]
    %v63 = vld [vmem:[%s1 + $0xa0] sm:$0xf]
    %v64 = vld [vmem:[%s1 + $0xa4] sm:$0xf]
    %v65 = vld [vmem:[%s1 + $0xa8] sm:$0xf]
    %v66 = vld [vmem:[%s1 + $0xac] sm:$0xf]
    %v67 = vld [vmem:[%s1 + $0xb0] sm:$0xf]
    %v68 = vld [vmem:[%s1 + $0xb4] sm:$0xf]
    %v69 = vld [vmem:[%s1 + $0xb8] sm:$0xf]
    %v70 = vld [vmem:[%s1 + $0xbc] sm:$0xf]
    %v71 = vld [vmem:[%s1 + $0xc0] sm:$0xf]
    %v72 = vld [vmem:[%s1 + $0xc4] sm:$0xf]
    %v73 = vld [vmem:[%s1 + $0xc8] sm:$0xf]
    %v74 = vld [vmem:[%s1 + $0xcc] sm:$0xf]
    %v75 = vld [vmem:[%s1 + $0xd0] sm:$0xf]
    %v76 = vld [vmem:[%s1 + $0xd4] sm:$0xf]
    %v77 = vld [vmem:[%s1 + $0xd8] sm:$0xf]
    %v78 = vld [vmem:[%s1 + $0xdc] sm:$0xf]
    %v79 = vld [vmem:[%s1 + $0xe0] sm:$0xf]
    %v80 = vld [vmem:[%s1 + $0xe4] sm:$0xf]
    %v81 = vld [vmem:[%s1 + $0xe8] sm:$0xf]
    %v82 = vld [vmem:[%s1 + $0xec] sm:$0xf]
    %v83 = vld [vmem:[%s1 + $0xf0] sm:$0xf]
    %v84 = vld [vmem:[%s1 + $0xf4] sm:$0xf]
    %v85 = vld [vmem:[%s1 + $0xf8] sm:$0xf]
    %v86 = vld [vmem:[%s1 + $0xfc] sm:$0xf]
    %v87 = vld [vmem:[%s1 + $0x100] sm:$0xf]
    %v88 = vld [vmem:[%s1 + $0x104] sm:$0xf]
    %v89 = vld [vmem:[%s1 + $0x108] sm:$0xf]
    %v90 = vld [vmem:[%s1 + $0x10c] sm:$0xf]
    %v91 = vld [vmem:[%s1 + $0x110] sm:$0xf]
    %v92 = vld [vmem:[%s1 + $0x114] sm:$0xf]
    %v93 = vld [vmem:[%s1 + $0x118] sm:$0xf]
    %v94 = vld [vmem:[%s1 + $0x11c] sm:$0xf]
    %v95 = vld [vmem:[%s1 + $0x120] sm:$0xf]
    %v96 = vld [vmem:[%s1 + $0x124] sm:$0xf]
    %v97 = vld [vmem:[%s1 + $0x128] sm:$0xf]
    %v98 = vld [vmem:[%s1 + $0x12c] sm:$0xf]
    %v99 = vld [vmem:[%s1 + $0x130] sm:$0xf]
    %v100 = vld [vmem:[%s1 + $0x134] sm:$0xf]
    %v101 = vld [vmem:[%s1 + $0x138] sm:$0xf]
    %v102 = vld [vmem:[%s1 + $0x13c] sm:$0xf]
    %v103 = vld [vmem:[%s1 + $0x140] sm:$0xf]
    %v104 = vld [vmem:[%s1 + $0x144] sm:$0xf]
    %v105 = vld [vmem:[%s1 + $0x148] sm:$0xf]
    %v106 = vld [vmem:[%s1 + $0x14c] sm:$0xf]
    %v107 = vld [vmem:[%s1 + $0x150] sm:$0xf]
    %v108 = vld [vmem:[%s1 + $0x154] sm:$0xf]
    %v109 = vld [vmem:[%s1 + $0x158] sm:$0xf]
    %v110 = vld [vmem:[%s1 + $0x15c] sm:$0xf]
    %v111 = vld [vmem:[%s1 + $0x160] sm:$0xf]
    %v112 = vld [vmem:[%s1 + $0x164] sm:$0xf]
    %v113 = vld [vmem:[%s1 + $0x168] sm:$0xf]
    %v114 = vld [vmem:[%s1 + $0x16c] sm:$0xf]
    %v115 = vld [vmem:[%s1 + $0x170] sm:$0xf]
    %v116 = vld [vmem:[%s1 + $0x174] sm:$0xf]
    %v117 = vld [vmem:[%s1 + $0x178] sm:$0xf]
    %v118 = vld [vmem:[%s1 + $0x17c] sm:$0xf]
    %v119 = vld [vmem:[%s1 + $0x180] sm:$0xf]
    %v120 = vld [vmem:[%s1 + $0x184] sm:$0xf]
    %v121 = vld [vmem:[%s1 + $0x188] sm:$0xf]
    %v122 = vld [vmem:[%s1 + $0x18c] sm:$0xf]
    %v123 = vld [vmem:[%s1 + $0x190] sm:$0xf]
    %v124 = vld [vmem:[%s1 + $0x194] sm:$0xf]
    %v125 = vld [vmem:[%s1 + $0x198] sm:$0xf]
    %v126 = vld [vmem:[%s1 + $0x19c] sm:$0xf]
    %v127 = vld [vmem:[%s1 + $0x1a0] sm:$0xf]
    %v128 = vld [vmem:[%s1 + $0x1a4] sm:$0xf]
    %v129 = vld [vmem:[%s1 + $0x1a8] sm:$0xf]
    %v130 = vld [vmem:[%s1 + $0x1ac] sm:$0xf]
    %v131 = vld [vmem:[%s1 + $0x1b0] sm:$0xf]
    %v132 = vld [vmem:[%s1 + $0x1b4] sm:$0xf]
    %v133 = vld [vmem:[%s1 + $0x1b8] sm:$0xf]
    %v134 = vld [vmem:[%s1 + $0x1bc] sm:$0xf]
    %v135 = vld [vmem:[%s1 + $0x1c0] sm:$0xf]
    %v136 = vld [vmem:[%s1 + $0x1c4] sm:$0xf]
    %v137 = vld [vmem:[%s1 + $0x1c8] sm:$0xf]
    %v138 = vld [vmem:[%s1 + $0x1cc] sm:$0xf]
    %v139 = vld [vmem:[%s1 + $0x1d0] sm:$0xf]
    %v140 = vld [vmem:[%s1 + $0x1d4] sm:$0xf]
    %v141 = vld [vmem:[%s1 + $0x1d8] sm:$0xf]
    %v142 = vld [vmem:[%s1 + $0x1dc] sm:$0xf]
    %v143 = vld [vmem:[%s1 + $0x1e0] sm:$0xf]
    %v144 = vld [vmem:[%s1 + $0x1e4] sm:$0xf]
    %v145 = vld [vmem:[%s1 + $0x1e8] sm:$0xf]
    %v146 = vld [vmem:[%s1 + $0x1ec] sm:$0xf]
    %v147 = vld [vmem:[%s1 + $0x1f0] sm:$0xf]
    %v148 = vld [vmem:[%s1 + $0x1f4] sm:$0xf]
    %v149 = vld [vmem:[%s1 + $0x1f8] sm:$0xf]
    %v150 = vld [vmem:[%s1 + $0x1fc] sm:$0xf]
    %v151 = vld [vmem:[%s1 + $0x200] sm:$0xf]
    %v152 = vld [vmem:[%s1 + $0x204] sm:$0xf]
    %v153 = vld [vmem:[%s1 + $0x208] sm:$0xf]
    %v154 = vld [vmem:[%s1 + $0x20c] sm:$0xf]
    %v155 = vld [vmem:[%s1 + $0x210] sm:$0xf]
    %v156 = vld [vmem:[%s1 + $0x214] sm:$0xf]
    %v157 = vld [vmem:[%s1 + $0x218] sm:$0xf]
    %v158 = vld [vmem:[%s1 + $0x21c] sm:$0xf]
    %v159 = vld [vmem:[%s1 + $0x220] sm:$0xf]
    %v160 = vld [vmem:[%s1 + $0x224] sm:$0xf]
    %v161 = vld [vmem:[%s1 + $0x228] sm:$0xf]
    %v162 = vld [vmem:[%s1 + $0x22c] sm:$0xf]
    %v163 = vld [vmem:[%s1 + $0x230] sm:$0xf]
    %v164 = vld [vmem:[%s1 + $0x234] sm:$0xf]
    %v165 = vld [vmem:[%s1 + $0x238] sm:$0xf]
    %v166 = vld [vmem:[%s1 + $0x23c] sm:$0xf]
    %v167 = vld [vmem:[%s1 + $0x240] sm:$0xf]
    %v168 = vld [vmem:[%s1 + $0x244] sm:$0xf]
    %v169 = vld [vmem:[%s1 + $0x248] sm:$0xf]
    %v170 = vld [vmem:[%s1 + $0x24c] sm:$0xf]
    %v171 = vld [vmem:[%s1 + $0x250] sm:$0xf]
    %v172 = vld [vmem:[%s1 + $0x254] sm:$0xf]
    %v173 = vld [vmem:[%s1 + $0x258] sm:$0xf]
    %v174 = vld [vmem:[%s1 + $0x25c] sm:$0xf]
    %v175 = vld [vmem:[%s1 + $0x260] sm:$0xf]
    %v176 = vld [vmem:[%s1 + $0x264] sm:$0xf]
    %v177 = vld [vmem:[%s1 + $0x268] sm:$0xf]
    %v178 = vld [vmem:[%s1 + $0x26c] sm:$0xf]
    %v179 = vld [vmem:[%s1 + $0x270] sm:$0xf]
    %v180 = vld [vmem:[%s1 + $0x274] sm:$0xf]
    %v181 = vld [vmem:[%s1 + $0x278] sm:$0xf]
    %v182 = vld [vmem:[%s1 + $0x27c] sm:$0xf]
    %v183 = vld [vmem:[%s1 + $0x280] sm:$0xf]
    %v184 = vld [vmem:[%s1 + $0x284] sm:$0xf]
    %v185 = vld [vmem:[%s1 + $0x288] sm:$0xf]
    %v186 = vld [vmem:[%s1 + $0x28c] sm:$0xf]
    %v187 = vld [vmem:[%s1 + $0x290] sm:$0xf]
    %v188 = vld [vmem:[%s1 + $0x294] sm:$0xf]
    %v189 = vld [vmem:[%s1 + $0x298] sm:$0xf]
    %v190 = vld [vmem:[%s1 + $0x29c] sm:$0xf]
    %v191 = vld [vmem:[%s1 + $0x2a0] sm:$0xf]
    %v192 = vld [vmem:[%s1 + $0x2a4] sm:$0xf]
    %v193 = vld [vmem:[%s1 + $0x2a8] sm:$0xf]
    %v194 = vld [vmem:[%s1 + $0x2ac] sm:$0xf]
    %v195 = vld [vmem:[%s1 + $0x2b0] sm:$0xf]
    %v196 = vld [vmem:[%s1 + $0x2b4] sm:$0xf]
    %v197 = vld [vmem:[%s1 + $0x2b8] sm:$0xf]
    %v198 = vld [vmem:[%s1 + $0x2bc] sm:$0xf]
    %v199 = vld [vmem:[%s1 + $0x2c0] sm:$0xf]
    %v200 = vld [vmem:[%s1 + $0x2c4] sm:$0xf]
    %v201 = vld [vmem:[%s1 + $0x2c8] sm:$0xf]
    %v202 = vld [vmem:[%s1 + $0x2cc] sm:$0xf]
    %v203 = vld [vmem:[%s1 + $0x2d0] sm:$0xf]
    %v204 = vld [vmem:[%s1 + $0x2d4] sm:$0xf]
    %v205 = vld [vmem:[%s1 + $0x2d8] sm:$0xf]
    %v206 = vld [vmem:[%s1 + $0x2dc] sm:$0xf]
    %v207 = vld [vmem:[%s1 + $0x2e0] sm:$0xf]
    %v208 = vld [vmem:[%s1 + $0x2e4] sm:$0xf]
    %v209 = vld [vmem:[%s1 + $0x2e8] sm:$0xf]
    %v210 = vld [vmem:[%s1 + $0x2ec] sm:$0xf]
    %v211 = vld [vmem:[%s1 + $0x2f0] sm:$0xf]
    %v212 = vld [vmem:[%s1 + $0x2f4] sm:$0xf]
    %v213 = vld [vmem:[%s1 + $0x2f8] sm:$0xf]
    %v214 = vld [vmem:[%s1 + $0x2fc] sm:$0xf]
    %v215 = vld [vmem:[%s1 + $0x300] sm:$0xf]
    %v216 = vld [vmem:[%s1 + $0x304] sm:$0xf]
    %v217 = vld [vmem:[%s1 + $0x308] sm:$0xf]
    %v218 = vld [vmem:[%s1 + $0x30c] sm:$0xf]
    %v219 = vld [vmem:[%s2] sm:$0x1]
    %v221 = vlaneseq
    %v222 = vshrl.u32 %v221, 7
    %v223 = vsub.s32 0, %v222
    %v224 = vrot.slane %v219, %v223
    %v233 = vunpack.c.l.b16 %v16
    %v234 = vunpack.c.h.b16 %v16
    %v235 = vunpack.c.l.b16 %v17
    %v236 = vunpack.c.h.b16 %v17
    %v237 = vunpack.c.l.b16 %v18
    %v238 = vunpack.c.h.b16 %v18
    %v239 = vunpack.c.l.b16 %v19
    %v240 = vunpack.c.h.b16 %v19
    %v241 = vunpack.c.l.b16 %v20
    %v242 = vunpack.c.h.b16 %v20
    %v243 = vunpack.c.l.b16 %v21
    %v244 = vunpack.c.h.b16 %v21
    %v245 = vunpack.c.l.b16 %v22
    %v246 = vpack.c.b16 %v233, %v233
    %v247 = vpack.c.b16 %v234, %v234
    %v248 = vpack.c.b16 %v235, %v235
    %v249 = vpack.c.b16 %v236, %v236
    %v250 = vpack.c.b16 %v237, %v237
    %v251 = vpack.c.b16 %v238, %v238
    %v252 = vpack.c.b16 %v239, %v239
    %v253 = vpack.c.b16 %v240, %v240
    %v254 = vpack.c.b16 %v241, %v241
    %v255 = vpack.c.b16 %v242, %v242
    %v256 = vpack.c.b16 %v243, %v243
    %v257 = vpack.c.b16 %v244, %v244
    %v258 = vpack.c.b16 %v245, %v245
    %v467 = vunpack.c.l.b16 %v23
    %v468 = vunpack.c.l.b16 %v24
    %v469 = vunpack.c.l.b16 %v25
    %v470 = vunpack.c.l.b16 %v26
    %v471 = vunpack.c.l.b16 %v27
    %v472 = vunpack.c.l.b16 %v28
    %v473 = vunpack.c.l.b16 %v29
    %v474 = vunpack.c.l.b16 %v30
    %v475 = vunpack.c.l.b16 %v31
    %v476 = vunpack.c.l.b16 %v32
    %v477 = vunpack.c.l.b16 %v33
    %v478 = vunpack.c.l.b16 %v34
    %v479 = vunpack.c.l.b16 %v35
    %v480 = vunpack.c.l.b16 %v36
    %v481 = vunpack.c.l.b16 %v37
    %v482 = vunpack.c.l.b16 %v38
    %v483 = vunpack.c.l.b16 %v39
    %v484 = vunpack.c.l.b16 %v40
    %v485 = vunpack.c.l.b16 %v41
    %v486 = vunpack.c.l.b16 %v42
    %v487 = vunpack.c.l.b16 %v43
    %v488 = vunpack.c.l.b16 %v44
    %v489 = vunpack.c.l.b16 %v45
    %v490 = vunpack.c.l.b16 %v46
    %v491 = vunpack.c.l.b16 %v47
    %v492 = vunpack.c.l.b16 %v48
    %v493 = vunpack.c.l.b16 %v49
    %v494 = vunpack.c.l.b16 %v50
    %v495 = vunpack.c.l.b16 %v51
    %v496 = vunpack.c.l.b16 %v52
    %v497 = vunpack.c.l.b16 %v53
    %v498 = vunpack.c.l.b16 %v54
    %v499 = vunpack.c.l.b16 %v55
    %v500 = vunpack.c.l.b16 %v56
    %v501 = vunpack.c.l.b16 %v57
    %v502 = vunpack.c.l.b16 %v58
    %v503 = vunpack.c.l.b16 %v59
    %v504 = vunpack.c.l.b16 %v60
    %v505 = vunpack.c.l.b16 %v61
    %v506 = vunpack.c.l.b16 %v62
    %v507 = vunpack.c.l.b16 %v63
    %v508 = vunpack.c.l.b16 %v64
    %v509 = vunpack.c.l.b16 %v65
    %v510 = vunpack.c.l.b16 %v66
    %v511 = vunpack.c.l.b16 %v67
    %v512 = vunpack.c.l.b16 %v68
    %v513 = vunpack.c.l.b16 %v69
    %v514 = vunpack.c.l.b16 %v70
    %v515 = vunpack.c.l.b16 %v71
    %v516 = vunpack.c.l.b16 %v72
    %v517 = vunpack.c.l.b16 %v73
    %v518 = vunpack.c.l.b16 %v74
    %v519 = vunpack.c.l.b16 %v75
    %v520 = vunpack.c.l.b16 %v76
    %v521 = vunpack.c.l.b16 %v77
    %v522 = vunpack.c.l.b16 %v78
    %v523 = vunpack.c.l.b16 %v79
    %v524 = vunpack.c.l.b16 %v80
    %v525 = vunpack.c.l.b16 %v81
    %v526 = vunpack.c.l.b16 %v82
    %v527 = vunpack.c.l.b16 %v83
    %v528 = vunpack.c.l.b16 %v84
    %v529 = vunpack.c.l.b16 %v85
    %v530 = vunpack.c.l.b16 %v86
    %v531 = vunpack.c.l.b16 %v87
    %v532 = vunpack.c.l.b16 %v88
    %v533 = vunpack.c.l.b16 %v89
    %v534 = vunpack.c.l.b16 %v90
    %v535 = vunpack.c.l.b16 %v91
    %v536 = vunpack.c.l.b16 %v92
    %v537 = vunpack.c.l.b16 %v93
    %v538 = vunpack.c.l.b16 %v94
    %v539 = vunpack.c.l.b16 %v95
    %v540 = vunpack.c.l.b16 %v96
    %v541 = vunpack.c.l.b16 %v97
    %v542 = vunpack.c.l.b16 %v98
    %v543 = vunpack.c.l.b16 %v99
    %v544 = vunpack.c.l.b16 %v100
    %v545 = vunpack.c.l.b16 %v101
    %v546 = vunpack.c.l.b16 %v102
    %v547 = vunpack.c.l.b16 %v103
    %v548 = vunpack.c.l.b16 %v104
    %v549 = vunpack.c.l.b16 %v105
    %v550 = vunpack.c.l.b16 %v106
    %v551 = vunpack.c.l.b16 %v107
    %v552 = vunpack.c.l.b16 %v108
    %v553 = vunpack.c.l.b16 %v109
    %v554 = vunpack.c.l.b16 %v110
    %v555 = vunpack.c.l.b16 %v111
    %v556 = vunpack.c.l.b16 %v112
    %v557 = vunpack.c.l.b16 %v113
    %v558 = vunpack.c.l.b16 %v114
    %v559 = vunpack.c.l.b16 %v115
    %v560 = vunpack.c.l.b16 %v116
    %v561 = vunpack.c.l.b16 %v117
    %v562 = vunpack.c.l.b16 %v118
    %v563 = vunpack.c.l.b16 %v119
    %v564 = vunpack.c.l.b16 %v120
    %v565 = vunpack.c.l.b16 %v121
    %v566 = vunpack.c.l.b16 %v122
    %v567 = vunpack.c.l.b16 %v123
    %v568 = vunpack.c.l.b16 %v124
    %v569 = vunpack.c.l.b16 %v125
    %v570 = vunpack.c.l.b16 %v126
    %v571 = vunpack.c.l.b16 %v127
    %v572 = vunpack.c.l.b16 %v128
    %v573 = vunpack.c.l.b16 %v129
    %v574 = vunpack.c.l.b16 %v130
    %v575 = vunpack.c.l.b16 %v131
    %v576 = vunpack.c.l.b16 %v132
    %v577 = vunpack.c.l.b16 %v133
    %v578 = vunpack.c.l.b16 %v134
    %v579 = vunpack.c.l.b16 %v135
    %v580 = vunpack.c.l.b16 %v136
    %v581 = vunpack.c.l.b16 %v137
    %v582 = vunpack.c.l.b16 %v138
    %v583 = vunpack.c.l.b16 %v139
    %v584 = vunpack.c.l.b16 %v140
    %v585 = vunpack.c.l.b16 %v141
    %v586 = vunpack.c.l.b16 %v142
    %v587 = vunpack.c.l.b16 %v143
    %v588 = vunpack.c.l.b16 %v144
    %v589 = vunpack.c.l.b16 %v145
    %v590 = vunpack.c.l.b16 %v146
    %v591 = vunpack.c.l.b16 %v147
    %v592 = vunpack.c.l.b16 %v148
    %v593 = vunpack.c.l.b16 %v149
    %v594 = vunpack.c.l.b16 %v150
    %v595 = vunpack.c.l.b16 %v151
    %v596 = vunpack.c.l.b16 %v152
    %v597 = vunpack.c.l.b16 %v153
    %v598 = vunpack.c.l.b16 %v154
    %v599 = vunpack.c.l.b16 %v155
    %v600 = vunpack.c.l.b16 %v156
    %v601 = vunpack.c.l.b16 %v157
    %v602 = vunpack.c.l.b16 %v158
    %v603 = vunpack.c.l.b16 %v159
    %v604 = vunpack.c.l.b16 %v160
    %v605 = vunpack.c.l.b16 %v161
    %v606 = vunpack.c.l.b16 %v162
    %v607 = vunpack.c.l.b16 %v163
    %v608 = vunpack.c.l.b16 %v164
    %v609 = vunpack.c.l.b16 %v165
    %v610 = vunpack.c.l.b16 %v166
    %v611 = vunpack.c.l.b16 %v167
    %v612 = vunpack.c.l.b16 %v168
    %v613 = vunpack.c.l.b16 %v169
    %v614 = vunpack.c.l.b16 %v170
    %v615 = vunpack.c.l.b16 %v171
    %v616 = vunpack.c.l.b16 %v172
    %v617 = vunpack.c.l.b16 %v173
    %v618 = vunpack.c.l.b16 %v174
    %v619 = vunpack.c.l.b16 %v175
    %v620 = vunpack.c.l.b16 %v176
    %v621 = vunpack.c.l.b16 %v177
    %v622 = vunpack.c.l.b16 %v178
    %v623 = vunpack.c.l.b16 %v179
    %v624 = vunpack.c.l.b16 %v180
    %v625 = vunpack.c.l.b16 %v181
    %v626 = vunpack.c.l.b16 %v182
    %v627 = vunpack.c.l.b16 %v183
    %v628 = vunpack.c.l.b16 %v184
    %v629 = vunpack.c.l.b16 %v185
    %v630 = vunpack.c.l.b16 %v186
    %v631 = vunpack.c.l.b16 %v187
    %v632 = vunpack.c.l.b16 %v188
    %v633 = vunpack.c.l.b16 %v189
    %v634 = vunpack.c.l.b16 %v190
    %v635 = vunpack.c.l.b16 %v191
    %v636 = vunpack.c.l.b16 %v192
    %v637 = vunpack.c.l.b16 %v193
    %v638 = vunpack.c.l.b16 %v194
    %v639 = vunpack.c.l.b16 %v195
    %v640 = vunpack.c.l.b16 %v196
    %v641 = vunpack.c.l.b16 %v197
    %v642 = vunpack.c.l.b16 %v198
    %v643 = vunpack.c.l.b16 %v199
    %v644 = vunpack.c.l.b16 %v200
    %v645 = vunpack.c.l.b16 %v201
    %v646 = vunpack.c.l.b16 %v202
    %v647 = vunpack.c.l.b16 %v203
    %v648 = vunpack.c.l.b16 %v204
    %v649 = vunpack.c.l.b16 %v205
    %v650 = vunpack.c.l.b16 %v206
    %v651 = vunpack.c.l.b16 %v207
    %v652 = vunpack.c.l.b16 %v208
    %v653 = vunpack.c.l.b16 %v209
    %v654 = vunpack.c.l.b16 %v210
    %v655 = vunpack.c.l.b16 %v211
    %v656 = vunpack.c.l.b16 %v212
    %v657 = vunpack.c.l.b16 %v213
    %v658 = vunpack.c.l.b16 %v214
    %v659 = vunpack.c.l.b16 %v215
    %v660 = vunpack.c.l.b16 %v216
    %v661 = vunpack.c.l.b16 %v217
    %v662 = vunpack.c.l.b16 %v218
    %v663 = vpack.c.b16 %v468, %v467
    %v664 = vpack.c.b16 %v470, %v469
    %v665 = vpack.c.b16 %v472, %v471
    %v666 = vpack.c.b16 %v474, %v473
    %v667 = vpack.c.b16 %v476, %v475
    %v668 = vpack.c.b16 %v478, %v477
    %v669 = vpack.c.b16 %v480, %v479
    %v670 = vpack.c.b16 %v482, %v481
    %v671 = vpack.c.b16 %v484, %v483
    %v672 = vpack.c.b16 %v486, %v485
    %v673 = vpack.c.b16 %v488, %v487
    %v674 = vpack.c.b16 %v490, %v489
    %v675 = vpack.c.b16 %v492, %v491
    %v676 = vpack.c.b16 %v494, %v493
    %v677 = vpack.c.b16 %v496, %v495
    %v678 = vpack.c.b16 %v498, %v497
    %v679 = vpack.c.b16 %v500, %v499
    %v680 = vpack.c.b16 %v502, %v501
    %v681 = vpack.c.b16 %v504, %v503
    %v682 = vpack.c.b16 %v506, %v505
    %v683 = vpack.c.b16 %v508, %v507
    %v684 = vpack.c.b16 %v510, %v509
    %v685 = vpack.c.b16 %v512, %v511
    %v686 = vpack.c.b16 %v514, %v513
    %v687 = vpack.c.b16 %v516, %v515
    %v688 = vpack.c.b16 %v518, %v517
    %v689 = vpack.c.b16 %v520, %v519
    %v690 = vpack.c.b16 %v522, %v521
    %v691 = vpack.c.b16 %v524, %v523
    %v692 = vpack.c.b16 %v526, %v525
    %v693 = vpack.c.b16 %v528, %v527
    %v694 = vpack.c.b16 %v530, %v529
    %v695 = vpack.c.b16 %v532, %v531
    %v696 = vpack.c.b16 %v534, %v533
    %v697 = vpack.c.b16 %v536, %v535
    %v698 = vpack.c.b16 %v538, %v537
    %v699 = vpack.c.b16 %v540, %v539
    %v700 = vpack.c.b16 %v542, %v541
    %v701 = vpack.c.b16 %v544, %v543
    %v702 = vpack.c.b16 %v546, %v545
    %v703 = vpack.c.b16 %v548, %v547
    %v704 = vpack.c.b16 %v550, %v549
    %v705 = vpack.c.b16 %v552, %v551
    %v706 = vpack.c.b16 %v554, %v553
    %v707 = vpack.c.b16 %v556, %v555
    %v708 = vpack.c.b16 %v558, %v557
    %v709 = vpack.c.b16 %v560, %v559
    %v710 = vpack.c.b16 %v562, %v561
    %v711 = vpack.c.b16 %v564, %v563
    %v712 = vpack.c.b16 %v566, %v565
    %v713 = vpack.c.b16 %v568, %v567
    %v714 = vpack.c.b16 %v570, %v569
    %v715 = vpack.c.b16 %v572, %v571
    %v716 = vpack.c.b16 %v574, %v573
    %v717 = vpack.c.b16 %v576, %v575
    %v718 = vpack.c.b16 %v578, %v577
    %v719 = vpack.c.b16 %v580, %v579
    %v720 = vpack.c.b16 %v582, %v581
    %v721 = vpack.c.b16 %v584, %v583
    %v722 = vpack.c.b16 %v586, %v585
    %v723 = vpack.c.b16 %v588, %v587
    %v724 = vpack.c.b16 %v590, %v589
    %v725 = vpack.c.b16 %v592, %v591
    %v726 = vpack.c.b16 %v594, %v593
    %v727 = vpack.c.b16 %v596, %v595
    %v728 = vpack.c.b16 %v598, %v597
    %v729 = vpack.c.b16 %v600, %v599
    %v730 = vpack.c.b16 %v602, %v601
    %v731 = vpack.c.b16 %v604, %v603
    %v732 = vpack.c.b16 %v606, %v605
    %v733 = vpack.c.b16 %v608, %v607
    %v734 = vpack.c.b16 %v610, %v609
    %v735 = vpack.c.b16 %v612, %v611
    %v736 = vpack.c.b16 %v614, %v613
    %v737 = vpack.c.b16 %v616, %v615
    %v738 = vpack.c.b16 %v618, %v617
    %v739 = vpack.c.b16 %v620, %v619
    %v740 = vpack.c.b16 %v622, %v621
    %v741 = vpack.c.b16 %v624, %v623
    %v742 = vpack.c.b16 %v626, %v625
    %v743 = vpack.c.b16 %v628, %v627
    %v744 = vpack.c.b16 %v630, %v629
    %v745 = vpack.c.b16 %v632, %v631
    %v746 = vpack.c.b16 %v634, %v633
    %v747 = vpack.c.b16 %v636, %v635
    %v748 = vpack.c.b16 %v638, %v637
    %v749 = vpack.c.b16 %v640, %v639
    %v750 = vpack.c.b16 %v642, %v641
    %v751 = vpack.c.b16 %v644, %v643
    %v752 = vpack.c.b16 %v646, %v645
    %v753 = vpack.c.b16 %v648, %v647
    %v754 = vpack.c.b16 %v650, %v649
    %v755 = vpack.c.b16 %v652, %v651
    %v756 = vpack.c.b16 %v654, %v653
    %v757 = vpack.c.b16 %v656, %v655
    %v758 = vpack.c.b16 %v658, %v657
    %v759 = vpack.c.b16 %v660, %v659
    %v760 = vpack.c.b16 %v662, %v661
    %vm859 = vcmask 261120
    %v861 = vsel %vm859, %v258, 0
    %863 = vmatprep.subr.bf16.mxu0 0
    %864 = vmatpush1.bf16.msra.mxu0 %v663
    %865 = vmatprep.subr.bf16.mxu0 0
    %866 = vmatpush1.bf16.msra.mxu0 %v664
    %867 = vmatprep.subr.bf16.mxu0 0
    %868 = vmatpush1.bf16.msra.mxu0 %v665
    %869 = vmatprep.subr.bf16.mxu0 0
    %870 = vmatpush1.bf16.msra.mxu0 %v666
    %871 = vmatprep.subr.bf16.mxu0 0
    %872 = vmatpush1.bf16.msra.mxu0 %v667
    %873 = vmatprep.subr.bf16.mxu0 0
    %874 = vmatpush1.bf16.msra.mxu0 %v668
    %875 = vmatprep.subr.bf16.mxu0 0
    %876 = vmatpush1.bf16.msra.mxu0 %v669
    %877 = vmatprep.subr.bf16.mxu0 0
    %878 = vmatpush1.bf16.msra.mxu0 %v670
    %879 = vmatprep.subr.bf16.mxu0 0
    %880 = vmatpush1.bf16.msra.mxu0 %v671
    %881 = vmatprep.subr.bf16.mxu0 0
    %882 = vmatpush1.bf16.msra.mxu0 %v672
    %883 = vmatprep.subr.bf16.mxu0 0
    %884 = vmatpush1.bf16.msra.mxu0 %v673
    %885 = vmatprep.subr.bf16.mxu0 0
    %886 = vmatpush1.bf16.msra.mxu0 %v674
    %887 = vmatprep.subr.bf16.mxu0 0
    %888 = vmatpush1.bf16.msra.mxu0 %v675
    %889 = vmatprep.subr.bf16.mxu0 0
    %890 = vmatpush1.bf16.msra.mxu0 %v676
    %891 = vmatprep.subr.bf16.mxu0 0
    %892 = vmatpush1.bf16.msra.mxu0 %v677
    %893 = vmatprep.subr.bf16.mxu0 0
    %894 = vmatpush1.bf16.msra.mxu0 %v678
    %895 = vmatprep.mubr.bf16.mxu0 %v247
    %896 = vmatmul.mubr.bf16.gmra.mrb[0].mxu0 %v246
    %v897 = vpop.f32.mrb[0].mxu0
    %v898 = vadd.f32 %v224, %v897
    %v899 = vpop.f32.mrb[0].mxu0
    %v900 = vpop.f32.mrb[0].mxu0
    %v901 = vpop.f32.mrb[0].mxu0
    %902 = vdwg.mxu0
    %903 = vmatprep.subr.bf16.mxu0 0
    %904 = vmatpush1.bf16.msra.mxu0 %v679
    %905 = vmatprep.subr.bf16.mxu0 0
    %906 = vmatpush1.bf16.msra.mxu0 %v680
    %907 = vmatprep.subr.bf16.mxu0 0
    %908 = vmatpush1.bf16.msra.mxu0 %v681
    %909 = vmatprep.subr.bf16.mxu0 0
    %910 = vmatpush1.bf16.msra.mxu0 %v682
    %911 = vmatprep.subr.bf16.mxu0 0
    %912 = vmatpush1.bf16.msra.mxu0 %v683
    %913 = vmatprep.subr.bf16.mxu0 0
    %914 = vmatpush1.bf16.msra.mxu0 %v684
    %915 = vmatprep.subr.bf16.mxu0 0
    %916 = vmatpush1.bf16.msra.mxu0 %v685
    %917 = vmatprep.subr.bf16.mxu0 0
    %918 = vmatpush1.bf16.msra.mxu0 %v686
    %919 = vmatprep.subr.bf16.mxu0 0
    %920 = vmatpush1.bf16.msra.mxu0 %v687
    %921 = vmatprep.subr.bf16.mxu0 0
    %922 = vmatpush1.bf16.msra.mxu0 %v688
    %923 = vmatprep.subr.bf16.mxu0 0
    %924 = vmatpush1.bf16.msra.mxu0 %v689
    %925 = vmatprep.subr.bf16.mxu0 0
    %926 = vmatpush1.bf16.msra.mxu0 %v690
    %927 = vmatprep.subr.bf16.mxu0 0
    %928 = vmatpush1.bf16.msra.mxu0 %v691
    %929 = vmatprep.subr.bf16.mxu0 0
    %930 = vmatpush1.bf16.msra.mxu0 %v692
    %931 = vmatprep.subr.bf16.mxu0 0
    %932 = vmatpush1.bf16.msra.mxu0 %v693
    %933 = vmatprep.subr.bf16.mxu0 0
    %934 = vmatpush1.bf16.msra.mxu0 %v694
    %935 = vmatprep.mubr.bf16.mxu0 %v249
    %936 = vmatmul.mubr.bf16.gmra.mrb[0].mxu0 %v248
    %v937 = vpop.f32.mrb[0].mxu0
    %v938 = vadd.f32 %v898, %v937
    %v939 = vpop.f32.mrb[0].mxu0
    %v940 = vpop.f32.mrb[0].mxu0
    %v941 = vpop.f32.mrb[0].mxu0
    %942 = vdwg.mxu0
    %943 = vmatprep.subr.bf16.mxu0 0
    %944 = vmatpush1.bf16.msra.mxu0 %v695
    %945 = vmatprep.subr.bf16.mxu0 0
    %946 = vmatpush1.bf16.msra.mxu0 %v696
    %947 = vmatprep.subr.bf16.mxu0 0
    %948 = vmatpush1.bf16.msra.mxu0 %v697
    %949 = vmatprep.subr.bf16.mxu0 0
    %950 = vmatpush1.bf16.msra.mxu0 %v698
    %951 = vmatprep.subr.bf16.mxu0 0
    %952 = vmatpush1.bf16.msra.mxu0 %v699
    %953 = vmatprep.subr.bf16.mxu0 0
    %954 = vmatpush1.bf16.msra.mxu0 %v700
    %955 = vmatprep.subr.bf16.mxu0 0
    %956 = vmatpush1.bf16.msra.mxu0 %v701
    %957 = vmatprep.subr.bf16.mxu0 0
    %958 = vmatpush1.bf16.msra.mxu0 %v702
    %959 = vmatprep.subr.bf16.mxu0 0
    %960 = vmatpush1.bf16.msra.mxu0 %v703
    %961 = vmatprep.subr.bf16.mxu0 0
    %962 = vmatpush1.bf16.msra.mxu0 %v704
    %963 = vmatprep.subr.bf16.mxu0 0
    %964 = vmatpush1.bf16.msra.mxu0 %v705
    %965 = vmatprep.subr.bf16.mxu0 0
    %966 = vmatpush1.bf16.msra.mxu0 %v706
    %967 = vmatprep.subr.bf16.mxu0 0
    %968 = vmatpush1.bf16.msra.mxu0 %v707
    %969 = vmatprep.subr.bf16.mxu0 0
    %970 = vmatpush1.bf16.msra.mxu0 %v708
    %971 = vmatprep.subr.bf16.mxu0 0
    %972 = vmatpush1.bf16.msra.mxu0 %v709
    %973 = vmatprep.subr.bf16.mxu0 0
    %974 = vmatpush1.bf16.msra.mxu0 %v710
    %975 = vmatprep.mubr.bf16.mxu0 %v251
    %976 = vmatmul.mubr.bf16.gmra.mrb[0].mxu0 %v250
    %v977 = vpop.f32.mrb[0].mxu0
    %v978 = vadd.f32 %v938, %v977
    %v979 = vpop.f32.mrb[0].mxu0
    %v980 = vpop.f32.mrb[0].mxu0
    %v981 = vpop.f32.mrb[0].mxu0
    %982 = vdwg.mxu0
    %983 = vmatprep.subr.bf16.mxu0 0
    %984 = vmatpush1.bf16.msra.mxu0 %v711
    %985 = vmatprep.subr.bf16.mxu0 0
    %986 = vmatpush1.bf16.msra.mxu0 %v712
    %987 = vmatprep.subr.bf16.mxu0 0
    %988 = vmatpush1.bf16.msra.mxu0 %v713
    %989 = vmatprep.subr.bf16.mxu0 0
    %990 = vmatpush1.bf16.msra.mxu0 %v714
    %991 = vmatprep.subr.bf16.mxu0 0
    %992 = vmatpush1.bf16.msra.mxu0 %v715
    %993 = vmatprep.subr.bf16.mxu0 0
    %994 = vmatpush1.bf16.msra.mxu0 %v716
    %995 = vmatprep.subr.bf16.mxu0 0
    %996 = vmatpush1.bf16.msra.mxu0 %v717
    %997 = vmatprep.subr.bf16.mxu0 0
    %998 = vmatpush1.bf16.msra.mxu0 %v718
    %999 = vmatprep.subr.bf16.mxu0 0
    %1000 = vmatpush1.bf16.msra.mxu0 %v719
    %1001 = vmatprep.subr.bf16.mxu0 0
    %1002 = vmatpush1.bf16.msra.mxu0 %v720
    %1003 = vmatprep.subr.bf16.mxu0 0
    %1004 = vmatpush1.bf16.msra.mxu0 %v721
    %1005 = vmatprep.subr.bf16.mxu0 0
    %1006 = vmatpush1.bf16.msra.mxu0 %v722
    %1007 = vmatprep.subr.bf16.mxu0 0
    %1008 = vmatpush1.bf16.msra.mxu0 %v723
    %1009 = vmatprep.subr.bf16.mxu0 0
    %1010 = vmatpush1.bf16.msra.mxu0 %v724
    %1011 = vmatprep.subr.bf16.mxu0 0
    %1012 = vmatpush1.bf16.msra.mxu0 %v725
    %1013 = vmatprep.subr.bf16.mxu0 0
    %1014 = vmatpush1.bf16.msra.mxu0 %v726
    %1015 = vmatprep.mubr.bf16.mxu0 %v253
    %1016 = vmatmul.mubr.bf16.gmra.mrb[0].mxu0 %v252
    %v1017 = vpop.f32.mrb[0].mxu0
    %v1018 = vadd.f32 %v978, %v1017
    %v1019 = vpop.f32.mrb[0].mxu0
    %v1020 = vpop.f32.mrb[0].mxu0
    %v1021 = vpop.f32.mrb[0].mxu0
    %1022 = vdwg.mxu0
    %1023 = vmatprep.subr.bf16.mxu0 0
    %1024 = vmatpush1.bf16.msra.mxu0 %v727
    %1025 = vmatprep.subr.bf16.mxu0 0
    %1026 = vmatpush1.bf16.msra.mxu0 %v728
    %1027 = vmatprep.subr.bf16.mxu0 0
    %1028 = vmatpush1.bf16.msra.mxu0 %v729
    %1029 = vmatprep.subr.bf16.mxu0 0
    %1030 = vmatpush1.bf16.msra.mxu0 %v730
    %1031 = vmatprep.subr.bf16.mxu0 0
    %1032 = vmatpush1.bf16.msra.mxu0 %v731
    %1033 = vmatprep.subr.bf16.mxu0 0
    %1034 = vmatpush1.bf16.msra.mxu0 %v732
    %1035 = vmatprep.subr.bf16.mxu0 0
    %1036 = vmatpush1.bf16.msra.mxu0 %v733
    %1037 = vmatprep.subr.bf16.mxu0 0
    %1038 = vmatpush1.bf16.msra.mxu0 %v734
    %1039 = vmatprep.subr.bf16.mxu0 0
    %1040 = vmatpush1.bf16.msra.mxu0 %v735
    %1041 = vmatprep.subr.bf16.mxu0 0
    %1042 = vmatpush1.bf16.msra.mxu0 %v736
    %1043 = vmatprep.subr.bf16.mxu0 0
    %1044 = vmatpush1.bf16.msra.mxu0 %v737
    %1045 = vmatprep.subr.bf16.mxu0 0
    %1046 = vmatpush1.bf16.msra.mxu0 %v738
    %1047 = vmatprep.subr.bf16.mxu0 0
    %1048 = vmatpush1.bf16.msra.mxu0 %v739
    %1049 = vmatprep.subr.bf16.mxu0 0
    %1050 = vmatpush1.bf16.msra.mxu0 %v740
    %1051 = vmatprep.subr.bf16.mxu0 0
    %1052 = vmatpush1.bf16.msra.mxu0 %v741
    %1053 = vmatprep.subr.bf16.mxu0 0
    %1054 = vmatpush1.bf16.msra.mxu0 %v742
    %1055 = vmatprep.mubr.bf16.mxu0 %v255
    %1056 = vmatmul.mubr.bf16.gmra.mrb[0].mxu0 %v254
    %v1057 = vpop.f32.mrb[0].mxu0
    %v1058 = vadd.f32 %v1018, %v1057
    %v1059 = vpop.f32.mrb[0].mxu0
    %v1060 = vpop.f32.mrb[0].mxu0
    %v1061 = vpop.f32.mrb[0].mxu0
    %1062 = vdwg.mxu0
    %1063 = vmatprep.subr.bf16.mxu0 0
    %1064 = vmatpush1.bf16.msra.mxu0 %v743
    %1065 = vmatprep.subr.bf16.mxu0 0
    %1066 = vmatpush1.bf16.msra.mxu0 %v744
    %1067 = vmatprep.subr.bf16.mxu0 0
    %1068 = vmatpush1.bf16.msra.mxu0 %v745
    %1069 = vmatprep.subr.bf16.mxu0 0
    %1070 = vmatpush1.bf16.msra.mxu0 %v746
    %1071 = vmatprep.subr.bf16.mxu0 0
    %1072 = vmatpush1.bf16.msra.mxu0 %v747
    %1073 = vmatprep.subr.bf16.mxu0 0
    %1074 = vmatpush1.bf16.msra.mxu0 %v748
    %1075 = vmatprep.subr.bf16.mxu0 0
    %1076 = vmatpush1.bf16.msra.mxu0 %v749
    %1077 = vmatprep.subr.bf16.mxu0 0
    %1078 = vmatpush1.bf16.msra.mxu0 %v750
    %1079 = vmatprep.subr.bf16.mxu0 0
    %1080 = vmatpush1.bf16.msra.mxu0 %v751
    %1081 = vmatprep.subr.bf16.mxu0 0
    %1082 = vmatpush1.bf16.msra.mxu0 %v752
    %1083 = vmatprep.subr.bf16.mxu0 0
    %1084 = vmatpush1.bf16.msra.mxu0 %v753
    %1085 = vmatprep.subr.bf16.mxu0 0
    %1086 = vmatpush1.bf16.msra.mxu0 %v754
    %1087 = vmatprep.subr.bf16.mxu0 0
    %1088 = vmatpush1.bf16.msra.mxu0 %v755
    %1089 = vmatprep.subr.bf16.mxu0 0
    %1090 = vmatpush1.bf16.msra.mxu0 %v756
    %1091 = vmatprep.subr.bf16.mxu0 0
    %1092 = vmatpush1.bf16.msra.mxu0 %v757
    %1093 = vmatprep.subr.bf16.mxu0 0
    %1094 = vmatpush1.bf16.msra.mxu0 %v758
    %1095 = vmatprep.mubr.bf16.mxu0 %v257
    %1096 = vmatmul.mubr.bf16.gmra.mrb[0].mxu0 %v256
    %v1097 = vpop.f32.mrb[0].mxu0
    %v1098 = vadd.f32 %v1058, %v1097
    %v1099 = vpop.f32.mrb[0].mxu0
    %v1100 = vpop.f32.mrb[0].mxu0
    %v1101 = vpop.f32.mrb[0].mxu0
    %1102 = vdwg.mxu0
    %1103 = vmatprep.subr.bf16.mxu0 0
    %1104 = vmatpush1.bf16.msra.mxu0 %v759
    %1105 = vmatprep.subr.bf16.mxu0 0
    %1106 = vmatpush1.bf16.msra.mxu0 %v760
    %1107 = vmatprep.subr.bf16.mxu0 0
    %1108 = vmatpush1.bf16.msra.mxu0 0
    %1109 = vmatprep.subr.bf16.mxu0 0
    %1110 = vmatpush1.bf16.msra.mxu0 0
    %1111 = vmatprep.subr.bf16.mxu0 0
    %1112 = vmatpush1.bf16.msra.mxu0 0
    %1113 = vmatprep.subr.bf16.mxu0 0
    %1114 = vmatpush1.bf16.msra.mxu0 0
    %1115 = vmatprep.subr.bf16.mxu0 0
    %1116 = vmatpush1.bf16.msra.mxu0 0
    %1117 = vmatprep.subr.bf16.mxu0 0
    %1118 = vmatpush1.bf16.msra.mxu0 0
    %1119 = vmatprep.subr.bf16.mxu0 0
    %1120 = vmatpush1.bf16.msra.mxu0 0
    %1121 = vmatprep.subr.bf16.mxu0 0
    %1122 = vmatpush1.bf16.msra.mxu0 0
    %1123 = vmatprep.subr.bf16.mxu0 0
    %1124 = vmatpush1.bf16.msra.mxu0 0
    %1125 = vmatprep.subr.bf16.mxu0 0
    %1126 = vmatpush1.bf16.msra.mxu0 0
    %1127 = vmatprep.subr.bf16.mxu0 0
    %1128 = vmatpush1.bf16.msra.mxu0 0
    %1129 = vmatprep.subr.bf16.mxu0 0
    %1130 = vmatpush1.bf16.msra.mxu0 0
    %1131 = vmatprep.subr.bf16.mxu0 0
    %1132 = vmatpush1.bf16.msra.mxu0 0
    %1133 = vmatprep.subr.bf16.mxu0 0
    %1134 = vmatpush1.bf16.msra.mxu0 0
    %1135 = vmatprep.mubr.bf16.mxu0 0
    %1136 = vmatmul.mubr.bf16.gmra.mrb[0].mxu0 %v861
    %v1137 = vpop.f32.mrb[0].mxu0
    %v1138 = vadd.f32 %v1098, %v1137
    %v1139 = vpop.f32.mrb[0].mxu0
    %v1140 = vpop.f32.mrb[0].mxu0
    %v1141 = vpop.f32.mrb[0].mxu0
    %1142 = vdwg.mxu0
    %1143 = vst [vmem:[#allocation2] sm:$0xff] %v1138
    // Predicated region
    $region14: #{conv_nn_forward.9} parent=1 // pred_check
      _
    $region15: #{conv_nn_forward.9} parent=1 // pred_check_branch
      %1145 = sbr.rel (0) target = $region17
    $region16: #{conv_nn_forward.9} parent=1 // pred_region
      %s1147 = ssub.s32 128, 128
      %1148 = vsyncadd [#allocation3], %s1147
      %s1150 = sshll.u32 [#allocation2], 4
      %s1151 = int_to_ptr.vmem [resolvable:$true] %s1150
      %1153 = dma.vmem_to_hbm [thread:$0]  %s1151, 128, %s3, [#allocation3]
    $region17: #{conv_nn_forward.9} parent=1 // pred_fallthru
      _
    // Predicated region
    $region18: #{conv_nn_forward.9} parent=1 // pred_check
      _
    $region19: #{conv_nn_forward.9} parent=1 // pred_check_branch
      %1155 = sbr.rel (0) target = $region21
    $region20: #{conv_nn_forward.9} parent=1 // pred_region
      %1156 = dma.done [#allocation3], 128
    $region21: #{conv_nn_forward.9} parent=1 // pred_fallthru
      _
    %1157 = vsyncpa [#allocation3], 1

</llo_original>
